<compile_context>
chip_gen: v6e
topology: v6e:2x2x1
jax: 0.10.0
libtpu: 0.0.40
codegen_flags: <defaults>
</compile_context>

<pallas_src>
import math
import functools

import jax
import jax.numpy as jnp
from jax.experimental import pallas as pl
from jax.experimental.pallas import tpu as pltpu


_EDGE_TILE = 256          # edge-block tile for the GIN kernel
_BATCH_TILE = 8           # batch-block tile for the regression head
_KERNEL_SIZES = (4, 6, 8)  # SequenceNet conv kernel sizes


def _round_up(x, m):
    return ((x + m - 1) // m) * m


def _l2_normalize_rows(x):
    # F.normalize(p=2, dim=-1, eps=1e-12): sum-of-squares -> rsqrt (EUP) -> multiply
    ss = jnp.sum(x * x, axis=-1, keepdims=True)
    return x * jax.lax.rsqrt(jnp.maximum(ss, 1e-24))


# -----------------------------------------------------------------------------
# Quantum circuit unitary construction (parameter setup, plain JAX, run once)
# -----------------------------------------------------------------------------
def _rx(t):
    c = jnp.cos(t / 2).astype(jnp.complex64)
    s = jnp.sin(t / 2).astype(jnp.complex64)
    return jnp.stack([jnp.stack([c, -1j * s]), jnp.stack([-1j * s, c])])


def _ry(t):
    c = jnp.cos(t / 2).astype(jnp.complex64)
    s = jnp.sin(t / 2).astype(jnp.complex64)
    return jnp.stack([jnp.stack([c, -s]), jnp.stack([s, c])])


def _rz(t):
    e_m = jnp.exp(-1j * t / 2).astype(jnp.complex64)
    e_p = jnp.exp(1j * t / 2).astype(jnp.complex64)
    z = jnp.zeros((), jnp.complex64)
    return jnp.stack([jnp.stack([e_m, z]), jnp.stack([z, e_p])])


_CNOT = jnp.array([[1, 0, 0, 0],
                   [0, 1, 0, 0],
                   [0, 0, 0, 1],
                   [0, 0, 1, 0]], dtype=jnp.complex64)


def _apply_1q(psi, g, q):
    psi = jnp.moveaxis(psi, q, 0)
    shp = psi.shape
    psi = (g @ psi.reshape(2, -1)).reshape(shp)
    return jnp.moveaxis(psi, 0, q)


def _apply_cnot(psi, c, t):
    psi = jnp.moveaxis(psi, (c, t), (0, 1))
    shp = psi.shape
    psi = (_CNOT @ psi.reshape(4, -1)).reshape(shp)
    return jnp.moveaxis(psi, (0, 1), (c, t))


def build_circuit_unitary(weights, n_qubits, n_layers=5):
    """Unitary of: [XYZLayer ; ring_of_cnot] * n_layers ; XYZLayer.
    Qubit 0 = most-significant bit of the state index (matches
    state.view(batch, 2, ..., 2) in the PyTorch reference)."""
    dim = 2 ** n_qubits
    psi = jnp.eye(dim, dtype=jnp.complex64).reshape((2,) * n_qubits + (dim,))

    def xyz_layer(psi, w):
        # TODO(synk): per-wire rotation order (Rx, Ry, Rz) and parameter packing are
        # assumed; the original quantum library (Circuit.XYZLayer) is not provided.
        for q in range(n_qubits):
            psi = _apply_1q(psi, _rx(w[3 * q + 0]), q)
            psi = _apply_1q(psi, _ry(w[3 * q + 1]), q)
            psi = _apply_1q(psi, _rz(w[3 * q + 2]), q)
        return psi

    for _ in range(n_layers):
        psi = xyz_layer(psi, weights[0]) if False else psi  # placeholder (never taken)
    # (the real loop below; kept simple and explicit)
    psi = jnp.eye(dim, dtype=jnp.complex64).reshape((2,) * n_qubits + (dim,))
    for layer in range(n_layers):
        psi = xyz_layer(psi, weights[layer])
        for q in range(n_qubits):
            psi = _apply_cnot(psi, q, (q + 1) % n_qubits)
    psi = xyz_layer(psi, weights[n_layers])
    return psi.reshape(dim, dim)


# -----------------------------------------------------------------------------
# Pallas kernel 1: DrugNet (GINConv + quantum-MLP(+folded BN) + JK-sum + mean pool)
#   Grid over edge blocks ("arbitrary"); scatter-add accumulated in VMEM scratch;
#   node MLP + pooling in the final grid step.  One-hots built in-kernel from
#   int32 index rows (O(E+N) HBM traffic), cast to bf16 (exact) for the MXU.
# -----------------------------------------------------------------------------
def drug_gin_forward(eps, h0, edge_emb, src_col, dst_row, batch_row,
                     u1_fold_t, sh_mlp, u2_fold_t, sh_out, num_graphs):
    n_pad, dim = h0.shape
    e_pad = src_col.shape[0]
    te = _EDGE_TILE
    num_blocks = e_pad // te

    def kernel(eps_ref, h0_ref, ee_ref, src_ref, dst_ref, bat_ref,
               u1t_ref, sh1_ref, u2t_ref, sh2_ref, out_ref, aggr_ref):
        i = pl.program_id(0)

        @pl.when(i == 0)
        def _init():
            aggr_ref[...] = jnp.zeros_like(aggr_ref)

        h0v = h0_ref[...]                                           # (N, 64) f32 resident
        h0b = h0v.astype(jnp.bfloat16)

        # ---- per-edge-block gather / message / scatter-add ----
        src = src_ref[...]                                          # (TE, 1) int32
        oh_src = (jax.lax.broadcasted_iota(jnp.int32, (te, n_pad), 1)
                  == src).astype(jnp.bfloat16)                      # (TE, N), exact 0/1
        x_j = jnp.dot(oh_src, h0b, preferred_element_type=jnp.float32)
        msg = jnp.maximum(x_j + ee_ref[...], 0.0)                   # relu(x_j + e)

        dst = dst_ref[...]                                          # (1, TE) int32
        oh_dst = (jax.lax.broadcasted_iota(jnp.int32, (n_pad, te), 0)
                  == dst).astype(jnp.bfloat16)                      # (N, TE)
        aggr_ref[...] += jnp.dot(oh_dst, msg.astype(jnp.bfloat16),
                                 preferred_element_type=jnp.float32)

        # ---- final step: quantum MLP (BN folded), JK-sum residual, mean pool ----
        @pl.when(i == pl.num_programs(0) - 1)
        def _finalize():
            pre = (1.0 + eps_ref[...]) * h0v + aggr_ref[...]
            # mlp = QuLinear(measure=False) -> BN(eval, scale folded) -> ReLU
            #       -> QuLinear(measure=False); outer BN folded; dropout = identity
            q1 = jnp.dot(_l2_normalize_rows(pre).astype(jnp.bfloat16), u1t_ref[...],
                         preferred_element_type=jnp.float32)
            z = jnp.maximum(q1 + sh1_ref[...], 0.0)
            q2 = jnp.dot(_l2_normalize_rows(z).astype(jnp.bfloat16), u2t_ref[...],
                         preferred_element_type=jnp.float32)
            node_rep = h0v + q2 + sh2_ref[...]                      # JK = 'sum'
            # global mean pool: pool first (matmul), scale second (EUP reciprocal)
            bat = bat_ref[...]                                      # (1, N) int32
            oh_g = (jax.lax.broadcasted_iota(jnp.int32, (num_graphs, n_pad), 0)
                    == bat).astype(jnp.float32)                     # (G, N)
            cnt = jnp.sum(oh_g, axis=-1, keepdims=True)             # (G, 1)
            sums = jnp.dot(oh_g.astype(jnp.bfloat16), node_rep.astype(jnp.bfloat16),
                           preferred_element_type=jnp.float32)      # (G, 64)
            out_ref[...] = sums * pl.reciprocal(jnp.maximum(cnt, 1.0), approx=True)

    flops = int(4 * e_pad * n_pad * dim + 4 * n_pad * dim * dim
                + 2 * num_graphs * n_pad * dim)
    transc = int(2 * n_pad + num_graphs)
    bytes_acc = int(4 * (2 * n_pad * dim + e_pad * dim + num_graphs * dim + n_pad)
                    + 8 * e_pad + 4 * dim * dim)

    return pl.pallas_call(
        kernel,
        out_shape=jax.ShapeDtypeStruct((num_graphs, dim), jnp.float32),
        grid=(num_blocks,),
        in_specs=[
            pl.BlockSpec((1, 1), lambda i: (0, 0)),                 # eps
            pl.BlockSpec((n_pad, dim), lambda i: (0, 0)),           # h0 (resident)
            pl.BlockSpec((te, dim), lambda i: (i, 0)),              # edge_emb block
            pl.BlockSpec((te, 1), lambda i: (i, 0)),                # src block
            pl.BlockSpec((1, te), lambda i: (0, i)),                # dst block
            pl.BlockSpec((1, n_pad), lambda i: (0, 0)),             # batch (resident)
            pl.BlockSpec((dim, dim), lambda i: (0, 0)),             # u1_fold_t
            pl.BlockSpec((1, dim), lambda i: (0, 0)),               # sh_mlp
            pl.BlockSpec((dim, dim), lambda i: (0, 0)),             # u2_fold_t
            pl.BlockSpec((1, dim), lambda i: (0, 0)),               # sh_out
        ],
        out_specs=pl.BlockSpec((num_graphs, dim), lambda i: (0, 0)),
        scratch_shapes=[pltpu.VMEM((n_pad, dim), jnp.float32)],
        compiler_params=pltpu.CompilerParams(dimension_semantics=("arbitrary",)),
        cost_estimate=pl.CostEstimate(flops=flops, transcendentals=transc,
                                      bytes_accessed=bytes_acc),
    )(eps, h0, edge_emb, src_col, dst_row, batch_row,
      u1_fold_t, sh_mlp, u2_fold_t, sh_out)


# -----------------------------------------------------------------------------
# Pallas kernel 2: fused SequenceNet conv stack
#   Conv1d+ReLU x3 + AdaptiveMaxPool1d(1) in one kernel, grid over batch.
#   Each conv is ONE im2col matmul (lout, K*128) @ (K*128, 128) in bf16.
#   Channels zero-padded to 128 -> lane-dense matmuls and stores.
# -----------------------------------------------------------------------------
def seq_conv_forward(x, w1f, b1, w2f, b2, w3f, b3):
    """x: [B, L, 128] channels-last f32; w_kf: [K_k*128, 128] bf16; b_k: [1, 128] f32."""
    B, L, C = x.shape
    K1, K2, K3 = _KERNEL_SIZES
    l1 = L - K1 + 1
    l2 = l1 - K2 + 1
    l3 = l2 - K3 + 1
    cout = w3f.shape[1]

    def kernel(x_ref, w1_ref, b1_ref, w2_ref, b2_ref, w3_ref, b3_ref, o_ref):
        def conv_relu(h, wf_ref, b_ref, K, lout):
            # im2col: single deep-K contraction instead of K tap matmuls
            cols = [h[k:k + lout, :] for k in range(K)]
            im = jnp.concatenate(cols, axis=-1).astype(jnp.bfloat16)   # (lout, K*128)
            acc = jnp.dot(im, wf_ref[...], preferred_element_type=jnp.float32)
            return jnp.maximum(acc + b_ref[...], 0.0)

        h1 = conv_relu(x_ref[0], w1_ref, b1_ref, K1, l1)
        h2 = conv_relu(h1, w2_ref, b2_ref, K2, l2)
        h3 = conv_relu(h2, w3_ref, b3_ref, K3, l3)
        o_ref[0] = jnp.max(h3, axis=0, keepdims=True)                  # AdaptiveMaxPool1d(1)

    flops = int(2 * B * 128 * 128 * (l1 * K1 + l2 * K2 + l3 * K3))
    bytes_acc = int(4 * B * L * C + 2 * 128 * 128 * (K1 + K2 + K3) + 4 * B * C)

    return pl.pallas_call(
        kernel,
        out_shape=jax.ShapeDtypeStruct((B, 1, cout), jnp.float32),
        grid=(B,),
        in_specs=[
            pl.BlockSpec((1, L, C), lambda i: (i, 0, 0)),
            pl.BlockSpec(w1f.shape, lambda i: (0, 0)),
            pl.BlockSpec(b1.shape, lambda i: (0, 0)),
            pl.BlockSpec(w2f.shape, lambda i: (0, 0)),
            pl.BlockSpec(b2.shape, lambda i: (0, 0)),
            pl.BlockSpec(w3f.shape, lambda i: (0, 0)),
            pl.BlockSpec(b3.shape, lambda i: (0, 0)),
        ],
        out_specs=pl.BlockSpec((1, 1, cout), lambda i: (i, 0, 0)),
        compiler_params=pltpu.CompilerParams(dimension_semantics=("parallel",)),
        cost_estimate=pl.CostEstimate(flops=flops, transcendentals=0,
                                      bytes_accessed=bytes_acc),
    )(x, w1f, b1, w2f, b2, w3f, b3)


# -----------------------------------------------------------------------------
# Pallas kernel 3: Regression head (concat folded in)
#   h = relu(drug @ W_d + tgt @ W_t + b); xn = normalize(h);
#   out = xn^T M xn + b2   where M collapses QuLinear(measure=True)+Linear(30->1).
#   Grid over batch blocks ("parallel").
# -----------------------------------------------------------------------------
def regression_head(drug, tgt, w1d_t, w1t_t, b1, m, b2):
    B = drug.shape[0]
    tb = _BATCH_TILE
    assert B % tb == 0

    def kernel(drug_ref, tgt_ref, w1d_ref, w1t_ref, b1_ref, m_ref, b2_ref, o_ref):
        h = (jnp.dot(drug_ref[...].astype(jnp.bfloat16), w1d_ref[...],
                     preferred_element_type=jnp.float32)
             + jnp.dot(tgt_ref[...].astype(jnp.bfloat16), w1t_ref[...],
                       preferred_element_type=jnp.float32)
             + b1_ref[...])
        h = jnp.maximum(h, 0.0)
        xn = _l2_normalize_rows(h)                  # amplitude encoding (Dropout = id)
        y = jnp.dot(xn.astype(jnp.bfloat16), m_ref[...],
                    preferred_element_type=jnp.float32)
        o_ref[...] = jnp.sum(xn * y, axis=-1, keepdims=True) + b2_ref[...]

    flops = int(2 * B * 1024 * (64 + 128 + 1024) + 4 * B * 1024)
    bytes_acc = int(4 * B * (64 + 128 + 1) + 2 * 1024 * (64 + 128 + 1024) + 4 * 1024)

    return pl.pallas_call(
        kernel,
        out_shape=jax.ShapeDtypeStruct((B, 1), jnp.float32),
        grid=(B // tb,),
        in_specs=[
            pl.BlockSpec((tb, drug.shape[1]), lambda i: (i, 0)),
            pl.BlockSpec((tb, tgt.shape[1]), lambda i: (i, 0)),
            pl.BlockSpec(w1d_t.shape, lambda i: (0, 0)),
            pl.BlockSpec(w1t_t.shape, lambda i: (0, 0)),
            pl.BlockSpec(b1.shape, lambda i: (0, 0)),
            pl.BlockSpec(m.shape, lambda i: (0, 0)),
            pl.BlockSpec(b2.shape, lambda i: (0, 0)),
        ],
        out_specs=pl.BlockSpec((tb, 1), lambda i: (i, 0)),
        compiler_params=pltpu.CompilerParams(dimension_semantics=("parallel",)),
        cost_estimate=pl.CostEstimate(flops=flops, transcendentals=int(B),
                                      bytes_accessed=bytes_acc),
    )(drug, tgt, w1d_t, w1t_t, b1, m, b2)


# -----------------------------------------------------------------------------
# Parameter initialization (deterministic, synthetic)
# -----------------------------------------------------------------------------
def _mm(a, b):
    return jnp.matmul(a, b, precision=jax.lax.Precision.HIGHEST)


def init_params(key):
    ks = iter(jax.random.split(key, 40))
    nk = lambda: next(ks)
    p = {}
    # AtomEncoder (9 categorical features) / BondEncoder (3 features), emb dim 64
    p['atom_emb'] = [0.1 * jax.random.normal(nk(), (16, 64), jnp.float32) for _ in range(9)]
    p['bond_emb'] = [0.1 * jax.random.normal(nk(), (8, 64), jnp.float32) for _ in range(3)]
    p['gin_eps'] = jnp.zeros((1, 1), jnp.float32)       # nn.Parameter([0])

    # shared mlp: QuLinear(64,measure=False) -> BatchNorm1d(64) -> ReLU -> QuLinear(64)
    qw1 = jax.random.uniform(nk(), (6, 18), jnp.float32, 0.0, 2 * math.pi)
    qw2 = jax.random.uniform(nk(), (6, 18), jnp.float32, 0.0, 2 * math.pi)
    u1 = build_circuit_unitary(qw1, 6)
    u2 = build_circuit_unitary(qw2, 6)

    def bn_params(dim):
        gamma = jax.random.uniform(nk(), (dim,), jnp.float32, 0.5, 1.5)
        beta = 0.1 * jax.random.normal(nk(), (dim,), jnp.float32)
        rmean = 0.1 * jax.random.normal(nk(), (dim,), jnp.float32)
        rvar = jax.random.uniform(nk(), (dim,), jnp.float32, 0.5, 1.5)
        scale = gamma / jnp.sqrt(rvar + 1e-5)
        shift = beta - rmean * scale
        return scale.reshape(1, dim), shift.reshape(1, dim)

    sc_mlp, sh_mlp = bn_params(64)   # BN inside mlp (eval mode)
    sc_out, sh_out = bn_params(64)   # batch_norms[0]  (eval mode)
    # measure=False on real input -> output = Re(U) @ normalize(x); fold BN scale in.
    p['u1_fold_t'] = (jnp.real(u1).T.astype(jnp.float32) * sc_mlp).astype(jnp.bfloat16)
    p['u2_fold_t'] = (jnp.real(u2).T.astype(jnp.float32) * sc_out).astype(jnp.bfloat16)
    p['sh_mlp'] = sh_mlp
    p['sh_out'] = sh_out

    # SequenceNet: Embedding(25,128); Conv1d(128,32,4) Conv1d(32,64,6) Conv1d(64,96,8)
    p['seq_emb'] = jax.random.normal(nk(), (25, 128), jnp.float32)

    def conv_init(K, cin, cout):
        lim = 1.0 / math.sqrt(cin * K)
        w = jax.random.uniform(nk(), (K, cin, cout), jnp.float32, -lim, lim)
        b = jax.random.uniform(nk(), (1, cout), jnp.float32, -lim, lim)
        return w, b

    def pad_flatten(w, b, cin_p=128, cout_p=128):
        # zero-pad channels to 128 (numerics identical) and flatten taps for im2col
        K, cin, cout = w.shape
        wp = jnp.zeros((K, cin_p, cout_p), jnp.float32).at[:, :cin, :cout].set(w)
        bp = jnp.zeros((1, cout_p), jnp.float32).at[:, :cout].set(b)
        return wp.reshape(K * cin_p, cout_p).astype(jnp.bfloat16), bp

    w1, b1 = conv_init(_KERNEL_SIZES[0], 128, 32)
    w2, b2 = conv_init(_KERNEL_SIZES[1], 32, 64)
    w3, b3 = conv_init(_KERNEL_SIZES[2], 64, 96)
    p['conv1_wf'], p['conv1_b'] = pad_flatten(w1, b1)
    p['conv2_wf'], p['conv2_b'] = pad_flatten(w2, b2)
    p['conv3_wf'], p['conv3_b'] = pad_flatten(w3, b3)

    # Regression_Layer(160, 1024): Linear weight split into drug(64) / target(96->128 pad)
    lim = 1.0 / math.sqrt(160)
    w1_full = jax.random.uniform(nk(), (160, 1024), jnp.float32, -lim, lim)
    p['lin1_wd_t'] = w1_full[:64].astype(jnp.bfloat16)                        # (64, 1024)
    wt = jnp.zeros((128, 1024), jnp.float32).at[:96].set(w1_full[64:])
    p['lin1_wt_t'] = wt.astype(jnp.bfloat16)                                  # (128, 1024)
    p['lin1_b'] = jax.random.uniform(nk(), (1, 1024), jnp.float32, -lim, lim)

    qwr = jax.random.uniform(nk(), (6, 30), jnp.float32, 0.0, 2 * math.pi)
    ur = build_circuit_unitary(qwr, 10)                 # 10 qubits (1024-dim state)
    lim2 = 1.0 / math.sqrt(30)
    lin2_w = jax.random.uniform(nk(), (30, 1), jnp.float32, -lim2, lim2)
    lin2_b = jax.random.uniform(nk(), (1, 1), jnp.float32, -lim2, lim2)

    # ---- Fold  (Pauli X/Y/Z measurement  ->  Linear(30,1))  into one matrix M ----
    # For qubit q (MSB ordering: bit b = n_q-1-q):
    #   <X_q> = re^T P_q re + im^T P_q im ; <Z_q> = re^T S_q re + im^T S_q im
    #   <Y_q> = 2 re^T (S_q P_q) im
    # out = xn^T [U_re^T C U_re + U_im^T C U_im + U_re^T D U_im] xn + b
    n_q, dim = 10, 1024
    u_re = jnp.real(ur).astype(jnp.float32)
    u_im = jnp.imag(ur).astype(jnp.float32)
    wx, wy, wz = lin2_w[0:10, 0], lin2_w[10:20, 0], lin2_w[20:30, 0]
    idx = jnp.arange(dim)
    C = jnp.zeros((dim, dim), jnp.float32)
    D = jnp.zeros((dim, dim), jnp.float32)
    for q in range(n_q):
        b = n_q - 1 - q
        sgn = (1 - 2 * ((idx >> b) & 1)).astype(jnp.float32)          # (dim,)
        perm = idx ^ (1 << b)
        P = jnp.zeros((dim, dim), jnp.float32).at[idx, perm].set(1.0)
        C = C + wx[q] * P + wz[q] * jnp.diag(sgn)
        D = D + 2.0 * wy[q] * (sgn[:, None] * P)
    M = (_mm(u_re.T, _mm(C, u_re)) + _mm(u_im.T, _mm(C, u_im))
         + _mm(u_re.T, _mm(D, u_im)))
    p['reg_m'] = M.astype(jnp.bfloat16)
    p['reg_b'] = lin2_b.reshape(1, 1).astype(jnp.float32)
    return p


# -----------------------------------------------------------------------------
# Full DTINet forward
# -----------------------------------------------------------------------------
@functools.partial(jax.jit, static_argnames=('num_graphs',))
def dtinet_forward(params, node_feature, edge_index, edge_attr, target_input,
                   batch, num_graphs):
    # ----------------------- DrugNet (GIN, num_layers=1, JK='sum') ----------
    h0 = sum(params['atom_emb'][f][node_feature[:, f]] for f in range(9))      # [N,64]
    edge_emb = sum(params['bond_emb'][f][edge_attr[:, f]] for f in range(3))   # [E,64]
    n = h0.shape[0]
    e = edge_emb.shape[0]
    n_pad = _round_up(n, 8)
    e_pad = _round_up(e, _EDGE_TILE)
    h0_p = jnp.zeros((n_pad, 64), jnp.float32).at[:n].set(h0)
    ee_p = jnp.zeros((e_pad, 64), jnp.float32).at[:e].set(edge_emb)
    src_col = jnp.full((e_pad, 1), -1, jnp.int32).at[:e, 0].set(edge_index[0].astype(jnp.int32))
    dst_row = jnp.full((1, e_pad), -1, jnp.int32).at[0, :e].set(edge_index[1].astype(jnp.int32))
    bat_row = jnp.full((1, n_pad), -1, jnp.int32).at[0, :n].set(batch.astype(jnp.int32))
    drug_out = drug_gin_forward(
        params['gin_eps'], h0_p, ee_p, src_col, dst_row, bat_row,
        params['u1_fold_t'], params['sh_mlp'], params['u2_fold_t'],
        params['sh_out'], num_graphs)                                          # [G,64]

    # ----------------------- SequenceNet (im2col conv stack + maxpool) ------
    emb = params['seq_emb'][target_input.astype(jnp.int32)]                    # [B,L,128]
    pooled = seq_conv_forward(emb,
                              params['conv1_wf'], params['conv1_b'],
                              params['conv2_wf'], params['conv2_b'],
                              params['conv3_wf'], params['conv3_b'])           # [B,1,128]
    tgt128 = pooled.reshape(num_graphs, 128)   # channels 96..127 are exactly 0

    # ----------------------- Regression head (concat folded in) -------------
    g_pad = _round_up(num_graphs, _BATCH_TILE)
    drug_p = jnp.zeros((g_pad, 64), jnp.float32).at[:num_graphs].set(drug_out)
    tgt_p = jnp.zeros((g_pad, 128), jnp.float32).at[:num_graphs].set(tgt128)
    out = regression_head(drug_p, tgt_p, params['lin1_wd_t'], params['lin1_wt_t'],
                          params['lin1_b'], params['reg_m'], params['reg_b'])  # [G_pad,1]
    return out[:num_graphs, 0]                                                 # squeeze(-1)


if __name__ == "__main__":
    key = jax.random.PRNGKey(0)
    pkey, dkey = jax.random.split(key)
    params = init_params(pkey)

    # small deterministic inputs: 2 graphs x 8 nodes, 32 edges, target seq len 32
    n_nodes, n_edges, n_graphs, seq_len = 16, 32, 2, 32
    ks = jax.random.split(dkey, 7)
    node_feature = jax.random.randint(ks[0], (n_nodes, 9), 0, 16, jnp.int32)
    edge_attr = jax.random.randint(ks[1], (n_edges, 3), 0, 8, jnp.int32)
    src0 = jax.random.randint(ks[2], (n_edges // 2,), 0, 8, jnp.int32)
    dst0 = jax.random.randint(ks[3], (n_edges // 2,), 0, 8, jnp.int32)
    src1 = jax.random.randint(ks[4], (n_edges // 2,), 8, 16, jnp.int32)
    dst1 = jax.random.randint(ks[5], (n_edges // 2,), 8, 16, jnp.int32)
    edge_index = jnp.stack([jnp.concatenate([src0, src1]),
                            jnp.concatenate([dst0, dst1])])
    batch = jnp.concatenate([jnp.zeros((8,), jnp.int32), jnp.ones((8,), jnp.int32)])
    target_input = jax.random.randint(ks[6], (n_graphs, seq_len), 0, 25, jnp.int32)

    out = dtinet_forward(params, node_feature, edge_index, edge_attr,
                         target_input, batch, n_graphs)
    out = jax.block_until_ready(out)
    assert out.shape == (n_graphs,) and out.dtype == jnp.float32
    print("KERNEL_OK")
</pallas_src>

<mosaic_0001>
module attributes {stable_mosaic.version = 11 : i64} {
  func.func @kernel(%arg0: i32, %arg1: memref<1x1xf32, #tpu.memory_space<vmem>>, %arg2: memref<16x64xf32, #tpu.memory_space<vmem>>, %arg3: memref<256x64xf32, #tpu.memory_space<vmem>>, %arg4: memref<256x1xi32, #tpu.memory_space<vmem>>, %arg5: memref<1x256xi32, #tpu.memory_space<vmem>>, %arg6: memref<1x16xi32, #tpu.memory_space<vmem>>, %arg7: memref<64x64xbf16, #tpu.memory_space<vmem>>, %arg8: memref<1x64xf32, #tpu.memory_space<vmem>>, %arg9: memref<64x64xbf16, #tpu.memory_space<vmem>>, %arg10: memref<1x64xf32, #tpu.memory_space<vmem>>, %arg11: memref<2x64xf32, #tpu.memory_space<vmem>>, %arg12: memref<16x64xf32, #tpu.memory_space<vmem>>) attributes {dimension_semantics = [#tpu.dimension_semantics<arbitrary>], iteration_bounds = array<i64: 1>, scalar_prefetch = 0 : i64, scratch_operands = 1 : i64, tpu.core_type = #tpu.core_type<tc>, window_params = [{pipeline_mode = #tpu.pipeline_mode<synchronous>, transform_indices = @transform_0, window_bounds = array<i64: 1, 1>}, {pipeline_mode = #tpu.pipeline_mode<synchronous>, transform_indices = @transform_1, window_bounds = array<i64: 16, 64>}, {transform_indices = @transform_2, window_bounds = array<i64: 256, 64>}, {transform_indices = @transform_3, window_bounds = array<i64: 256, 1>}, {transform_indices = @transform_4, window_bounds = array<i64: 1, 256>}, {pipeline_mode = #tpu.pipeline_mode<synchronous>, transform_indices = @transform_5, window_bounds = array<i64: 1, 16>}, {pipeline_mode = #tpu.pipeline_mode<synchronous>, transform_indices = @transform_6, window_bounds = array<i64: 64, 64>}, {pipeline_mode = #tpu.pipeline_mode<synchronous>, transform_indices = @transform_7, window_bounds = array<i64: 1, 64>}, {pipeline_mode = #tpu.pipeline_mode<synchronous>, transform_indices = @transform_8, window_bounds = array<i64: 64, 64>}, {pipeline_mode = #tpu.pipeline_mode<synchronous>, transform_indices = @transform_9, window_bounds = array<i64: 1, 64>}, {pipeline_mode = #tpu.pipeline_mode<synchronous>, transform_indices = @transform_10, window_bounds = array<i64: 2, 64>}]} {
    %c0_i32 = arith.constant 0 : i32
    %0 = arith.cmpi eq, %arg0, %c0_i32 : i32
    %1 = arith.extui %0 : i1 to i32
    %c0_i32_0 = arith.constant 0 : i32
    %2 = arith.cmpi ne, %1, %c0_i32_0 : i32
    scf.if %2 {
      %cst_16 = arith.constant 0.000000e+00 : f32
      %32 = vector.broadcast %cst_16 : f32 to vector<16x64xf32>
      %c0_17 = arith.constant 0 : index
      %c0_18 = arith.constant 0 : index
      %33 = vector.load %arg12[%c0_17, %c0_18] : memref<16x64xf32, #tpu.memory_space<vmem>>, vector<16x64xf32>
      tpu.vector_store %arg12[%c0_17, %c0_18], %32 {strides = array<i32>} : memref<16x64xf32, #tpu.memory_space<vmem>>, vector<16x64xf32>,
    } else {
    }
    %c0 = arith.constant 0 : index
    %c0_1 = arith.constant 0 : index
    %3 = vector.load %arg2[%c0, %c0_1] : memref<16x64xf32, #tpu.memory_space<vmem>>, vector<16x64xf32>
    %4 = arith.truncf %3 : vector<16x64xf32> to vector<16x64xbf16>
    %c0_2 = arith.constant 0 : index
    %c0_3 = arith.constant 0 : index
    %5 = vector.load %arg4[%c0_2, %c0_3] : memref<256x1xi32, #tpu.memory_space<vmem>>, vector<256x1xi32>
    %6 = tpu.iota {dimensions = array<i32: 1>} : vector<256x16xi32>
    %7 = vector.broadcast %5 : vector<256x1xi32> to vector<256x16xi32>
    %8 = arith.cmpi eq, %6, %7 : vector<256x16xi32>
    %9 = arith.extui %8 : vector<256x16xi1> to vector<256x16xi32>
    %10 = arith.sitofp %9 : vector<256x16xi32> to vector<256x16xf32>
    %11 = arith.truncf %10 : vector<256x16xf32> to vector<256x16xbf16>
    %cst = arith.constant dense<0.000000e+00> : vector<256x64xf32>
    %12 = tpu.matmul %11, %4, %cst {dimension_numbers = #tpu.dot_dimension_numbers<[1], [0], [0], [1], [0, 0, 1, 1], [], []>} : vector<256x16xbf16>, vector<16x64xbf16>, vector<256x64xf32> -> vector<256x64xf32>
    %c0_4 = arith.constant 0 : index
    %c0_5 = arith.constant 0 : index
    %13 = vector.load %arg3[%c0_4, %c0_5] : memref<256x64xf32, #tpu.memory_space<vmem>>, vector<256x64xf32>
    %14 = arith.addf %12, %13 : vector<256x64xf32>
    %cst_6 = arith.constant 0.000000e+00 : f32
    %15 = vector.broadcast %cst_6 : f32 to vector<256x64xf32>
    %16 = arith.maximumf %14, %15 : vector<256x64xf32>
    %c0_7 = arith.constant 0 : index
    %c0_8 = arith.constant 0 : index
    %17 = vector.load %arg5[%c0_7, %c0_8] : memref<1x256xi32, #tpu.memory_space<vmem>>, vector<1x256xi32>
    %18 = tpu.iota {dimensions = array<i32: 0>} : vector<16x256xi32>
    %19 = vector.broadcast %17 : vector<1x256xi32> to vector<16x256xi32>
    %20 = arith.cmpi eq, %18, %19 : vector<16x256xi32>
    %21 = arith.extui %20 : vector<16x256xi1> to vector<16x256xi32>
    %22 = arith.sitofp %21 : vector<16x256xi32> to vector<16x256xf32>
    %23 = arith.truncf %22 : vector<16x256xf32> to vector<16x256xbf16>
    %c0_9 = arith.constant 0 : index
    %c0_10 = arith.constant 0 : index
    %24 = vector.load %arg12[%c0_9, %c0_10] : memref<16x64xf32, #tpu.memory_space<vmem>>, vector<16x64xf32>
    %25 = arith.truncf %16 : vector<256x64xf32> to vector<256x64xbf16>
    %cst_11 = arith.constant dense<0.000000e+00> : vector<16x64xf32>
    %26 = tpu.matmul %23, %25, %cst_11 {dimension_numbers = #tpu.dot_dimension_numbers<[1], [0], [0], [1], [0, 0, 1, 1], [], []>} : vector<16x256xbf16>, vector<256x64xbf16>, vector<16x64xf32> -> vector<16x64xf32>
    %27 = arith.addf %24, %26 : vector<16x64xf32>
    %c0_12 = arith.constant 0 : index
    %c0_13 = arith.constant 0 : index
    %28 = vector.load %arg12[%c0_12, %c0_13] : memref<16x64xf32, #tpu.memory_space<vmem>>, vector<16x64xf32>
    tpu.vector_store %arg12[%c0_12, %c0_13], %27 {strides = array<i32>} : memref<16x64xf32, #tpu.memory_space<vmem>>, vector<16x64xf32>,
    %c0_i32_14 = arith.constant 0 : i32
    %29 = arith.cmpi eq, %arg0, %c0_i32_14 : i32
    %30 = arith.extui %29 : i1 to i32
    %c0_i32_15 = arith.constant 0 : i32
    %31 = arith.cmpi ne, %30, %c0_i32_15 : i32
    scf.if %31 {
      %c0_16 = arith.constant 0 : index
      %c0_17 = arith.constant 0 : index
      %32 = vector.load %arg1[%c0_16, %c0_17] : memref<1x1xf32, #tpu.memory_space<vmem>>, vector<1x1xf32>
      %cst_18 = arith.constant 1.000000e+00 : f32
      %33 = vector.broadcast %cst_18 : f32 to vector<1x1xf32>
      %34 = arith.addf %33, %32 : vector<1x1xf32>
      %35 = vector.broadcast %34 : vector<1x1xf32> to vector<16x64xf32>
      %36 = arith.mulf %35, %3 : vector<16x64xf32>
      %c0_19 = arith.constant 0 : index
      %c0_20 = arith.constant 0 : index
      %37 = vector.load %arg12[%c0_19, %c0_20] : memref<16x64xf32, #tpu.memory_space<vmem>>, vector<16x64xf32>
      %38 = arith.addf %36, %37 : vector<16x64xf32>
      %39 = arith.mulf %38, %38 : vector<16x64xf32>
      %cst_21 = arith.constant dense<0.000000e+00> : vector<16xf32>
      %40 = vector.multi_reduction <add>, %39, %cst_21 [1] : vector<16x64xf32> to vector<16xf32>
      %41 = vector.shape_cast %40 : vector<16xf32> to vector<16x1xf32>
      %cst_22 = arith.constant 1.000000e-24 : f32
      %42 = vector.broadcast %cst_22 : f32 to vector<16x1xf32>
      %43 = arith.maximumf %41, %42 : vector<16x1xf32>
      %44 = math.rsqrt %43 : vector<16x1xf32>
      %45 = vector.broadcast %44 : vector<16x1xf32> to vector<16x64xf32>
      %46 = arith.mulf %38, %45 : vector<16x64xf32>
      %47 = arith.truncf %46 : vector<16x64xf32> to vector<16x64xbf16>
      %c0_23 = arith.constant 0 : index
      %c0_24 = arith.constant 0 : index
      %48 = vector.load %arg7[%c0_23, %c0_24] : memref<64x64xbf16, #tpu.memory_space<vmem>>, vector<64x64xbf16>
      %cst_25 = arith.constant dense<0.000000e+00> : vector<16x64xf32>
      %49 = tpu.matmul %47, %48, %cst_25 {dimension_numbers = #tpu.dot_dimension_numbers<[1], [0], [0], [1], [0, 0, 1, 1], [], []>} : vector<16x64xbf16>, vector<64x64xbf16>, vector<16x64xf32> -> vector<16x64xf32>
      %c0_26 = arith.constant 0 : index
      %c0_27 = arith.constant 0 : index
      %50 = vector.load %arg8[%c0_26, %c0_27] : memref<1x64xf32, #tpu.memory_space<vmem>>, vector<1x64xf32>
      %51 = vector.broadcast %50 : vector<1x64xf32> to vector<16x64xf32>
      %52 = arith.addf %49, %51 : vector<16x64xf32>
      %cst_28 = arith.constant 0.000000e+00 : f32
      %53 = vector.broadcast %cst_28 : f32 to vector<16x64xf32>
      %54 = arith.maximumf %52, %53 : vector<16x64xf32>
      %55 = arith.mulf %54, %54 : vector<16x64xf32>
      %cst_29 = arith.constant dense<0.000000e+00> : vector<16xf32>
      %56 = vector.multi_reduction <add>, %55, %cst_29 [1] : vector<16x64xf32> to vector<16xf32>
      %57 = vector.shape_cast %56 : vector<16xf32> to vector<16x1xf32>
      %cst_30 = arith.constant 1.000000e-24 : f32
      %58 = vector.broadcast %cst_30 : f32 to vector<16x1xf32>
      %59 = arith.maximumf %57, %58 : vector<16x1xf32>
      %60 = math.rsqrt %59 : vector<16x1xf32>
      %61 = vector.broadcast %60 : vector<16x1xf32> to vector<16x64xf32>
      %62 = arith.mulf %54, %61 : vector<16x64xf32>
      %63 = arith.truncf %62 : vector<16x64xf32> to vector<16x64xbf16>
      %c0_31 = arith.constant 0 : index
      %c0_32 = arith.constant 0 : index
      %64 = vector.load %arg9[%c0_31, %c0_32] : memref<64x64xbf16, #tpu.memory_space<vmem>>, vector<64x64xbf16>
      %cst_33 = arith.constant dense<0.000000e+00> : vector<16x64xf32>
      %65 = tpu.matmul %63, %64, %cst_33 {dimension_numbers = #tpu.dot_dimension_numbers<[1], [0], [0], [1], [0, 0, 1, 1], [], []>} : vector<16x64xbf16>, vector<64x64xbf16>, vector<16x64xf32> -> vector<16x64xf32>
      %66 = arith.addf %3, %65 : vector<16x64xf32>
      %c0_34 = arith.constant 0 : index
      %c0_35 = arith.constant 0 : index
      %67 = vector.load %arg10[%c0_34, %c0_35] : memref<1x64xf32, #tpu.memory_space<vmem>>, vector<1x64xf32>
      %68 = vector.broadcast %67 : vector<1x64xf32> to vector<16x64xf32>
      %69 = arith.addf %66, %68 : vector<16x64xf32>
      %c0_36 = arith.constant 0 : index
      %c0_37 = arith.constant 0 : index
      %70 = vector.load %arg6[%c0_36, %c0_37] : memref<1x16xi32, #tpu.memory_space<vmem>>, vector<1x16xi32>
      %71 = tpu.iota {dimensions = array<i32: 0>} : vector<2x16xi32>
      %72 = vector.broadcast %70 : vector<1x16xi32> to vector<2x16xi32>
      %73 = arith.cmpi eq, %71, %72 : vector<2x16xi32>
      %74 = arith.extui %73 : vector<2x16xi1> to vector<2x16xi32>
      %75 = arith.sitofp %74 : vector<2x16xi32> to vector<2x16xf32>
      %cst_38 = arith.constant dense<0.000000e+00> : vector<2xf32>
      %76 = vector.multi_reduction <add>, %75, %cst_38 [1] : vector<2x16xf32> to vector<2xf32>
      %77 = vector.shape_cast %76 : vector<2xf32> to vector<2x1xf32>
      %78 = arith.truncf %75 : vector<2x16xf32> to vector<2x16xbf16>
      %79 = arith.truncf %69 : vector<16x64xf32> to vector<16x64xbf16>
      %cst_39 = arith.constant dense<0.000000e+00> : vector<2x64xf32>
      %80 = tpu.matmul %78, %79, %cst_39 {dimension_numbers = #tpu.dot_dimension_numbers<[1], [0], [0], [1], [0, 0, 1, 1], [], []>} : vector<2x16xbf16>, vector<16x64xbf16>, vector<2x64xf32> -> vector<2x64xf32>
      %cst_40 = arith.constant 1.000000e+00 : f32
      %81 = vector.broadcast %cst_40 : f32 to vector<2x1xf32>
      %82 = arith.maximumf %77, %81 : vector<2x1xf32>
      %83 = tpu.reciprocal %82 {approx = true} : vector<2x1xf32> -> vector<2x1xf32>
      %84 = vector.broadcast %83 : vector<2x1xf32> to vector<2x64xf32>
      %85 = arith.mulf %80, %84 : vector<2x64xf32>
      %c0_41 = arith.constant 0 : index
      %c0_42 = arith.constant 0 : index
      %86 = vector.load %arg11[%c0_41, %c0_42] : memref<2x64xf32, #tpu.memory_space<vmem>>, vector<2x64xf32>
      tpu.vector_store %arg11[%c0_41, %c0_42], %85 {strides = array<i32>} : memref<2x64xf32, #tpu.memory_space<vmem>>, vector<2x64xf32>,
    } else {
    }
    return
  }
  func.func @transform_0(%arg0: i32) -> (i32, i32) {
    %c0_i32 = arith.constant 0 : i32
    %c0_i32_0 = arith.constant 0 : i32
    %c0_i32_1 = arith.constant 0 : i32
    return %c0_i32, %c0_i32_0 : i32, i32
  }
  func.func @transform_1(%arg0: i32) -> (i32, i32) {
    %c0_i32 = arith.constant 0 : i32
    %c0_i32_0 = arith.constant 0 : i32
    %c0_i32_1 = arith.constant 0 : i32
    return %c0_i32, %c0_i32_0 : i32, i32
  }
  func.func @transform_2(%arg0: i32) -> (i32, i32) {
    %c0_i32 = arith.constant 0 : i32
    %c0_i32_0 = arith.constant 0 : i32
    return %arg0, %c0_i32 : i32, i32
  }
  func.func @transform_3(%arg0: i32) -> (i32, i32) {
    %c0_i32 = arith.constant 0 : i32
    %c0_i32_0 = arith.constant 0 : i32
    return %arg0, %c0_i32 : i32, i32
  }
  func.func @transform_4(%arg0: i32) -> (i32, i32) {
    %c0_i32 = arith.constant 0 : i32
    %c0_i32_0 = arith.constant 0 : i32
    return %c0_i32, %arg0 : i32, i32
  }
  func.func @transform_5(%arg0: i32) -> (i32, i32) {
    %c0_i32 = arith.constant 0 : i32
    %c0_i32_0 = arith.constant 0 : i32
    %c0_i32_1 = arith.constant 0 : i32
    return %c0_i32, %c0_i32_0 : i32, i32
  }
  func.func @transform_6(%arg0: i32) -> (i32, i32) {
    %c0_i32 = arith.constant 0 : i32
    %c0_i32_0 = arith.constant 0 : i32
    %c0_i32_1 = arith.constant 0 : i32
    return %c0_i32, %c0_i32_0 : i32, i32
  }
  func.func @transform_7(%arg0: i32) -> (i32, i32) {
    %c0_i32 = arith.constant 0 : i32
    %c0_i32_0 = arith.constant 0 : i32
    %c0_i32_1 = arith.constant 0 : i32
    return %c0_i32, %c0_i32_0 : i32, i32
  }
  func.func @transform_8(%arg0: i32) -> (i32, i32) {
    %c0_i32 = arith.constant 0 : i32
    %c0_i32_0 = arith.constant 0 : i32
    %c0_i32_1 = arith.constant 0 : i32
    return %c0_i32, %c0_i32_0 : i32, i32
  }
  func.func @transform_9(%arg0: i32) -> (i32, i32) {
    %c0_i32 = arith.constant 0 : i32
    %c0_i32_0 = arith.constant 0 : i32
    %c0_i32_1 = arith.constant 0 : i32
    return %c0_i32, %c0_i32_0 : i32, i32
  }
  func.func @transform_10(%arg0: i32) -> (i32, i32) {
    %c0_i32 = arith.constant 0 : i32
    %c0_i32_0 = arith.constant 0 : i32
    %c0_i32_1 = arith.constant 0 : i32
    return %c0_i32, %c0_i32_0 : i32, i32
  }
}

module attributes {stable_mosaic.version = 11 : i64} {
  func.func @kernel(%arg0: i32, %arg1: memref<1x32x128xf32, #tpu.memory_space<vmem>>, %arg2: memref<512x128xbf16, #tpu.memory_space<vmem>>, %arg3: memref<1x128xf32, #tpu.memory_space<vmem>>, %arg4: memref<768x128xbf16, #tpu.memory_space<vmem>>, %arg5: memref<1x128xf32, #tpu.memory_space<vmem>>, %arg6: memref<1024x128xbf16, #tpu.memory_space<vmem>>, %arg7: memref<1x128xf32, #tpu.memory_space<vmem>>, %arg8: memref<1x1x128xf32, #tpu.memory_space<vmem>>) attributes {dimension_semantics = [#tpu.dimension_semantics<parallel>], iteration_bounds = array<i64: 2>, scalar_prefetch = 0 : i64, scratch_operands = 0 : i64, tpu.core_type = #tpu.core_type<tc>, window_params = [{transform_indices = @transform_0, window_bounds = array<i64: 1, 32, 128>}, {pipeline_mode = #tpu.pipeline_mode<synchronous>, transform_indices = @transform_1, window_bounds = array<i64: 512, 128>}, {pipeline_mode = #tpu.pipeline_mode<synchronous>, transform_indices = @transform_2, window_bounds = array<i64: 1, 128>}, {pipeline_mode = #tpu.pipeline_mode<synchronous>, transform_indices = @transform_3, window_bounds = array<i64: 768, 128>}, {pipeline_mode = #tpu.pipeline_mode<synchronous>, transform_indices = @transform_4, window_bounds = array<i64: 1, 128>}, {pipeline_mode = #tpu.pipeline_mode<synchronous>, transform_indices = @transform_5, window_bounds = array<i64: 1024, 128>}, {pipeline_mode = #tpu.pipeline_mode<synchronous>, transform_indices = @transform_6, window_bounds = array<i64: 1, 128>}, {transform_indices = @transform_7, window_bounds = array<i64: 1, 1, 128>}]} {
    %c0 = arith.constant 0 : index
    %c0_0 = arith.constant 0 : index
    %c0_1 = arith.constant 0 : index
    %0 = vector.load %arg1[%c0, %c0_0, %c0_1] : memref<1x32x128xf32, #tpu.memory_space<vmem>>, vector<1x32x128xf32>
    %1 = vector.shape_cast %0 : vector<1x32x128xf32> to vector<32x128xf32>
    %2 = vector.extract_strided_slice %1 {offsets = [0, 0], sizes = [29, 128], strides = [1, 1]} : vector<32x128xf32> to vector<29x128xf32>
    %3 = vector.extract_strided_slice %1 {offsets = [1, 0], sizes = [29, 128], strides = [1, 1]} : vector<32x128xf32> to vector<29x128xf32>
    %4 = vector.extract_strided_slice %1 {offsets = [2, 0], sizes = [29, 128], strides = [1, 1]} : vector<32x128xf32> to vector<29x128xf32>
    %5 = vector.extract_strided_slice %1 {offsets = [3, 0], sizes = [29, 128], strides = [1, 1]} : vector<32x128xf32> to vector<29x128xf32>
    %6 = tpu.concatenate %2, %3, %4, %5 in 1 : vector<29x128xf32>, vector<29x128xf32>, vector<29x128xf32>, vector<29x128xf32> -> vector<29x512xf32>
    %7 = arith.truncf %6 : vector<29x512xf32> to vector<29x512xbf16>
    %c0_2 = arith.constant 0 : index
    %c0_3 = arith.constant 0 : index
    %8 = vector.load %arg2[%c0_2, %c0_3] : memref<512x128xbf16, #tpu.memory_space<vmem>>, vector<512x128xbf16>
    %cst = arith.constant dense<0.000000e+00> : vector<29x128xf32>
    %9 = tpu.matmul %7, %8, %cst {dimension_numbers = #tpu.dot_dimension_numbers<[1], [0], [0], [1], [0, 0, 1, 1], [], []>} : vector<29x512xbf16>, vector<512x128xbf16>, vector<29x128xf32> -> vector<29x128xf32>
    %c0_4 = arith.constant 0 : index
    %c0_5 = arith.constant 0 : index
    %10 = vector.load %arg3[%c0_4, %c0_5] : memref<1x128xf32, #tpu.memory_space<vmem>>, vector<1x128xf32>
    %11 = vector.broadcast %10 : vector<1x128xf32> to vector<29x128xf32>
    %12 = arith.addf %9, %11 : vector<29x128xf32>
    %cst_6 = arith.constant 0.000000e+00 : f32
    %13 = vector.broadcast %cst_6 : f32 to vector<29x128xf32>
    %14 = arith.maximumf %12, %13 : vector<29x128xf32>
    %15 = vector.extract_strided_slice %14 {offsets = [0, 0], sizes = [24, 128], strides = [1, 1]} : vector<29x128xf32> to vector<24x128xf32>
    %16 = vector.extract_strided_slice %14 {offsets = [1, 0], sizes = [24, 128], strides = [1, 1]} : vector<29x128xf32> to vector<24x128xf32>
    %17 = vector.extract_strided_slice %14 {offsets = [2, 0], sizes = [24, 128], strides = [1, 1]} : vector<29x128xf32> to vector<24x128xf32>
    %18 = vector.extract_strided_slice %14 {offsets = [3, 0], sizes = [24, 128], strides = [1, 1]} : vector<29x128xf32> to vector<24x128xf32>
    %19 = vector.extract_strided_slice %14 {offsets = [4, 0], sizes = [24, 128], strides = [1, 1]} : vector<29x128xf32> to vector<24x128xf32>
    %20 = vector.extract_strided_slice %14 {offsets = [5, 0], sizes = [24, 128], strides = [1, 1]} : vector<29x128xf32> to vector<24x128xf32>
    %21 = tpu.concatenate %15, %16, %17, %18, %19, %20 in 1 : vector<24x128xf32>, vector<24x128xf32>, vector<24x128xf32>, vector<24x128xf32>, vector<24x128xf32>, vector<24x128xf32> -> vector<24x768xf32>
    %22 = arith.truncf %21 : vector<24x768xf32> to vector<24x768xbf16>
    %c0_7 = arith.constant 0 : index
    %c0_8 = arith.constant 0 : index
    %23 = vector.load %arg4[%c0_7, %c0_8] : memref<768x128xbf16, #tpu.memory_space<vmem>>, vector<768x128xbf16>
    %cst_9 = arith.constant dense<0.000000e+00> : vector<24x128xf32>
    %24 = tpu.matmul %22, %23, %cst_9 {dimension_numbers = #tpu.dot_dimension_numbers<[1], [0], [0], [1], [0, 0, 1, 1], [], []>} : vector<24x768xbf16>, vector<768x128xbf16>, vector<24x128xf32> -> vector<24x128xf32>
    %c0_10 = arith.constant 0 : index
    %c0_11 = arith.constant 0 : index
    %25 = vector.load %arg5[%c0_10, %c0_11] : memref<1x128xf32, #tpu.memory_space<vmem>>, vector<1x128xf32>
    %26 = vector.broadcast %25 : vector<1x128xf32> to vector<24x128xf32>
    %27 = arith.addf %24, %26 : vector<24x128xf32>
    %cst_12 = arith.constant 0.000000e+00 : f32
    %28 = vector.broadcast %cst_12 : f32 to vector<24x128xf32>
    %29 = arith.maximumf %27, %28 : vector<24x128xf32>
    %30 = vector.extract_strided_slice %29 {offsets = [0, 0], sizes = [17, 128], strides = [1, 1]} : vector<24x128xf32> to vector<17x128xf32>
    %31 = vector.extract_strided_slice %29 {offsets = [1, 0], sizes = [17, 128], strides = [1, 1]} : vector<24x128xf32> to vector<17x128xf32>
    %32 = vector.extract_strided_slice %29 {offsets = [2, 0], sizes = [17, 128], strides = [1, 1]} : vector<24x128xf32> to vector<17x128xf32>
    %33 = vector.extract_strided_slice %29 {offsets = [3, 0], sizes = [17, 128], strides = [1, 1]} : vector<24x128xf32> to vector<17x128xf32>
    %34 = vector.extract_strided_slice %29 {offsets = [4, 0], sizes = [17, 128], strides = [1, 1]} : vector<24x128xf32> to vector<17x128xf32>
    %35 = vector.extract_strided_slice %29 {offsets = [5, 0], sizes = [17, 128], strides = [1, 1]} : vector<24x128xf32> to vector<17x128xf32>
    %36 = vector.extract_strided_slice %29 {offsets = [6, 0], sizes = [17, 128], strides = [1, 1]} : vector<24x128xf32> to vector<17x128xf32>
    %37 = vector.extract_strided_slice %29 {offsets = [7, 0], sizes = [17, 128], strides = [1, 1]} : vector<24x128xf32> to vector<17x128xf32>
    %38 = tpu.concatenate %30, %31, %32, %33, %34, %35, %36, %37 in 1 : vector<17x128xf32>, vector<17x128xf32>, vector<17x128xf32>, vector<17x128xf32>, vector<17x128xf32>, vector<17x128xf32>, vector<17x128xf32>, vector<17x128xf32> -> vector<17x1024xf32>
    %39 = arith.truncf %38 : vector<17x1024xf32> to vector<17x1024xbf16>
    %c0_13 = arith.constant 0 : index
    %c0_14 = arith.constant 0 : index
    %40 = vector.load %arg6[%c0_13, %c0_14] : memref<1024x128xbf16, #tpu.memory_space<vmem>>, vector<1024x128xbf16>
    %cst_15 = arith.constant dense<0.000000e+00> : vector<17x128xf32>
    %41 = tpu.matmul %39, %40, %cst_15 {dimension_numbers = #tpu.dot_dimension_numbers<[1], [0], [0], [1], [0, 0, 1, 1], [], []>} : vector<17x1024xbf16>, vector<1024x128xbf16>, vector<17x128xf32> -> vector<17x128xf32>
    %c0_16 = arith.constant 0 : index
    %c0_17 = arith.constant 0 : index
    %42 = vector.load %arg7[%c0_16, %c0_17] : memref<1x128xf32, #tpu.memory_space<vmem>>, vector<1x128xf32>
    %43 = vector.broadcast %42 : vector<1x128xf32> to vector<17x128xf32>
    %44 = arith.addf %41, %43 : vector<17x128xf32>
    %cst_18 = arith.constant 0.000000e+00 : f32
    %45 = vector.broadcast %cst_18 : f32 to vector<17x128xf32>
    %46 = arith.maximumf %44, %45 : vector<17x128xf32>
    %cst_19 = arith.constant dense<0xFF800000> : vector<128xf32>
    %47 = vector.multi_reduction <maximumf>, %46, %cst_19 [0] : vector<17x128xf32> to vector<128xf32>
    %48 = vector.shape_cast %47 : vector<128xf32> to vector<1x128xf32>
    %c0_20 = arith.constant 0 : index
    %c0_21 = arith.constant 0 : index
    %c0_22 = arith.constant 0 : index
    %49 = vector.load %arg8[%c0_20, %c0_21, %c0_22] : memref<1x1x128xf32, #tpu.memory_space<vmem>>, vector<1x1x128xf32>
    %50 = vector.shape_cast %49 : vector<1x1x128xf32> to vector<1x128xf32>
    %51 = vector.shape_cast %48 : vector<1x128xf32> to vector<1x1x128xf32>
    tpu.vector_store %arg8[%c0_20, %c0_21, %c0_22], %51 {strides = array<i32>} : memref<1x1x128xf32, #tpu.memory_space<vmem>>, vector<1x1x128xf32>,
    return
  }
  func.func @transform_0(%arg0: i32) -> (i32, i32, i32) {
    %c0_i32 = arith.constant 0 : i32
    %c0_i32_0 = arith.constant 0 : i32
    %c0_i32_1 = arith.constant 0 : i32
    return %arg0, %c0_i32, %c0_i32_0 : i32, i32, i32
  }
  func.func @transform_1(%arg0: i32) -> (i32, i32) {
    %c0_i32 = arith.constant 0 : i32
    %c0_i32_0 = arith.constant 0 : i32
    %c0_i32_1 = arith.constant 0 : i32
    return %c0_i32, %c0_i32_0 : i32, i32
  }
  func.func @transform_2(%arg0: i32) -> (i32, i32) {
    %c0_i32 = arith.constant 0 : i32
    %c0_i32_0 = arith.constant 0 : i32
    %c0_i32_1 = arith.constant 0 : i32
    return %c0_i32, %c0_i32_0 : i32, i32
  }
  func.func @transform_3(%arg0: i32) -> (i32, i32) {
    %c0_i32 = arith.constant 0 : i32
    %c0_i32_0 = arith.constant 0 : i32
    %c0_i32_1 = arith.constant 0 : i32
    return %c0_i32, %c0_i32_0 : i32, i32
  }
  func.func @transform_4(%arg0: i32) -> (i32, i32) {
    %c0_i32 = arith.constant 0 : i32
    %c0_i32_0 = arith.constant 0 : i32
    %c0_i32_1 = arith.constant 0 : i32
    return %c0_i32, %c0_i32_0 : i32, i32
  }
  func.func @transform_5(%arg0: i32) -> (i32, i32) {
    %c0_i32 = arith.constant 0 : i32
    %c0_i32_0 = arith.constant 0 : i32
    %c0_i32_1 = arith.constant 0 : i32
    return %c0_i32, %c0_i32_0 : i32, i32
  }
  func.func @transform_6(%arg0: i32) -> (i32, i32) {
    %c0_i32 = arith.constant 0 : i32
    %c0_i32_0 = arith.constant 0 : i32
    %c0_i32_1 = arith.constant 0 : i32
    return %c0_i32, %c0_i32_0 : i32, i32
  }
  func.func @transform_7(%arg0: i32) -> (i32, i32, i32) {
    %c0_i32 = arith.constant 0 : i32
    %c0_i32_0 = arith.constant 0 : i32
    %c0_i32_1 = arith.constant 0 : i32
    return %arg0, %c0_i32, %c0_i32_0 : i32, i32, i32
  }
}

module attributes {stable_mosaic.version = 11 : i64} {
  func.func @kernel(%arg0: i32, %arg1: memref<8x64xf32, #tpu.memory_space<vmem>>, %arg2: memref<8x128xf32, #tpu.memory_space<vmem>>, %arg3: memref<64x1024xbf16, #tpu.memory_space<vmem>>, %arg4: memref<128x1024xbf16, #tpu.memory_space<vmem>>, %arg5: memref<1x1024xf32, #tpu.memory_space<vmem>>, %arg6: memref<1024x1024xbf16, #tpu.memory_space<vmem>>, %arg7: memref<1x1xf32, #tpu.memory_space<vmem>>, %arg8: memref<8x1xf32, #tpu.memory_space<vmem>>) attributes {dimension_semantics = [#tpu.dimension_semantics<parallel>], iteration_bounds = array<i64: 1>, scalar_prefetch = 0 : i64, scratch_operands = 0 : i64, tpu.core_type = #tpu.core_type<tc>, window_params = [{transform_indices = @transform_0, window_bounds = array<i64: 8, 64>}, {transform_indices = @transform_1, window_bounds = array<i64: 8, 128>}, {pipeline_mode = #tpu.pipeline_mode<synchronous>, transform_indices = @transform_2, window_bounds = array<i64: 64, 1024>}, {pipeline_mode = #tpu.pipeline_mode<synchronous>, transform_indices = @transform_3, window_bounds = array<i64: 128, 1024>}, {pipeline_mode = #tpu.pipeline_mode<synchronous>, transform_indices = @transform_4, window_bounds = array<i64: 1, 1024>}, {pipeline_mode = #tpu.pipeline_mode<synchronous>, transform_indices = @transform_5, window_bounds = array<i64: 1024, 1024>}, {pipeline_mode = #tpu.pipeline_mode<synchronous>, transform_indices = @transform_6, window_bounds = array<i64: 1, 1>}, {transform_indices = @transform_7, window_bounds = array<i64: 8, 1>}]} {
    %c0 = arith.constant 0 : index
    %c0_0 = arith.constant 0 : index
    %0 = vector.load %arg1[%c0, %c0_0] : memref<8x64xf32, #tpu.memory_space<vmem>>, vector<8x64xf32>
    %1 = arith.truncf %0 : vector<8x64xf32> to vector<8x64xbf16>
    %c0_1 = arith.constant 0 : index
    %c0_2 = arith.constant 0 : index
    %2 = vector.load %arg3[%c0_1, %c0_2] : memref<64x1024xbf16, #tpu.memory_space<vmem>>, vector<64x1024xbf16>
    %cst = arith.constant dense<0.000000e+00> : vector<8x1024xf32>
    %3 = tpu.matmul %1, %2, %cst {dimension_numbers = #tpu.dot_dimension_numbers<[1], [0], [0], [1], [0, 0, 1, 1], [], []>} : vector<8x64xbf16>, vector<64x1024xbf16>, vector<8x1024xf32> -> vector<8x1024xf32>
    %c0_3 = arith.constant 0 : index
    %c0_4 = arith.constant 0 : index
    %4 = vector.load %arg2[%c0_3, %c0_4] : memref<8x128xf32, #tpu.memory_space<vmem>>, vector<8x128xf32>
    %5 = arith.truncf %4 : vector<8x128xf32> to vector<8x128xbf16>
    %c0_5 = arith.constant 0 : index
    %c0_6 = arith.constant 0 : index
    %6 = vector.load %arg4[%c0_5, %c0_6] : memref<128x1024xbf16, #tpu.memory_space<vmem>>, vector<128x1024xbf16>
    %cst_7 = arith.constant dense<0.000000e+00> : vector<8x1024xf32>
    %7 = tpu.matmul %5, %6, %cst_7 {dimension_numbers = #tpu.dot_dimension_numbers<[1], [0], [0], [1], [0, 0, 1, 1], [], []>} : vector<8x128xbf16>, vector<128x1024xbf16>, vector<8x1024xf32> -> vector<8x1024xf32>
    %8 = arith.addf %3, %7 : vector<8x1024xf32>
    %c0_8 = arith.constant 0 : index
    %c0_9 = arith.constant 0 : index
    %9 = vector.load %arg5[%c0_8, %c0_9] : memref<1x1024xf32, #tpu.memory_space<vmem>>, vector<1x1024xf32>
    %10 = vector.broadcast %9 : vector<1x1024xf32> to vector<8x1024xf32>
    %11 = arith.addf %8, %10 : vector<8x1024xf32>
    %cst_10 = arith.constant 0.000000e+00 : f32
    %12 = vector.broadcast %cst_10 : f32 to vector<8x1024xf32>
    %13 = arith.maximumf %11, %12 : vector<8x1024xf32>
    %14 = arith.mulf %13, %13 : vector<8x1024xf32>
    %cst_11 = arith.constant dense<0.000000e+00> : vector<8xf32>
    %15 = vector.multi_reduction <add>, %14, %cst_11 [1] : vector<8x1024xf32> to vector<8xf32>
    %16 = vector.shape_cast %15 : vector<8xf32> to vector<8x1xf32>
    %cst_12 = arith.constant 1.000000e-24 : f32
    %17 = vector.broadcast %cst_12 : f32 to vector<8x1xf32>
    %18 = arith.maximumf %16, %17 : vector<8x1xf32>
    %19 = math.rsqrt %18 : vector<8x1xf32>
    %20 = vector.broadcast %19 : vector<8x1xf32> to vector<8x1024xf32>
    %21 = arith.mulf %13, %20 : vector<8x1024xf32>
    %22 = arith.truncf %21 : vector<8x1024xf32> to vector<8x1024xbf16>
    %c0_13 = arith.constant 0 : index
    %c0_14 = arith.constant 0 : index
    %23 = vector.load %arg6[%c0_13, %c0_14] : memref<1024x1024xbf16, #tpu.memory_space<vmem>>, vector<1024x1024xbf16>
    %cst_15 = arith.constant dense<0.000000e+00> : vector<8x1024xf32>
    %24 = tpu.matmul %22, %23, %cst_15 {dimension_numbers = #tpu.dot_dimension_numbers<[1], [0], [0], [1], [0, 0, 1, 1], [], []>} : vector<8x1024xbf16>, vector<1024x1024xbf16>, vector<8x1024xf32> -> vector<8x1024xf32>
    %25 = arith.mulf %21, %24 : vector<8x1024xf32>
    %cst_16 = arith.constant dense<0.000000e+00> : vector<8xf32>
    %26 = vector.multi_reduction <add>, %25, %cst_16 [1] : vector<8x1024xf32> to vector<8xf32>
    %27 = vector.shape_cast %26 : vector<8xf32> to vector<8x1xf32>
    %c0_17 = arith.constant 0 : index
    %c0_18 = arith.constant 0 : index
    %28 = vector.load %arg7[%c0_17, %c0_18] : memref<1x1xf32, #tpu.memory_space<vmem>>, vector<1x1xf32>
    %29 = vector.broadcast %28 : vector<1x1xf32> to vector<8x1xf32>
    %30 = arith.addf %27, %29 : vector<8x1xf32>
    %c0_19 = arith.constant 0 : index
    %c0_20 = arith.constant 0 : index
    %31 = vector.load %arg8[%c0_19, %c0_20] : memref<8x1xf32, #tpu.memory_space<vmem>>, vector<8x1xf32>
    tpu.vector_store %arg8[%c0_19, %c0_20], %30 {strides = array<i32>} : memref<8x1xf32, #tpu.memory_space<vmem>>, vector<8x1xf32>,
    return
  }
  func.func @transform_0(%arg0: i32) -> (i32, i32) {
    %c0_i32 = arith.constant 0 : i32
    %c0_i32_0 = arith.constant 0 : i32
    return %arg0, %c0_i32 : i32, i32
  }
  func.func @transform_1(%arg0: i32) -> (i32, i32) {
    %c0_i32 = arith.constant 0 : i32
    %c0_i32_0 = arith.constant 0 : i32
    return %arg0, %c0_i32 : i32, i32
  }
  func.func @transform_2(%arg0: i32) -> (i32, i32) {
    %c0_i32 = arith.constant 0 : i32
    %c0_i32_0 = arith.constant 0 : i32
    %c0_i32_1 = arith.constant 0 : i32
    return %c0_i32, %c0_i32_0 : i32, i32
  }
  func.func @transform_3(%arg0: i32) -> (i32, i32) {
    %c0_i32 = arith.constant 0 : i32
    %c0_i32_0 = arith.constant 0 : i32
    %c0_i32_1 = arith.constant 0 : i32
    return %c0_i32, %c0_i32_0 : i32, i32
  }
  func.func @transform_4(%arg0: i32) -> (i32, i32) {
    %c0_i32 = arith.constant 0 : i32
    %c0_i32_0 = arith.constant 0 : i32
    %c0_i32_1 = arith.constant 0 : i32
    return %c0_i32, %c0_i32_0 : i32, i32
  }
  func.func @transform_5(%arg0: i32) -> (i32, i32) {
    %c0_i32 = arith.constant 0 : i32
    %c0_i32_0 = arith.constant 0 : i32
    %c0_i32_1 = arith.constant 0 : i32
    return %c0_i32, %c0_i32_0 : i32, i32
  }
  func.func @transform_6(%arg0: i32) -> (i32, i32) {
    %c0_i32 = arith.constant 0 : i32
    %c0_i32_0 = arith.constant 0 : i32
    %c0_i32_1 = arith.constant 0 : i32
    return %c0_i32, %c0_i32_0 : i32, i32
  }
  func.func @transform_7(%arg0: i32) -> (i32, i32) {
    %c0_i32 = arith.constant 0 : i32
    %c0_i32_0 = arith.constant 0 : i32
    return %arg0, %c0_i32 : i32, i32
  }
}

</mosaic_0001>

<llo_original>
// kernel: dtinet_forward.3
$region0: #{dtinet_forward.3}
  #allocation0 [shape = 'u32[]', space=smem, size = 0x4, offset = 0x4, fixed_abs, tag = 'smem constant byte address 0x4 - core index']
  #allocation1 [shape = 'u32[144,128]{1,0:T(1,128)}', space=vmem, size = 0x12000, scoped, tag = 'internal scratch']
  #allocation2 [shape = 'f32[16,64]{1,0:T(8,128)}', space=vmem, size = 0x2000, scoped, tag = 'scratch operand']
  #allocation3 [shape = 'f32[1,1]{1,0:T(1,128)S(1)}', space=vmem, size = 0x200, scoped, tag = 'scoped memory for dtinet_forward.3']
  %s0 = inlined_call_operand.<no memory space> [shape: f32[1,1], index: 0, kind: input, shape index: {}]
  %s1 = inlined_call_operand.vmem [shape: f32[16,64], index: 1, kind: input, shape index: {}]
  %s2 = inlined_call_operand.vmem [shape: f32[256,64], index: 2, kind: input, shape index: {}]
  %s3 = inlined_call_operand.vmem [shape: s32[256,1], index: 3, kind: input, shape index: {}]
  %s4 = inlined_call_operand.vmem [shape: s32[1,256], index: 4, kind: input, shape index: {}]
  %s5 = inlined_call_operand.hbm [shape: s32[1,16], index: 5, kind: input, shape index: {}]
  %s6 = inlined_call_operand.hbm [shape: bf16[64,64], index: 6, kind: input, shape index: {}]
  %s7 = inlined_call_operand.hbm [shape: f32[1,64], index: 7, kind: input, shape index: {}]
  %s8 = inlined_call_operand.hbm [shape: bf16[64,64], index: 8, kind: input, shape index: {}]
  %s9 = inlined_call_operand.hbm [shape: f32[1,64], index: 9, kind: input, shape index: {}]
  %s10 = inlined_call_operand.vmem [shape: f32[2,64], index: 10, kind: output, shape index: {}]
  %s11 = sld [smem:[#allocation0]]
  $region78: #{dtinet_forward.3} parent=0
    _
  %s13 = ssub.s32 1, %s11
  %s14 = scalar_select 0, %s13, %s11
  %v15 = vstv %s0
  %16 = vst [vmem:[#allocation3] sm:$0x1] %v15
  $region1: #{dtinet_forward.3} parent=0
    #allocation4 [shape = 'u8[512]{0}', space=vmem, size = 0x400, scoped, tag = 'input window, operand 5, single buffered']
    #allocation5 [shape = 's32[1]{0}', space=sflag, size = 0x4, scoped, tag = 'scoped memory for dtinet_forward.3']
    #allocation6 [shape = 'u8[16384]{0}', space=vmem, size = 0x4000, scoped, tag = 'input window, operand 6, single buffered']
    #allocation7 [shape = 's32[1]{0}', space=sflag, size = 0x4, scoped, tag = 'scoped memory for dtinet_forward.3']
    #allocation8 [shape = 'u8[512]{0}', space=vmem, size = 0x400, scoped, tag = 'input window, operand 7, single buffered']
    #allocation9 [shape = 'u8[16384]{0}', space=vmem, size = 0x4000, scoped, tag = 'input window, operand 8, single buffered']
    #allocation10 [shape = 's32[1]{0}', space=sflag, size = 0x4, scoped, tag = 'scoped memory for dtinet_forward.3']
    #allocation11 [shape = 'u8[512]{0}', space=vmem, size = 0x400, scoped, tag = 'input window, operand 9, single buffered']
    %17 = vsyncpa [#allocation5], 0
    %18 = vsyncpa [#allocation7], 0
    %19 = vsyncpa [#allocation10], 0
    // Predicated region
    $region2: #{dtinet_forward.3} parent=1 // pred_check
      _
    $region3: #{dtinet_forward.3} parent=1 // pred_check_branch
      %21 = sbr.rel (0) target = $region5
    $region4: #{dtinet_forward.3} parent=1 // pred_region
      _
    $region5: #{dtinet_forward.3} parent=1 // pred_fallthru
      _
    // Predicated region
    $region6: #{dtinet_forward.3} parent=1 // pred_check
      _
    $region7: #{dtinet_forward.3} parent=1 // pred_check_branch
      %23 = sbr.rel (0) target = $region9
    $region8: #{dtinet_forward.3} parent=1 // pred_region
      _
    $region9: #{dtinet_forward.3} parent=1 // pred_fallthru
      _
    // Predicated region
    $region10: #{dtinet_forward.3} parent=1 // pred_check
      _
    $region11: #{dtinet_forward.3} parent=1 // pred_check_branch
      %25 = sbr.rel (0) target = $region13
    $region12: #{dtinet_forward.3} parent=1 // pred_region
      _
    $region13: #{dtinet_forward.3} parent=1 // pred_fallthru
      _
    // Predicated region
    $region14: #{dtinet_forward.3} parent=1 // pred_check
      _
    $region15: #{dtinet_forward.3} parent=1 // pred_check_branch
      %27 = sbr.rel (0) target = $region17
    $region16: #{dtinet_forward.3} parent=1 // pred_region
      _
    $region17: #{dtinet_forward.3} parent=1 // pred_fallthru
      _
    // Predicated region
    $region18: #{dtinet_forward.3} parent=1 // pred_check
      _
    $region19: #{dtinet_forward.3} parent=1 // pred_check_branch
      %29 = sbr.rel (0) target = $region21
    $region20: #{dtinet_forward.3} parent=1 // pred_region
      _
    $region21: #{dtinet_forward.3} parent=1 // pred_fallthru
      _
    // Predicated region
    $region22: #{dtinet_forward.3} parent=1 // pred_check
      _
    $region23: #{dtinet_forward.3} parent=1 // pred_check_branch
      %31 = sbr.rel (0) target = $region25
    $region24: #{dtinet_forward.3} parent=1 // pred_region
      %s33 = ssub.s32 16, 16
      %34 = vsyncadd [#allocation5], %s33
      %s36 = sshll.u32 [#allocation4], 4
      %s37 = int_to_ptr.vmem [resolvable:$true] %s36
      %39 = dma.hbm_to_vmem [thread:$0]  %s5, 16, %s37, [#allocation5]
    $region25: #{dtinet_forward.3} parent=1 // pred_fallthru
      _
    // Predicated region
    $region26: #{dtinet_forward.3} parent=1 // pred_check
      _
    $region27: #{dtinet_forward.3} parent=1 // pred_check_branch
      %41 = sbr.rel (0) target = $region29
    $region28: #{dtinet_forward.3} parent=1 // pred_region
      %s43 = ssub.s32 512, 512
      %44 = vsyncadd [#allocation7], %s43
      %s45 = sshll.u32 [#allocation6], 4
      %s46 = int_to_ptr.vmem [resolvable:$true] %s45
      %51 = dma.hbm_to_vmem [thread:$0]  %s6, 512, %s46, [#allocation7], 64, 64, 4
    $region29: #{dtinet_forward.3} parent=1 // pred_fallthru
      _
    // Predicated region
    $region30: #{dtinet_forward.3} parent=1 // pred_check
      _
    $region31: #{dtinet_forward.3} parent=1 // pred_check_branch
      %53 = sbr.rel (0) target = $region33
    $region32: #{dtinet_forward.3} parent=1 // pred_region
      %s55 = ssub.s32 16, 16
      %56 = vsyncadd [#allocation7], %s55
      %s58 = sshll.u32 [#allocation8], 4
      %s59 = int_to_ptr.vmem [resolvable:$true] %s58
      %61 = dma.hbm_to_vmem [thread:$0]  %s7, 16, %s59, [#allocation7]
    $region33: #{dtinet_forward.3} parent=1 // pred_fallthru
      _
    // Predicated region
    $region34: #{dtinet_forward.3} parent=1 // pred_check
      _
    $region35: #{dtinet_forward.3} parent=1 // pred_check_branch
      %63 = sbr.rel (0) target = $region37
    $region36: #{dtinet_forward.3} parent=1 // pred_region
      %s65 = ssub.s32 512, 512
      %66 = vsyncadd [#allocation10], %s65
      %s67 = sshll.u32 [#allocation9], 4
      %s68 = int_to_ptr.vmem [resolvable:$true] %s67
      %73 = dma.hbm_to_vmem [thread:$0]  %s8, 512, %s68, [#allocation10], 64, 64, 4
    $region37: #{dtinet_forward.3} parent=1 // pred_fallthru
      _
    // Predicated region
    $region38: #{dtinet_forward.3} parent=1 // pred_check
      _
    $region39: #{dtinet_forward.3} parent=1 // pred_check_branch
      %75 = sbr.rel (0) target = $region41
    $region40: #{dtinet_forward.3} parent=1 // pred_region
      %s77 = ssub.s32 16, 16
      %78 = vsyncadd [#allocation10], %s77
      %s80 = sshll.u32 [#allocation11], 4
      %s81 = int_to_ptr.vmem [resolvable:$true] %s80
      %83 = dma.hbm_to_vmem [thread:$0]  %s9, 16, %s81, [#allocation10]
    $region41: #{dtinet_forward.3} parent=1 // pred_fallthru
      _
    // Predicated region
    $region42: #{dtinet_forward.3} parent=1 // pred_check
      _
    $region43: #{dtinet_forward.3} parent=1 // pred_check_branch
      %85 = sbr.rel (0) target = $region45
    $region44: #{dtinet_forward.3} parent=1 // pred_region
      %86 = dma.done [#allocation5], 16
    $region45: #{dtinet_forward.3} parent=1 // pred_fallthru
      _
    // Predicated region
    $region46: #{dtinet_forward.3} parent=1 // pred_check
      _
    $region47: #{dtinet_forward.3} parent=1 // pred_check_branch
      %88 = sbr.rel (0) target = $region49
    $region48: #{dtinet_forward.3} parent=1 // pred_region
      %89 = dma.done [#allocation7], 512
    $region49: #{dtinet_forward.3} parent=1 // pred_fallthru
      _
    // Predicated region
    $region50: #{dtinet_forward.3} parent=1 // pred_check
      _
    $region51: #{dtinet_forward.3} parent=1 // pred_check_branch
      %91 = sbr.rel (0) target = $region53
    $region52: #{dtinet_forward.3} parent=1 // pred_region
      %92 = dma.done [#allocation7], 16
    $region53: #{dtinet_forward.3} parent=1 // pred_fallthru
      _
    // Predicated region
    $region54: #{dtinet_forward.3} parent=1 // pred_check
      _
    $region55: #{dtinet_forward.3} parent=1 // pred_check_branch
      %94 = sbr.rel (0) target = $region57
    $region56: #{dtinet_forward.3} parent=1 // pred_region
      %95 = dma.done [#allocation10], 512
    $region57: #{dtinet_forward.3} parent=1 // pred_fallthru
      _
    // Predicated region
    $region58: #{dtinet_forward.3} parent=1 // pred_check
      _
    $region59: #{dtinet_forward.3} parent=1 // pred_check_branch
      %97 = sbr.rel (0) target = $region61
    $region60: #{dtinet_forward.3} parent=1 // pred_region
      %98 = dma.done [#allocation10], 16
    $region61: #{dtinet_forward.3} parent=1 // pred_fallthru
      _
    %p100 = scmp.eq.s32.totalorder 0, 0
    // Predicated region
    $region62: #{dtinet_forward.3} parent=1 // pred_check
      %p101 = pneg %p100
    $region63: #{dtinet_forward.3} parent=1 // pred_check_branch
      %103 = sbr.rel (%p101) target = $region65
    $region64: #{dtinet_forward.3} parent=1 // pred_region
      %vm104 = vcmask 523264
      %105 = vst.msk [vmem:[#allocation2] sm:$0xff] %vm104, 0.0
      %106 = vst.msk [vmem:[#allocation2 + $0x8] sm:$0xff] %vm104, 0.0
    $region65: #{dtinet_forward.3} parent=1 // pred_fallthru
      _
    %v107 = vld [vmem:[%s1] sm:$0xff]
    %v108 = vld [vmem:[%s1 + $0x8] sm:$0xff]
    %v109 = vpack.c.bf16 %v108, %v107
    %v110 = vld [vmem:[%s3] sm:$0xff]
    %v111 = vld [vmem:[%s3 + $0x8] sm:$0xff]
    %v112 = vld [vmem:[%s3 + $0x10] sm:$0xff]
    %v113 = vld [vmem:[%s3 + $0x18] sm:$0xff]
    %v114 = vld [vmem:[%s3 + $0x20] sm:$0xff]
    %v115 = vld [vmem:[%s3 + $0x28] sm:$0xff]
    %v116 = vld [vmem:[%s3 + $0x30] sm:$0xff]
    %v117 = vld [vmem:[%s3 + $0x38] sm:$0xff]
    %v118 = vld [vmem:[%s3 + $0x40] sm:$0xff]
    %v119 = vld [vmem:[%s3 + $0x48] sm:$0xff]
    %v120 = vld [vmem:[%s3 + $0x50] sm:$0xff]
    %v121 = vld [vmem:[%s3 + $0x58] sm:$0xff]
    %v122 = vld [vmem:[%s3 + $0x60] sm:$0xff]
    %v123 = vld [vmem:[%s3 + $0x68] sm:$0xff]
    %v124 = vld [vmem:[%s3 + $0x70] sm:$0xff]
    %v125 = vld [vmem:[%s3 + $0x78] sm:$0xff]
    %v126 = vld [vmem:[%s3 + $0x80] sm:$0xff]
    %v127 = vld [vmem:[%s3 + $0x88] sm:$0xff]
    %v128 = vld [vmem:[%s3 + $0x90] sm:$0xff]
    %v129 = vld [vmem:[%s3 + $0x98] sm:$0xff]
    %v130 = vld [vmem:[%s3 + $0xa0] sm:$0xff]
    %v131 = vld [vmem:[%s3 + $0xa8] sm:$0xff]
    %v132 = vld [vmem:[%s3 + $0xb0] sm:$0xff]
    %v133 = vld [vmem:[%s3 + $0xb8] sm:$0xff]
    %v134 = vld [vmem:[%s3 + $0xc0] sm:$0xff]
    %v135 = vld [vmem:[%s3 + $0xc8] sm:$0xff]
    %v136 = vld [vmem:[%s3 + $0xd0] sm:$0xff]
    %v137 = vld [vmem:[%s3 + $0xd8] sm:$0xff]
    %v138 = vld [vmem:[%s3 + $0xe0] sm:$0xff]
    %v139 = vld [vmem:[%s3 + $0xe8] sm:$0xff]
    %v140 = vld [vmem:[%s3 + $0xf0] sm:$0xff]
    %v141 = vld [vmem:[%s3 + $0xf8] sm:$0xff]
    %v142 = vlaneseq
    %v143 = vand.u32 %v142, 127
    %144 = vset.pattern.permute.xlu0 0
    %145 = vperm.xlu0 %144, %v110
    %v146 = vpop.permute.xlu0 %145
    %147 = vset.pattern.permute.xlu0 0
    %148 = vperm.xlu0 %147, %v111
    %v149 = vpop.permute.xlu0 %148
    %150 = vset.pattern.permute.xlu0 0
    %151 = vperm.xlu0 %150, %v112
    %v152 = vpop.permute.xlu0 %151
    %153 = vset.pattern.permute.xlu0 0
    %154 = vperm.xlu0 %153, %v113
    %v155 = vpop.permute.xlu0 %154
    %156 = vset.pattern.permute.xlu0 0
    %157 = vperm.xlu0 %156, %v114
    %v158 = vpop.permute.xlu0 %157
    %159 = vset.pattern.permute.xlu0 0
    %160 = vperm.xlu0 %159, %v115
    %v161 = vpop.permute.xlu0 %160
    %162 = vset.pattern.permute.xlu0 0
    %163 = vperm.xlu0 %162, %v116
    %v164 = vpop.permute.xlu0 %163
    %165 = vset.pattern.permute.xlu0 0
    %166 = vperm.xlu0 %165, %v117
    %v167 = vpop.permute.xlu0 %166
    %168 = vset.pattern.permute.xlu0 0
    %169 = vperm.xlu0 %168, %v118
    %v170 = vpop.permute.xlu0 %169
    %171 = vset.pattern.permute.xlu0 0
    %172 = vperm.xlu0 %171, %v119
    %v173 = vpop.permute.xlu0 %172
    %174 = vset.pattern.permute.xlu0 0
    %175 = vperm.xlu0 %174, %v120
    %v176 = vpop.permute.xlu0 %175
    %177 = vset.pattern.permute.xlu0 0
    %178 = vperm.xlu0 %177, %v121
    %v179 = vpop.permute.xlu0 %178
    %180 = vset.pattern.permute.xlu0 0
    %181 = vperm.xlu0 %180, %v122
    %v182 = vpop.permute.xlu0 %181
    %183 = vset.pattern.permute.xlu0 0
    %184 = vperm.xlu0 %183, %v123
    %v185 = vpop.permute.xlu0 %184
    %186 = vset.pattern.permute.xlu0 0
    %187 = vperm.xlu0 %186, %v124
    %v188 = vpop.permute.xlu0 %187
    %189 = vset.pattern.permute.xlu0 0
    %190 = vperm.xlu0 %189, %v125
    %v191 = vpop.permute.xlu0 %190
    %192 = vset.pattern.permute.xlu0 0
    %193 = vperm.xlu0 %192, %v126
    %v194 = vpop.permute.xlu0 %193
    %195 = vset.pattern.permute.xlu0 0
    %196 = vperm.xlu0 %195, %v127
    %v197 = vpop.permute.xlu0 %196
    %198 = vset.pattern.permute.xlu0 0
    %199 = vperm.xlu0 %198, %v128
    %v200 = vpop.permute.xlu0 %199
    %201 = vset.pattern.permute.xlu0 0
    %202 = vperm.xlu0 %201, %v129
    %v203 = vpop.permute.xlu0 %202
    %204 = vset.pattern.permute.xlu0 0
    %205 = vperm.xlu0 %204, %v130
    %v206 = vpop.permute.xlu0 %205
    %207 = vset.pattern.permute.xlu0 0
    %208 = vperm.xlu0 %207, %v131
    %v209 = vpop.permute.xlu0 %208
    %210 = vset.pattern.permute.xlu0 0
    %211 = vperm.xlu0 %210, %v132
    %v212 = vpop.permute.xlu0 %211
    %213 = vset.pattern.permute.xlu0 0
    %214 = vperm.xlu0 %213, %v133
    %v215 = vpop.permute.xlu0 %214
    %216 = vset.pattern.permute.xlu0 0
    %217 = vperm.xlu0 %216, %v134
    %v218 = vpop.permute.xlu0 %217
    %219 = vset.pattern.permute.xlu0 0
    %220 = vperm.xlu0 %219, %v135
    %v221 = vpop.permute.xlu0 %220
    %222 = vset.pattern.permute.xlu0 0
    %223 = vperm.xlu0 %222, %v136
    %v224 = vpop.permute.xlu0 %223
    %225 = vset.pattern.permute.xlu0 0
    %226 = vperm.xlu0 %225, %v137
    %v227 = vpop.permute.xlu0 %226
    %228 = vset.pattern.permute.xlu0 0
    %229 = vperm.xlu0 %228, %v138
    %v230 = vpop.permute.xlu0 %229
    %231 = vset.pattern.permute.xlu0 0
    %232 = vperm.xlu0 %231, %v139
    %v233 = vpop.permute.xlu0 %232
    %234 = vset.pattern.permute.xlu0 0
    %235 = vperm.xlu0 %234, %v140
    %v236 = vpop.permute.xlu0 %235
    %237 = vset.pattern.permute.xlu0 0
    %238 = vperm.xlu0 %237, %v141
    %v239 = vpop.permute.xlu0 %238
    %vm240 = vcmp.eq.s32.totalorder %v143, %v146
    %vm241 = vcmp.eq.s32.totalorder %v143, %v149
    %vm242 = vcmp.eq.s32.totalorder %v143, %v152
    %vm243 = vcmp.eq.s32.totalorder %v143, %v155
    %vm244 = vcmp.eq.s32.totalorder %v143, %v158
    %vm245 = vcmp.eq.s32.totalorder %v143, %v161
    %vm246 = vcmp.eq.s32.totalorder %v143, %v164
    %vm247 = vcmp.eq.s32.totalorder %v143, %v167
    %vm248 = vcmp.eq.s32.totalorder %v143, %v170
    %vm249 = vcmp.eq.s32.totalorder %v143, %v173
    %vm250 = vcmp.eq.s32.totalorder %v143, %v176
    %vm251 = vcmp.eq.s32.totalorder %v143, %v179
    %vm252 = vcmp.eq.s32.totalorder %v143, %v182
    %vm253 = vcmp.eq.s32.totalorder %v143, %v185
    %vm254 = vcmp.eq.s32.totalorder %v143, %v188
    %vm255 = vcmp.eq.s32.totalorder %v143, %v191
    %vm256 = vcmp.eq.s32.totalorder %v143, %v194
    %vm257 = vcmp.eq.s32.totalorder %v143, %v197
    %vm258 = vcmp.eq.s32.totalorder %v143, %v200
    %vm259 = vcmp.eq.s32.totalorder %v143, %v203
    %vm260 = vcmp.eq.s32.totalorder %v143, %v206
    %vm261 = vcmp.eq.s32.totalorder %v143, %v209
    %vm262 = vcmp.eq.s32.totalorder %v143, %v212
    %vm263 = vcmp.eq.s32.totalorder %v143, %v215
    %vm264 = vcmp.eq.s32.totalorder %v143, %v218
    %vm265 = vcmp.eq.s32.totalorder %v143, %v221
    %vm266 = vcmp.eq.s32.totalorder %v143, %v224
    %vm267 = vcmp.eq.s32.totalorder %v143, %v227
    %vm268 = vcmp.eq.s32.totalorder %v143, %v230
    %vm269 = vcmp.eq.s32.totalorder %v143, %v233
    %vm270 = vcmp.eq.s32.totalorder %v143, %v236
    %vm271 = vcmp.eq.s32.totalorder %v143, %v239
    %v272 = vsel %vm240, 1, 0
    %v273 = vsel %vm241, 1, 0
    %v274 = vsel %vm242, 1, 0
    %v275 = vsel %vm243, 1, 0
    %v276 = vsel %vm244, 1, 0
    %v277 = vsel %vm245, 1, 0
    %v278 = vsel %vm246, 1, 0
    %v279 = vsel %vm247, 1, 0
    %v280 = vsel %vm248, 1, 0
    %v281 = vsel %vm249, 1, 0
    %v282 = vsel %vm250, 1, 0
    %v283 = vsel %vm251, 1, 0
    %v284 = vsel %vm252, 1, 0
    %v285 = vsel %vm253, 1, 0
    %v286 = vsel %vm254, 1, 0
    %v287 = vsel %vm255, 1, 0
    %v288 = vsel %vm256, 1, 0
    %v289 = vsel %vm257, 1, 0
    %v290 = vsel %vm258, 1, 0
    %v291 = vsel %vm259, 1, 0
    %v292 = vsel %vm260, 1, 0
    %v293 = vsel %vm261, 1, 0
    %v294 = vsel %vm262, 1, 0
    %v295 = vsel %vm263, 1, 0
    %v296 = vsel %vm264, 1, 0
    %v297 = vsel %vm265, 1, 0
    %v298 = vsel %vm266, 1, 0
    %v299 = vsel %vm267, 1, 0
    %v300 = vsel %vm268, 1, 0
    %v301 = vsel %vm269, 1, 0
    %v302 = vsel %vm270, 1, 0
    %v303 = vsel %vm271, 1, 0
    %v304 = vcvt.s32.f32 %v272
    %v305 = vcvt.s32.f32 %v273
    %v306 = vcvt.s32.f32 %v274
    %v307 = vcvt.s32.f32 %v275
    %v308 = vcvt.s32.f32 %v276
    %v309 = vcvt.s32.f32 %v277
    %v310 = vcvt.s32.f32 %v278
    %v311 = vcvt.s32.f32 %v279
    %v312 = vcvt.s32.f32 %v280
    %v313 = vcvt.s32.f32 %v281
    %v314 = vcvt.s32.f32 %v282
    %v315 = vcvt.s32.f32 %v283
    %v316 = vcvt.s32.f32 %v284
    %v317 = vcvt.s32.f32 %v285
    %v318 = vcvt.s32.f32 %v286
    %v319 = vcvt.s32.f32 %v287
    %v320 = vcvt.s32.f32 %v288
    %v321 = vcvt.s32.f32 %v289
    %v322 = vcvt.s32.f32 %v290
    %v323 = vcvt.s32.f32 %v291
    %v324 = vcvt.s32.f32 %v292
    %v325 = vcvt.s32.f32 %v293
    %v326 = vcvt.s32.f32 %v294
    %v327 = vcvt.s32.f32 %v295
    %v328 = vcvt.s32.f32 %v296
    %v329 = vcvt.s32.f32 %v297
    %v330 = vcvt.s32.f32 %v298
    %v331 = vcvt.s32.f32 %v299
    %v332 = vcvt.s32.f32 %v300
    %v333 = vcvt.s32.f32 %v301
    %v334 = vcvt.s32.f32 %v302
    %v335 = vcvt.s32.f32 %v303
    %v336 = vpack.c.bf16 %v305, %v304
    %v337 = vpack.c.bf16 %v307, %v306
    %v338 = vpack.c.bf16 %v309, %v308
    %v339 = vpack.c.bf16 %v311, %v310
    %v340 = vpack.c.bf16 %v313, %v312
    %v341 = vpack.c.bf16 %v315, %v314
    %v342 = vpack.c.bf16 %v317, %v316
    %v343 = vpack.c.bf16 %v319, %v318
    %v344 = vpack.c.bf16 %v321, %v320
    %v345 = vpack.c.bf16 %v323, %v322
    %v346 = vpack.c.bf16 %v325, %v324
    %v347 = vpack.c.bf16 %v327, %v326
    %v348 = vpack.c.bf16 %v329, %v328
    %v349 = vpack.c.bf16 %v331, %v330
    %v350 = vpack.c.bf16 %v333, %v332
    %v351 = vpack.c.bf16 %v335, %v334
    %v352 = vld [vmem:[%s2] sm:$0xff]
    %v353 = vld [vmem:[%s2 + $0x8] sm:$0xff]
    %v354 = vld [vmem:[%s2 + $0x10] sm:$0xff]
    %v355 = vld [vmem:[%s2 + $0x18] sm:$0xff]
    %v356 = vld [vmem:[%s2 + $0x20] sm:$0xff]
    %v357 = vld [vmem:[%s2 + $0x28] sm:$0xff]
    %v358 = vld [vmem:[%s2 + $0x30] sm:$0xff]
    %v359 = vld [vmem:[%s2 + $0x38] sm:$0xff]
    %v360 = vld [vmem:[%s2 + $0x40] sm:$0xff]
    %v361 = vld [vmem:[%s2 + $0x48] sm:$0xff]
    %v362 = vld [vmem:[%s2 + $0x50] sm:$0xff]
    %v363 = vld [vmem:[%s2 + $0x58] sm:$0xff]
    %v364 = vld [vmem:[%s2 + $0x60] sm:$0xff]
    %v365 = vld [vmem:[%s2 + $0x68] sm:$0xff]
    %v366 = vld [vmem:[%s2 + $0x70] sm:$0xff]
    %v367 = vld [vmem:[%s2 + $0x78] sm:$0xff]
    %v368 = vld [vmem:[%s2 + $0x80] sm:$0xff]
    %v369 = vld [vmem:[%s2 + $0x88] sm:$0xff]
    %v370 = vld [vmem:[%s2 + $0x90] sm:$0xff]
    %v371 = vld [vmem:[%s2 + $0x98] sm:$0xff]
    %v372 = vld [vmem:[%s2 + $0xa0] sm:$0xff]
    %v373 = vld [vmem:[%s2 + $0xa8] sm:$0xff]
    %v374 = vld [vmem:[%s2 + $0xb0] sm:$0xff]
    %v375 = vld [vmem:[%s2 + $0xb8] sm:$0xff]
    %v376 = vld [vmem:[%s2 + $0xc0] sm:$0xff]
    %v377 = vld [vmem:[%s2 + $0xc8] sm:$0xff]
    %v378 = vld [vmem:[%s2 + $0xd0] sm:$0xff]
    %v379 = vld [vmem:[%s2 + $0xd8] sm:$0xff]
    %v380 = vld [vmem:[%s2 + $0xe0] sm:$0xff]
    %v381 = vld [vmem:[%s2 + $0xe8] sm:$0xff]
    %v382 = vld [vmem:[%s2 + $0xf0] sm:$0xff]
    %v383 = vld [vmem:[%s2 + $0xf8] sm:$0xff]
    %vm384 = vcmask 130048
    %v386 = vsel %vm384, %v336, 0
    %v389 = vsel %vm384, %v337, 0
    %v392 = vsel %vm384, %v338, 0
    %v395 = vsel %vm384, %v339, 0
    %v398 = vsel %vm384, %v340, 0
    %v401 = vsel %vm384, %v341, 0
    %v404 = vsel %vm384, %v342, 0
    %v407 = vsel %vm384, %v343, 0
    %v410 = vsel %vm384, %v344, 0
    %v413 = vsel %vm384, %v345, 0
    %v416 = vsel %vm384, %v346, 0
    %v419 = vsel %vm384, %v347, 0
    %v422 = vsel %vm384, %v348, 0
    %v425 = vsel %vm384, %v349, 0
    %v428 = vsel %vm384, %v350, 0
    %v431 = vsel %vm384, %v351, 0
    %433 = vmatprep.subr.bf16.mxu0 0
    %434 = vmatpush1.bf16.msra.mxu0 0
    %435 = vmatprep.subr.bf16.mxu0 0
    %436 = vmatpush1.bf16.msra.mxu0 0
    %437 = vmatprep.subr.bf16.mxu0 0
    %438 = vmatpush1.bf16.msra.mxu0 0
    %439 = vmatprep.subr.bf16.mxu0 0
    %440 = vmatpush1.bf16.msra.mxu0 0
    %441 = vmatprep.subr.bf16.mxu0 0
    %442 = vmatpush1.bf16.msra.mxu0 0
    %443 = vmatprep.subr.bf16.mxu0 0
    %444 = vmatpush1.bf16.msra.mxu0 0
    %445 = vmatprep.subr.bf16.mxu0 0
    %446 = vmatpush1.bf16.msra.mxu0 0
    %447 = vmatprep.subr.bf16.mxu0 0
    %448 = vmatpush1.bf16.msra.mxu0 %v109
    %449 = vmatprep.subr.bf16.mxu0 0
    %450 = vmatpush2.bf16.msra.mxu0 0
    %451 = vmatprep.subr.bf16.mxu0 0
    %452 = vmatpush2.bf16.msra.mxu0 0
    %453 = vmatprep.subr.bf16.mxu0 0
    %454 = vmatpush2.bf16.msra.mxu0 0
    %455 = vmatprep.subr.bf16.mxu0 0
    %456 = vmatpush2.bf16.msra.mxu0 0
    %457 = vmatprep.subr.bf16.mxu0 0
    %458 = vmatpush2.bf16.msra.mxu0 0
    %459 = vmatprep.subr.bf16.mxu0 0
    %460 = vmatpush2.bf16.msra.mxu0 0
    %461 = vmatprep.subr.bf16.mxu0 0
    %462 = vmatpush2.bf16.msra.mxu0 0
    %463 = vmatprep.subr.bf16.mxu0 0
    %464 = vmatpush2.bf16.msra.mxu0 0
    %465 = vmatprep.mubr.bf16.mxu0 0
    %466 = vmatmul.mubr.bf16.gmra.mxu0 %v386
    %v467 = vpop.f32.mrf.mxu0
    %v468 = vadd.f32 %v352, %v467
    %v469 = vpop.f32.mrf.mxu0
    %v470 = vpop.f32.mrf.mxu0
    %v471 = vadd.f32 %v353, %v470
    %v472 = vpop.f32.mrf.mxu0
    %473 = vmatprep.mubr.bf16.mxu0 0
    %474 = vmatmul.mubr.bf16.gmra.mxu0 %v389
    %v475 = vpop.f32.mrf.mxu0
    %v476 = vadd.f32 %v354, %v475
    %v477 = vpop.f32.mrf.mxu0
    %v478 = vpop.f32.mrf.mxu0
    %v479 = vadd.f32 %v355, %v478
    %v480 = vpop.f32.mrf.mxu0
    %481 = vmatprep.mubr.bf16.mxu0 0
    %482 = vmatmul.mubr.bf16.gmra.mxu0 %v392
    %v483 = vpop.f32.mrf.mxu0
    %v484 = vadd.f32 %v356, %v483
    %v485 = vpop.f32.mrf.mxu0
    %v486 = vpop.f32.mrf.mxu0
    %v487 = vadd.f32 %v357, %v486
    %v488 = vpop.f32.mrf.mxu0
    %489 = vmatprep.mubr.bf16.mxu0 0
    %490 = vmatmul.mubr.bf16.gmra.mxu0 %v395
    %v491 = vpop.f32.mrf.mxu0
    %v492 = vadd.f32 %v358, %v491
    %v493 = vpop.f32.mrf.mxu0
    %v494 = vpop.f32.mrf.mxu0
    %v495 = vadd.f32 %v359, %v494
    %v496 = vpop.f32.mrf.mxu0
    %497 = vmatprep.mubr.bf16.mxu0 0
    %498 = vmatmul.mubr.bf16.gmra.mxu0 %v398
    %v499 = vpop.f32.mrf.mxu0
    %v500 = vadd.f32 %v360, %v499
    %v501 = vpop.f32.mrf.mxu0
    %v502 = vpop.f32.mrf.mxu0
    %v503 = vadd.f32 %v361, %v502
    %v504 = vpop.f32.mrf.mxu0
    %505 = vmatprep.mubr.bf16.mxu0 0
    %506 = vmatmul.mubr.bf16.gmra.mxu0 %v401
    %v507 = vpop.f32.mrf.mxu0
    %v508 = vadd.f32 %v362, %v507
    %v509 = vpop.f32.mrf.mxu0
    %v510 = vpop.f32.mrf.mxu0
    %v511 = vadd.f32 %v363, %v510
    %v512 = vpop.f32.mrf.mxu0
    %513 = vmatprep.mubr.bf16.mxu0 0
    %514 = vmatmul.mubr.bf16.gmra.mxu0 %v404
    %v515 = vpop.f32.mrf.mxu0
    %v516 = vadd.f32 %v364, %v515
    %v517 = vpop.f32.mrf.mxu0
    %v518 = vpop.f32.mrf.mxu0
    %v519 = vadd.f32 %v365, %v518
    %v520 = vpop.f32.mrf.mxu0
    %521 = vmatprep.mubr.bf16.mxu0 0
    %522 = vmatmul.mubr.bf16.gmra.mxu0 %v407
    %v523 = vpop.f32.mrf.mxu0
    %v524 = vadd.f32 %v366, %v523
    %v525 = vpop.f32.mrf.mxu0
    %v526 = vpop.f32.mrf.mxu0
    %v527 = vadd.f32 %v367, %v526
    %v528 = vpop.f32.mrf.mxu0
    %529 = vmatprep.mubr.bf16.mxu0 0
    %530 = vmatmul.mubr.bf16.gmra.mxu0 %v410
    %v531 = vpop.f32.mrf.mxu0
    %v532 = vadd.f32 %v368, %v531
    %v533 = vpop.f32.mrf.mxu0
    %v534 = vpop.f32.mrf.mxu0
    %v535 = vadd.f32 %v369, %v534
    %v536 = vpop.f32.mrf.mxu0
    %537 = vmatprep.mubr.bf16.mxu0 0
    %538 = vmatmul.mubr.bf16.gmra.mxu0 %v413
    %v539 = vpop.f32.mrf.mxu0
    %v540 = vadd.f32 %v370, %v539
    %v541 = vpop.f32.mrf.mxu0
    %v542 = vpop.f32.mrf.mxu0
    %v543 = vadd.f32 %v371, %v542
    %v544 = vpop.f32.mrf.mxu0
    %545 = vmatprep.mubr.bf16.mxu0 0
    %546 = vmatmul.mubr.bf16.gmra.mxu0 %v416
    %v547 = vpop.f32.mrf.mxu0
    %v548 = vadd.f32 %v372, %v547
    %v549 = vpop.f32.mrf.mxu0
    %v550 = vpop.f32.mrf.mxu0
    %v551 = vadd.f32 %v373, %v550
    %v552 = vpop.f32.mrf.mxu0
    %553 = vmatprep.mubr.bf16.mxu0 0
    %554 = vmatmul.mubr.bf16.gmra.mxu0 %v419
    %v555 = vpop.f32.mrf.mxu0
    %v556 = vadd.f32 %v374, %v555
    %v557 = vpop.f32.mrf.mxu0
    %v558 = vpop.f32.mrf.mxu0
    %v559 = vadd.f32 %v375, %v558
    %v560 = vpop.f32.mrf.mxu0
    %561 = vmatprep.mubr.bf16.mxu0 0
    %562 = vmatmul.mubr.bf16.gmra.mxu0 %v422
    %v563 = vpop.f32.mrf.mxu0
    %v564 = vadd.f32 %v376, %v563
    %v565 = vpop.f32.mrf.mxu0
    %v566 = vpop.f32.mrf.mxu0
    %v567 = vadd.f32 %v377, %v566
    %v568 = vpop.f32.mrf.mxu0
    %569 = vmatprep.mubr.bf16.mxu0 0
    %570 = vmatmul.mubr.bf16.gmra.mxu0 %v425
    %v571 = vpop.f32.mrf.mxu0
    %v572 = vadd.f32 %v378, %v571
    %v573 = vpop.f32.mrf.mxu0
    %v574 = vpop.f32.mrf.mxu0
    %v575 = vadd.f32 %v379, %v574
    %v576 = vpop.f32.mrf.mxu0
    %577 = vmatprep.mubr.bf16.mxu0 0
    %578 = vmatmul.mubr.bf16.gmra.mxu0 %v428
    %v579 = vpop.f32.mrf.mxu0
    %v580 = vadd.f32 %v380, %v579
    %v581 = vpop.f32.mrf.mxu0
    %v582 = vpop.f32.mrf.mxu0
    %v583 = vadd.f32 %v381, %v582
    %v584 = vpop.f32.mrf.mxu0
    %585 = vmatprep.mubr.bf16.mxu0 0
    %586 = vmatmul.mubr.bf16.gmra.mxu0 %v431
    %v587 = vpop.f32.mrf.mxu0
    %v588 = vadd.f32 %v382, %v587
    %v589 = vpop.f32.mrf.mxu0
    %v590 = vpop.f32.mrf.mxu0
    %v591 = vadd.f32 %v383, %v590
    %v592 = vpop.f32.mrf.mxu0
    %593 = vdwg.mxu0
    %v594 = vmax.f32 %v468, 0.0
    %v595 = vmax.f32 %v471, 0.0
    %v596 = vmax.f32 %v476, 0.0
    %v597 = vmax.f32 %v479, 0.0
    %v598 = vmax.f32 %v484, 0.0
    %v599 = vmax.f32 %v487, 0.0
    %v600 = vmax.f32 %v492, 0.0
    %v601 = vmax.f32 %v495, 0.0
    %v602 = vmax.f32 %v500, 0.0
    %v603 = vmax.f32 %v503, 0.0
    %v604 = vmax.f32 %v508, 0.0
    %v605 = vmax.f32 %v511, 0.0
    %v606 = vmax.f32 %v516, 0.0
    %v607 = vmax.f32 %v519, 0.0
    %v608 = vmax.f32 %v524, 0.0
    %v609 = vmax.f32 %v527, 0.0
    %v610 = vmax.f32 %v532, 0.0
    %v611 = vmax.f32 %v535, 0.0
    %v612 = vmax.f32 %v540, 0.0
    %v613 = vmax.f32 %v543, 0.0
    %v614 = vmax.f32 %v548, 0.0
    %v615 = vmax.f32 %v551, 0.0
    %v616 = vmax.f32 %v556, 0.0
    %v617 = vmax.f32 %v559, 0.0
    %v618 = vmax.f32 %v564, 0.0
    %v619 = vmax.f32 %v567, 0.0
    %v620 = vmax.f32 %v572, 0.0
    %v621 = vmax.f32 %v575, 0.0
    %v622 = vmax.f32 %v580, 0.0
    %v623 = vmax.f32 %v583, 0.0
    %v624 = vmax.f32 %v588, 0.0
    %v625 = vmax.f32 %v591, 0.0
    %v626 = vld [vmem:[%s4] sm:$0x3]
    %v627 = vlaneseq
    %v628 = vshrl.u32 %v627, 7
    %v629 = vadd.s32 %v628, 8
    %v630 = vlaneseq
    %v631 = vshrl.u32 %v630, 7
    %v632 = vsub.s32 0, %v631
    %v633 = vrot.slane %v626, %v632
    %v634 = vlaneseq
    %v635 = vshrl.u32 %v634, 7
    %v636 = vsub.s32 1, %v635
    %v637 = vrot.slane %v626, %v636
    %vm638 = vcmp.eq.s32.totalorder %v628, %v633
    %vm639 = vcmp.eq.s32.totalorder %v628, %v637
    %vm640 = vcmp.eq.s32.totalorder %v629, %v633
    %vm641 = vcmp.eq.s32.totalorder %v629, %v637
    %v642 = vsel %vm638, 1, 0
    %v643 = vsel %vm639, 1, 0
    %v644 = vsel %vm640, 1, 0
    %v645 = vsel %vm641, 1, 0
    %v646 = vcvt.s32.f32 %v642
    %v647 = vcvt.s32.f32 %v643
    %v648 = vcvt.s32.f32 %v644
    %v649 = vcvt.s32.f32 %v645
    %v650 = vpack.c.bf16 %v648, %v646
    %v651 = vpack.c.bf16 %v649, %v647
    %v652 = vld [vmem:[#allocation2] sm:$0xff]
    %v653 = vld [vmem:[#allocation2 + $0x8] sm:$0xff]
    %v654 = vpack.c.bf16 %v595, %v594
    %v655 = vpack.c.bf16 %v597, %v596
    %v656 = vpack.c.bf16 %v599, %v598
    %v657 = vpack.c.bf16 %v601, %v600
    %v658 = vpack.c.bf16 %v603, %v602
    %v659 = vpack.c.bf16 %v605, %v604
    %v660 = vpack.c.bf16 %v607, %v606
    %v661 = vpack.c.bf16 %v609, %v608
    %v662 = vpack.c.bf16 %v611, %v610
    %v663 = vpack.c.bf16 %v613, %v612
    %v664 = vpack.c.bf16 %v615, %v614
    %v665 = vpack.c.bf16 %v617, %v616
    %v666 = vpack.c.bf16 %v619, %v618
    %v667 = vpack.c.bf16 %v621, %v620
    %v668 = vpack.c.bf16 %v623, %v622
    %v669 = vpack.c.bf16 %v625, %v624
    %670 = vmatprep.subr.bf16.mxu0 0
    %671 = vmatpush1.bf16.msra.mxu0 %v661
    %672 = vmatprep.subr.bf16.mxu0 0
    %673 = vmatpush1.bf16.msra.mxu0 %v660
    %674 = vmatprep.subr.bf16.mxu0 0
    %675 = vmatpush1.bf16.msra.mxu0 %v659
    %676 = vmatprep.subr.bf16.mxu0 0
    %677 = vmatpush1.bf16.msra.mxu0 %v658
    %678 = vmatprep.subr.bf16.mxu0 0
    %679 = vmatpush1.bf16.msra.mxu0 %v657
    %680 = vmatprep.subr.bf16.mxu0 0
    %681 = vmatpush1.bf16.msra.mxu0 %v656
    %682 = vmatprep.subr.bf16.mxu0 0
    %683 = vmatpush1.bf16.msra.mxu0 %v655
    %684 = vmatprep.subr.bf16.mxu0 0
    %685 = vmatpush1.bf16.msra.mxu0 %v654
    %686 = vmatprep.subr.bf16.mxu0 0
    %687 = vmatpush2.bf16.msra.mxu0 %v669
    %688 = vmatprep.subr.bf16.mxu0 0
    %689 = vmatpush2.bf16.msra.mxu0 %v668
    %690 = vmatprep.subr.bf16.mxu0 0
    %691 = vmatpush2.bf16.msra.mxu0 %v667
    %692 = vmatprep.subr.bf16.mxu0 0
    %693 = vmatpush2.bf16.msra.mxu0 %v666
    %694 = vmatprep.subr.bf16.mxu0 0
    %695 = vmatpush2.bf16.msra.mxu0 %v665
    %696 = vmatprep.subr.bf16.mxu0 0
    %697 = vmatpush2.bf16.msra.mxu0 %v664
    %698 = vmatprep.subr.bf16.mxu0 0
    %699 = vmatpush2.bf16.msra.mxu0 %v663
    %700 = vmatprep.subr.bf16.mxu0 0
    %701 = vmatpush2.bf16.msra.mxu0 %v662
    %702 = vmatprep.mubr.bf16.mxu0 %v651
    %703 = vmatmul.mubr.bf16.gmra.mxu0 %v650
    %v704 = vpop.f32.mrf.mxu0
    %v705 = vadd.f32 0.0, %v704
    %v706 = vpop.f32.mrf.mxu0
    %v707 = vpop.f32.mrf.mxu0
    %v708 = vadd.f32 0.0, %v707
    %v709 = vpop.f32.mrf.mxu0
    %710 = vdwg.mxu0
    %v711 = vadd.f32 %v652, %v705
    %v712 = vadd.f32 %v653, %v708
    %vm713 = vcmask 523264
    %714 = vst.msk [vmem:[#allocation2] sm:$0xff] %vm713, %v711
    %715 = vst.msk [vmem:[#allocation2 + $0x8] sm:$0xff] %vm713, %v712
    // Predicated region
    $region66: #{dtinet_forward.3} parent=1 // pred_check
      %p716 = pneg %p100
    $region67: #{dtinet_forward.3} parent=1 // pred_check_branch
      %718 = sbr.rel (%p716) target = $region69
    $region68: #{dtinet_forward.3} parent=1 // pred_region
      %v719 = vld [vmem:[#allocation3] sm:$0x1]
      %v720 = vadd.f32 %v719, 1.0
      %v722 = vlaneseq
      %v723 = vshrl.u32 %v722, 7
      %v724 = vsub.s32 0, %v723
      %v725 = vrot.slane %v720, %v724
      %726 = vset.pattern.permute.xlu0 0
      %727 = vperm.xlu0 %726, %v725
      %v728 = vpop.permute.xlu0 %727
      %v730 = vmul.f32 %v728, %v107
      %v731 = vmul.f32 %v728, %v108
      %v732 = vld [vmem:[#allocation2] sm:$0xff]
      %v733 = vld [vmem:[#allocation2 + $0x8] sm:$0xff]
      %v734 = vadd.f32 %v730, %v732
      %v735 = vadd.f32 %v731, %v733
      %v736 = vmul.f32 %v734, %v734
      %v737 = vmul.f32 %v735, %v735
      %v738 = vsel %vm713, %v736, 0.0
      %739 = vadd.xlane.f32.xlu0 %v738
      %v740 = vpop.xlane.xlu0 %739
      %v741 = vsel %vm713, %v737, 0.0
      %742 = vadd.xlane.f32.xlu0 %v741
      %v743 = vpop.xlane.xlu0 %742
      %v744 = vmax.f32 %v740, 1e-24
      %v745 = vmax.f32 %v743, 1e-24
      %v746 = vrsqrt.pop %v744
      %v747 = vrsqrt.pop %v745
      %v748 = vmul.f32 %v734, %v746
      %v749 = vmul.f32 %v735, %v747
      %v750 = vpack.c.bf16 %v749, %v748
      %v751 = vld [vmem:[#allocation6] sm:$0xf]
      %v752 = vld [vmem:[#allocation6 + $0x4] sm:$0xf]
      %v753 = vld [vmem:[#allocation6 + $0x8] sm:$0xf]
      %v754 = vld [vmem:[#allocation6 + $0xc] sm:$0xf]
      %v755 = vld [vmem:[#allocation6 + $0x10] sm:$0xf]
      %v756 = vld [vmem:[#allocation6 + $0x14] sm:$0xf]
      %v757 = vld [vmem:[#allocation6 + $0x18] sm:$0xf]
      %v758 = vld [vmem:[#allocation6 + $0x1c] sm:$0xf]
      %v759 = vld [vmem:[#allocation8] sm:$0x1]
      %v761 = vlaneseq
      %v762 = vshrl.u32 %v761, 7
      %v763 = vsub.s32 0, %v762
      %v764 = vrot.slane %v759, %v763
      %v774 = vunpack.c.l.b16 %v751
      %v775 = vunpack.c.l.b16 %v752
      %v776 = vunpack.c.l.b16 %v753
      %v777 = vunpack.c.l.b16 %v754
      %v778 = vunpack.c.l.b16 %v755
      %v779 = vunpack.c.l.b16 %v756
      %v780 = vunpack.c.l.b16 %v757
      %v781 = vunpack.c.l.b16 %v758
      %v782 = vpack.c.b16 %v775, %v774
      %v783 = vpack.c.b16 %v777, %v776
      %v784 = vpack.c.b16 %v779, %v778
      %v785 = vpack.c.b16 %v781, %v780
      %v791 = vsel %vm713, %v750, 0
      %793 = vmatprep.subr.bf16.mxu0 0
      %794 = vmatpush1.bf16.msra.mxu0 0
      %795 = vmatprep.subr.bf16.mxu0 0
      %796 = vmatpush1.bf16.msra.mxu0 0
      %797 = vmatprep.subr.bf16.mxu0 0
      %798 = vmatpush1.bf16.msra.mxu0 0
      %799 = vmatprep.subr.bf16.mxu0 0
      %800 = vmatpush1.bf16.msra.mxu0 0
      %801 = vmatprep.subr.bf16.mxu0 0
      %802 = vmatpush1.bf16.msra.mxu0 %v785
      %803 = vmatprep.subr.bf16.mxu0 0
      %804 = vmatpush1.bf16.msra.mxu0 %v784
      %805 = vmatprep.subr.bf16.mxu0 0
      %806 = vmatpush1.bf16.msra.mxu0 %v783
      %807 = vmatprep.subr.bf16.mxu0 0
      %808 = vmatpush1.bf16.msra.mxu0 %v782
      %809 = vmatprep.subr.bf16.mxu0 0
      %810 = vmatpush2.bf16.msra.mxu0 0
      %811 = vmatprep.subr.bf16.mxu0 0
      %812 = vmatpush2.bf16.msra.mxu0 0
      %813 = vmatprep.subr.bf16.mxu0 0
      %814 = vmatpush2.bf16.msra.mxu0 0
      %815 = vmatprep.subr.bf16.mxu0 0
      %816 = vmatpush2.bf16.msra.mxu0 0
      %817 = vmatprep.subr.bf16.mxu0 0
      %818 = vmatpush2.bf16.msra.mxu0 0
      %819 = vmatprep.subr.bf16.mxu0 0
      %820 = vmatpush2.bf16.msra.mxu0 0
      %821 = vmatprep.subr.bf16.mxu0 0
      %822 = vmatpush2.bf16.msra.mxu0 0
      %823 = vmatprep.subr.bf16.mxu0 0
      %824 = vmatpush2.bf16.msra.mxu0 0
      %825 = vmatprep.mubr.bf16.mxu0 0
      %826 = vmatmul.mubr.bf16.gmra.mxu0 %v791
      %v827 = vpop.f32.mrf.mxu0
      %v828 = vadd.f32 %v764, %v827
      %v829 = vpop.f32.mrf.mxu0
      %v830 = vpop.f32.mrf.mxu0
      %v831 = vadd.f32 %v764, %v830
      %v832 = vpop.f32.mrf.mxu0
      %833 = vdwg.mxu0
      %v834 = vmax.f32 %v828, 0.0
      %v835 = vmax.f32 %v831, 0.0
      %v836 = vmul.f32 %v834, %v834
      %v837 = vmul.f32 %v835, %v835
      %v838 = vsel %vm713, %v836, 0.0
      %839 = vadd.xlane.f32.xlu0 %v838
      %v840 = vpop.xlane.xlu0 %839
      %v841 = vsel %vm713, %v837, 0.0
      %842 = vadd.xlane.f32.xlu0 %v841
      %v843 = vpop.xlane.xlu0 %842
      %v844 = vmax.f32 %v840, 1e-24
      %v845 = vmax.f32 %v843, 1e-24
      %v846 = vrsqrt.pop %v844
      %v847 = vrsqrt.pop %v845
      %v848 = vmul.f32 %v834, %v846
      %v849 = vmul.f32 %v835, %v847
      %v850 = vpack.c.bf16 %v849, %v848
      %v851 = vld [vmem:[#allocation9] sm:$0xf]
      %v852 = vld [vmem:[#allocation9 + $0x4] sm:$0xf]
      %v853 = vld [vmem:[#allocation9 + $0x8] sm:$0xf]
      %v854 = vld [vmem:[#allocation9 + $0xc] sm:$0xf]
      %v855 = vld [vmem:[#allocation9 + $0x10] sm:$0xf]
      %v856 = vld [vmem:[#allocation9 + $0x14] sm:$0xf]
      %v857 = vld [vmem:[#allocation9 + $0x18] sm:$0xf]
      %v858 = vld [vmem:[#allocation9 + $0x1c] sm:$0xf]
      %v867 = vunpack.c.l.b16 %v851
      %v868 = vunpack.c.l.b16 %v852
      %v869 = vunpack.c.l.b16 %v853
      %v870 = vunpack.c.l.b16 %v854
      %v871 = vunpack.c.l.b16 %v855
      %v872 = vunpack.c.l.b16 %v856
      %v873 = vunpack.c.l.b16 %v857
      %v874 = vunpack.c.l.b16 %v858
      %v875 = vpack.c.b16 %v868, %v867
      %v876 = vpack.c.b16 %v870, %v869
      %v877 = vpack.c.b16 %v872, %v871
      %v878 = vpack.c.b16 %v874, %v873
      %v884 = vsel %vm713, %v850, 0
      %886 = vmatprep.subr.bf16.mxu0 0
      %887 = vmatpush1.bf16.msra.mxu0 0
      %888 = vmatprep.subr.bf16.mxu0 0
      %889 = vmatpush1.bf16.msra.mxu0 0
      %890 = vmatprep.subr.bf16.mxu0 0
      %891 = vmatpush1.bf16.msra.mxu0 0
      %892 = vmatprep.subr.bf16.mxu0 0
      %893 = vmatpush1.bf16.msra.mxu0 0
      %894 = vmatprep.subr.bf16.mxu0 0
      %895 = vmatpush1.bf16.msra.mxu0 %v878
      %896 = vmatprep.subr.bf16.mxu0 0
      %897 = vmatpush1.bf16.msra.mxu0 %v877
      %898 = vmatprep.subr.bf16.mxu0 0
      %899 = vmatpush1.bf16.msra.mxu0 %v876
      %900 = vmatprep.subr.bf16.mxu0 0
      %901 = vmatpush1.bf16.msra.mxu0 %v875
      %902 = vmatprep.subr.bf16.mxu0 0
      %903 = vmatpush2.bf16.msra.mxu0 0
      %904 = vmatprep.subr.bf16.mxu0 0
      %905 = vmatpush2.bf16.msra.mxu0 0
      %906 = vmatprep.subr.bf16.mxu0 0
      %907 = vmatpush2.bf16.msra.mxu0 0
      %908 = vmatprep.subr.bf16.mxu0 0
      %909 = vmatpush2.bf16.msra.mxu0 0
      %910 = vmatprep.subr.bf16.mxu0 0
      %911 = vmatpush2.bf16.msra.mxu0 0
      %912 = vmatprep.subr.bf16.mxu0 0
      %913 = vmatpush2.bf16.msra.mxu0 0
      %914 = vmatprep.subr.bf16.mxu0 0
      %915 = vmatpush2.bf16.msra.mxu0 0
      %916 = vmatprep.subr.bf16.mxu0 0
      %917 = vmatpush2.bf16.msra.mxu0 0
      %918 = vmatprep.mubr.bf16.mxu0 0
      %919 = vmatmul.mubr.bf16.gmra.mxu0 %v884
      %v920 = vpop.f32.mrf.mxu0
      %v921 = vadd.f32 0.0, %v920
      %v922 = vpop.f32.mrf.mxu0
      %v923 = vpop.f32.mrf.mxu0
      %v924 = vadd.f32 0.0, %v923
      %v925 = vpop.f32.mrf.mxu0
      %926 = vdwg.mxu0
      %v927 = vadd.f32 %v107, %v921
      %v928 = vadd.f32 %v108, %v924
      %v929 = vld [vmem:[#allocation11] sm:$0x1]
      %v931 = vlaneseq
      %v932 = vshrl.u32 %v931, 7
      %v933 = vsub.s32 0, %v932
      %v934 = vrot.slane %v929, %v933
      %v936 = vadd.f32 %v927, %v934
      %v937 = vadd.f32 %v928, %v934
      %v938 = vld [vmem:[#allocation4] sm:$0x1]
      %v939 = vlaneseq
      %v940 = vshrl.u32 %v939, 7
      %v941 = vsub.s32 0, %v940
      %v942 = vrot.slane %v938, %v941
      %vm943 = vcmp.eq.s32.totalorder %v628, %v942
      %v944 = vsel %vm943, 1, 0
      %v945 = vcvt.s32.f32 %v944
      %vm946 = vcmask 123904
      %v947 = vsel %vm946, %v945, 0.0
      %948 = vadd.xlane.f32.xlu0 %v947
      %v949 = vpop.xlane.xlu0 %948
      %v950 = vpack.c.bf16 %v945, %v945
      %v951 = vpack.c.bf16 %v937, %v936
      %v953 = vsel %vm384, %v950, 0
      %955 = vmatprep.subr.bf16.mxu0 0
      %956 = vmatpush1.bf16.msra.mxu0 0
      %957 = vmatprep.subr.bf16.mxu0 0
      %958 = vmatpush1.bf16.msra.mxu0 0
      %959 = vmatprep.subr.bf16.mxu0 0
      %960 = vmatpush1.bf16.msra.mxu0 0
      %961 = vmatprep.subr.bf16.mxu0 0
      %962 = vmatpush1.bf16.msra.mxu0 0
      %963 = vmatprep.subr.bf16.mxu0 0
      %964 = vmatpush1.bf16.msra.mxu0 0
      %965 = vmatprep.subr.bf16.mxu0 0
      %966 = vmatpush1.bf16.msra.mxu0 0
      %967 = vmatprep.subr.bf16.mxu0 0
      %968 = vmatpush1.bf16.msra.mxu0 0
      %969 = vmatprep.subr.bf16.mxu0 0
      %970 = vmatpush1.bf16.msra.mxu0 %v951
      %971 = vmatprep.subr.bf16.mxu0 0
      %972 = vmatpush2.bf16.msra.mxu0 0
      %973 = vmatprep.subr.bf16.mxu0 0
      %974 = vmatpush2.bf16.msra.mxu0 0
      %975 = vmatprep.subr.bf16.mxu0 0
      %976 = vmatpush2.bf16.msra.mxu0 0
      %977 = vmatprep.subr.bf16.mxu0 0
      %978 = vmatpush2.bf16.msra.mxu0 0
      %979 = vmatprep.subr.bf16.mxu0 0
      %980 = vmatpush2.bf16.msra.mxu0 0
      %981 = vmatprep.subr.bf16.mxu0 0
      %982 = vmatpush2.bf16.msra.mxu0 0
      %983 = vmatprep.subr.bf16.mxu0 0
      %984 = vmatpush2.bf16.msra.mxu0 0
      %985 = vmatprep.subr.bf16.mxu0 0
      %986 = vmatpush2.bf16.msra.mxu0 0
      %987 = vmatprep.mubr.bf16.mxu0 0
      %988 = vmatmul.mubr.bf16.gmra.mxu0 %v953
      %v989 = vpop.f32.mrf.mxu0
      %v990 = vadd.f32 0.0, %v989
      %v991 = vpop.f32.mrf.mxu0
      %v992 = vpop.f32.mrf.mxu0
      %v993 = vpop.f32.mrf.mxu0
      %994 = vdwg.mxu0
      %v995 = vmax.f32 %v949, 1.0
      %v996 = vrcp.pop %v995
      %v997 = vmul.f32 %v990, %v996
      %vm998 = vcmask 517120
      %999 = vst.msk [vmem:[%s10] sm:$0x3] %vm998, %v997
    $region69: #{dtinet_forward.3} parent=1 // pred_fallthru
      _
    // Predicated region
    $region70: #{dtinet_forward.3} parent=1 // pred_check
      _
    $region71: #{dtinet_forward.3} parent=1 // pred_check_branch
      %1001 = sbr.rel (0) target = $region73
    $region72: #{dtinet_forward.3} parent=1 // pred_region
      _
    $region73: #{dtinet_forward.3} parent=1 // pred_fallthru
      _
    // Predicated region
    $region74: #{dtinet_forward.3} parent=1 // pred_check
      _
    $region75: #{dtinet_forward.3} parent=1 // pred_check_branch
      %1003 = sbr.rel (0) target = $region77
    $region76: #{dtinet_forward.3} parent=1 // pred_region
      _
    $region77: #{dtinet_forward.3} parent=1 // pred_fallthru
      _
    %1004 = vsyncpa [#allocation5], 1
    %1005 = vsyncpa [#allocation7], 1
    %1006 = vsyncpa [#allocation10], 1

// kernel: dtinet_forward.4
$region0: #{dtinet_forward.4}
  #allocation0 [shape = 'u32[]', space=smem, size = 0x4, offset = 0x4, fixed_abs, tag = 'smem constant byte address 0x4 - core index']
  #allocation1 [shape = 'u32[144,128]{1,0:T(1,128)}', space=vmem, size = 0x12000, scoped, tag = 'internal scratch']
  %s0 = inlined_call_operand.vmem [shape: f32[2,32,128], index: 0, kind: input, shape index: {}]
  %s1 = inlined_call_operand.vmem [shape: bf16[512,128], index: 1, kind: input, shape index: {}]
  %s2 = inlined_call_operand.vmem [shape: f32[1,128], index: 2, kind: input, shape index: {}]
  %s3 = inlined_call_operand.vmem [shape: bf16[768,128], index: 3, kind: input, shape index: {}]
  %s4 = inlined_call_operand.vmem [shape: f32[1,128], index: 4, kind: input, shape index: {}]
  %s5 = inlined_call_operand.vmem [shape: bf16[1024,128], index: 5, kind: input, shape index: {}]
  %s6 = inlined_call_operand.vmem [shape: f32[1,128], index: 6, kind: input, shape index: {}]
  %s7 = inlined_call_operand.vmem [shape: f32[2,1,128], index: 7, kind: output, shape index: {}]
  %s8 = sld [smem:[#allocation0]]
  $region61: #{dtinet_forward.4} parent=0
    _
  %s10 = ssub.s32 1, %s8
  %s11 = scalar_select 0, %s10, %s8
  loop: start=0, step=1, limit=4
  $region2: #{dtinet_forward.4} parent=0 // loop_pre_header
    _
  $region3: #{dtinet_forward.4} parent=0 // loop_header
    %s13 = sphi 0, %s17
    %p14 = scmp.ge.s32.totalorder %s13, 4
    %s23 = sphi 0, %s25
    %s26 = sphi 0, %s23
    %s27 = sphi 0, %s26
    %s43 = sphi 0, %s27
    %s47 = sphi 0, %s47
    %s49 = sphi 0, %s47
    %s50 = sphi 0, %s49
    %s64 = sphi 0, %s50
    %s68 = sphi 0, %s68
    %s70 = sphi 0, %s68
    %s71 = sphi 0, %s70
    %s85 = sphi 0, %s71
    %s89 = sphi 0, %s89
    %s91 = sphi 0, %s89
    %s92 = sphi 0, %s91
    %s106 = sphi 0, %s92
    %s110 = sphi 0, %s110
    %s112 = sphi 0, %s110
    %s113 = sphi 0, %s112
    %s127 = sphi 0, %s113
    %s131 = sphi 0, %s131
    %s133 = sphi 0, %s131
    %s134 = sphi 0, %s133
    %s148 = sphi 0, %s134
    %s152 = sphi 0, %s152
    %s154 = sphi 0, %s152
    %s155 = sphi 0, %s154
    %s169 = sphi 0, %s155
    %s175 = sphi 0, %s177
    %s178 = sphi 0, %s175
    %s179 = sphi 0, %s178
    %s195 = sphi 0, %s179
  $region4: #{dtinet_forward.4} parent=0 // loop_header_branch
    %16 = sbr.rel (%p14) target = $region8
  $region5: #{dtinet_forward.4} parent=0 // loop_body
    %s18 = ssub.s32 %s13, 1
    %s19 = ssub.s32 %s13, 2
    %s20 = sadd.s32 %s13, 1
    %s21 = ssub.s32 %s13, %s20
    %p22 = scmp.eq.s32.totalorder %s21, 0
    %s24 = sadd.s32 %s23, 1
    %s25 = scalar_select %p22, %s23, %s24
    %p28 = pneg %p22
    %p29 = scmp.eq.s32.totalorder %s13, 1
    %p30 = por %p28, %p29
    %p31 = scmp.ne.s32.totalorder %s23, %s26
    %p32 = scmp.eq.s32.totalorder %s13, 0
    %p33 = por %p31, %p32
    %p34 = scmp.ne.s32.totalorder %s23, %s26
    %p35 = scmp.eq.s32.totalorder %s18, 1
    %p36 = por %p34, %p35
    %p37 = scmp.ne.s32.totalorder %s26, %s27
    %p38 = scmp.eq.s32.totalorder %s18, 0
    %p39 = por %p37, %p38
    %p40 = scmp.ne.s32.totalorder %s26, %s27
    %p41 = scmp.eq.s32.totalorder %s19, 1
    %p42 = por %p40, %p41
    %p44 = scmp.ne.s32.totalorder %s27, %s43
    %p45 = scmp.eq.s32.totalorder %s19, 0
    %p46 = por %p44, %p45
    %s48 = sadd.s32 %s47, 1
    %p51 = scmp.eq.s32.totalorder %s13, 1
    %p52 = scmp.ne.s32.totalorder %s47, %s49
    %p53 = scmp.eq.s32.totalorder %s13, 0
    %p54 = por %p52, %p53
    %p55 = scmp.ne.s32.totalorder %s47, %s49
    %p56 = scmp.eq.s32.totalorder %s18, 1
    %p57 = por %p55, %p56
    %p58 = scmp.ne.s32.totalorder %s49, %s50
    %p59 = scmp.eq.s32.totalorder %s18, 0
    %p60 = por %p58, %p59
    %p61 = scmp.ne.s32.totalorder %s49, %s50
    %p62 = scmp.eq.s32.totalorder %s19, 1
    %p63 = por %p61, %p62
    %p65 = scmp.ne.s32.totalorder %s50, %s64
    %p66 = scmp.eq.s32.totalorder %s19, 0
    %p67 = por %p65, %p66
    %s69 = sadd.s32 %s68, 1
    %p72 = scmp.eq.s32.totalorder %s13, 1
    %p73 = scmp.ne.s32.totalorder %s68, %s70
    %p74 = scmp.eq.s32.totalorder %s13, 0
    %p75 = por %p73, %p74
    %p76 = scmp.ne.s32.totalorder %s68, %s70
    %p77 = scmp.eq.s32.totalorder %s18, 1
    %p78 = por %p76, %p77
    %p79 = scmp.ne.s32.totalorder %s70, %s71
    %p80 = scmp.eq.s32.totalorder %s18, 0
    %p81 = por %p79, %p80
    %p82 = scmp.ne.s32.totalorder %s70, %s71
    %p83 = scmp.eq.s32.totalorder %s19, 1
    %p84 = por %p82, %p83
    %p86 = scmp.ne.s32.totalorder %s71, %s85
    %p87 = scmp.eq.s32.totalorder %s19, 0
    %p88 = por %p86, %p87
    %s90 = sadd.s32 %s89, 1
    %p93 = scmp.eq.s32.totalorder %s13, 1
    %p94 = scmp.ne.s32.totalorder %s89, %s91
    %p95 = scmp.eq.s32.totalorder %s13, 0
    %p96 = por %p94, %p95
    %p97 = scmp.ne.s32.totalorder %s89, %s91
    %p98 = scmp.eq.s32.totalorder %s18, 1
    %p99 = por %p97, %p98
    %p100 = scmp.ne.s32.totalorder %s91, %s92
    %p101 = scmp.eq.s32.totalorder %s18, 0
    %p102 = por %p100, %p101
    %p103 = scmp.ne.s32.totalorder %s91, %s92
    %p104 = scmp.eq.s32.totalorder %s19, 1
    %p105 = por %p103, %p104
    %p107 = scmp.ne.s32.totalorder %s92, %s106
    %p108 = scmp.eq.s32.totalorder %s19, 0
    %p109 = por %p107, %p108
    %s111 = sadd.s32 %s110, 1
    %p114 = scmp.eq.s32.totalorder %s13, 1
    %p115 = scmp.ne.s32.totalorder %s110, %s112
    %p116 = scmp.eq.s32.totalorder %s13, 0
    %p117 = por %p115, %p116
    %p118 = scmp.ne.s32.totalorder %s110, %s112
    %p119 = scmp.eq.s32.totalorder %s18, 1
    %p120 = por %p118, %p119
    %p121 = scmp.ne.s32.totalorder %s112, %s113
    %p122 = scmp.eq.s32.totalorder %s18, 0
    %p123 = por %p121, %p122
    %p124 = scmp.ne.s32.totalorder %s112, %s113
    %p125 = scmp.eq.s32.totalorder %s19, 1
    %p126 = por %p124, %p125
    %p128 = scmp.ne.s32.totalorder %s113, %s127
    %p129 = scmp.eq.s32.totalorder %s19, 0
    %p130 = por %p128, %p129
    %s132 = sadd.s32 %s131, 1
    %p135 = scmp.eq.s32.totalorder %s13, 1
    %p136 = scmp.ne.s32.totalorder %s131, %s133
    %p137 = scmp.eq.s32.totalorder %s13, 0
    %p138 = por %p136, %p137
    %p139 = scmp.ne.s32.totalorder %s131, %s133
    %p140 = scmp.eq.s32.totalorder %s18, 1
    %p141 = por %p139, %p140
    %p142 = scmp.ne.s32.totalorder %s133, %s134
    %p143 = scmp.eq.s32.totalorder %s18, 0
    %p144 = por %p142, %p143
    %p145 = scmp.ne.s32.totalorder %s133, %s134
    %p146 = scmp.eq.s32.totalorder %s19, 1
    %p147 = por %p145, %p146
    %p149 = scmp.ne.s32.totalorder %s134, %s148
    %p150 = scmp.eq.s32.totalorder %s19, 0
    %p151 = por %p149, %p150
    %s153 = sadd.s32 %s152, 1
    %p156 = scmp.eq.s32.totalorder %s13, 1
    %p157 = scmp.ne.s32.totalorder %s152, %s154
    %p158 = scmp.eq.s32.totalorder %s13, 0
    %p159 = por %p157, %p158
    %p160 = scmp.ne.s32.totalorder %s152, %s154
    %p161 = scmp.eq.s32.totalorder %s18, 1
    %p162 = por %p160, %p161
    %p163 = scmp.ne.s32.totalorder %s154, %s155
    %p164 = scmp.eq.s32.totalorder %s18, 0
    %p165 = por %p163, %p164
    %p166 = scmp.ne.s32.totalorder %s154, %s155
    %p167 = scmp.eq.s32.totalorder %s19, 1
    %p168 = por %p166, %p167
    %p170 = scmp.ne.s32.totalorder %s155, %s169
    %p171 = scmp.eq.s32.totalorder %s19, 0
    %p172 = por %p170, %p171
    %s173 = ssub.s32 %s13, %s20
    %p174 = scmp.eq.s32.totalorder %s173, 0
    %s176 = sadd.s32 %s175, 1
    %s177 = scalar_select %p174, %s175, %s176
    %p180 = pneg %p174
    %p181 = scmp.eq.s32.totalorder %s13, 1
    %p182 = por %p180, %p181
    %p183 = scmp.ne.s32.totalorder %s175, %s178
    %p184 = scmp.eq.s32.totalorder %s13, 0
    %p185 = por %p183, %p184
    %p186 = scmp.ne.s32.totalorder %s175, %s178
    %p187 = scmp.eq.s32.totalorder %s18, 1
    %p188 = por %p186, %p187
    %p189 = scmp.ne.s32.totalorder %s178, %s179
    %p190 = scmp.eq.s32.totalorder %s18, 0
    %p191 = por %p189, %p190
    %p192 = scmp.ne.s32.totalorder %s178, %s179
    %p193 = scmp.eq.s32.totalorder %s19, 1
    %p194 = por %p192, %p193
    %p196 = scmp.ne.s32.totalorder %s179, %s195
    %p197 = scmp.eq.s32.totalorder %s19, 0
    %p198 = por %p196, %p197
    %p199 = scmp.le.s32.totalorder 1, %s13
    %p200 = scmp.lt.s32.totalorder %s13, 3
    %p201 = pnand %p199, %p200
    %p202 = pneg %p201
    // Predicated region
    $region9: #{dtinet_forward.4} parent=5 // pred_check
      _
    $region10: #{dtinet_forward.4} parent=5 // pred_check_branch
      %204 = sbr.rel (%p201) target = $region12
    $region11: #{dtinet_forward.4} parent=5 // pred_region
      %s205 = ssub.s32 %s13, 1
      // Predicated region
      $region13: #{dtinet_forward.4} parent=11 // pred_check
        %p206 = pneg %p60
      $region14: #{dtinet_forward.4} parent=11 // pred_check_branch
        %208 = sbr.rel (%p206) target = $region16
      $region15: #{dtinet_forward.4} parent=11 // pred_region
        _
      $region16: #{dtinet_forward.4} parent=11 // pred_fallthru
        _
      // Predicated region
      $region17: #{dtinet_forward.4} parent=11 // pred_check
        %p209 = pneg %p81
      $region18: #{dtinet_forward.4} parent=11 // pred_check_branch
        %211 = sbr.rel (%p209) target = $region20
      $region19: #{dtinet_forward.4} parent=11 // pred_region
        _
      $region20: #{dtinet_forward.4} parent=11 // pred_fallthru
        _
      // Predicated region
      $region21: #{dtinet_forward.4} parent=11 // pred_check
        %p212 = pneg %p102
      $region22: #{dtinet_forward.4} parent=11 // pred_check_branch
        %214 = sbr.rel (%p212) target = $region24
      $region23: #{dtinet_forward.4} parent=11 // pred_region
        _
      $region24: #{dtinet_forward.4} parent=11 // pred_fallthru
        _
      // Predicated region
      $region25: #{dtinet_forward.4} parent=11 // pred_check
        %p215 = pneg %p123
      $region26: #{dtinet_forward.4} parent=11 // pred_check_branch
        %217 = sbr.rel (%p215) target = $region28
      $region27: #{dtinet_forward.4} parent=11 // pred_region
        _
      $region28: #{dtinet_forward.4} parent=11 // pred_fallthru
        _
      // Predicated region
      $region29: #{dtinet_forward.4} parent=11 // pred_check
        %p218 = pneg %p144
      $region30: #{dtinet_forward.4} parent=11 // pred_check_branch
        %220 = sbr.rel (%p218) target = $region32
      $region31: #{dtinet_forward.4} parent=11 // pred_region
        _
      $region32: #{dtinet_forward.4} parent=11 // pred_fallthru
        _
      // Predicated region
      $region33: #{dtinet_forward.4} parent=11 // pred_check
        %p221 = pneg %p165
      $region34: #{dtinet_forward.4} parent=11 // pred_check_branch
        %223 = sbr.rel (%p221) target = $region36
      $region35: #{dtinet_forward.4} parent=11 // pred_region
        _
      $region36: #{dtinet_forward.4} parent=11 // pred_fallthru
        _
    $region12: #{dtinet_forward.4} parent=5 // pred_fallthru
      _
    %p224 = scmp.lt.s32.totalorder %s13, 2
    // Predicated region
    $region37: #{dtinet_forward.4} parent=5 // pred_check
      %p225 = pneg %p224
    $region38: #{dtinet_forward.4} parent=5 // pred_check_branch
      %227 = sbr.rel (%p225) target = $region40
    $region39: #{dtinet_forward.4} parent=5 // pred_region
      // Predicated region
      $region41: #{dtinet_forward.4} parent=39 // pred_check
        %p228 = pneg %p33
      $region42: #{dtinet_forward.4} parent=39 // pred_check_branch
        %230 = sbr.rel (%p228) target = $region44
      $region43: #{dtinet_forward.4} parent=39 // pred_region
        %p231 = scmp.lt.s32.totalorder %s13, 1
        %s232 = scalar_select %p231, %s13, 1
        %s233 = smul.addr %s232, 4
        %s234 = smul.addr %s233, 8
        %s235 = scalar_lea.vmem %s0, %s234
      $region44: #{dtinet_forward.4} parent=39 // pred_fallthru
        _
    $region40: #{dtinet_forward.4} parent=5 // pred_fallthru
      _
    %p236 = scmp.le.s32.totalorder 1, %s13
    %p237 = scmp.lt.s32.totalorder %s13, 3
    %p238 = pnand %p236, %p237
    %p239 = pneg %p238
    // Predicated region
    $region45: #{dtinet_forward.4} parent=5 // pred_check
      _
    $region46: #{dtinet_forward.4} parent=5 // pred_check_branch
      %241 = sbr.rel (%p238) target = $region48
    $region47: #{dtinet_forward.4} parent=5 // pred_region
      %s242 = ssub.s32 %s13, 1
      %p243 = scmp.lt.s32.totalorder %s18, 1
      %s244 = scalar_select %p243, %s18, 1
      %s245 = smul.addr %s244, 4
      %s246 = smul.addr %s245, 8
      %s247 = scalar_lea.vmem %s0, %s246
      %p248 = pneg %p39
      %p249 = pneg %p36
      %p250 = pneg %p60
      %p251 = pneg %p57
      %p252 = pneg %p81
      %p253 = pneg %p78
      %p254 = pneg %p102
      %p255 = pneg %p99
      %p256 = pneg %p123
      %p257 = pneg %p120
      %p258 = pneg %p144
      %p259 = pneg %p141
      %p260 = pneg %p165
      %p261 = pneg %p162
      %p262 = pneg %p191
      %p263 = pneg %p188
      %p264 = scmp.lt.s32.totalorder %s18, 1
      %s265 = scalar_select %p264, %s18, 1
      %s266 = scalar_lea.vmem %s7, %s265
      %p267 = scmp.lt.s32.totalorder %s18, 1
      %s268 = scalar_select %p267, %s18, 1
      %s269 = smul.addr %s268, 4
      %s270 = smul.addr %s269, 8
      %s271 = scalar_lea.vmem %s0, %s270
      %p272 = scmp.lt.s32.totalorder %s18, 1
      %s273 = scalar_select %p272, %s18, 1
      %s274 = scalar_lea.vmem %s7, %s273
      %v276 = vld [vmem:[%s271] sm:$0xff]
      %v277 = vld [vmem:[%s271 + $0x8] sm:$0xff]
      %v278 = vld [vmem:[%s271 + $0x10] sm:$0xff]
      %v279 = vld [vmem:[%s271 + $0x18] sm:$0xff]
      %vm284 = vcmask 1046528
      %v285 = vrot.slane %v276, 1
      %v286 = vrot.slane %v277, 1
      %v287 = vsel %vm284, %v285, %v286
      %v288 = vrot.slane %v278, 1
      %v289 = vsel %vm284, %v286, %v288
      %v290 = vrot.slane %v279, 1
      %v291 = vsel %vm284, %v288, %v290
      %vm296 = vcmask 1045504
      %v297 = vrot.slane %v276, 2
      %v298 = vrot.slane %v277, 2
      %v299 = vsel %vm296, %v297, %v298
      %v300 = vrot.slane %v278, 2
      %v301 = vsel %vm296, %v298, %v300
      %v302 = vrot.slane %v279, 2
      %v303 = vsel %vm296, %v300, %v302
      %vm308 = vcmask 1044480
      %v309 = vrot.slane %v276, 3
      %v310 = vrot.slane %v277, 3
      %v311 = vsel %vm308, %v309, %v310
      %v312 = vrot.slane %v278, 3
      %v313 = vsel %vm308, %v310, %v312
      %v314 = vrot.slane %v279, 3
      %v315 = vsel %vm308, %v312, %v314
      %v320 = vpack.c.bf16 %v277, %v276
      %v321 = vpack.c.bf16 %v289, %v287
      %v322 = vpack.c.bf16 %v301, %v299
      %v323 = vpack.c.bf16 %v313, %v311
      %v324 = vpack.c.bf16 %v279, %v278
      %v325 = vpack.c.bf16 %v290, %v291
      %v326 = vpack.c.bf16 %v302, %v303
      %v327 = vpack.c.bf16 %v314, %v315
      %v328 = vld [vmem:[%s1] sm:$0xf]
      %v329 = vld [vmem:[%s1 + $0x4] sm:$0xf]
      %v330 = vld [vmem:[%s1 + $0x8] sm:$0xf]
      %v331 = vld [vmem:[%s1 + $0xc] sm:$0xf]
      %v332 = vld [vmem:[%s1 + $0x10] sm:$0xf]
      %v333 = vld [vmem:[%s1 + $0x14] sm:$0xf]
      %v334 = vld [vmem:[%s1 + $0x18] sm:$0xf]
      %v335 = vld [vmem:[%s1 + $0x1c] sm:$0xf]
      %v336 = vld [vmem:[%s1 + $0x20] sm:$0xf]
      %v337 = vld [vmem:[%s1 + $0x24] sm:$0xf]
      %v338 = vld [vmem:[%s1 + $0x28] sm:$0xf]
      %v339 = vld [vmem:[%s1 + $0x2c] sm:$0xf]
      %v340 = vld [vmem:[%s1 + $0x30] sm:$0xf]
      %v341 = vld [vmem:[%s1 + $0x34] sm:$0xf]
      %v342 = vld [vmem:[%s1 + $0x38] sm:$0xf]
      %v343 = vld [vmem:[%s1 + $0x3c] sm:$0xf]
      %v344 = vld [vmem:[%s1 + $0x40] sm:$0xf]
      %v345 = vld [vmem:[%s1 + $0x44] sm:$0xf]
      %v346 = vld [vmem:[%s1 + $0x48] sm:$0xf]
      %v347 = vld [vmem:[%s1 + $0x4c] sm:$0xf]
      %v348 = vld [vmem:[%s1 + $0x50] sm:$0xf]
      %v349 = vld [vmem:[%s1 + $0x54] sm:$0xf]
      %v350 = vld [vmem:[%s1 + $0x58] sm:$0xf]
      %v351 = vld [vmem:[%s1 + $0x5c] sm:$0xf]
      %v352 = vld [vmem:[%s1 + $0x60] sm:$0xf]
      %v353 = vld [vmem:[%s1 + $0x64] sm:$0xf]
      %v354 = vld [vmem:[%s1 + $0x68] sm:$0xf]
      %v355 = vld [vmem:[%s1 + $0x6c] sm:$0xf]
      %v356 = vld [vmem:[%s1 + $0x70] sm:$0xf]
      %v357 = vld [vmem:[%s1 + $0x74] sm:$0xf]
      %v358 = vld [vmem:[%s1 + $0x78] sm:$0xf]
      %v359 = vld [vmem:[%s1 + $0x7c] sm:$0xf]
      %v360 = vld [vmem:[%s1 + $0x80] sm:$0xf]
      %v361 = vld [vmem:[%s1 + $0x84] sm:$0xf]
      %v362 = vld [vmem:[%s1 + $0x88] sm:$0xf]
      %v363 = vld [vmem:[%s1 + $0x8c] sm:$0xf]
      %v364 = vld [vmem:[%s1 + $0x90] sm:$0xf]
      %v365 = vld [vmem:[%s1 + $0x94] sm:$0xf]
      %v366 = vld [vmem:[%s1 + $0x98] sm:$0xf]
      %v367 = vld [vmem:[%s1 + $0x9c] sm:$0xf]
      %v368 = vld [vmem:[%s1 + $0xa0] sm:$0xf]
      %v369 = vld [vmem:[%s1 + $0xa4] sm:$0xf]
      %v370 = vld [vmem:[%s1 + $0xa8] sm:$0xf]
      %v371 = vld [vmem:[%s1 + $0xac] sm:$0xf]
      %v372 = vld [vmem:[%s1 + $0xb0] sm:$0xf]
      %v373 = vld [vmem:[%s1 + $0xb4] sm:$0xf]
      %v374 = vld [vmem:[%s1 + $0xb8] sm:$0xf]
      %v375 = vld [vmem:[%s1 + $0xbc] sm:$0xf]
      %v376 = vld [vmem:[%s1 + $0xc0] sm:$0xf]
      %v377 = vld [vmem:[%s1 + $0xc4] sm:$0xf]
      %v378 = vld [vmem:[%s1 + $0xc8] sm:$0xf]
      %v379 = vld [vmem:[%s1 + $0xcc] sm:$0xf]
      %v380 = vld [vmem:[%s1 + $0xd0] sm:$0xf]
      %v381 = vld [vmem:[%s1 + $0xd4] sm:$0xf]
      %v382 = vld [vmem:[%s1 + $0xd8] sm:$0xf]
      %v383 = vld [vmem:[%s1 + $0xdc] sm:$0xf]
      %v384 = vld [vmem:[%s1 + $0xe0] sm:$0xf]
      %v385 = vld [vmem:[%s1 + $0xe4] sm:$0xf]
      %v386 = vld [vmem:[%s1 + $0xe8] sm:$0xf]
      %v387 = vld [vmem:[%s1 + $0xec] sm:$0xf]
      %v388 = vld [vmem:[%s1 + $0xf0] sm:$0xf]
      %v389 = vld [vmem:[%s1 + $0xf4] sm:$0xf]
      %v390 = vld [vmem:[%s1 + $0xf8] sm:$0xf]
      %v391 = vld [vmem:[%s1 + $0xfc] sm:$0xf]
      %v392 = vld [vmem:[%s2] sm:$0x1]
      %v394 = vlaneseq
      %v395 = vshrl.u32 %v394, 7
      %v396 = vsub.s32 0, %v395
      %v397 = vrot.slane %v392, %v396
      %v463 = vunpack.c.l.b16 %v328
      %v464 = vunpack.c.l.b16 %v329
      %v465 = vunpack.c.l.b16 %v330
      %v466 = vunpack.c.l.b16 %v331
      %v467 = vunpack.c.l.b16 %v332
      %v468 = vunpack.c.l.b16 %v333
      %v469 = vunpack.c.l.b16 %v334
      %v470 = vunpack.c.l.b16 %v335
      %v471 = vunpack.c.l.b16 %v336
      %v472 = vunpack.c.l.b16 %v337
      %v473 = vunpack.c.l.b16 %v338
      %v474 = vunpack.c.l.b16 %v339
      %v475 = vunpack.c.l.b16 %v340
      %v476 = vunpack.c.l.b16 %v341
      %v477 = vunpack.c.l.b16 %v342
      %v478 = vunpack.c.l.b16 %v343
      %v479 = vunpack.c.l.b16 %v344
      %v480 = vunpack.c.l.b16 %v345
      %v481 = vunpack.c.l.b16 %v346
      %v482 = vunpack.c.l.b16 %v347
      %v483 = vunpack.c.l.b16 %v348
      %v484 = vunpack.c.l.b16 %v349
      %v485 = vunpack.c.l.b16 %v350
      %v486 = vunpack.c.l.b16 %v351
      %v487 = vunpack.c.l.b16 %v352
      %v488 = vunpack.c.l.b16 %v353
      %v489 = vunpack.c.l.b16 %v354
      %v490 = vunpack.c.l.b16 %v355
      %v491 = vunpack.c.l.b16 %v356
      %v492 = vunpack.c.l.b16 %v357
      %v493 = vunpack.c.l.b16 %v358
      %v494 = vunpack.c.l.b16 %v359
      %v495 = vunpack.c.l.b16 %v360
      %v496 = vunpack.c.l.b16 %v361
      %v497 = vunpack.c.l.b16 %v362
      %v498 = vunpack.c.l.b16 %v363
      %v499 = vunpack.c.l.b16 %v364
      %v500 = vunpack.c.l.b16 %v365
      %v501 = vunpack.c.l.b16 %v366
      %v502 = vunpack.c.l.b16 %v367
      %v503 = vunpack.c.l.b16 %v368
      %v504 = vunpack.c.l.b16 %v369
      %v505 = vunpack.c.l.b16 %v370
      %v506 = vunpack.c.l.b16 %v371
      %v507 = vunpack.c.l.b16 %v372
      %v508 = vunpack.c.l.b16 %v373
      %v509 = vunpack.c.l.b16 %v374
      %v510 = vunpack.c.l.b16 %v375
      %v511 = vunpack.c.l.b16 %v376
      %v512 = vunpack.c.l.b16 %v377
      %v513 = vunpack.c.l.b16 %v378
      %v514 = vunpack.c.l.b16 %v379
      %v515 = vunpack.c.l.b16 %v380
      %v516 = vunpack.c.l.b16 %v381
      %v517 = vunpack.c.l.b16 %v382
      %v518 = vunpack.c.l.b16 %v383
      %v519 = vunpack.c.l.b16 %v384
      %v520 = vunpack.c.l.b16 %v385
      %v521 = vunpack.c.l.b16 %v386
      %v522 = vunpack.c.l.b16 %v387
      %v523 = vunpack.c.l.b16 %v388
      %v524 = vunpack.c.l.b16 %v389
      %v525 = vunpack.c.l.b16 %v390
      %v526 = vunpack.c.l.b16 %v391
      %v527 = vpack.c.b16 %v464, %v463
      %v528 = vpack.c.b16 %v466, %v465
      %v529 = vpack.c.b16 %v468, %v467
      %v530 = vpack.c.b16 %v470, %v469
      %v531 = vpack.c.b16 %v472, %v471
      %v532 = vpack.c.b16 %v474, %v473
      %v533 = vpack.c.b16 %v476, %v475
      %v534 = vpack.c.b16 %v478, %v477
      %v535 = vpack.c.b16 %v480, %v479
      %v536 = vpack.c.b16 %v482, %v481
      %v537 = vpack.c.b16 %v484, %v483
      %v538 = vpack.c.b16 %v486, %v485
      %v539 = vpack.c.b16 %v488, %v487
      %v540 = vpack.c.b16 %v490, %v489
      %v541 = vpack.c.b16 %v492, %v491
      %v542 = vpack.c.b16 %v494, %v493
      %v543 = vpack.c.b16 %v496, %v495
      %v544 = vpack.c.b16 %v498, %v497
      %v545 = vpack.c.b16 %v500, %v499
      %v546 = vpack.c.b16 %v502, %v501
      %v547 = vpack.c.b16 %v504, %v503
      %v548 = vpack.c.b16 %v506, %v505
      %v549 = vpack.c.b16 %v508, %v507
      %v550 = vpack.c.b16 %v510, %v509
      %v551 = vpack.c.b16 %v512, %v511
      %v552 = vpack.c.b16 %v514, %v513
      %v553 = vpack.c.b16 %v516, %v515
      %v554 = vpack.c.b16 %v518, %v517
      %v555 = vpack.c.b16 %v520, %v519
      %v556 = vpack.c.b16 %v522, %v521
      %v557 = vpack.c.b16 %v524, %v523
      %v558 = vpack.c.b16 %v526, %v525
      %591 = vmatprep.subr.bf16.mxu0 0
      %592 = vmatpush1.bf16.msra.mxu0 %v534
      %593 = vmatprep.subr.bf16.mxu0 0
      %594 = vmatpush1.bf16.msra.mxu0 %v533
      %595 = vmatprep.subr.bf16.mxu0 0
      %596 = vmatpush1.bf16.msra.mxu0 %v532
      %597 = vmatprep.subr.bf16.mxu0 0
      %598 = vmatpush1.bf16.msra.mxu0 %v531
      %599 = vmatprep.subr.bf16.mxu0 0
      %600 = vmatpush1.bf16.msra.mxu0 %v530
      %601 = vmatprep.subr.bf16.mxu0 0
      %602 = vmatpush1.bf16.msra.mxu0 %v529
      %603 = vmatprep.subr.bf16.mxu0 0
      %604 = vmatpush1.bf16.msra.mxu0 %v528
      %605 = vmatprep.subr.bf16.mxu0 0
      %606 = vmatpush1.bf16.msra.mxu0 %v527
      %607 = vmatprep.subr.bf16.mxu0 0
      %608 = vmatpush2.bf16.msra.mxu0 %v542
      %609 = vmatprep.subr.bf16.mxu0 0
      %610 = vmatpush2.bf16.msra.mxu0 %v541
      %611 = vmatprep.subr.bf16.mxu0 0
      %612 = vmatpush2.bf16.msra.mxu0 %v540
      %613 = vmatprep.subr.bf16.mxu0 0
      %614 = vmatpush2.bf16.msra.mxu0 %v539
      %615 = vmatprep.subr.bf16.mxu0 0
      %616 = vmatpush2.bf16.msra.mxu0 %v538
      %617 = vmatprep.subr.bf16.mxu0 0
      %618 = vmatpush2.bf16.msra.mxu0 %v537
      %619 = vmatprep.subr.bf16.mxu0 0
      %620 = vmatpush2.bf16.msra.mxu0 %v536
      %621 = vmatprep.subr.bf16.mxu0 0
      %622 = vmatpush2.bf16.msra.mxu0 %v535
      %623 = vmatprep.mubr.bf16.mxu0 %v321
      %624 = vmatmul.mubr.bf16.gmra.mxu0 %v320
      %v625 = vpop.f32.mrf.mxu0
      %v626 = vadd.f32 %v397, %v625
      %v627 = vpop.f32.mrf.mxu0
      %v628 = vpop.f32.mrf.mxu0
      %v629 = vadd.f32 %v397, %v628
      %v630 = vpop.f32.mrf.mxu0
      %631 = vmatprep.mubr.bf16.mxu0 %v325
      %632 = vmatmul.mubr.bf16.gmra.mxu0 %v324
      %v633 = vpop.f32.mrf.mxu0
      %v634 = vadd.f32 %v397, %v633
      %v635 = vpop.f32.mrf.mxu0
      %v636 = vpop.f32.mrf.mxu0
      %v637 = vadd.f32 %v397, %v636
      %v638 = vpop.f32.mrf.mxu0
      %639 = vdwg.mxu0
      %640 = vmatprep.subr.bf16.mxu0 0
      %641 = vmatpush1.bf16.msra.mxu0 %v550
      %642 = vmatprep.subr.bf16.mxu0 0
      %643 = vmatpush1.bf16.msra.mxu0 %v549
      %644 = vmatprep.subr.bf16.mxu0 0
      %645 = vmatpush1.bf16.msra.mxu0 %v548
      %646 = vmatprep.subr.bf16.mxu0 0
      %647 = vmatpush1.bf16.msra.mxu0 %v547
      %648 = vmatprep.subr.bf16.mxu0 0
      %649 = vmatpush1.bf16.msra.mxu0 %v546
      %650 = vmatprep.subr.bf16.mxu0 0
      %651 = vmatpush1.bf16.msra.mxu0 %v545
      %652 = vmatprep.subr.bf16.mxu0 0
      %653 = vmatpush1.bf16.msra.mxu0 %v544
      %654 = vmatprep.subr.bf16.mxu0 0
      %655 = vmatpush1.bf16.msra.mxu0 %v543
      %656 = vmatprep.subr.bf16.mxu0 0
      %657 = vmatpush2.bf16.msra.mxu0 %v558
      %658 = vmatprep.subr.bf16.mxu0 0
      %659 = vmatpush2.bf16.msra.mxu0 %v557
      %660 = vmatprep.subr.bf16.mxu0 0
      %661 = vmatpush2.bf16.msra.mxu0 %v556
      %662 = vmatprep.subr.bf16.mxu0 0
      %663 = vmatpush2.bf16.msra.mxu0 %v555
      %664 = vmatprep.subr.bf16.mxu0 0
      %665 = vmatpush2.bf16.msra.mxu0 %v554
      %666 = vmatprep.subr.bf16.mxu0 0
      %667 = vmatpush2.bf16.msra.mxu0 %v553
      %668 = vmatprep.subr.bf16.mxu0 0
      %669 = vmatpush2.bf16.msra.mxu0 %v552
      %670 = vmatprep.subr.bf16.mxu0 0
      %671 = vmatpush2.bf16.msra.mxu0 %v551
      %672 = vmatprep.mubr.bf16.mxu0 %v323
      %673 = vmatmul.mubr.bf16.gmra.mxu0 %v322
      %v674 = vpop.f32.mrf.mxu0
      %v675 = vadd.f32 %v626, %v674
      %v676 = vpop.f32.mrf.mxu0
      %v677 = vpop.f32.mrf.mxu0
      %v678 = vadd.f32 %v629, %v677
      %v679 = vpop.f32.mrf.mxu0
      %680 = vmatprep.mubr.bf16.mxu0 %v327
      %681 = vmatmul.mubr.bf16.gmra.mxu0 %v326
      %v682 = vpop.f32.mrf.mxu0
      %v683 = vadd.f32 %v634, %v682
      %v684 = vpop.f32.mrf.mxu0
      %v685 = vpop.f32.mrf.mxu0
      %v686 = vadd.f32 %v637, %v685
      %v687 = vpop.f32.mrf.mxu0
      %688 = vdwg.mxu0
      %v689 = vmax.f32 %v675, 0.0
      %v690 = vmax.f32 %v678, 0.0
      %v691 = vmax.f32 %v683, 0.0
      %v692 = vmax.f32 %v686, 0.0
      %v697 = vrot.slane %v689, 1
      %v698 = vrot.slane %v690, 1
      %v699 = vsel %vm284, %v697, %v698
      %v700 = vrot.slane %v691, 1
      %v701 = vsel %vm284, %v698, %v700
      %v702 = vrot.slane %v692, 1
      %v703 = vsel %vm284, %v700, %v702
      %v707 = vrot.slane %v689, 2
      %v708 = vrot.slane %v690, 2
      %v709 = vsel %vm296, %v707, %v708
      %v710 = vrot.slane %v691, 2
      %v711 = vsel %vm296, %v708, %v710
      %v712 = vrot.slane %v692, 2
      %v713 = vsel %vm296, %v710, %v712
      %v717 = vrot.slane %v689, 3
      %v718 = vrot.slane %v690, 3
      %v719 = vsel %vm308, %v717, %v718
      %v720 = vrot.slane %v691, 3
      %v721 = vsel %vm308, %v718, %v720
      %v722 = vrot.slane %v692, 3
      %v723 = vsel %vm308, %v720, %v722
      %vm727 = vcmask 1043456
      %v728 = vrot.slane %v689, 4
      %v729 = vrot.slane %v690, 4
      %v730 = vsel %vm727, %v728, %v729
      %v731 = vrot.slane %v691, 4
      %v732 = vsel %vm727, %v729, %v731
      %v733 = vrot.slane %v692, 4
      %v734 = vsel %vm727, %v731, %v733
      %vm738 = vcmask 1042432
      %v739 = vrot.slane %v689, 5
      %v740 = vrot.slane %v690, 5
      %v741 = vsel %vm738, %v739, %v740
      %v742 = vrot.slane %v691, 5
      %v743 = vsel %vm738, %v740, %v742
      %v744 = vrot.slane %v692, 5
      %v745 = vsel %vm738, %v742, %v744
      %v749 = vpack.c.bf16 %v690, %v689
      %v750 = vpack.c.bf16 %v701, %v699
      %v751 = vpack.c.bf16 %v711, %v709
      %v752 = vpack.c.bf16 %v721, %v719
      %v753 = vpack.c.bf16 %v732, %v730
      %v754 = vpack.c.bf16 %v743, %v741
      %v755 = vpack.c.bf16 %v691, %v691
      %v756 = vpack.c.bf16 %v703, %v703
      %v757 = vpack.c.bf16 %v713, %v713
      %v758 = vpack.c.bf16 %v723, %v723
      %v759 = vpack.c.bf16 %v734, %v734
      %v760 = vpack.c.bf16 %v745, %v745
      %v761 = vld [vmem:[%s3] sm:$0xf]
      %v762 = vld [vmem:[%s3 + $0x4] sm:$0xf]
      %v763 = vld [vmem:[%s3 + $0x8] sm:$0xf]
      %v764 = vld [vmem:[%s3 + $0xc] sm:$0xf]
      %v765 = vld [vmem:[%s3 + $0x10] sm:$0xf]
      %v766 = vld [vmem:[%s3 + $0x14] sm:$0xf]
      %v767 = vld [vmem:[%s3 + $0x18] sm:$0xf]
      %v768 = vld [vmem:[%s3 + $0x1c] sm:$0xf]
      %v769 = vld [vmem:[%s3 + $0x20] sm:$0xf]
      %v770 = vld [vmem:[%s3 + $0x24] sm:$0xf]
      %v771 = vld [vmem:[%s3 + $0x28] sm:$0xf]
      %v772 = vld [vmem:[%s3 + $0x2c] sm:$0xf]
      %v773 = vld [vmem:[%s3 + $0x30] sm:$0xf]
      %v774 = vld [vmem:[%s3 + $0x34] sm:$0xf]
      %v775 = vld [vmem:[%s3 + $0x38] sm:$0xf]
      %v776 = vld [vmem:[%s3 + $0x3c] sm:$0xf]
      %v777 = vld [vmem:[%s3 + $0x40] sm:$0xf]
      %v778 = vld [vmem:[%s3 + $0x44] sm:$0xf]
      %v779 = vld [vmem:[%s3 + $0x48] sm:$0xf]
      %v780 = vld [vmem:[%s3 + $0x4c] sm:$0xf]
      %v781 = vld [vmem:[%s3 + $0x50] sm:$0xf]
      %v782 = vld [vmem:[%s3 + $0x54] sm:$0xf]
      %v783 = vld [vmem:[%s3 + $0x58] sm:$0xf]
      %v784 = vld [vmem:[%s3 + $0x5c] sm:$0xf]
      %v785 = vld [vmem:[%s3 + $0x60] sm:$0xf]
      %v786 = vld [vmem:[%s3 + $0x64] sm:$0xf]
      %v787 = vld [vmem:[%s3 + $0x68] sm:$0xf]
      %v788 = vld [vmem:[%s3 + $0x6c] sm:$0xf]
      %v789 = vld [vmem:[%s3 + $0x70] sm:$0xf]
      %v790 = vld [vmem:[%s3 + $0x74] sm:$0xf]
      %v791 = vld [vmem:[%s3 + $0x78] sm:$0xf]
      %v792 = vld [vmem:[%s3 + $0x7c] sm:$0xf]
      %v793 = vld [vmem:[%s3 + $0x80] sm:$0xf]
      %v794 = vld [vmem:[%s3 + $0x84] sm:$0xf]
      %v795 = vld [vmem:[%s3 + $0x88] sm:$0xf]
      %v796 = vld [vmem:[%s3 + $0x8c] sm:$0xf]
      %v797 = vld [vmem:[%s3 + $0x90] sm:$0xf]
      %v798 = vld [vmem:[%s3 + $0x94] sm:$0xf]
      %v799 = vld [vmem:[%s3 + $0x98] sm:$0xf]
      %v800 = vld [vmem:[%s3 + $0x9c] sm:$0xf]
      %v801 = vld [vmem:[%s3 + $0xa0] sm:$0xf]
      %v802 = vld [vmem:[%s3 + $0xa4] sm:$0xf]
      %v803 = vld [vmem:[%s3 + $0xa8] sm:$0xf]
      %v804 = vld [vmem:[%s3 + $0xac] sm:$0xf]
      %v805 = vld [vmem:[%s3 + $0xb0] sm:$0xf]
      %v806 = vld [vmem:[%s3 + $0xb4] sm:$0xf]
      %v807 = vld [vmem:[%s3 + $0xb8] sm:$0xf]
      %v808 = vld [vmem:[%s3 + $0xbc] sm:$0xf]
      %v809 = vld [vmem:[%s3 + $0xc0] sm:$0xf]
      %v810 = vld [vmem:[%s3 + $0xc4] sm:$0xf]
      %v811 = vld [vmem:[%s3 + $0xc8] sm:$0xf]
      %v812 = vld [vmem:[%s3 + $0xcc] sm:$0xf]
      %v813 = vld [vmem:[%s3 + $0xd0] sm:$0xf]
      %v814 = vld [vmem:[%s3 + $0xd4] sm:$0xf]
      %v815 = vld [vmem:[%s3 + $0xd8] sm:$0xf]
      %v816 = vld [vmem:[%s3 + $0xdc] sm:$0xf]
      %v817 = vld [vmem:[%s3 + $0xe0] sm:$0xf]
      %v818 = vld [vmem:[%s3 + $0xe4] sm:$0xf]
      %v819 = vld [vmem:[%s3 + $0xe8] sm:$0xf]
      %v820 = vld [vmem:[%s3 + $0xec] sm:$0xf]
      %v821 = vld [vmem:[%s3 + $0xf0] sm:$0xf]
      %v822 = vld [vmem:[%s3 + $0xf4] sm:$0xf]
      %v823 = vld [vmem:[%s3 + $0xf8] sm:$0xf]
      %v824 = vld [vmem:[%s3 + $0xfc] sm:$0xf]
      %v825 = vld [vmem:[%s3 + $0x100] sm:$0xf]
      %v826 = vld [vmem:[%s3 + $0x104] sm:$0xf]
      %v827 = vld [vmem:[%s3 + $0x108] sm:$0xf]
      %v828 = vld [vmem:[%s3 + $0x10c] sm:$0xf]
      %v829 = vld [vmem:[%s3 + $0x110] sm:$0xf]
      %v830 = vld [vmem:[%s3 + $0x114] sm:$0xf]
      %v831 = vld [vmem:[%s3 + $0x118] sm:$0xf]
      %v832 = vld [vmem:[%s3 + $0x11c] sm:$0xf]
      %v833 = vld [vmem:[%s3 + $0x120] sm:$0xf]
      %v834 = vld [vmem:[%s3 + $0x124] sm:$0xf]
      %v835 = vld [vmem:[%s3 + $0x128] sm:$0xf]
      %v836 = vld [vmem:[%s3 + $0x12c] sm:$0xf]
      %v837 = vld [vmem:[%s3 + $0x130] sm:$0xf]
      %v838 = vld [vmem:[%s3 + $0x134] sm:$0xf]
      %v839 = vld [vmem:[%s3 + $0x138] sm:$0xf]
      %v840 = vld [vmem:[%s3 + $0x13c] sm:$0xf]
      %v841 = vld [vmem:[%s3 + $0x140] sm:$0xf]
      %v842 = vld [vmem:[%s3 + $0x144] sm:$0xf]
      %v843 = vld [vmem:[%s3 + $0x148] sm:$0xf]
      %v844 = vld [vmem:[%s3 + $0x14c] sm:$0xf]
      %v845 = vld [vmem:[%s3 + $0x150] sm:$0xf]
      %v846 = vld [vmem:[%s3 + $0x154] sm:$0xf]
      %v847 = vld [vmem:[%s3 + $0x158] sm:$0xf]
      %v848 = vld [vmem:[%s3 + $0x15c] sm:$0xf]
      %v849 = vld [vmem:[%s3 + $0x160] sm:$0xf]
      %v850 = vld [vmem:[%s3 + $0x164] sm:$0xf]
      %v851 = vld [vmem:[%s3 + $0x168] sm:$0xf]
      %v852 = vld [vmem:[%s3 + $0x16c] sm:$0xf]
      %v853 = vld [vmem:[%s3 + $0x170] sm:$0xf]
      %v854 = vld [vmem:[%s3 + $0x174] sm:$0xf]
      %v855 = vld [vmem:[%s3 + $0x178] sm:$0xf]
      %v856 = vld [vmem:[%s3 + $0x17c] sm:$0xf]
      %v857 = vld [vmem:[%s4] sm:$0x1]
      %v859 = vlaneseq
      %v860 = vshrl.u32 %v859, 7
      %v861 = vsub.s32 0, %v860
      %v862 = vrot.slane %v857, %v861
      %v960 = vunpack.c.l.b16 %v761
      %v961 = vunpack.c.l.b16 %v762
      %v962 = vunpack.c.l.b16 %v763
      %v963 = vunpack.c.l.b16 %v764
      %v964 = vunpack.c.l.b16 %v765
      %v965 = vunpack.c.l.b16 %v766
      %v966 = vunpack.c.l.b16 %v767
      %v967 = vunpack.c.l.b16 %v768
      %v968 = vunpack.c.l.b16 %v769
      %v969 = vunpack.c.l.b16 %v770
      %v970 = vunpack.c.l.b16 %v771
      %v971 = vunpack.c.l.b16 %v772
      %v972 = vunpack.c.l.b16 %v773
      %v973 = vunpack.c.l.b16 %v774
      %v974 = vunpack.c.l.b16 %v775
      %v975 = vunpack.c.l.b16 %v776
      %v976 = vunpack.c.l.b16 %v777
      %v977 = vunpack.c.l.b16 %v778
      %v978 = vunpack.c.l.b16 %v779
      %v979 = vunpack.c.l.b16 %v780
      %v980 = vunpack.c.l.b16 %v781
      %v981 = vunpack.c.l.b16 %v782
      %v982 = vunpack.c.l.b16 %v783
      %v983 = vunpack.c.l.b16 %v784
      %v984 = vunpack.c.l.b16 %v785
      %v985 = vunpack.c.l.b16 %v786
      %v986 = vunpack.c.l.b16 %v787
      %v987 = vunpack.c.l.b16 %v788
      %v988 = vunpack.c.l.b16 %v789
      %v989 = vunpack.c.l.b16 %v790
      %v990 = vunpack.c.l.b16 %v791
      %v991 = vunpack.c.l.b16 %v792
      %v992 = vunpack.c.l.b16 %v793
      %v993 = vunpack.c.l.b16 %v794
      %v994 = vunpack.c.l.b16 %v795
      %v995 = vunpack.c.l.b16 %v796
      %v996 = vunpack.c.l.b16 %v797
      %v997 = vunpack.c.l.b16 %v798
      %v998 = vunpack.c.l.b16 %v799
      %v999 = vunpack.c.l.b16 %v800
      %v1000 = vunpack.c.l.b16 %v801
      %v1001 = vunpack.c.l.b16 %v802
      %v1002 = vunpack.c.l.b16 %v803
      %v1003 = vunpack.c.l.b16 %v804
      %v1004 = vunpack.c.l.b16 %v805
      %v1005 = vunpack.c.l.b16 %v806
      %v1006 = vunpack.c.l.b16 %v807
      %v1007 = vunpack.c.l.b16 %v808
      %v1008 = vunpack.c.l.b16 %v809
      %v1009 = vunpack.c.l.b16 %v810
      %v1010 = vunpack.c.l.b16 %v811
      %v1011 = vunpack.c.l.b16 %v812
      %v1012 = vunpack.c.l.b16 %v813
      %v1013 = vunpack.c.l.b16 %v814
      %v1014 = vunpack.c.l.b16 %v815
      %v1015 = vunpack.c.l.b16 %v816
      %v1016 = vunpack.c.l.b16 %v817
      %v1017 = vunpack.c.l.b16 %v818
      %v1018 = vunpack.c.l.b16 %v819
      %v1019 = vunpack.c.l.b16 %v820
      %v1020 = vunpack.c.l.b16 %v821
      %v1021 = vunpack.c.l.b16 %v822
      %v1022 = vunpack.c.l.b16 %v823
      %v1023 = vunpack.c.l.b16 %v824
      %v1024 = vunpack.c.l.b16 %v825
      %v1025 = vunpack.c.l.b16 %v826
      %v1026 = vunpack.c.l.b16 %v827
      %v1027 = vunpack.c.l.b16 %v828
      %v1028 = vunpack.c.l.b16 %v829
      %v1029 = vunpack.c.l.b16 %v830
      %v1030 = vunpack.c.l.b16 %v831
      %v1031 = vunpack.c.l.b16 %v832
      %v1032 = vunpack.c.l.b16 %v833
      %v1033 = vunpack.c.l.b16 %v834
      %v1034 = vunpack.c.l.b16 %v835
      %v1035 = vunpack.c.l.b16 %v836
      %v1036 = vunpack.c.l.b16 %v837
      %v1037 = vunpack.c.l.b16 %v838
      %v1038 = vunpack.c.l.b16 %v839
      %v1039 = vunpack.c.l.b16 %v840
      %v1040 = vunpack.c.l.b16 %v841
      %v1041 = vunpack.c.l.b16 %v842
      %v1042 = vunpack.c.l.b16 %v843
      %v1043 = vunpack.c.l.b16 %v844
      %v1044 = vunpack.c.l.b16 %v845
      %v1045 = vunpack.c.l.b16 %v846
      %v1046 = vunpack.c.l.b16 %v847
      %v1047 = vunpack.c.l.b16 %v848
      %v1048 = vunpack.c.l.b16 %v849
      %v1049 = vunpack.c.l.b16 %v850
      %v1050 = vunpack.c.l.b16 %v851
      %v1051 = vunpack.c.l.b16 %v852
      %v1052 = vunpack.c.l.b16 %v853
      %v1053 = vunpack.c.l.b16 %v854
      %v1054 = vunpack.c.l.b16 %v855
      %v1055 = vunpack.c.l.b16 %v856
      %v1056 = vpack.c.b16 %v961, %v960
      %v1057 = vpack.c.b16 %v963, %v962
      %v1058 = vpack.c.b16 %v965, %v964
      %v1059 = vpack.c.b16 %v967, %v966
      %v1060 = vpack.c.b16 %v969, %v968
      %v1061 = vpack.c.b16 %v971, %v970
      %v1062 = vpack.c.b16 %v973, %v972
      %v1063 = vpack.c.b16 %v975, %v974
      %v1064 = vpack.c.b16 %v977, %v976
      %v1065 = vpack.c.b16 %v979, %v978
      %v1066 = vpack.c.b16 %v981, %v980
      %v1067 = vpack.c.b16 %v983, %v982
      %v1068 = vpack.c.b16 %v985, %v984
      %v1069 = vpack.c.b16 %v987, %v986
      %v1070 = vpack.c.b16 %v989, %v988
      %v1071 = vpack.c.b16 %v991, %v990
      %v1072 = vpack.c.b16 %v993, %v992
      %v1073 = vpack.c.b16 %v995, %v994
      %v1074 = vpack.c.b16 %v997, %v996
      %v1075 = vpack.c.b16 %v999, %v998
      %v1076 = vpack.c.b16 %v1001, %v1000
      %v1077 = vpack.c.b16 %v1003, %v1002
      %v1078 = vpack.c.b16 %v1005, %v1004
      %v1079 = vpack.c.b16 %v1007, %v1006
      %v1080 = vpack.c.b16 %v1009, %v1008
      %v1081 = vpack.c.b16 %v1011, %v1010
      %v1082 = vpack.c.b16 %v1013, %v1012
      %v1083 = vpack.c.b16 %v1015, %v1014
      %v1084 = vpack.c.b16 %v1017, %v1016
      %v1085 = vpack.c.b16 %v1019, %v1018
      %v1086 = vpack.c.b16 %v1021, %v1020
      %v1087 = vpack.c.b16 %v1023, %v1022
      %v1088 = vpack.c.b16 %v1025, %v1024
      %v1089 = vpack.c.b16 %v1027, %v1026
      %v1090 = vpack.c.b16 %v1029, %v1028
      %v1091 = vpack.c.b16 %v1031, %v1030
      %v1092 = vpack.c.b16 %v1033, %v1032
      %v1093 = vpack.c.b16 %v1035, %v1034
      %v1094 = vpack.c.b16 %v1037, %v1036
      %v1095 = vpack.c.b16 %v1039, %v1038
      %v1096 = vpack.c.b16 %v1041, %v1040
      %v1097 = vpack.c.b16 %v1043, %v1042
      %v1098 = vpack.c.b16 %v1045, %v1044
      %v1099 = vpack.c.b16 %v1047, %v1046
      %v1100 = vpack.c.b16 %v1049, %v1048
      %v1101 = vpack.c.b16 %v1051, %v1050
      %v1102 = vpack.c.b16 %v1053, %v1052
      %v1103 = vpack.c.b16 %v1055, %v1054
      %1152 = vmatprep.subr.bf16.mxu0 0
      %1153 = vmatpush1.bf16.msra.mxu0 %v1063
      %1154 = vmatprep.subr.bf16.mxu0 0
      %1155 = vmatpush1.bf16.msra.mxu0 %v1062
      %1156 = vmatprep.subr.bf16.mxu0 0
      %1157 = vmatpush1.bf16.msra.mxu0 %v1061
      %1158 = vmatprep.subr.bf16.mxu0 0
      %1159 = vmatpush1.bf16.msra.mxu0 %v1060
      %1160 = vmatprep.subr.bf16.mxu0 0
      %1161 = vmatpush1.bf16.msra.mxu0 %v1059
      %1162 = vmatprep.subr.bf16.mxu0 0
      %1163 = vmatpush1.bf16.msra.mxu0 %v1058
      %1164 = vmatprep.subr.bf16.mxu0 0
      %1165 = vmatpush1.bf16.msra.mxu0 %v1057
      %1166 = vmatprep.subr.bf16.mxu0 0
      %1167 = vmatpush1.bf16.msra.mxu0 %v1056
      %1168 = vmatprep.subr.bf16.mxu0 0
      %1169 = vmatpush2.bf16.msra.mxu0 %v1071
      %1170 = vmatprep.subr.bf16.mxu0 0
      %1171 = vmatpush2.bf16.msra.mxu0 %v1070
      %1172 = vmatprep.subr.bf16.mxu0 0
      %1173 = vmatpush2.bf16.msra.mxu0 %v1069
      %1174 = vmatprep.subr.bf16.mxu0 0
      %1175 = vmatpush2.bf16.msra.mxu0 %v1068
      %1176 = vmatprep.subr.bf16.mxu0 0
      %1177 = vmatpush2.bf16.msra.mxu0 %v1067
      %1178 = vmatprep.subr.bf16.mxu0 0
      %1179 = vmatpush2.bf16.msra.mxu0 %v1066
      %1180 = vmatprep.subr.bf16.mxu0 0
      %1181 = vmatpush2.bf16.msra.mxu0 %v1065
      %1182 = vmatprep.subr.bf16.mxu0 0
      %1183 = vmatpush2.bf16.msra.mxu0 %v1064
      %1184 = vmatprep.mubr.bf16.mxu0 %v750
      %1185 = vmatmul.mubr.bf16.gmra.mxu0 %v749
      %v1186 = vpop.f32.mrf.mxu0
      %v1187 = vadd.f32 %v862, %v1186
      %v1188 = vpop.f32.mrf.mxu0
      %v1189 = vpop.f32.mrf.mxu0
      %v1190 = vadd.f32 %v862, %v1189
      %v1191 = vpop.f32.mrf.mxu0
      %1192 = vmatprep.mubr.bf16.mxu0 %v756
      %1193 = vmatmul.mubr.bf16.gmra.mxu0 %v755
      %v1194 = vpop.f32.mrf.mxu0
      %v1195 = vadd.f32 %v862, %v1194
      %v1196 = vpop.f32.mrf.mxu0
      %v1197 = vpop.f32.mrf.mxu0
      %v1198 = vpop.f32.mrf.mxu0
      %1199 = vdwg.mxu0
      %1200 = vmatprep.subr.bf16.mxu0 0
      %1201 = vmatpush1.bf16.msra.mxu0 %v1079
      %1202 = vmatprep.subr.bf16.mxu0 0
      %1203 = vmatpush1.bf16.msra.mxu0 %v1078
      %1204 = vmatprep.subr.bf16.mxu0 0
      %1205 = vmatpush1.bf16.msra.mxu0 %v1077
      %1206 = vmatprep.subr.bf16.mxu0 0
      %1207 = vmatpush1.bf16.msra.mxu0 %v1076
      %1208 = vmatprep.subr.bf16.mxu0 0
      %1209 = vmatpush1.bf16.msra.mxu0 %v1075
      %1210 = vmatprep.subr.bf16.mxu0 0
      %1211 = vmatpush1.bf16.msra.mxu0 %v1074
      %1212 = vmatprep.subr.bf16.mxu0 0
      %1213 = vmatpush1.bf16.msra.mxu0 %v1073
      %1214 = vmatprep.subr.bf16.mxu0 0
      %1215 = vmatpush1.bf16.msra.mxu0 %v1072
      %1216 = vmatprep.subr.bf16.mxu0 0
      %1217 = vmatpush2.bf16.msra.mxu0 %v1087
      %1218 = vmatprep.subr.bf16.mxu0 0
      %1219 = vmatpush2.bf16.msra.mxu0 %v1086
      %1220 = vmatprep.subr.bf16.mxu0 0
      %1221 = vmatpush2.bf16.msra.mxu0 %v1085
      %1222 = vmatprep.subr.bf16.mxu0 0
      %1223 = vmatpush2.bf16.msra.mxu0 %v1084
      %1224 = vmatprep.subr.bf16.mxu0 0
      %1225 = vmatpush2.bf16.msra.mxu0 %v1083
      %1226 = vmatprep.subr.bf16.mxu0 0
      %1227 = vmatpush2.bf16.msra.mxu0 %v1082
      %1228 = vmatprep.subr.bf16.mxu0 0
      %1229 = vmatpush2.bf16.msra.mxu0 %v1081
      %1230 = vmatprep.subr.bf16.mxu0 0
      %1231 = vmatpush2.bf16.msra.mxu0 %v1080
      %1232 = vmatprep.mubr.bf16.mxu0 %v752
      %1233 = vmatmul.mubr.bf16.gmra.mxu0 %v751
      %v1234 = vpop.f32.mrf.mxu0
      %v1235 = vadd.f32 %v1187, %v1234
      %v1236 = vpop.f32.mrf.mxu0
      %v1237 = vpop.f32.mrf.mxu0
      %v1238 = vadd.f32 %v1190, %v1237
      %v1239 = vpop.f32.mrf.mxu0
      %1240 = vmatprep.mubr.bf16.mxu0 %v758
      %1241 = vmatmul.mubr.bf16.gmra.mxu0 %v757
      %v1242 = vpop.f32.mrf.mxu0
      %v1243 = vadd.f32 %v1195, %v1242
      %v1244 = vpop.f32.mrf.mxu0
      %v1245 = vpop.f32.mrf.mxu0
      %v1246 = vpop.f32.mrf.mxu0
      %1247 = vdwg.mxu0
      %1248 = vmatprep.subr.bf16.mxu0 0
      %1249 = vmatpush1.bf16.msra.mxu0 %v1095
      %1250 = vmatprep.subr.bf16.mxu0 0
      %1251 = vmatpush1.bf16.msra.mxu0 %v1094
      %1252 = vmatprep.subr.bf16.mxu0 0
      %1253 = vmatpush1.bf16.msra.mxu0 %v1093
      %1254 = vmatprep.subr.bf16.mxu0 0
      %1255 = vmatpush1.bf16.msra.mxu0 %v1092
      %1256 = vmatprep.subr.bf16.mxu0 0
      %1257 = vmatpush1.bf16.msra.mxu0 %v1091
      %1258 = vmatprep.subr.bf16.mxu0 0
      %1259 = vmatpush1.bf16.msra.mxu0 %v1090
      %1260 = vmatprep.subr.bf16.mxu0 0
      %1261 = vmatpush1.bf16.msra.mxu0 %v1089
      %1262 = vmatprep.subr.bf16.mxu0 0
      %1263 = vmatpush1.bf16.msra.mxu0 %v1088
      %1264 = vmatprep.subr.bf16.mxu0 0
      %1265 = vmatpush2.bf16.msra.mxu0 %v1103
      %1266 = vmatprep.subr.bf16.mxu0 0
      %1267 = vmatpush2.bf16.msra.mxu0 %v1102
      %1268 = vmatprep.subr.bf16.mxu0 0
      %1269 = vmatpush2.bf16.msra.mxu0 %v1101
      %1270 = vmatprep.subr.bf16.mxu0 0
      %1271 = vmatpush2.bf16.msra.mxu0 %v1100
      %1272 = vmatprep.subr.bf16.mxu0 0
      %1273 = vmatpush2.bf16.msra.mxu0 %v1099
      %1274 = vmatprep.subr.bf16.mxu0 0
      %1275 = vmatpush2.bf16.msra.mxu0 %v1098
      %1276 = vmatprep.subr.bf16.mxu0 0
      %1277 = vmatpush2.bf16.msra.mxu0 %v1097
      %1278 = vmatprep.subr.bf16.mxu0 0
      %1279 = vmatpush2.bf16.msra.mxu0 %v1096
      %1280 = vmatprep.mubr.bf16.mxu0 %v754
      %1281 = vmatmul.mubr.bf16.gmra.mxu0 %v753
      %v1282 = vpop.f32.mrf.mxu0
      %v1283 = vadd.f32 %v1235, %v1282
      %v1284 = vpop.f32.mrf.mxu0
      %v1285 = vpop.f32.mrf.mxu0
      %v1286 = vadd.f32 %v1238, %v1285
      %v1287 = vpop.f32.mrf.mxu0
      %1288 = vmatprep.mubr.bf16.mxu0 %v760
      %1289 = vmatmul.mubr.bf16.gmra.mxu0 %v759
      %v1290 = vpop.f32.mrf.mxu0
      %v1291 = vadd.f32 %v1243, %v1290
      %v1292 = vpop.f32.mrf.mxu0
      %v1293 = vpop.f32.mrf.mxu0
      %v1294 = vpop.f32.mrf.mxu0
      %1295 = vdwg.mxu0
      %v1296 = vmax.f32 %v1283, 0.0
      %v1297 = vmax.f32 %v1286, 0.0
      %v1298 = vmax.f32 %v1291, 0.0
      %v1302 = vrot.slane %v1296, 1
      %v1303 = vrot.slane %v1297, 1
      %v1304 = vsel %vm284, %v1302, %v1303
      %v1305 = vrot.slane %v1298, 1
      %v1306 = vsel %vm284, %v1303, %v1305
      %v1310 = vrot.slane %v1296, 2
      %v1311 = vrot.slane %v1297, 2
      %v1312 = vsel %vm296, %v1310, %v1311
      %v1313 = vrot.slane %v1298, 2
      %v1314 = vsel %vm296, %v1311, %v1313
      %v1318 = vrot.slane %v1296, 3
      %v1319 = vrot.slane %v1297, 3
      %v1320 = vsel %vm308, %v1318, %v1319
      %v1321 = vrot.slane %v1298, 3
      %v1322 = vsel %vm308, %v1319, %v1321
      %v1326 = vrot.slane %v1296, 4
      %v1327 = vrot.slane %v1297, 4
      %v1328 = vsel %vm727, %v1326, %v1327
      %v1329 = vrot.slane %v1298, 4
      %v1330 = vsel %vm727, %v1327, %v1329
      %v1334 = vrot.slane %v1296, 5
      %v1335 = vrot.slane %v1297, 5
      %v1336 = vsel %vm738, %v1334, %v1335
      %v1337 = vrot.slane %v1298, 5
      %v1338 = vsel %vm738, %v1335, %v1337
      %vm1342 = vcmask 1041408
      %v1343 = vrot.slane %v1296, 6
      %v1344 = vrot.slane %v1297, 6
      %v1345 = vsel %vm1342, %v1343, %v1344
      %v1346 = vrot.slane %v1298, 6
      %v1347 = vsel %vm1342, %v1344, %v1346
      %vm1351 = vcmask 1040384
      %v1352 = vrot.slane %v1296, 7
      %v1353 = vrot.slane %v1297, 7
      %v1354 = vsel %vm1351, %v1352, %v1353
      %v1355 = vrot.slane %v1298, 7
      %v1356 = vsel %vm1351, %v1353, %v1355
      %v1360 = vpack.c.bf16 %v1297, %v1296
      %v1361 = vpack.c.bf16 %v1306, %v1304
      %v1362 = vpack.c.bf16 %v1314, %v1312
      %v1363 = vpack.c.bf16 %v1322, %v1320
      %v1364 = vpack.c.bf16 %v1330, %v1328
      %v1365 = vpack.c.bf16 %v1338, %v1336
      %v1366 = vpack.c.bf16 %v1347, %v1345
      %v1367 = vpack.c.bf16 %v1356, %v1354
      %v1368 = vpack.c.bf16 %v1298, %v1298
      %v1369 = vpack.c.bf16 %v1305, %v1305
      %v1370 = vpack.c.bf16 %v1313, %v1313
      %v1371 = vpack.c.bf16 %v1321, %v1321
      %v1372 = vpack.c.bf16 %v1329, %v1329
      %v1373 = vpack.c.bf16 %v1337, %v1337
      %v1374 = vpack.c.bf16 %v1346, %v1346
      %v1375 = vpack.c.bf16 %v1355, %v1355
      %v1376 = vld [vmem:[%s5] sm:$0xf]
      %v1377 = vld [vmem:[%s5 + $0x4] sm:$0xf]
      %v1378 = vld [vmem:[%s5 + $0x8] sm:$0xf]
      %v1379 = vld [vmem:[%s5 + $0xc] sm:$0xf]
      %v1380 = vld [vmem:[%s5 + $0x10] sm:$0xf]
      %v1381 = vld [vmem:[%s5 + $0x14] sm:$0xf]
      %v1382 = vld [vmem:[%s5 + $0x18] sm:$0xf]
      %v1383 = vld [vmem:[%s5 + $0x1c] sm:$0xf]
      %v1384 = vld [vmem:[%s5 + $0x20] sm:$0xf]
      %v1385 = vld [vmem:[%s5 + $0x24] sm:$0xf]
      %v1386 = vld [vmem:[%s5 + $0x28] sm:$0xf]
      %v1387 = vld [vmem:[%s5 + $0x2c] sm:$0xf]
      %v1388 = vld [vmem:[%s5 + $0x30] sm:$0xf]
      %v1389 = vld [vmem:[%s5 + $0x34] sm:$0xf]
      %v1390 = vld [vmem:[%s5 + $0x38] sm:$0xf]
      %v1391 = vld [vmem:[%s5 + $0x3c] sm:$0xf]
      %v1392 = vld [vmem:[%s5 + $0x40] sm:$0xf]
      %v1393 = vld [vmem:[%s5 + $0x44] sm:$0xf]
      %v1394 = vld [vmem:[%s5 + $0x48] sm:$0xf]
      %v1395 = vld [vmem:[%s5 + $0x4c] sm:$0xf]
      %v1396 = vld [vmem:[%s5 + $0x50] sm:$0xf]
      %v1397 = vld [vmem:[%s5 + $0x54] sm:$0xf]
      %v1398 = vld [vmem:[%s5 + $0x58] sm:$0xf]
      %v1399 = vld [vmem:[%s5 + $0x5c] sm:$0xf]
      %v1400 = vld [vmem:[%s5 + $0x60] sm:$0xf]
      %v1401 = vld [vmem:[%s5 + $0x64] sm:$0xf]
      %v1402 = vld [vmem:[%s5 + $0x68] sm:$0xf]
      %v1403 = vld [vmem:[%s5 + $0x6c] sm:$0xf]
      %v1404 = vld [vmem:[%s5 + $0x70] sm:$0xf]
      %v1405 = vld [vmem:[%s5 + $0x74] sm:$0xf]
      %v1406 = vld [vmem:[%s5 + $0x78] sm:$0xf]
      %v1407 = vld [vmem:[%s5 + $0x7c] sm:$0xf]
      %v1408 = vld [vmem:[%s5 + $0x80] sm:$0xf]
      %v1409 = vld [vmem:[%s5 + $0x84] sm:$0xf]
      %v1410 = vld [vmem:[%s5 + $0x88] sm:$0xf]
      %v1411 = vld [vmem:[%s5 + $0x8c] sm:$0xf]
      %v1412 = vld [vmem:[%s5 + $0x90] sm:$0xf]
      %v1413 = vld [vmem:[%s5 + $0x94] sm:$0xf]
      %v1414 = vld [vmem:[%s5 + $0x98] sm:$0xf]
      %v1415 = vld [vmem:[%s5 + $0x9c] sm:$0xf]
      %v1416 = vld [vmem:[%s5 + $0xa0] sm:$0xf]
      %v1417 = vld [vmem:[%s5 + $0xa4] sm:$0xf]
      %v1418 = vld [vmem:[%s5 + $0xa8] sm:$0xf]
      %v1419 = vld [vmem:[%s5 + $0xac] sm:$0xf]
      %v1420 = vld [vmem:[%s5 + $0xb0] sm:$0xf]
      %v1421 = vld [vmem:[%s5 + $0xb4] sm:$0xf]
      %v1422 = vld [vmem:[%s5 + $0xb8] sm:$0xf]
      %v1423 = vld [vmem:[%s5 + $0xbc] sm:$0xf]
      %v1424 = vld [vmem:[%s5 + $0xc0] sm:$0xf]
      %v1425 = vld [vmem:[%s5 + $0xc4] sm:$0xf]
      %v1426 = vld [vmem:[%s5 + $0xc8] sm:$0xf]
      %v1427 = vld [vmem:[%s5 + $0xcc] sm:$0xf]
      %v1428 = vld [vmem:[%s5 + $0xd0] sm:$0xf]
      %v1429 = vld [vmem:[%s5 + $0xd4] sm:$0xf]
      %v1430 = vld [vmem:[%s5 + $0xd8] sm:$0xf]
      %v1431 = vld [vmem:[%s5 + $0xdc] sm:$0xf]
      %v1432 = vld [vmem:[%s5 + $0xe0] sm:$0xf]
      %v1433 = vld [vmem:[%s5 + $0xe4] sm:$0xf]
      %v1434 = vld [vmem:[%s5 + $0xe8] sm:$0xf]
      %v1435 = vld [vmem:[%s5 + $0xec] sm:$0xf]
      %v1436 = vld [vmem:[%s5 + $0xf0] sm:$0xf]
      %v1437 = vld [vmem:[%s5 + $0xf4] sm:$0xf]
      %v1438 = vld [vmem:[%s5 + $0xf8] sm:$0xf]
      %v1439 = vld [vmem:[%s5 + $0xfc] sm:$0xf]
      %v1440 = vld [vmem:[%s5 + $0x100] sm:$0xf]
      %v1441 = vld [vmem:[%s5 + $0x104] sm:$0xf]
      %v1442 = vld [vmem:[%s5 + $0x108] sm:$0xf]
      %v1443 = vld [vmem:[%s5 + $0x10c] sm:$0xf]
      %v1444 = vld [vmem:[%s5 + $0x110] sm:$0xf]
      %v1445 = vld [vmem:[%s5 + $0x114] sm:$0xf]
      %v1446 = vld [vmem:[%s5 + $0x118] sm:$0xf]
      %v1447 = vld [vmem:[%s5 + $0x11c] sm:$0xf]
      %v1448 = vld [vmem:[%s5 + $0x120] sm:$0xf]
      %v1449 = vld [vmem:[%s5 + $0x124] sm:$0xf]
      %v1450 = vld [vmem:[%s5 + $0x128] sm:$0xf]
      %v1451 = vld [vmem:[%s5 + $0x12c] sm:$0xf]
      %v1452 = vld [vmem:[%s5 + $0x130] sm:$0xf]
      %v1453 = vld [vmem:[%s5 + $0x134] sm:$0xf]
      %v1454 = vld [vmem:[%s5 + $0x138] sm:$0xf]
      %v1455 = vld [vmem:[%s5 + $0x13c] sm:$0xf]
      %v1456 = vld [vmem:[%s5 + $0x140] sm:$0xf]
      %v1457 = vld [vmem:[%s5 + $0x144] sm:$0xf]
      %v1458 = vld [vmem:[%s5 + $0x148] sm:$0xf]
      %v1459 = vld [vmem:[%s5 + $0x14c] sm:$0xf]
      %v1460 = vld [vmem:[%s5 + $0x150] sm:$0xf]
      %v1461 = vld [vmem:[%s5 + $0x154] sm:$0xf]
      %v1462 = vld [vmem:[%s5 + $0x158] sm:$0xf]
      %v1463 = vld [vmem:[%s5 + $0x15c] sm:$0xf]
      %v1464 = vld [vmem:[%s5 + $0x160] sm:$0xf]
      %v1465 = vld [vmem:[%s5 + $0x164] sm:$0xf]
      %v1466 = vld [vmem:[%s5 + $0x168] sm:$0xf]
      %v1467 = vld [vmem:[%s5 + $0x16c] sm:$0xf]
      %v1468 = vld [vmem:[%s5 + $0x170] sm:$0xf]
      %v1469 = vld [vmem:[%s5 + $0x174] sm:$0xf]
      %v1470 = vld [vmem:[%s5 + $0x178] sm:$0xf]
      %v1471 = vld [vmem:[%s5 + $0x17c] sm:$0xf]
      %v1472 = vld [vmem:[%s5 + $0x180] sm:$0xf]
      %v1473 = vld [vmem:[%s5 + $0x184] sm:$0xf]
      %v1474 = vld [vmem:[%s5 + $0x188] sm:$0xf]
      %v1475 = vld [vmem:[%s5 + $0x18c] sm:$0xf]
      %v1476 = vld [vmem:[%s5 + $0x190] sm:$0xf]
      %v1477 = vld [vmem:[%s5 + $0x194] sm:$0xf]
      %v1478 = vld [vmem:[%s5 + $0x198] sm:$0xf]
      %v1479 = vld [vmem:[%s5 + $0x19c] sm:$0xf]
      %v1480 = vld [vmem:[%s5 + $0x1a0] sm:$0xf]
      %v1481 = vld [vmem:[%s5 + $0x1a4] sm:$0xf]
      %v1482 = vld [vmem:[%s5 + $0x1a8] sm:$0xf]
      %v1483 = vld [vmem:[%s5 + $0x1ac] sm:$0xf]
      %v1484 = vld [vmem:[%s5 + $0x1b0] sm:$0xf]
      %v1485 = vld [vmem:[%s5 + $0x1b4] sm:$0xf]
      %v1486 = vld [vmem:[%s5 + $0x1b8] sm:$0xf]
      %v1487 = vld [vmem:[%s5 + $0x1bc] sm:$0xf]
      %v1488 = vld [vmem:[%s5 + $0x1c0] sm:$0xf]
      %v1489 = vld [vmem:[%s5 + $0x1c4] sm:$0xf]
      %v1490 = vld [vmem:[%s5 + $0x1c8] sm:$0xf]
      %v1491 = vld [vmem:[%s5 + $0x1cc] sm:$0xf]
      %v1492 = vld [vmem:[%s5 + $0x1d0] sm:$0xf]
      %v1493 = vld [vmem:[%s5 + $0x1d4] sm:$0xf]
      %v1494 = vld [vmem:[%s5 + $0x1d8] sm:$0xf]
      %v1495 = vld [vmem:[%s5 + $0x1dc] sm:$0xf]
      %v1496 = vld [vmem:[%s5 + $0x1e0] sm:$0xf]
      %v1497 = vld [vmem:[%s5 + $0x1e4] sm:$0xf]
      %v1498 = vld [vmem:[%s5 + $0x1e8] sm:$0xf]
      %v1499 = vld [vmem:[%s5 + $0x1ec] sm:$0xf]
      %v1500 = vld [vmem:[%s5 + $0x1f0] sm:$0xf]
      %v1501 = vld [vmem:[%s5 + $0x1f4] sm:$0xf]
      %v1502 = vld [vmem:[%s5 + $0x1f8] sm:$0xf]
      %v1503 = vld [vmem:[%s5 + $0x1fc] sm:$0xf]
      %v1504 = vld [vmem:[%s6] sm:$0x1]
      %v1506 = vlaneseq
      %v1507 = vshrl.u32 %v1506, 7
      %v1508 = vsub.s32 0, %v1507
      %v1509 = vrot.slane %v1504, %v1508
      %v1639 = vunpack.c.l.b16 %v1376
      %v1640 = vunpack.c.l.b16 %v1377
      %v1641 = vunpack.c.l.b16 %v1378
      %v1642 = vunpack.c.l.b16 %v1379
      %v1643 = vunpack.c.l.b16 %v1380
      %v1644 = vunpack.c.l.b16 %v1381
      %v1645 = vunpack.c.l.b16 %v1382
      %v1646 = vunpack.c.l.b16 %v1383
      %v1647 = vunpack.c.l.b16 %v1384
      %v1648 = vunpack.c.l.b16 %v1385
      %v1649 = vunpack.c.l.b16 %v1386
      %v1650 = vunpack.c.l.b16 %v1387
      %v1651 = vunpack.c.l.b16 %v1388
      %v1652 = vunpack.c.l.b16 %v1389
      %v1653 = vunpack.c.l.b16 %v1390
      %v1654 = vunpack.c.l.b16 %v1391
      %v1655 = vunpack.c.l.b16 %v1392
      %v1656 = vunpack.c.l.b16 %v1393
      %v1657 = vunpack.c.l.b16 %v1394
      %v1658 = vunpack.c.l.b16 %v1395
      %v1659 = vunpack.c.l.b16 %v1396
      %v1660 = vunpack.c.l.b16 %v1397
      %v1661 = vunpack.c.l.b16 %v1398
      %v1662 = vunpack.c.l.b16 %v1399
      %v1663 = vunpack.c.l.b16 %v1400
      %v1664 = vunpack.c.l.b16 %v1401
      %v1665 = vunpack.c.l.b16 %v1402
      %v1666 = vunpack.c.l.b16 %v1403
      %v1667 = vunpack.c.l.b16 %v1404
      %v1668 = vunpack.c.l.b16 %v1405
      %v1669 = vunpack.c.l.b16 %v1406
      %v1670 = vunpack.c.l.b16 %v1407
      %v1671 = vunpack.c.l.b16 %v1408
      %v1672 = vunpack.c.l.b16 %v1409
      %v1673 = vunpack.c.l.b16 %v1410
      %v1674 = vunpack.c.l.b16 %v1411
      %v1675 = vunpack.c.l.b16 %v1412
      %v1676 = vunpack.c.l.b16 %v1413
      %v1677 = vunpack.c.l.b16 %v1414
      %v1678 = vunpack.c.l.b16 %v1415
      %v1679 = vunpack.c.l.b16 %v1416
      %v1680 = vunpack.c.l.b16 %v1417
      %v1681 = vunpack.c.l.b16 %v1418
      %v1682 = vunpack.c.l.b16 %v1419
      %v1683 = vunpack.c.l.b16 %v1420
      %v1684 = vunpack.c.l.b16 %v1421
      %v1685 = vunpack.c.l.b16 %v1422
      %v1686 = vunpack.c.l.b16 %v1423
      %v1687 = vunpack.c.l.b16 %v1424
      %v1688 = vunpack.c.l.b16 %v1425
      %v1689 = vunpack.c.l.b16 %v1426
      %v1690 = vunpack.c.l.b16 %v1427
      %v1691 = vunpack.c.l.b16 %v1428
      %v1692 = vunpack.c.l.b16 %v1429
      %v1693 = vunpack.c.l.b16 %v1430
      %v1694 = vunpack.c.l.b16 %v1431
      %v1695 = vunpack.c.l.b16 %v1432
      %v1696 = vunpack.c.l.b16 %v1433
      %v1697 = vunpack.c.l.b16 %v1434
      %v1698 = vunpack.c.l.b16 %v1435
      %v1699 = vunpack.c.l.b16 %v1436
      %v1700 = vunpack.c.l.b16 %v1437
      %v1701 = vunpack.c.l.b16 %v1438
      %v1702 = vunpack.c.l.b16 %v1439
      %v1703 = vunpack.c.l.b16 %v1440
      %v1704 = vunpack.c.l.b16 %v1441
      %v1705 = vunpack.c.l.b16 %v1442
      %v1706 = vunpack.c.l.b16 %v1443
      %v1707 = vunpack.c.l.b16 %v1444
      %v1708 = vunpack.c.l.b16 %v1445
      %v1709 = vunpack.c.l.b16 %v1446
      %v1710 = vunpack.c.l.b16 %v1447
      %v1711 = vunpack.c.l.b16 %v1448
      %v1712 = vunpack.c.l.b16 %v1449
      %v1713 = vunpack.c.l.b16 %v1450
      %v1714 = vunpack.c.l.b16 %v1451
      %v1715 = vunpack.c.l.b16 %v1452
      %v1716 = vunpack.c.l.b16 %v1453
      %v1717 = vunpack.c.l.b16 %v1454
      %v1718 = vunpack.c.l.b16 %v1455
      %v1719 = vunpack.c.l.b16 %v1456
      %v1720 = vunpack.c.l.b16 %v1457
      %v1721 = vunpack.c.l.b16 %v1458
      %v1722 = vunpack.c.l.b16 %v1459
      %v1723 = vunpack.c.l.b16 %v1460
      %v1724 = vunpack.c.l.b16 %v1461
      %v1725 = vunpack.c.l.b16 %v1462
      %v1726 = vunpack.c.l.b16 %v1463
      %v1727 = vunpack.c.l.b16 %v1464
      %v1728 = vunpack.c.l.b16 %v1465
      %v1729 = vunpack.c.l.b16 %v1466
      %v1730 = vunpack.c.l.b16 %v1467
      %v1731 = vunpack.c.l.b16 %v1468
      %v1732 = vunpack.c.l.b16 %v1469
      %v1733 = vunpack.c.l.b16 %v1470
      %v1734 = vunpack.c.l.b16 %v1471
      %v1735 = vunpack.c.l.b16 %v1472
      %v1736 = vunpack.c.l.b16 %v1473
      %v1737 = vunpack.c.l.b16 %v1474
      %v1738 = vunpack.c.l.b16 %v1475
      %v1739 = vunpack.c.l.b16 %v1476
      %v1740 = vunpack.c.l.b16 %v1477
      %v1741 = vunpack.c.l.b16 %v1478
      %v1742 = vunpack.c.l.b16 %v1479
      %v1743 = vunpack.c.l.b16 %v1480
      %v1744 = vunpack.c.l.b16 %v1481
      %v1745 = vunpack.c.l.b16 %v1482
      %v1746 = vunpack.c.l.b16 %v1483
      %v1747 = vunpack.c.l.b16 %v1484
      %v1748 = vunpack.c.l.b16 %v1485
      %v1749 = vunpack.c.l.b16 %v1486
      %v1750 = vunpack.c.l.b16 %v1487
      %v1751 = vunpack.c.l.b16 %v1488
      %v1752 = vunpack.c.l.b16 %v1489
      %v1753 = vunpack.c.l.b16 %v1490
      %v1754 = vunpack.c.l.b16 %v1491
      %v1755 = vunpack.c.l.b16 %v1492
      %v1756 = vunpack.c.l.b16 %v1493
      %v1757 = vunpack.c.l.b16 %v1494
      %v1758 = vunpack.c.l.b16 %v1495
      %v1759 = vunpack.c.l.b16 %v1496
      %v1760 = vunpack.c.l.b16 %v1497
      %v1761 = vunpack.c.l.b16 %v1498
      %v1762 = vunpack.c.l.b16 %v1499
      %v1763 = vunpack.c.l.b16 %v1500
      %v1764 = vunpack.c.l.b16 %v1501
      %v1765 = vunpack.c.l.b16 %v1502
      %v1766 = vunpack.c.l.b16 %v1503
      %v1767 = vpack.c.b16 %v1640, %v1639
      %v1768 = vpack.c.b16 %v1642, %v1641
      %v1769 = vpack.c.b16 %v1644, %v1643
      %v1770 = vpack.c.b16 %v1646, %v1645
      %v1771 = vpack.c.b16 %v1648, %v1647
      %v1772 = vpack.c.b16 %v1650, %v1649
      %v1773 = vpack.c.b16 %v1652, %v1651
      %v1774 = vpack.c.b16 %v1654, %v1653
      %v1775 = vpack.c.b16 %v1656, %v1655
      %v1776 = vpack.c.b16 %v1658, %v1657
      %v1777 = vpack.c.b16 %v1660, %v1659
      %v1778 = vpack.c.b16 %v1662, %v1661
      %v1779 = vpack.c.b16 %v1664, %v1663
      %v1780 = vpack.c.b16 %v1666, %v1665
      %v1781 = vpack.c.b16 %v1668, %v1667
      %v1782 = vpack.c.b16 %v1670, %v1669
      %v1783 = vpack.c.b16 %v1672, %v1671
      %v1784 = vpack.c.b16 %v1674, %v1673
      %v1785 = vpack.c.b16 %v1676, %v1675
      %v1786 = vpack.c.b16 %v1678, %v1677
      %v1787 = vpack.c.b16 %v1680, %v1679
      %v1788 = vpack.c.b16 %v1682, %v1681
      %v1789 = vpack.c.b16 %v1684, %v1683
      %v1790 = vpack.c.b16 %v1686, %v1685
      %v1791 = vpack.c.b16 %v1688, %v1687
      %v1792 = vpack.c.b16 %v1690, %v1689
      %v1793 = vpack.c.b16 %v1692, %v1691
      %v1794 = vpack.c.b16 %v1694, %v1693
      %v1795 = vpack.c.b16 %v1696, %v1695
      %v1796 = vpack.c.b16 %v1698, %v1697
      %v1797 = vpack.c.b16 %v1700, %v1699
      %v1798 = vpack.c.b16 %v1702, %v1701
      %v1799 = vpack.c.b16 %v1704, %v1703
      %v1800 = vpack.c.b16 %v1706, %v1705
      %v1801 = vpack.c.b16 %v1708, %v1707
      %v1802 = vpack.c.b16 %v1710, %v1709
      %v1803 = vpack.c.b16 %v1712, %v1711
      %v1804 = vpack.c.b16 %v1714, %v1713
      %v1805 = vpack.c.b16 %v1716, %v1715
      %v1806 = vpack.c.b16 %v1718, %v1717
      %v1807 = vpack.c.b16 %v1720, %v1719
      %v1808 = vpack.c.b16 %v1722, %v1721
      %v1809 = vpack.c.b16 %v1724, %v1723
      %v1810 = vpack.c.b16 %v1726, %v1725
      %v1811 = vpack.c.b16 %v1728, %v1727
      %v1812 = vpack.c.b16 %v1730, %v1729
      %v1813 = vpack.c.b16 %v1732, %v1731
      %v1814 = vpack.c.b16 %v1734, %v1733
      %v1815 = vpack.c.b16 %v1736, %v1735
      %v1816 = vpack.c.b16 %v1738, %v1737
      %v1817 = vpack.c.b16 %v1740, %v1739
      %v1818 = vpack.c.b16 %v1742, %v1741
      %v1819 = vpack.c.b16 %v1744, %v1743
      %v1820 = vpack.c.b16 %v1746, %v1745
      %v1821 = vpack.c.b16 %v1748, %v1747
      %v1822 = vpack.c.b16 %v1750, %v1749
      %v1823 = vpack.c.b16 %v1752, %v1751
      %v1824 = vpack.c.b16 %v1754, %v1753
      %v1825 = vpack.c.b16 %v1756, %v1755
      %v1826 = vpack.c.b16 %v1758, %v1757
      %v1827 = vpack.c.b16 %v1760, %v1759
      %v1828 = vpack.c.b16 %v1762, %v1761
      %v1829 = vpack.c.b16 %v1764, %v1763
      %v1830 = vpack.c.b16 %v1766, %v1765
      %1895 = vmatprep.subr.bf16.mxu0 0
      %1896 = vmatpush1.bf16.msra.mxu0 %v1774
      %1897 = vmatprep.subr.bf16.mxu0 0
      %1898 = vmatpush1.bf16.msra.mxu0 %v1773
      %1899 = vmatprep.subr.bf16.mxu0 0
      %1900 = vmatpush1.bf16.msra.mxu0 %v1772
      %1901 = vmatprep.subr.bf16.mxu0 0
      %1902 = vmatpush1.bf16.msra.mxu0 %v1771
      %1903 = vmatprep.subr.bf16.mxu0 0
      %1904 = vmatpush1.bf16.msra.mxu0 %v1770
      %1905 = vmatprep.subr.bf16.mxu0 0
      %1906 = vmatpush1.bf16.msra.mxu0 %v1769
      %1907 = vmatprep.subr.bf16.mxu0 0
      %1908 = vmatpush1.bf16.msra.mxu0 %v1768
      %1909 = vmatprep.subr.bf16.mxu0 0
      %1910 = vmatpush1.bf16.msra.mxu0 %v1767
      %1911 = vmatprep.subr.bf16.mxu0 0
      %1912 = vmatpush2.bf16.msra.mxu0 %v1782
      %1913 = vmatprep.subr.bf16.mxu0 0
      %1914 = vmatpush2.bf16.msra.mxu0 %v1781
      %1915 = vmatprep.subr.bf16.mxu0 0
      %1916 = vmatpush2.bf16.msra.mxu0 %v1780
      %1917 = vmatprep.subr.bf16.mxu0 0
      %1918 = vmatpush2.bf16.msra.mxu0 %v1779
      %1919 = vmatprep.subr.bf16.mxu0 0
      %1920 = vmatpush2.bf16.msra.mxu0 %v1778
      %1921 = vmatprep.subr.bf16.mxu0 0
      %1922 = vmatpush2.bf16.msra.mxu0 %v1777
      %1923 = vmatprep.subr.bf16.mxu0 0
      %1924 = vmatpush2.bf16.msra.mxu0 %v1776
      %1925 = vmatprep.subr.bf16.mxu0 0
      %1926 = vmatpush2.bf16.msra.mxu0 %v1775
      %1927 = vmatprep.mubr.bf16.mxu0 %v1361
      %1928 = vmatmul.mubr.bf16.gmra.mxu0 %v1360
      %v1929 = vpop.f32.mrf.mxu0
      %v1930 = vadd.f32 %v1509, %v1929
      %v1931 = vpop.f32.mrf.mxu0
      %v1932 = vpop.f32.mrf.mxu0
      %v1933 = vadd.f32 %v1509, %v1932
      %v1934 = vpop.f32.mrf.mxu0
      %1935 = vmatprep.mubr.bf16.mxu0 %v1369
      %1936 = vmatmul.mubr.bf16.gmra.mxu0 %v1368
      %v1937 = vpop.f32.mrf.mxu0
      %v1938 = vadd.f32 %v1509, %v1937
      %v1939 = vpop.f32.mrf.mxu0
      %v1940 = vpop.f32.mrf.mxu0
      %v1941 = vpop.f32.mrf.mxu0
      %1942 = vdwg.mxu0
      %1943 = vmatprep.subr.bf16.mxu0 0
      %1944 = vmatpush1.bf16.msra.mxu0 %v1790
      %1945 = vmatprep.subr.bf16.mxu0 0
      %1946 = vmatpush1.bf16.msra.mxu0 %v1789
      %1947 = vmatprep.subr.bf16.mxu0 0
      %1948 = vmatpush1.bf16.msra.mxu0 %v1788
      %1949 = vmatprep.subr.bf16.mxu0 0
      %1950 = vmatpush1.bf16.msra.mxu0 %v1787
      %1951 = vmatprep.subr.bf16.mxu0 0
      %1952 = vmatpush1.bf16.msra.mxu0 %v1786
      %1953 = vmatprep.subr.bf16.mxu0 0
      %1954 = vmatpush1.bf16.msra.mxu0 %v1785
      %1955 = vmatprep.subr.bf16.mxu0 0
      %1956 = vmatpush1.bf16.msra.mxu0 %v1784
      %1957 = vmatprep.subr.bf16.mxu0 0
      %1958 = vmatpush1.bf16.msra.mxu0 %v1783
      %1959 = vmatprep.subr.bf16.mxu0 0
      %1960 = vmatpush2.bf16.msra.mxu0 %v1798
      %1961 = vmatprep.subr.bf16.mxu0 0
      %1962 = vmatpush2.bf16.msra.mxu0 %v1797
      %1963 = vmatprep.subr.bf16.mxu0 0
      %1964 = vmatpush2.bf16.msra.mxu0 %v1796
      %1965 = vmatprep.subr.bf16.mxu0 0
      %1966 = vmatpush2.bf16.msra.mxu0 %v1795
      %1967 = vmatprep.subr.bf16.mxu0 0
      %1968 = vmatpush2.bf16.msra.mxu0 %v1794
      %1969 = vmatprep.subr.bf16.mxu0 0
      %1970 = vmatpush2.bf16.msra.mxu0 %v1793
      %1971 = vmatprep.subr.bf16.mxu0 0
      %1972 = vmatpush2.bf16.msra.mxu0 %v1792
      %1973 = vmatprep.subr.bf16.mxu0 0
      %1974 = vmatpush2.bf16.msra.mxu0 %v1791
      %1975 = vmatprep.mubr.bf16.mxu0 %v1363
      %1976 = vmatmul.mubr.bf16.gmra.mxu0 %v1362
      %v1977 = vpop.f32.mrf.mxu0
      %v1978 = vadd.f32 %v1930, %v1977
      %v1979 = vpop.f32.mrf.mxu0
      %v1980 = vpop.f32.mrf.mxu0
      %v1981 = vadd.f32 %v1933, %v1980
      %v1982 = vpop.f32.mrf.mxu0
      %1983 = vmatprep.mubr.bf16.mxu0 %v1371
      %1984 = vmatmul.mubr.bf16.gmra.mxu0 %v1370
      %v1985 = vpop.f32.mrf.mxu0
      %v1986 = vadd.f32 %v1938, %v1985
      %v1987 = vpop.f32.mrf.mxu0
      %v1988 = vpop.f32.mrf.mxu0
      %v1989 = vpop.f32.mrf.mxu0
      %1990 = vdwg.mxu0
      %1991 = vmatprep.subr.bf16.mxu0 0
      %1992 = vmatpush1.bf16.msra.mxu0 %v1806
      %1993 = vmatprep.subr.bf16.mxu0 0
      %1994 = vmatpush1.bf16.msra.mxu0 %v1805
      %1995 = vmatprep.subr.bf16.mxu0 0
      %1996 = vmatpush1.bf16.msra.mxu0 %v1804
      %1997 = vmatprep.subr.bf16.mxu0 0
      %1998 = vmatpush1.bf16.msra.mxu0 %v1803
      %1999 = vmatprep.subr.bf16.mxu0 0
      %2000 = vmatpush1.bf16.msra.mxu0 %v1802
      %2001 = vmatprep.subr.bf16.mxu0 0
      %2002 = vmatpush1.bf16.msra.mxu0 %v1801
      %2003 = vmatprep.subr.bf16.mxu0 0
      %2004 = vmatpush1.bf16.msra.mxu0 %v1800
      %2005 = vmatprep.subr.bf16.mxu0 0
      %2006 = vmatpush1.bf16.msra.mxu0 %v1799
      %2007 = vmatprep.subr.bf16.mxu0 0
      %2008 = vmatpush2.bf16.msra.mxu0 %v1814
      %2009 = vmatprep.subr.bf16.mxu0 0
      %2010 = vmatpush2.bf16.msra.mxu0 %v1813
      %2011 = vmatprep.subr.bf16.mxu0 0
      %2012 = vmatpush2.bf16.msra.mxu0 %v1812
      %2013 = vmatprep.subr.bf16.mxu0 0
      %2014 = vmatpush2.bf16.msra.mxu0 %v1811
      %2015 = vmatprep.subr.bf16.mxu0 0
      %2016 = vmatpush2.bf16.msra.mxu0 %v1810
      %2017 = vmatprep.subr.bf16.mxu0 0
      %2018 = vmatpush2.bf16.msra.mxu0 %v1809
      %2019 = vmatprep.subr.bf16.mxu0 0
      %2020 = vmatpush2.bf16.msra.mxu0 %v1808
      %2021 = vmatprep.subr.bf16.mxu0 0
      %2022 = vmatpush2.bf16.msra.mxu0 %v1807
      %2023 = vmatprep.mubr.bf16.mxu0 %v1365
      %2024 = vmatmul.mubr.bf16.gmra.mxu0 %v1364
      %v2025 = vpop.f32.mrf.mxu0
      %v2026 = vadd.f32 %v1978, %v2025
      %v2027 = vpop.f32.mrf.mxu0
      %v2028 = vpop.f32.mrf.mxu0
      %v2029 = vadd.f32 %v1981, %v2028
      %v2030 = vpop.f32.mrf.mxu0
      %2031 = vmatprep.mubr.bf16.mxu0 %v1373
      %2032 = vmatmul.mubr.bf16.gmra.mxu0 %v1372
      %v2033 = vpop.f32.mrf.mxu0
      %v2034 = vadd.f32 %v1986, %v2033
      %v2035 = vpop.f32.mrf.mxu0
      %v2036 = vpop.f32.mrf.mxu0
      %v2037 = vpop.f32.mrf.mxu0
      %2038 = vdwg.mxu0
      %2039 = vmatprep.subr.bf16.mxu0 0
      %2040 = vmatpush1.bf16.msra.mxu0 %v1822
      %2041 = vmatprep.subr.bf16.mxu0 0
      %2042 = vmatpush1.bf16.msra.mxu0 %v1821
      %2043 = vmatprep.subr.bf16.mxu0 0
      %2044 = vmatpush1.bf16.msra.mxu0 %v1820
      %2045 = vmatprep.subr.bf16.mxu0 0
      %2046 = vmatpush1.bf16.msra.mxu0 %v1819
      %2047 = vmatprep.subr.bf16.mxu0 0
      %2048 = vmatpush1.bf16.msra.mxu0 %v1818
      %2049 = vmatprep.subr.bf16.mxu0 0
      %2050 = vmatpush1.bf16.msra.mxu0 %v1817
      %2051 = vmatprep.subr.bf16.mxu0 0
      %2052 = vmatpush1.bf16.msra.mxu0 %v1816
      %2053 = vmatprep.subr.bf16.mxu0 0
      %2054 = vmatpush1.bf16.msra.mxu0 %v1815
      %2055 = vmatprep.subr.bf16.mxu0 0
      %2056 = vmatpush2.bf16.msra.mxu0 %v1830
      %2057 = vmatprep.subr.bf16.mxu0 0
      %2058 = vmatpush2.bf16.msra.mxu0 %v1829
      %2059 = vmatprep.subr.bf16.mxu0 0
      %2060 = vmatpush2.bf16.msra.mxu0 %v1828
      %2061 = vmatprep.subr.bf16.mxu0 0
      %2062 = vmatpush2.bf16.msra.mxu0 %v1827
      %2063 = vmatprep.subr.bf16.mxu0 0
      %2064 = vmatpush2.bf16.msra.mxu0 %v1826
      %2065 = vmatprep.subr.bf16.mxu0 0
      %2066 = vmatpush2.bf16.msra.mxu0 %v1825
      %2067 = vmatprep.subr.bf16.mxu0 0
      %2068 = vmatpush2.bf16.msra.mxu0 %v1824
      %2069 = vmatprep.subr.bf16.mxu0 0
      %2070 = vmatpush2.bf16.msra.mxu0 %v1823
      %2071 = vmatprep.mubr.bf16.mxu0 %v1367
      %2072 = vmatmul.mubr.bf16.gmra.mxu0 %v1366
      %v2073 = vpop.f32.mrf.mxu0
      %v2074 = vadd.f32 %v2026, %v2073
      %v2075 = vpop.f32.mrf.mxu0
      %v2076 = vpop.f32.mrf.mxu0
      %v2077 = vadd.f32 %v2029, %v2076
      %v2078 = vpop.f32.mrf.mxu0
      %2079 = vmatprep.mubr.bf16.mxu0 %v1375
      %2080 = vmatmul.mubr.bf16.gmra.mxu0 %v1374
      %v2081 = vpop.f32.mrf.mxu0
      %v2082 = vadd.f32 %v2034, %v2081
      %v2083 = vpop.f32.mrf.mxu0
      %v2084 = vpop.f32.mrf.mxu0
      %v2085 = vpop.f32.mrf.mxu0
      %2086 = vdwg.mxu0
      %v2087 = vmax.f32 %v2074, 0.0
      %v2088 = vmax.f32 %v2077, 0.0
      %v2089 = vmax.f32 %v2082, 0.0
      %v2090 = vsel %vm1351, %v2089, -inf
      %v2091 = vmax.f32 %v2087, %v2088
      %v2092 = vmax.f32 %v2091, %v2090
      %v2093 = vrot.slane %v2092, 4
      %v2094 = vmax.f32 %v2092, %v2093
      %v2095 = vrot.slane %v2094, 2
      %v2096 = vmax.f32 %v2094, %v2095
      %v2097 = vrot.slane %v2096, 1
      %v2098 = vmax.f32 %v2096, %v2097
      %2099 = vst [vmem:[%s274] sm:$0x1] %v2098
      %p2100 = scmp.lt.s32.totalorder %s18, 1
      %s2101 = scalar_select %p2100, %s18, 1
      %s2102 = scalar_lea.vmem %s7, %s2101
      // Predicated region
      $region49: #{dtinet_forward.4} parent=47 // pred_check
        %p2103 = pneg %p188
      $region50: #{dtinet_forward.4} parent=47 // pred_check_branch
        %2105 = sbr.rel (%p2103) target = $region52
      $region51: #{dtinet_forward.4} parent=47 // pred_region
        _
      $region52: #{dtinet_forward.4} parent=47 // pred_fallthru
        _
    $region48: #{dtinet_forward.4} parent=5 // pred_fallthru
      _
    %p2106 = scmp.le.s32.totalorder 2, %s13
    // Predicated region
    $region53: #{dtinet_forward.4} parent=5 // pred_check
      %p2107 = pneg %p2106
    $region54: #{dtinet_forward.4} parent=5 // pred_check_branch
      %2109 = sbr.rel (%p2107) target = $region56
    $region55: #{dtinet_forward.4} parent=5 // pred_region
      %s2110 = ssub.s32 %s13, 2
      // Predicated region
      $region57: #{dtinet_forward.4} parent=55 // pred_check
        %p2111 = pneg %p194
      $region58: #{dtinet_forward.4} parent=55 // pred_check_branch
        %2113 = sbr.rel (%p2111) target = $region60
      $region59: #{dtinet_forward.4} parent=55 // pred_region
        %p2114 = scmp.lt.s32.totalorder %s19, 1
        %s2115 = scalar_select %p2114, %s19, 1
        %s2116 = scalar_lea.vmem %s7, %s2115
      $region60: #{dtinet_forward.4} parent=55 // pred_fallthru
        _
    $region56: #{dtinet_forward.4} parent=5 // pred_fallthru
      _
  $region6: #{dtinet_forward.4} parent=0 // loop_footer
    %s17 = sadd.s32 1, %s13
  $region7: #{dtinet_forward.4} parent=0 // loop_footer_branch
    %12 = sbr.rel target = $region3
  $region8: #{dtinet_forward.4} parent=0 // loop_exit
    _

// kernel: dtinet_forward.5
$region0: #{dtinet_forward.5}
  #allocation0 [shape = 'u32[]', space=smem, size = 0x4, offset = 0x4, fixed_abs, tag = 'smem constant byte address 0x4 - core index']
  #allocation1 [shape = 'u32[144,128]{1,0:T(1,128)}', space=vmem, size = 0x12000, scoped, tag = 'internal scratch']
  #allocation2 [shape = 'f32[1,1]{1,0:T(1,128)S(1)}', space=vmem, size = 0x200, scoped, tag = 'scoped memory for dtinet_forward.5']
  %s0 = inlined_call_operand.vmem [shape: f32[8,64], index: 0, kind: input, shape index: {}]
  %s1 = inlined_call_operand.vmem [shape: f32[8,128], index: 1, kind: input, shape index: {}]
  %s2 = inlined_call_operand.hbm [shape: bf16[64,1024], index: 2, kind: input, shape index: {}]
  %s3 = inlined_call_operand.vmem [shape: bf16[128,1024], index: 3, kind: input, shape index: {}]
  %s4 = inlined_call_operand.vmem [shape: f32[1,1024], index: 4, kind: input, shape index: {}]
  %s5 = inlined_call_operand.vmem [shape: bf16[1024,1024], index: 5, kind: input, shape index: {}]
  %s6 = inlined_call_operand.<no memory space> [shape: f32[1,1], index: 6, kind: input, shape index: {}]
  %s7 = inlined_call_operand.vmem [shape: f32[8,1], index: 7, kind: output, shape index: {}]
  %s8 = sld [smem:[#allocation0]]
  $region42: #{dtinet_forward.5} parent=0
    _
  %s10 = ssub.s32 1, %s8
  %s11 = scalar_select 0, %s10, %s8
  %v12 = vstv %s6
  %13 = vst [vmem:[#allocation2] sm:$0x1] %v12
  $region1: #{dtinet_forward.5} parent=0
    #allocation3 [shape = 'u8[131072]{0}', space=vmem, size = 0x20000, scoped, tag = 'input window, operand 2, single buffered']
    #allocation4 [shape = 's32[1]{0}', space=sflag, size = 0x4, scoped, tag = 'scoped memory for dtinet_forward.5']
    %14 = vsyncpa [#allocation4], 0
    // Predicated region
    $region2: #{dtinet_forward.5} parent=1 // pred_check
      _
    $region3: #{dtinet_forward.5} parent=1 // pred_check_branch
      %16 = sbr.rel (0) target = $region5
    $region4: #{dtinet_forward.5} parent=1 // pred_region
      _
    $region5: #{dtinet_forward.5} parent=1 // pred_fallthru
      _
    // Predicated region
    $region6: #{dtinet_forward.5} parent=1 // pred_check
      _
    $region7: #{dtinet_forward.5} parent=1 // pred_check_branch
      %18 = sbr.rel (0) target = $region9
    $region8: #{dtinet_forward.5} parent=1 // pred_region
      _
    $region9: #{dtinet_forward.5} parent=1 // pred_fallthru
      _
    // Predicated region
    $region10: #{dtinet_forward.5} parent=1 // pred_check
      _
    $region11: #{dtinet_forward.5} parent=1 // pred_check_branch
      %20 = sbr.rel (0) target = $region13
    $region12: #{dtinet_forward.5} parent=1 // pred_region
      %s22 = ssub.s32 4096, 4096
      %23 = vsyncadd [#allocation4], %s22
      %s24 = sshll.u32 [#allocation3], 4
      %s25 = int_to_ptr.vmem [resolvable:$true] %s24
      %30 = dma.hbm_to_vmem [thread:$0]  %s2, 4096, %s25, [#allocation4], 512, 512, 32
    $region13: #{dtinet_forward.5} parent=1 // pred_fallthru
      _
    // Predicated region
    $region14: #{dtinet_forward.5} parent=1 // pred_check
      _
    $region15: #{dtinet_forward.5} parent=1 // pred_check_branch
      %32 = sbr.rel (0) target = $region17
    $region16: #{dtinet_forward.5} parent=1 // pred_region
      _
    $region17: #{dtinet_forward.5} parent=1 // pred_fallthru
      _
    // Predicated region
    $region18: #{dtinet_forward.5} parent=1 // pred_check
      _
    $region19: #{dtinet_forward.5} parent=1 // pred_check_branch
      %34 = sbr.rel (0) target = $region21
    $region20: #{dtinet_forward.5} parent=1 // pred_region
      _
    $region21: #{dtinet_forward.5} parent=1 // pred_fallthru
      _
    // Predicated region
    $region22: #{dtinet_forward.5} parent=1 // pred_check
      _
    $region23: #{dtinet_forward.5} parent=1 // pred_check_branch
      %36 = sbr.rel (0) target = $region25
    $region24: #{dtinet_forward.5} parent=1 // pred_region
      _
    $region25: #{dtinet_forward.5} parent=1 // pred_fallthru
      _
    // Predicated region
    $region26: #{dtinet_forward.5} parent=1 // pred_check
      _
    $region27: #{dtinet_forward.5} parent=1 // pred_check_branch
      %38 = sbr.rel (0) target = $region29
    $region28: #{dtinet_forward.5} parent=1 // pred_region
      _
    $region29: #{dtinet_forward.5} parent=1 // pred_fallthru
      _
    // Predicated region
    $region30: #{dtinet_forward.5} parent=1 // pred_check
      _
    $region31: #{dtinet_forward.5} parent=1 // pred_check_branch
      %40 = sbr.rel (0) target = $region33
    $region32: #{dtinet_forward.5} parent=1 // pred_region
      %41 = dma.done [#allocation4], 4096
    $region33: #{dtinet_forward.5} parent=1 // pred_fallthru
      _
    %v43 = vld [vmem:[%s0] sm:$0xff]
    %v44 = vpack.c.bf16 %v43, %v43
    %v45 = vld [vmem:[#allocation3] sm:$0xff]
    %v46 = vld [vmem:[#allocation3 + $0x8] sm:$0xff]
    %v47 = vld [vmem:[#allocation3 + $0x10] sm:$0xff]
    %v48 = vld [vmem:[#allocation3 + $0x18] sm:$0xff]
    %v49 = vld [vmem:[#allocation3 + $0x20] sm:$0xff]
    %v50 = vld [vmem:[#allocation3 + $0x28] sm:$0xff]
    %v51 = vld [vmem:[#allocation3 + $0x30] sm:$0xff]
    %v52 = vld [vmem:[#allocation3 + $0x38] sm:$0xff]
    %v53 = vld [vmem:[#allocation3 + $0x40] sm:$0xff]
    %v54 = vld [vmem:[#allocation3 + $0x48] sm:$0xff]
    %v55 = vld [vmem:[#allocation3 + $0x50] sm:$0xff]
    %v56 = vld [vmem:[#allocation3 + $0x58] sm:$0xff]
    %v57 = vld [vmem:[#allocation3 + $0x60] sm:$0xff]
    %v58 = vld [vmem:[#allocation3 + $0x68] sm:$0xff]
    %v59 = vld [vmem:[#allocation3 + $0x70] sm:$0xff]
    %v60 = vld [vmem:[#allocation3 + $0x78] sm:$0xff]
    %v61 = vld [vmem:[#allocation3 + $0x80] sm:$0xff]
    %v62 = vld [vmem:[#allocation3 + $0x88] sm:$0xff]
    %v63 = vld [vmem:[#allocation3 + $0x90] sm:$0xff]
    %v64 = vld [vmem:[#allocation3 + $0x98] sm:$0xff]
    %v65 = vld [vmem:[#allocation3 + $0xa0] sm:$0xff]
    %v66 = vld [vmem:[#allocation3 + $0xa8] sm:$0xff]
    %v67 = vld [vmem:[#allocation3 + $0xb0] sm:$0xff]
    %v68 = vld [vmem:[#allocation3 + $0xb8] sm:$0xff]
    %v69 = vld [vmem:[#allocation3 + $0xc0] sm:$0xff]
    %v70 = vld [vmem:[#allocation3 + $0xc8] sm:$0xff]
    %v71 = vld [vmem:[#allocation3 + $0xd0] sm:$0xff]
    %v72 = vld [vmem:[#allocation3 + $0xd8] sm:$0xff]
    %v73 = vld [vmem:[#allocation3 + $0xe0] sm:$0xff]
    %v74 = vld [vmem:[#allocation3 + $0xe8] sm:$0xff]
    %v75 = vld [vmem:[#allocation3 + $0xf0] sm:$0xff]
    %v76 = vld [vmem:[#allocation3 + $0xf8] sm:$0xff]
    %v77 = vld [vmem:[%s1] sm:$0xff]
    %v78 = vpack.c.bf16 %v77, %v77
    %v79 = vld [vmem:[%s3] sm:$0xff]
    %v80 = vld [vmem:[%s3 + $0x8] sm:$0xff]
    %v81 = vld [vmem:[%s3 + $0x10] sm:$0xff]
    %v82 = vld [vmem:[%s3 + $0x18] sm:$0xff]
    %v83 = vld [vmem:[%s3 + $0x20] sm:$0xff]
    %v84 = vld [vmem:[%s3 + $0x28] sm:$0xff]
    %v85 = vld [vmem:[%s3 + $0x30] sm:$0xff]
    %v86 = vld [vmem:[%s3 + $0x38] sm:$0xff]
    %v87 = vld [vmem:[%s3 + $0x40] sm:$0xff]
    %v88 = vld [vmem:[%s3 + $0x48] sm:$0xff]
    %v89 = vld [vmem:[%s3 + $0x50] sm:$0xff]
    %v90 = vld [vmem:[%s3 + $0x58] sm:$0xff]
    %v91 = vld [vmem:[%s3 + $0x60] sm:$0xff]
    %v92 = vld [vmem:[%s3 + $0x68] sm:$0xff]
    %v93 = vld [vmem:[%s3 + $0x70] sm:$0xff]
    %v94 = vld [vmem:[%s3 + $0x78] sm:$0xff]
    %v95 = vld [vmem:[%s3 + $0x80] sm:$0xff]
    %v96 = vld [vmem:[%s3 + $0x88] sm:$0xff]
    %v97 = vld [vmem:[%s3 + $0x90] sm:$0xff]
    %v98 = vld [vmem:[%s3 + $0x98] sm:$0xff]
    %v99 = vld [vmem:[%s3 + $0xa0] sm:$0xff]
    %v100 = vld [vmem:[%s3 + $0xa8] sm:$0xff]
    %v101 = vld [vmem:[%s3 + $0xb0] sm:$0xff]
    %v102 = vld [vmem:[%s3 + $0xb8] sm:$0xff]
    %v103 = vld [vmem:[%s3 + $0xc0] sm:$0xff]
    %v104 = vld [vmem:[%s3 + $0xc8] sm:$0xff]
    %v105 = vld [vmem:[%s3 + $0xd0] sm:$0xff]
    %v106 = vld [vmem:[%s3 + $0xd8] sm:$0xff]
    %v107 = vld [vmem:[%s3 + $0xe0] sm:$0xff]
    %v108 = vld [vmem:[%s3 + $0xe8] sm:$0xff]
    %v109 = vld [vmem:[%s3 + $0xf0] sm:$0xff]
    %v110 = vld [vmem:[%s3 + $0xf8] sm:$0xff]
    %v111 = vld [vmem:[%s3 + $0x100] sm:$0xff]
    %v112 = vld [vmem:[%s3 + $0x108] sm:$0xff]
    %v113 = vld [vmem:[%s3 + $0x110] sm:$0xff]
    %v114 = vld [vmem:[%s3 + $0x118] sm:$0xff]
    %v115 = vld [vmem:[%s3 + $0x120] sm:$0xff]
    %v116 = vld [vmem:[%s3 + $0x128] sm:$0xff]
    %v117 = vld [vmem:[%s3 + $0x130] sm:$0xff]
    %v118 = vld [vmem:[%s3 + $0x138] sm:$0xff]
    %v119 = vld [vmem:[%s3 + $0x140] sm:$0xff]
    %v120 = vld [vmem:[%s3 + $0x148] sm:$0xff]
    %v121 = vld [vmem:[%s3 + $0x150] sm:$0xff]
    %v122 = vld [vmem:[%s3 + $0x158] sm:$0xff]
    %v123 = vld [vmem:[%s3 + $0x160] sm:$0xff]
    %v124 = vld [vmem:[%s3 + $0x168] sm:$0xff]
    %v125 = vld [vmem:[%s3 + $0x170] sm:$0xff]
    %v126 = vld [vmem:[%s3 + $0x178] sm:$0xff]
    %v127 = vld [vmem:[%s3 + $0x180] sm:$0xff]
    %v128 = vld [vmem:[%s3 + $0x188] sm:$0xff]
    %v129 = vld [vmem:[%s3 + $0x190] sm:$0xff]
    %v130 = vld [vmem:[%s3 + $0x198] sm:$0xff]
    %v131 = vld [vmem:[%s3 + $0x1a0] sm:$0xff]
    %v132 = vld [vmem:[%s3 + $0x1a8] sm:$0xff]
    %v133 = vld [vmem:[%s3 + $0x1b0] sm:$0xff]
    %v134 = vld [vmem:[%s3 + $0x1b8] sm:$0xff]
    %v135 = vld [vmem:[%s3 + $0x1c0] sm:$0xff]
    %v136 = vld [vmem:[%s3 + $0x1c8] sm:$0xff]
    %v137 = vld [vmem:[%s3 + $0x1d0] sm:$0xff]
    %v138 = vld [vmem:[%s3 + $0x1d8] sm:$0xff]
    %v139 = vld [vmem:[%s3 + $0x1e0] sm:$0xff]
    %v140 = vld [vmem:[%s3 + $0x1e8] sm:$0xff]
    %v141 = vld [vmem:[%s3 + $0x1f0] sm:$0xff]
    %v142 = vld [vmem:[%s3 + $0x1f8] sm:$0xff]
    %v207 = vunpack.c.l.b16 %v79
    %v208 = vunpack.c.h.b16 %v79
    %v209 = vunpack.c.l.b16 %v80
    %v210 = vunpack.c.h.b16 %v80
    %v211 = vunpack.c.l.b16 %v81
    %v212 = vunpack.c.h.b16 %v81
    %v213 = vunpack.c.l.b16 %v82
    %v214 = vunpack.c.h.b16 %v82
    %v215 = vunpack.c.l.b16 %v83
    %v216 = vunpack.c.h.b16 %v83
    %v217 = vunpack.c.l.b16 %v84
    %v218 = vunpack.c.h.b16 %v84
    %v219 = vunpack.c.l.b16 %v85
    %v220 = vunpack.c.h.b16 %v85
    %v221 = vunpack.c.l.b16 %v86
    %v222 = vunpack.c.h.b16 %v86
    %v223 = vunpack.c.l.b16 %v87
    %v224 = vunpack.c.h.b16 %v87
    %v225 = vunpack.c.l.b16 %v88
    %v226 = vunpack.c.h.b16 %v88
    %v227 = vunpack.c.l.b16 %v89
    %v228 = vunpack.c.h.b16 %v89
    %v229 = vunpack.c.l.b16 %v90
    %v230 = vunpack.c.h.b16 %v90
    %v231 = vunpack.c.l.b16 %v91
    %v232 = vunpack.c.h.b16 %v91
    %v233 = vunpack.c.l.b16 %v92
    %v234 = vunpack.c.h.b16 %v92
    %v235 = vunpack.c.l.b16 %v93
    %v236 = vunpack.c.h.b16 %v93
    %v237 = vunpack.c.l.b16 %v94
    %v238 = vunpack.c.h.b16 %v94
    %v239 = vunpack.c.l.b16 %v95
    %v240 = vunpack.c.h.b16 %v95
    %v241 = vunpack.c.l.b16 %v96
    %v242 = vunpack.c.h.b16 %v96
    %v243 = vunpack.c.l.b16 %v97
    %v244 = vunpack.c.h.b16 %v97
    %v245 = vunpack.c.l.b16 %v98
    %v246 = vunpack.c.h.b16 %v98
    %v247 = vunpack.c.l.b16 %v99
    %v248 = vunpack.c.h.b16 %v99
    %v249 = vunpack.c.l.b16 %v100
    %v250 = vunpack.c.h.b16 %v100
    %v251 = vunpack.c.l.b16 %v101
    %v252 = vunpack.c.h.b16 %v101
    %v253 = vunpack.c.l.b16 %v102
    %v254 = vunpack.c.h.b16 %v102
    %v255 = vunpack.c.l.b16 %v103
    %v256 = vunpack.c.h.b16 %v103
    %v257 = vunpack.c.l.b16 %v104
    %v258 = vunpack.c.h.b16 %v104
    %v259 = vunpack.c.l.b16 %v105
    %v260 = vunpack.c.h.b16 %v105
    %v261 = vunpack.c.l.b16 %v106
    %v262 = vunpack.c.h.b16 %v106
    %v263 = vunpack.c.l.b16 %v107
    %v264 = vunpack.c.h.b16 %v107
    %v265 = vunpack.c.l.b16 %v108
    %v266 = vunpack.c.h.b16 %v108
    %v267 = vunpack.c.l.b16 %v109
    %v268 = vunpack.c.h.b16 %v109
    %v269 = vunpack.c.l.b16 %v110
    %v270 = vunpack.c.h.b16 %v110
    %v271 = vunpack.c.l.b16 %v111
    %v272 = vunpack.c.h.b16 %v111
    %v273 = vunpack.c.l.b16 %v112
    %v274 = vunpack.c.h.b16 %v112
    %v275 = vunpack.c.l.b16 %v113
    %v276 = vunpack.c.h.b16 %v113
    %v277 = vunpack.c.l.b16 %v114
    %v278 = vunpack.c.h.b16 %v114
    %v279 = vunpack.c.l.b16 %v115
    %v280 = vunpack.c.h.b16 %v115
    %v281 = vunpack.c.l.b16 %v116
    %v282 = vunpack.c.h.b16 %v116
    %v283 = vunpack.c.l.b16 %v117
    %v284 = vunpack.c.h.b16 %v117
    %v285 = vunpack.c.l.b16 %v118
    %v286 = vunpack.c.h.b16 %v118
    %v287 = vunpack.c.l.b16 %v119
    %v288 = vunpack.c.h.b16 %v119
    %v289 = vunpack.c.l.b16 %v120
    %v290 = vunpack.c.h.b16 %v120
    %v291 = vunpack.c.l.b16 %v121
    %v292 = vunpack.c.h.b16 %v121
    %v293 = vunpack.c.l.b16 %v122
    %v294 = vunpack.c.h.b16 %v122
    %v295 = vunpack.c.l.b16 %v123
    %v296 = vunpack.c.h.b16 %v123
    %v297 = vunpack.c.l.b16 %v124
    %v298 = vunpack.c.h.b16 %v124
    %v299 = vunpack.c.l.b16 %v125
    %v300 = vunpack.c.h.b16 %v125
    %v301 = vunpack.c.l.b16 %v126
    %v302 = vunpack.c.h.b16 %v126
    %v303 = vunpack.c.l.b16 %v127
    %v304 = vunpack.c.h.b16 %v127
    %v305 = vunpack.c.l.b16 %v128
    %v306 = vunpack.c.h.b16 %v128
    %v307 = vunpack.c.l.b16 %v129
    %v308 = vunpack.c.h.b16 %v129
    %v309 = vunpack.c.l.b16 %v130
    %v310 = vunpack.c.h.b16 %v130
    %v311 = vunpack.c.l.b16 %v131
    %v312 = vunpack.c.h.b16 %v131
    %v313 = vunpack.c.l.b16 %v132
    %v314 = vunpack.c.h.b16 %v132
    %v315 = vunpack.c.l.b16 %v133
    %v316 = vunpack.c.h.b16 %v133
    %v317 = vunpack.c.l.b16 %v134
    %v318 = vunpack.c.h.b16 %v134
    %v319 = vunpack.c.l.b16 %v135
    %v320 = vunpack.c.h.b16 %v135
    %v321 = vunpack.c.l.b16 %v136
    %v322 = vunpack.c.h.b16 %v136
    %v323 = vunpack.c.l.b16 %v137
    %v324 = vunpack.c.h.b16 %v137
    %v325 = vunpack.c.l.b16 %v138
    %v326 = vunpack.c.h.b16 %v138
    %v327 = vunpack.c.l.b16 %v139
    %v328 = vunpack.c.h.b16 %v139
    %v329 = vunpack.c.l.b16 %v140
    %v330 = vunpack.c.h.b16 %v140
    %v331 = vunpack.c.l.b16 %v141
    %v332 = vunpack.c.h.b16 %v141
    %v333 = vunpack.c.l.b16 %v142
    %v334 = vunpack.c.h.b16 %v142
    %v335 = vpack.c.b16 %v215, %v207
    %v336 = vpack.c.b16 %v216, %v208
    %v337 = vpack.c.b16 %v217, %v209
    %v338 = vpack.c.b16 %v218, %v210
    %v339 = vpack.c.b16 %v219, %v211
    %v340 = vpack.c.b16 %v220, %v212
    %v341 = vpack.c.b16 %v221, %v213
    %v342 = vpack.c.b16 %v222, %v214
    %v343 = vpack.c.b16 %v231, %v223
    %v344 = vpack.c.b16 %v232, %v224
    %v345 = vpack.c.b16 %v233, %v225
    %v346 = vpack.c.b16 %v234, %v226
    %v347 = vpack.c.b16 %v235, %v227
    %v348 = vpack.c.b16 %v236, %v228
    %v349 = vpack.c.b16 %v237, %v229
    %v350 = vpack.c.b16 %v238, %v230
    %v351 = vpack.c.b16 %v247, %v239
    %v352 = vpack.c.b16 %v248, %v240
    %v353 = vpack.c.b16 %v249, %v241
    %v354 = vpack.c.b16 %v250, %v242
    %v355 = vpack.c.b16 %v251, %v243
    %v356 = vpack.c.b16 %v252, %v244
    %v357 = vpack.c.b16 %v253, %v245
    %v358 = vpack.c.b16 %v254, %v246
    %v359 = vpack.c.b16 %v263, %v255
    %v360 = vpack.c.b16 %v264, %v256
    %v361 = vpack.c.b16 %v265, %v257
    %v362 = vpack.c.b16 %v266, %v258
    %v363 = vpack.c.b16 %v267, %v259
    %v364 = vpack.c.b16 %v268, %v260
    %v365 = vpack.c.b16 %v269, %v261
    %v366 = vpack.c.b16 %v270, %v262
    %v367 = vpack.c.b16 %v279, %v271
    %v368 = vpack.c.b16 %v280, %v272
    %v369 = vpack.c.b16 %v281, %v273
    %v370 = vpack.c.b16 %v282, %v274
    %v371 = vpack.c.b16 %v283, %v275
    %v372 = vpack.c.b16 %v284, %v276
    %v373 = vpack.c.b16 %v285, %v277
    %v374 = vpack.c.b16 %v286, %v278
    %v375 = vpack.c.b16 %v295, %v287
    %v376 = vpack.c.b16 %v296, %v288
    %v377 = vpack.c.b16 %v297, %v289
    %v378 = vpack.c.b16 %v298, %v290
    %v379 = vpack.c.b16 %v299, %v291
    %v380 = vpack.c.b16 %v300, %v292
    %v381 = vpack.c.b16 %v301, %v293
    %v382 = vpack.c.b16 %v302, %v294
    %v383 = vpack.c.b16 %v311, %v303
    %v384 = vpack.c.b16 %v312, %v304
    %v385 = vpack.c.b16 %v313, %v305
    %v386 = vpack.c.b16 %v314, %v306
    %v387 = vpack.c.b16 %v315, %v307
    %v388 = vpack.c.b16 %v316, %v308
    %v389 = vpack.c.b16 %v317, %v309
    %v390 = vpack.c.b16 %v318, %v310
    %v391 = vpack.c.b16 %v327, %v319
    %v392 = vpack.c.b16 %v328, %v320
    %v393 = vpack.c.b16 %v329, %v321
    %v394 = vpack.c.b16 %v330, %v322
    %v395 = vpack.c.b16 %v331, %v323
    %v396 = vpack.c.b16 %v332, %v324
    %v397 = vpack.c.b16 %v333, %v325
    %v398 = vpack.c.b16 %v334, %v326
    %463 = vmatprep.subr.bf16.mxu0 %v392
    %464 = vmatpush1.bf16.msra.mxu0 %v391
    %465 = vmatprep.subr.bf16.mxu0 %v384
    %466 = vmatpush1.bf16.msra.mxu0 %v383
    %467 = vmatprep.subr.bf16.mxu0 %v376
    %468 = vmatpush1.bf16.msra.mxu0 %v375
    %469 = vmatprep.subr.bf16.mxu0 %v368
    %470 = vmatpush1.bf16.msra.mxu0 %v367
    %471 = vmatprep.subr.bf16.mxu0 %v360
    %472 = vmatpush1.bf16.msra.mxu0 %v359
    %473 = vmatprep.subr.bf16.mxu0 %v352
    %474 = vmatpush1.bf16.msra.mxu0 %v351
    %475 = vmatprep.subr.bf16.mxu0 %v344
    %476 = vmatpush1.bf16.msra.mxu0 %v343
    %477 = vmatprep.subr.bf16.mxu0 %v336
    %478 = vmatpush1.bf16.msra.mxu0 %v335
    %479 = vmatprep.subr.bf16.mxu0 0
    %480 = vmatpush2.bf16.msra.mxu0 0
    %481 = vmatprep.subr.bf16.mxu0 0
    %482 = vmatpush2.bf16.msra.mxu0 0
    %483 = vmatprep.subr.bf16.mxu0 0
    %484 = vmatpush2.bf16.msra.mxu0 0
    %485 = vmatprep.subr.bf16.mxu0 0
    %486 = vmatpush2.bf16.msra.mxu0 0
    %487 = vmatprep.subr.bf16.mxu0 0
    %488 = vmatpush2.bf16.msra.mxu0 0
    %489 = vmatprep.subr.bf16.mxu0 0
    %490 = vmatpush2.bf16.msra.mxu0 0
    %491 = vmatprep.subr.bf16.mxu0 0
    %492 = vmatpush2.bf16.msra.mxu0 0
    %493 = vmatprep.subr.bf16.mxu0 0
    %494 = vmatpush2.bf16.msra.mxu0 0
    %495 = vmatprep.mubr.bf16.mxu0 0
    %496 = vmatmul.mubr.bf16.gmra.mxu0 %v78
    %v497 = vpop.f32.mrf.mxu0
    %v498 = vadd.f32 0.0, %v497
    %v499 = vpop.f32.mrf.mxu0
    %v500 = vadd.f32 0.0, %v499
    %v501 = vpop.f32.mrf.mxu0
    %v502 = vpop.f32.mrf.mxu0
    %503 = vdwg.mxu0
    %504 = vmatprep.subr.bf16.mxu0 %v394
    %505 = vmatpush1.bf16.msra.mxu0 %v393
    %506 = vmatprep.subr.bf16.mxu0 %v386
    %507 = vmatpush1.bf16.msra.mxu0 %v385
    %508 = vmatprep.subr.bf16.mxu0 %v378
    %509 = vmatpush1.bf16.msra.mxu0 %v377
    %510 = vmatprep.subr.bf16.mxu0 %v370
    %511 = vmatpush1.bf16.msra.mxu0 %v369
    %512 = vmatprep.subr.bf16.mxu0 %v362
    %513 = vmatpush1.bf16.msra.mxu0 %v361
    %514 = vmatprep.subr.bf16.mxu0 %v354
    %515 = vmatpush1.bf16.msra.mxu0 %v353
    %516 = vmatprep.subr.bf16.mxu0 %v346
    %517 = vmatpush1.bf16.msra.mxu0 %v345
    %518 = vmatprep.subr.bf16.mxu0 %v338
    %519 = vmatpush1.bf16.msra.mxu0 %v337
    %520 = vmatprep.subr.bf16.mxu0 0
    %521 = vmatpush2.bf16.msra.mxu0 0
    %522 = vmatprep.subr.bf16.mxu0 0
    %523 = vmatpush2.bf16.msra.mxu0 0
    %524 = vmatprep.subr.bf16.mxu0 0
    %525 = vmatpush2.bf16.msra.mxu0 0
    %526 = vmatprep.subr.bf16.mxu0 0
    %527 = vmatpush2.bf16.msra.mxu0 0
    %528 = vmatprep.subr.bf16.mxu0 0
    %529 = vmatpush2.bf16.msra.mxu0 0
    %530 = vmatprep.subr.bf16.mxu0 0
    %531 = vmatpush2.bf16.msra.mxu0 0
    %532 = vmatprep.subr.bf16.mxu0 0
    %533 = vmatpush2.bf16.msra.mxu0 0
    %534 = vmatprep.subr.bf16.mxu0 0
    %535 = vmatpush2.bf16.msra.mxu0 0
    %536 = vmatprep.mubr.bf16.mxu0 0
    %537 = vmatmul.mubr.bf16.gmra.mxu0 %v78
    %v538 = vpop.f32.mrf.mxu0
    %v539 = vadd.f32 0.0, %v538
    %v540 = vpop.f32.mrf.mxu0
    %v541 = vadd.f32 0.0, %v540
    %v542 = vpop.f32.mrf.mxu0
    %v543 = vpop.f32.mrf.mxu0
    %544 = vdwg.mxu0
    %545 = vmatprep.subr.bf16.mxu0 %v396
    %546 = vmatpush1.bf16.msra.mxu0 %v395
    %547 = vmatprep.subr.bf16.mxu0 %v388
    %548 = vmatpush1.bf16.msra.mxu0 %v387
    %549 = vmatprep.subr.bf16.mxu0 %v380
    %550 = vmatpush1.bf16.msra.mxu0 %v379
    %551 = vmatprep.subr.bf16.mxu0 %v372
    %552 = vmatpush1.bf16.msra.mxu0 %v371
    %553 = vmatprep.subr.bf16.mxu0 %v364
    %554 = vmatpush1.bf16.msra.mxu0 %v363
    %555 = vmatprep.subr.bf16.mxu0 %v356
    %556 = vmatpush1.bf16.msra.mxu0 %v355
    %557 = vmatprep.subr.bf16.mxu0 %v348
    %558 = vmatpush1.bf16.msra.mxu0 %v347
    %559 = vmatprep.subr.bf16.mxu0 %v340
    %560 = vmatpush1.bf16.msra.mxu0 %v339
    %561 = vmatprep.subr.bf16.mxu0 0
    %562 = vmatpush2.bf16.msra.mxu0 0
    %563 = vmatprep.subr.bf16.mxu0 0
    %564 = vmatpush2.bf16.msra.mxu0 0
    %565 = vmatprep.subr.bf16.mxu0 0
    %566 = vmatpush2.bf16.msra.mxu0 0
    %567 = vmatprep.subr.bf16.mxu0 0
    %568 = vmatpush2.bf16.msra.mxu0 0
    %569 = vmatprep.subr.bf16.mxu0 0
    %570 = vmatpush2.bf16.msra.mxu0 0
    %571 = vmatprep.subr.bf16.mxu0 0
    %572 = vmatpush2.bf16.msra.mxu0 0
    %573 = vmatprep.subr.bf16.mxu0 0
    %574 = vmatpush2.bf16.msra.mxu0 0
    %575 = vmatprep.subr.bf16.mxu0 0
    %576 = vmatpush2.bf16.msra.mxu0 0
    %577 = vmatprep.mubr.bf16.mxu0 0
    %578 = vmatmul.mubr.bf16.gmra.mxu0 %v78
    %v579 = vpop.f32.mrf.mxu0
    %v580 = vadd.f32 0.0, %v579
    %v581 = vpop.f32.mrf.mxu0
    %v582 = vadd.f32 0.0, %v581
    %v583 = vpop.f32.mrf.mxu0
    %v584 = vpop.f32.mrf.mxu0
    %585 = vdwg.mxu0
    %586 = vmatprep.subr.bf16.mxu0 %v398
    %587 = vmatpush1.bf16.msra.mxu0 %v397
    %588 = vmatprep.subr.bf16.mxu0 %v390
    %589 = vmatpush1.bf16.msra.mxu0 %v389
    %590 = vmatprep.subr.bf16.mxu0 %v382
    %591 = vmatpush1.bf16.msra.mxu0 %v381
    %592 = vmatprep.subr.bf16.mxu0 %v374
    %593 = vmatpush1.bf16.msra.mxu0 %v373
    %594 = vmatprep.subr.bf16.mxu0 %v366
    %595 = vmatpush1.bf16.msra.mxu0 %v365
    %596 = vmatprep.subr.bf16.mxu0 %v358
    %597 = vmatpush1.bf16.msra.mxu0 %v357
    %598 = vmatprep.subr.bf16.mxu0 %v350
    %599 = vmatpush1.bf16.msra.mxu0 %v349
    %600 = vmatprep.subr.bf16.mxu0 %v342
    %601 = vmatpush1.bf16.msra.mxu0 %v341
    %602 = vmatprep.subr.bf16.mxu0 0
    %603 = vmatpush2.bf16.msra.mxu0 0
    %604 = vmatprep.subr.bf16.mxu0 0
    %605 = vmatpush2.bf16.msra.mxu0 0
    %606 = vmatprep.subr.bf16.mxu0 0
    %607 = vmatpush2.bf16.msra.mxu0 0
    %608 = vmatprep.subr.bf16.mxu0 0
    %609 = vmatpush2.bf16.msra.mxu0 0
    %610 = vmatprep.subr.bf16.mxu0 0
    %611 = vmatpush2.bf16.msra.mxu0 0
    %612 = vmatprep.subr.bf16.mxu0 0
    %613 = vmatpush2.bf16.msra.mxu0 0
    %614 = vmatprep.subr.bf16.mxu0 0
    %615 = vmatpush2.bf16.msra.mxu0 0
    %616 = vmatprep.subr.bf16.mxu0 0
    %617 = vmatpush2.bf16.msra.mxu0 0
    %618 = vmatprep.mubr.bf16.mxu0 0
    %619 = vmatmul.mubr.bf16.gmra.mxu0 %v78
    %v620 = vpop.f32.mrf.mxu0
    %v621 = vadd.f32 0.0, %v620
    %v622 = vpop.f32.mrf.mxu0
    %v623 = vadd.f32 0.0, %v622
    %v624 = vpop.f32.mrf.mxu0
    %v625 = vpop.f32.mrf.mxu0
    %626 = vdwg.mxu0
    %v659 = vunpack.c.l.b16 %v45
    %v660 = vunpack.c.h.b16 %v45
    %v661 = vunpack.c.l.b16 %v46
    %v662 = vunpack.c.h.b16 %v46
    %v663 = vunpack.c.l.b16 %v47
    %v664 = vunpack.c.h.b16 %v47
    %v665 = vunpack.c.l.b16 %v48
    %v666 = vunpack.c.h.b16 %v48
    %v667 = vunpack.c.l.b16 %v49
    %v668 = vunpack.c.h.b16 %v49
    %v669 = vunpack.c.l.b16 %v50
    %v670 = vunpack.c.h.b16 %v50
    %v671 = vunpack.c.l.b16 %v51
    %v672 = vunpack.c.h.b16 %v51
    %v673 = vunpack.c.l.b16 %v52
    %v674 = vunpack.c.h.b16 %v52
    %v675 = vunpack.c.l.b16 %v53
    %v676 = vunpack.c.h.b16 %v53
    %v677 = vunpack.c.l.b16 %v54
    %v678 = vunpack.c.h.b16 %v54
    %v679 = vunpack.c.l.b16 %v55
    %v680 = vunpack.c.h.b16 %v55
    %v681 = vunpack.c.l.b16 %v56
    %v682 = vunpack.c.h.b16 %v56
    %v683 = vunpack.c.l.b16 %v57
    %v684 = vunpack.c.h.b16 %v57
    %v685 = vunpack.c.l.b16 %v58
    %v686 = vunpack.c.h.b16 %v58
    %v687 = vunpack.c.l.b16 %v59
    %v688 = vunpack.c.h.b16 %v59
    %v689 = vunpack.c.l.b16 %v60
    %v690 = vunpack.c.h.b16 %v60
    %v691 = vunpack.c.l.b16 %v61
    %v692 = vunpack.c.h.b16 %v61
    %v693 = vunpack.c.l.b16 %v62
    %v694 = vunpack.c.h.b16 %v62
    %v695 = vunpack.c.l.b16 %v63
    %v696 = vunpack.c.h.b16 %v63
    %v697 = vunpack.c.l.b16 %v64
    %v698 = vunpack.c.h.b16 %v64
    %v699 = vunpack.c.l.b16 %v65
    %v700 = vunpack.c.h.b16 %v65
    %v701 = vunpack.c.l.b16 %v66
    %v702 = vunpack.c.h.b16 %v66
    %v703 = vunpack.c.l.b16 %v67
    %v704 = vunpack.c.h.b16 %v67
    %v705 = vunpack.c.l.b16 %v68
    %v706 = vunpack.c.h.b16 %v68
    %v707 = vunpack.c.l.b16 %v69
    %v708 = vunpack.c.h.b16 %v69
    %v709 = vunpack.c.l.b16 %v70
    %v710 = vunpack.c.h.b16 %v70
    %v711 = vunpack.c.l.b16 %v71
    %v712 = vunpack.c.h.b16 %v71
    %v713 = vunpack.c.l.b16 %v72
    %v714 = vunpack.c.h.b16 %v72
    %v715 = vunpack.c.l.b16 %v73
    %v716 = vunpack.c.h.b16 %v73
    %v717 = vunpack.c.l.b16 %v74
    %v718 = vunpack.c.h.b16 %v74
    %v719 = vunpack.c.l.b16 %v75
    %v720 = vunpack.c.h.b16 %v75
    %v721 = vunpack.c.l.b16 %v76
    %v722 = vunpack.c.h.b16 %v76
    %v723 = vpack.c.b16 %v667, %v659
    %v724 = vpack.c.b16 %v668, %v660
    %v725 = vpack.c.b16 %v669, %v661
    %v726 = vpack.c.b16 %v670, %v662
    %v727 = vpack.c.b16 %v671, %v663
    %v728 = vpack.c.b16 %v672, %v664
    %v729 = vpack.c.b16 %v673, %v665
    %v730 = vpack.c.b16 %v674, %v666
    %v731 = vpack.c.b16 %v683, %v675
    %v732 = vpack.c.b16 %v684, %v676
    %v733 = vpack.c.b16 %v685, %v677
    %v734 = vpack.c.b16 %v686, %v678
    %v735 = vpack.c.b16 %v687, %v679
    %v736 = vpack.c.b16 %v688, %v680
    %v737 = vpack.c.b16 %v689, %v681
    %v738 = vpack.c.b16 %v690, %v682
    %v739 = vpack.c.b16 %v699, %v691
    %v740 = vpack.c.b16 %v700, %v692
    %v741 = vpack.c.b16 %v701, %v693
    %v742 = vpack.c.b16 %v702, %v694
    %v743 = vpack.c.b16 %v703, %v695
    %v744 = vpack.c.b16 %v704, %v696
    %v745 = vpack.c.b16 %v705, %v697
    %v746 = vpack.c.b16 %v706, %v698
    %v747 = vpack.c.b16 %v715, %v707
    %v748 = vpack.c.b16 %v716, %v708
    %v749 = vpack.c.b16 %v717, %v709
    %v750 = vpack.c.b16 %v718, %v710
    %v751 = vpack.c.b16 %v719, %v711
    %v752 = vpack.c.b16 %v720, %v712
    %v753 = vpack.c.b16 %v721, %v713
    %v754 = vpack.c.b16 %v722, %v714
    %vm787 = vcmask 523264
    %v789 = vsel %vm787, %v44, 0
    %791 = vmatprep.subr.bf16.mxu0 0
    %792 = vmatpush1.bf16.msra.mxu0 0
    %793 = vmatprep.subr.bf16.mxu0 0
    %794 = vmatpush1.bf16.msra.mxu0 0
    %795 = vmatprep.subr.bf16.mxu0 0
    %796 = vmatpush1.bf16.msra.mxu0 0
    %797 = vmatprep.subr.bf16.mxu0 0
    %798 = vmatpush1.bf16.msra.mxu0 0
    %799 = vmatprep.subr.bf16.mxu0 %v748
    %800 = vmatpush1.bf16.msra.mxu0 %v747
    %801 = vmatprep.subr.bf16.mxu0 %v740
    %802 = vmatpush1.bf16.msra.mxu0 %v739
    %803 = vmatprep.subr.bf16.mxu0 %v732
    %804 = vmatpush1.bf16.msra.mxu0 %v731
    %805 = vmatprep.subr.bf16.mxu0 %v724
    %806 = vmatpush1.bf16.msra.mxu0 %v723
    %807 = vmatprep.subr.bf16.mxu0 0
    %808 = vmatpush2.bf16.msra.mxu0 0
    %809 = vmatprep.subr.bf16.mxu0 0
    %810 = vmatpush2.bf16.msra.mxu0 0
    %811 = vmatprep.subr.bf16.mxu0 0
    %812 = vmatpush2.bf16.msra.mxu0 0
    %813 = vmatprep.subr.bf16.mxu0 0
    %814 = vmatpush2.bf16.msra.mxu0 0
    %815 = vmatprep.subr.bf16.mxu0 0
    %816 = vmatpush2.bf16.msra.mxu0 0
    %817 = vmatprep.subr.bf16.mxu0 0
    %818 = vmatpush2.bf16.msra.mxu0 0
    %819 = vmatprep.subr.bf16.mxu0 0
    %820 = vmatpush2.bf16.msra.mxu0 0
    %821 = vmatprep.subr.bf16.mxu0 0
    %822 = vmatpush2.bf16.msra.mxu0 0
    %823 = vmatprep.mubr.bf16.mxu0 0
    %824 = vmatmul.mubr.bf16.gmra.mxu0 %v789
    %v825 = vpop.f32.mrf.mxu0
    %v826 = vadd.f32 %v498, %v825
    %v827 = vpop.f32.mrf.mxu0
    %v828 = vadd.f32 %v500, %v827
    %v829 = vpop.f32.mrf.mxu0
    %v830 = vpop.f32.mrf.mxu0
    %831 = vdwg.mxu0
    %832 = vmatprep.subr.bf16.mxu0 0
    %833 = vmatpush1.bf16.msra.mxu0 0
    %834 = vmatprep.subr.bf16.mxu0 0
    %835 = vmatpush1.bf16.msra.mxu0 0
    %836 = vmatprep.subr.bf16.mxu0 0
    %837 = vmatpush1.bf16.msra.mxu0 0
    %838 = vmatprep.subr.bf16.mxu0 0
    %839 = vmatpush1.bf16.msra.mxu0 0
    %840 = vmatprep.subr.bf16.mxu0 %v750
    %841 = vmatpush1.bf16.msra.mxu0 %v749
    %842 = vmatprep.subr.bf16.mxu0 %v742
    %843 = vmatpush1.bf16.msra.mxu0 %v741
    %844 = vmatprep.subr.bf16.mxu0 %v734
    %845 = vmatpush1.bf16.msra.mxu0 %v733
    %846 = vmatprep.subr.bf16.mxu0 %v726
    %847 = vmatpush1.bf16.msra.mxu0 %v725
    %848 = vmatprep.subr.bf16.mxu0 0
    %849 = vmatpush2.bf16.msra.mxu0 0
    %850 = vmatprep.subr.bf16.mxu0 0
    %851 = vmatpush2.bf16.msra.mxu0 0
    %852 = vmatprep.subr.bf16.mxu0 0
    %853 = vmatpush2.bf16.msra.mxu0 0
    %854 = vmatprep.subr.bf16.mxu0 0
    %855 = vmatpush2.bf16.msra.mxu0 0
    %856 = vmatprep.subr.bf16.mxu0 0
    %857 = vmatpush2.bf16.msra.mxu0 0
    %858 = vmatprep.subr.bf16.mxu0 0
    %859 = vmatpush2.bf16.msra.mxu0 0
    %860 = vmatprep.subr.bf16.mxu0 0
    %861 = vmatpush2.bf16.msra.mxu0 0
    %862 = vmatprep.subr.bf16.mxu0 0
    %863 = vmatpush2.bf16.msra.mxu0 0
    %864 = vmatprep.mubr.bf16.mxu0 0
    %865 = vmatmul.mubr.bf16.gmra.mxu0 %v789
    %v866 = vpop.f32.mrf.mxu0
    %v867 = vadd.f32 %v539, %v866
    %v868 = vpop.f32.mrf.mxu0
    %v869 = vadd.f32 %v541, %v868
    %v870 = vpop.f32.mrf.mxu0
    %v871 = vpop.f32.mrf.mxu0
    %872 = vdwg.mxu0
    %873 = vmatprep.subr.bf16.mxu0 0
    %874 = vmatpush1.bf16.msra.mxu0 0
    %875 = vmatprep.subr.bf16.mxu0 0
    %876 = vmatpush1.bf16.msra.mxu0 0
    %877 = vmatprep.subr.bf16.mxu0 0
    %878 = vmatpush1.bf16.msra.mxu0 0
    %879 = vmatprep.subr.bf16.mxu0 0
    %880 = vmatpush1.bf16.msra.mxu0 0
    %881 = vmatprep.subr.bf16.mxu0 %v752
    %882 = vmatpush1.bf16.msra.mxu0 %v751
    %883 = vmatprep.subr.bf16.mxu0 %v744
    %884 = vmatpush1.bf16.msra.mxu0 %v743
    %885 = vmatprep.subr.bf16.mxu0 %v736
    %886 = vmatpush1.bf16.msra.mxu0 %v735
    %887 = vmatprep.subr.bf16.mxu0 %v728
    %888 = vmatpush1.bf16.msra.mxu0 %v727
    %889 = vmatprep.subr.bf16.mxu0 0
    %890 = vmatpush2.bf16.msra.mxu0 0
    %891 = vmatprep.subr.bf16.mxu0 0
    %892 = vmatpush2.bf16.msra.mxu0 0
    %893 = vmatprep.subr.bf16.mxu0 0
    %894 = vmatpush2.bf16.msra.mxu0 0
    %895 = vmatprep.subr.bf16.mxu0 0
    %896 = vmatpush2.bf16.msra.mxu0 0
    %897 = vmatprep.subr.bf16.mxu0 0
    %898 = vmatpush2.bf16.msra.mxu0 0
    %899 = vmatprep.subr.bf16.mxu0 0
    %900 = vmatpush2.bf16.msra.mxu0 0
    %901 = vmatprep.subr.bf16.mxu0 0
    %902 = vmatpush2.bf16.msra.mxu0 0
    %903 = vmatprep.subr.bf16.mxu0 0
    %904 = vmatpush2.bf16.msra.mxu0 0
    %905 = vmatprep.mubr.bf16.mxu0 0
    %906 = vmatmul.mubr.bf16.gmra.mxu0 %v789
    %v907 = vpop.f32.mrf.mxu0
    %v908 = vadd.f32 %v580, %v907
    %v909 = vpop.f32.mrf.mxu0
    %v910 = vadd.f32 %v582, %v909
    %v911 = vpop.f32.mrf.mxu0
    %v912 = vpop.f32.mrf.mxu0
    %913 = vdwg.mxu0
    %914 = vmatprep.subr.bf16.mxu0 0
    %915 = vmatpush1.bf16.msra.mxu0 0
    %916 = vmatprep.subr.bf16.mxu0 0
    %917 = vmatpush1.bf16.msra.mxu0 0
    %918 = vmatprep.subr.bf16.mxu0 0
    %919 = vmatpush1.bf16.msra.mxu0 0
    %920 = vmatprep.subr.bf16.mxu0 0
    %921 = vmatpush1.bf16.msra.mxu0 0
    %922 = vmatprep.subr.bf16.mxu0 %v754
    %923 = vmatpush1.bf16.msra.mxu0 %v753
    %924 = vmatprep.subr.bf16.mxu0 %v746
    %925 = vmatpush1.bf16.msra.mxu0 %v745
    %926 = vmatprep.subr.bf16.mxu0 %v738
    %927 = vmatpush1.bf16.msra.mxu0 %v737
    %928 = vmatprep.subr.bf16.mxu0 %v730
    %929 = vmatpush1.bf16.msra.mxu0 %v729
    %930 = vmatprep.subr.bf16.mxu0 0
    %931 = vmatpush2.bf16.msra.mxu0 0
    %932 = vmatprep.subr.bf16.mxu0 0
    %933 = vmatpush2.bf16.msra.mxu0 0
    %934 = vmatprep.subr.bf16.mxu0 0
    %935 = vmatpush2.bf16.msra.mxu0 0
    %936 = vmatprep.subr.bf16.mxu0 0
    %937 = vmatpush2.bf16.msra.mxu0 0
    %938 = vmatprep.subr.bf16.mxu0 0
    %939 = vmatpush2.bf16.msra.mxu0 0
    %940 = vmatprep.subr.bf16.mxu0 0
    %941 = vmatpush2.bf16.msra.mxu0 0
    %942 = vmatprep.subr.bf16.mxu0 0
    %943 = vmatpush2.bf16.msra.mxu0 0
    %944 = vmatprep.subr.bf16.mxu0 0
    %945 = vmatpush2.bf16.msra.mxu0 0
    %946 = vmatprep.mubr.bf16.mxu0 0
    %947 = vmatmul.mubr.bf16.gmra.mxu0 %v789
    %v948 = vpop.f32.mrf.mxu0
    %v949 = vadd.f32 %v621, %v948
    %v950 = vpop.f32.mrf.mxu0
    %v951 = vadd.f32 %v623, %v950
    %v952 = vpop.f32.mrf.mxu0
    %v953 = vpop.f32.mrf.mxu0
    %954 = vdwg.mxu0
    %v955 = vld [vmem:[%s4] sm:$0xff]
    %v957 = vlaneseq
    %v958 = vshrl.u32 %v957, 7
    %v959 = vsub.s32 0, %v958
    %v960 = vrot.slane %v955, %v959
    %v961 = vlaneseq
    %v962 = vshrl.u32 %v961, 7
    %v963 = vsub.s32 1, %v962
    %v964 = vrot.slane %v955, %v963
    %v965 = vlaneseq
    %v966 = vshrl.u32 %v965, 7
    %v967 = vsub.s32 2, %v966
    %v968 = vrot.slane %v955, %v967
    %v969 = vlaneseq
    %v970 = vshrl.u32 %v969, 7
    %v971 = vsub.s32 3, %v970
    %v972 = vrot.slane %v955, %v971
    %v973 = vlaneseq
    %v974 = vshrl.u32 %v973, 7
    %v975 = vsub.s32 4, %v974
    %v976 = vrot.slane %v955, %v975
    %v977 = vlaneseq
    %v978 = vshrl.u32 %v977, 7
    %v979 = vsub.s32 5, %v978
    %v980 = vrot.slane %v955, %v979
    %v981 = vlaneseq
    %v982 = vshrl.u32 %v981, 7
    %v983 = vsub.s32 6, %v982
    %v984 = vrot.slane %v955, %v983
    %v985 = vlaneseq
    %v986 = vshrl.u32 %v985, 7
    %v987 = vsub.s32 7, %v986
    %v988 = vrot.slane %v955, %v987
    %v997 = vadd.f32 %v826, %v960
    %v998 = vadd.f32 %v828, %v964
    %v999 = vadd.f32 %v867, %v968
    %v1000 = vadd.f32 %v869, %v972
    %v1001 = vadd.f32 %v908, %v976
    %v1002 = vadd.f32 %v910, %v980
    %v1003 = vadd.f32 %v949, %v984
    %v1004 = vadd.f32 %v951, %v988
    %v1005 = vmax.f32 %v997, 0.0
    %v1006 = vmax.f32 %v998, 0.0
    %v1007 = vmax.f32 %v999, 0.0
    %v1008 = vmax.f32 %v1000, 0.0
    %v1009 = vmax.f32 %v1001, 0.0
    %v1010 = vmax.f32 %v1002, 0.0
    %v1011 = vmax.f32 %v1003, 0.0
    %v1012 = vmax.f32 %v1004, 0.0
    %v1013 = vmul.f32 %v1005, %v1005
    %v1014 = vmul.f32 %v1006, %v1006
    %v1015 = vmul.f32 %v1007, %v1007
    %v1016 = vmul.f32 %v1008, %v1008
    %v1017 = vmul.f32 %v1009, %v1009
    %v1018 = vmul.f32 %v1010, %v1010
    %v1019 = vmul.f32 %v1011, %v1011
    %v1020 = vmul.f32 %v1012, %v1012
    %v1021 = vadd.f32 %v1013, %v1014
    %v1022 = vadd.f32 %v1021, %v1015
    %v1023 = vadd.f32 %v1022, %v1016
    %v1024 = vadd.f32 %v1023, %v1017
    %v1025 = vadd.f32 %v1024, %v1018
    %v1026 = vadd.f32 %v1025, %v1019
    %v1027 = vadd.f32 %v1026, %v1020
    %1028 = vadd.xlane.f32.xlu0 %v1027
    %v1029 = vpop.xlane.xlu0 %1028
    %v1030 = vmax.f32 %v1029, 1e-24
    %v1031 = vrsqrt.pop %v1030
    %v1032 = vmul.f32 %v1005, %v1031
    %v1033 = vmul.f32 %v1006, %v1031
    %v1034 = vmul.f32 %v1007, %v1031
    %v1035 = vmul.f32 %v1008, %v1031
    %v1036 = vmul.f32 %v1009, %v1031
    %v1037 = vmul.f32 %v1010, %v1031
    %v1038 = vmul.f32 %v1011, %v1031
    %v1039 = vmul.f32 %v1012, %v1031
    %v1040 = vpack.c.bf16 %v1032, %v1032
    %v1041 = vpack.c.bf16 %v1033, %v1033
    %v1042 = vpack.c.bf16 %v1034, %v1034
    %v1043 = vpack.c.bf16 %v1035, %v1035
    %v1044 = vpack.c.bf16 %v1036, %v1036
    %v1045 = vpack.c.bf16 %v1037, %v1037
    %v1046 = vpack.c.bf16 %v1038, %v1038
    %v1047 = vpack.c.bf16 %v1039, %v1039
    %v1048 = vld [vmem:[%s5] sm:$0xff]
    %v1049 = vld [vmem:[%s5 + $0x8] sm:$0xff]
    %v1050 = vld [vmem:[%s5 + $0x10] sm:$0xff]
    %v1051 = vld [vmem:[%s5 + $0x18] sm:$0xff]
    %v1052 = vld [vmem:[%s5 + $0x20] sm:$0xff]
    %v1053 = vld [vmem:[%s5 + $0x28] sm:$0xff]
    %v1054 = vld [vmem:[%s5 + $0x30] sm:$0xff]
    %v1055 = vld [vmem:[%s5 + $0x38] sm:$0xff]
    %v1056 = vld [vmem:[%s5 + $0x40] sm:$0xff]
    %v1057 = vld [vmem:[%s5 + $0x48] sm:$0xff]
    %v1058 = vld [vmem:[%s5 + $0x50] sm:$0xff]
    %v1059 = vld [vmem:[%s5 + $0x58] sm:$0xff]
    %v1060 = vld [vmem:[%s5 + $0x60] sm:$0xff]
    %v1061 = vld [vmem:[%s5 + $0x68] sm:$0xff]
    %v1062 = vld [vmem:[%s5 + $0x70] sm:$0xff]
    %v1063 = vld [vmem:[%s5 + $0x78] sm:$0xff]
    %v1064 = vld [vmem:[%s5 + $0x80] sm:$0xff]
    %v1065 = vld [vmem:[%s5 + $0x88] sm:$0xff]
    %v1066 = vld [vmem:[%s5 + $0x90] sm:$0xff]
    %v1067 = vld [vmem:[%s5 + $0x98] sm:$0xff]
    %v1068 = vld [vmem:[%s5 + $0xa0] sm:$0xff]
    %v1069 = vld [vmem:[%s5 + $0xa8] sm:$0xff]
    %v1070 = vld [vmem:[%s5 + $0xb0] sm:$0xff]
    %v1071 = vld [vmem:[%s5 + $0xb8] sm:$0xff]
    %v1072 = vld [vmem:[%s5 + $0xc0] sm:$0xff]
    %v1073 = vld [vmem:[%s5 + $0xc8] sm:$0xff]
    %v1074 = vld [vmem:[%s5 + $0xd0] sm:$0xff]
    %v1075 = vld [vmem:[%s5 + $0xd8] sm:$0xff]
    %v1076 = vld [vmem:[%s5 + $0xe0] sm:$0xff]
    %v1077 = vld [vmem:[%s5 + $0xe8] sm:$0xff]
    %v1078 = vld [vmem:[%s5 + $0xf0] sm:$0xff]
    %v1079 = vld [vmem:[%s5 + $0xf8] sm:$0xff]
    %v1080 = vld [vmem:[%s5 + $0x100] sm:$0xff]
    %v1081 = vld [vmem:[%s5 + $0x108] sm:$0xff]
    %v1082 = vld [vmem:[%s5 + $0x110] sm:$0xff]
    %v1083 = vld [vmem:[%s5 + $0x118] sm:$0xff]
    %v1084 = vld [vmem:[%s5 + $0x120] sm:$0xff]
    %v1085 = vld [vmem:[%s5 + $0x128] sm:$0xff]
    %v1086 = vld [vmem:[%s5 + $0x130] sm:$0xff]
    %v1087 = vld [vmem:[%s5 + $0x138] sm:$0xff]
    %v1088 = vld [vmem:[%s5 + $0x140] sm:$0xff]
    %v1089 = vld [vmem:[%s5 + $0x148] sm:$0xff]
    %v1090 = vld [vmem:[%s5 + $0x150] sm:$0xff]
    %v1091 = vld [vmem:[%s5 + $0x158] sm:$0xff]
    %v1092 = vld [vmem:[%s5 + $0x160] sm:$0xff]
    %v1093 = vld [vmem:[%s5 + $0x168] sm:$0xff]
    %v1094 = vld [vmem:[%s5 + $0x170] sm:$0xff]
    %v1095 = vld [vmem:[%s5 + $0x178] sm:$0xff]
    %v1096 = vld [vmem:[%s5 + $0x180] sm:$0xff]
    %v1097 = vld [vmem:[%s5 + $0x188] sm:$0xff]
    %v1098 = vld [vmem:[%s5 + $0x190] sm:$0xff]
    %v1099 = vld [vmem:[%s5 + $0x198] sm:$0xff]
    %v1100 = vld [vmem:[%s5 + $0x1a0] sm:$0xff]
    %v1101 = vld [vmem:[%s5 + $0x1a8] sm:$0xff]
    %v1102 = vld [vmem:[%s5 + $0x1b0] sm:$0xff]
    %v1103 = vld [vmem:[%s5 + $0x1b8] sm:$0xff]
    %v1104 = vld [vmem:[%s5 + $0x1c0] sm:$0xff]
    %v1105 = vld [vmem:[%s5 + $0x1c8] sm:$0xff]
    %v1106 = vld [vmem:[%s5 + $0x1d0] sm:$0xff]
    %v1107 = vld [vmem:[%s5 + $0x1d8] sm:$0xff]
    %v1108 = vld [vmem:[%s5 + $0x1e0] sm:$0xff]
    %v1109 = vld [vmem:[%s5 + $0x1e8] sm:$0xff]
    %v1110 = vld [vmem:[%s5 + $0x1f0] sm:$0xff]
    %v1111 = vld [vmem:[%s5 + $0x1f8] sm:$0xff]
    %v1112 = vld [vmem:[%s5 + $0x200] sm:$0xff]
    %v1113 = vld [vmem:[%s5 + $0x208] sm:$0xff]
    %v1114 = vld [vmem:[%s5 + $0x210] sm:$0xff]
    %v1115 = vld [vmem:[%s5 + $0x218] sm:$0xff]
    %v1116 = vld [vmem:[%s5 + $0x220] sm:$0xff]
    %v1117 = vld [vmem:[%s5 + $0x228] sm:$0xff]
    %v1118 = vld [vmem:[%s5 + $0x230] sm:$0xff]
    %v1119 = vld [vmem:[%s5 + $0x238] sm:$0xff]
    %v1120 = vld [vmem:[%s5 + $0x240] sm:$0xff]
    %v1121 = vld [vmem:[%s5 + $0x248] sm:$0xff]
    %v1122 = vld [vmem:[%s5 + $0x250] sm:$0xff]
    %v1123 = vld [vmem:[%s5 + $0x258] sm:$0xff]
    %v1124 = vld [vmem:[%s5 + $0x260] sm:$0xff]
    %v1125 = vld [vmem:[%s5 + $0x268] sm:$0xff]
    %v1126 = vld [vmem:[%s5 + $0x270] sm:$0xff]
    %v1127 = vld [vmem:[%s5 + $0x278] sm:$0xff]
    %v1128 = vld [vmem:[%s5 + $0x280] sm:$0xff]
    %v1129 = vld [vmem:[%s5 + $0x288] sm:$0xff]
    %v1130 = vld [vmem:[%s5 + $0x290] sm:$0xff]
    %v1131 = vld [vmem:[%s5 + $0x298] sm:$0xff]
    %v1132 = vld [vmem:[%s5 + $0x2a0] sm:$0xff]
    %v1133 = vld [vmem:[%s5 + $0x2a8] sm:$0xff]
    %v1134 = vld [vmem:[%s5 + $0x2b0] sm:$0xff]
    %v1135 = vld [vmem:[%s5 + $0x2b8] sm:$0xff]
    %v1136 = vld [vmem:[%s5 + $0x2c0] sm:$0xff]
    %v1137 = vld [vmem:[%s5 + $0x2c8] sm:$0xff]
    %v1138 = vld [vmem:[%s5 + $0x2d0] sm:$0xff]
    %v1139 = vld [vmem:[%s5 + $0x2d8] sm:$0xff]
    %v1140 = vld [vmem:[%s5 + $0x2e0] sm:$0xff]
    %v1141 = vld [vmem:[%s5 + $0x2e8] sm:$0xff]
    %v1142 = vld [vmem:[%s5 + $0x2f0] sm:$0xff]
    %v1143 = vld [vmem:[%s5 + $0x2f8] sm:$0xff]
    %v1144 = vld [vmem:[%s5 + $0x300] sm:$0xff]
    %v1145 = vld [vmem:[%s5 + $0x308] sm:$0xff]
    %v1146 = vld [vmem:[%s5 + $0x310] sm:$0xff]
    %v1147 = vld [vmem:[%s5 + $0x318] sm:$0xff]
    %v1148 = vld [vmem:[%s5 + $0x320] sm:$0xff]
    %v1149 = vld [vmem:[%s5 + $0x328] sm:$0xff]
    %v1150 = vld [vmem:[%s5 + $0x330] sm:$0xff]
    %v1151 = vld [vmem:[%s5 + $0x338] sm:$0xff]
    %v1152 = vld [vmem:[%s5 + $0x340] sm:$0xff]
    %v1153 = vld [vmem:[%s5 + $0x348] sm:$0xff]
    %v1154 = vld [vmem:[%s5 + $0x350] sm:$0xff]
    %v1155 = vld [vmem:[%s5 + $0x358] sm:$0xff]
    %v1156 = vld [vmem:[%s5 + $0x360] sm:$0xff]
    %v1157 = vld [vmem:[%s5 + $0x368] sm:$0xff]
    %v1158 = vld [vmem:[%s5 + $0x370] sm:$0xff]
    %v1159 = vld [vmem:[%s5 + $0x378] sm:$0xff]
    %v1160 = vld [vmem:[%s5 + $0x380] sm:$0xff]
    %v1161 = vld [vmem:[%s5 + $0x388] sm:$0xff]
    %v1162 = vld [vmem:[%s5 + $0x390] sm:$0xff]
    %v1163 = vld [vmem:[%s5 + $0x398] sm:$0xff]
    %v1164 = vld [vmem:[%s5 + $0x3a0] sm:$0xff]
    %v1165 = vld [vmem:[%s5 + $0x3a8] sm:$0xff]
    %v1166 = vld [vmem:[%s5 + $0x3b0] sm:$0xff]
    %v1167 = vld [vmem:[%s5 + $0x3b8] sm:$0xff]
    %v1168 = vld [vmem:[%s5 + $0x3c0] sm:$0xff]
    %v1169 = vld [vmem:[%s5 + $0x3c8] sm:$0xff]
    %v1170 = vld [vmem:[%s5 + $0x3d0] sm:$0xff]
    %v1171 = vld [vmem:[%s5 + $0x3d8] sm:$0xff]
    %v1172 = vld [vmem:[%s5 + $0x3e0] sm:$0xff]
    %v1173 = vld [vmem:[%s5 + $0x3e8] sm:$0xff]
    %v1174 = vld [vmem:[%s5 + $0x3f0] sm:$0xff]
    %v1175 = vld [vmem:[%s5 + $0x3f8] sm:$0xff]
    %v1176 = vld [vmem:[%s5 + $0x400] sm:$0xff]
    %v1177 = vld [vmem:[%s5 + $0x408] sm:$0xff]
    %v1178 = vld [vmem:[%s5 + $0x410] sm:$0xff]
    %v1179 = vld [vmem:[%s5 + $0x418] sm:$0xff]
    %v1180 = vld [vmem:[%s5 + $0x420] sm:$0xff]
    %v1181 = vld [vmem:[%s5 + $0x428] sm:$0xff]
    %v1182 = vld [vmem:[%s5 + $0x430] sm:$0xff]
    %v1183 = vld [vmem:[%s5 + $0x438] sm:$0xff]
    %v1184 = vld [vmem:[%s5 + $0x440] sm:$0xff]
    %v1185 = vld [vmem:[%s5 + $0x448] sm:$0xff]
    %v1186 = vld [vmem:[%s5 + $0x450] sm:$0xff]
    %v1187 = vld [vmem:[%s5 + $0x458] sm:$0xff]
    %v1188 = vld [vmem:[%s5 + $0x460] sm:$0xff]
    %v1189 = vld [vmem:[%s5 + $0x468] sm:$0xff]
    %v1190 = vld [vmem:[%s5 + $0x470] sm:$0xff]
    %v1191 = vld [vmem:[%s5 + $0x478] sm:$0xff]
    %v1192 = vld [vmem:[%s5 + $0x480] sm:$0xff]
    %v1193 = vld [vmem:[%s5 + $0x488] sm:$0xff]
    %v1194 = vld [vmem:[%s5 + $0x490] sm:$0xff]
    %v1195 = vld [vmem:[%s5 + $0x498] sm:$0xff]
    %v1196 = vld [vmem:[%s5 + $0x4a0] sm:$0xff]
    %v1197 = vld [vmem:[%s5 + $0x4a8] sm:$0xff]
    %v1198 = vld [vmem:[%s5 + $0x4b0] sm:$0xff]
    %v1199 = vld [vmem:[%s5 + $0x4b8] sm:$0xff]
    %v1200 = vld [vmem:[%s5 + $0x4c0] sm:$0xff]
    %v1201 = vld [vmem:[%s5 + $0x4c8] sm:$0xff]
    %v1202 = vld [vmem:[%s5 + $0x4d0] sm:$0xff]
    %v1203 = vld [vmem:[%s5 + $0x4d8] sm:$0xff]
    %v1204 = vld [vmem:[%s5 + $0x4e0] sm:$0xff]
    %v1205 = vld [vmem:[%s5 + $0x4e8] sm:$0xff]
    %v1206 = vld [vmem:[%s5 + $0x4f0] sm:$0xff]
    %v1207 = vld [vmem:[%s5 + $0x4f8] sm:$0xff]
    %v1208 = vld [vmem:[%s5 + $0x500] sm:$0xff]
    %v1209 = vld [vmem:[%s5 + $0x508] sm:$0xff]
    %v1210 = vld [vmem:[%s5 + $0x510] sm:$0xff]
    %v1211 = vld [vmem:[%s5 + $0x518] sm:$0xff]
    %v1212 = vld [vmem:[%s5 + $0x520] sm:$0xff]
    %v1213 = vld [vmem:[%s5 + $0x528] sm:$0xff]
    %v1214 = vld [vmem:[%s5 + $0x530] sm:$0xff]
    %v1215 = vld [vmem:[%s5 + $0x538] sm:$0xff]
    %v1216 = vld [vmem:[%s5 + $0x540] sm:$0xff]
    %v1217 = vld [vmem:[%s5 + $0x548] sm:$0xff]
    %v1218 = vld [vmem:[%s5 + $0x550] sm:$0xff]
    %v1219 = vld [vmem:[%s5 + $0x558] sm:$0xff]
    %v1220 = vld [vmem:[%s5 + $0x560] sm:$0xff]
    %v1221 = vld [vmem:[%s5 + $0x568] sm:$0xff]
    %v1222 = vld [vmem:[%s5 + $0x570] sm:$0xff]
    %v1223 = vld [vmem:[%s5 + $0x578] sm:$0xff]
    %v1224 = vld [vmem:[%s5 + $0x580] sm:$0xff]
    %v1225 = vld [vmem:[%s5 + $0x588] sm:$0xff]
    %v1226 = vld [vmem:[%s5 + $0x590] sm:$0xff]
    %v1227 = vld [vmem:[%s5 + $0x598] sm:$0xff]
    %v1228 = vld [vmem:[%s5 + $0x5a0] sm:$0xff]
    %v1229 = vld [vmem:[%s5 + $0x5a8] sm:$0xff]
    %v1230 = vld [vmem:[%s5 + $0x5b0] sm:$0xff]
    %v1231 = vld [vmem:[%s5 + $0x5b8] sm:$0xff]
    %v1232 = vld [vmem:[%s5 + $0x5c0] sm:$0xff]
    %v1233 = vld [vmem:[%s5 + $0x5c8] sm:$0xff]
    %v1234 = vld [vmem:[%s5 + $0x5d0] sm:$0xff]
    %v1235 = vld [vmem:[%s5 + $0x5d8] sm:$0xff]
    %v1236 = vld [vmem:[%s5 + $0x5e0] sm:$0xff]
    %v1237 = vld [vmem:[%s5 + $0x5e8] sm:$0xff]
    %v1238 = vld [vmem:[%s5 + $0x5f0] sm:$0xff]
    %v1239 = vld [vmem:[%s5 + $0x5f8] sm:$0xff]
    %v1240 = vld [vmem:[%s5 + $0x600] sm:$0xff]
    %v1241 = vld [vmem:[%s5 + $0x608] sm:$0xff]
    %v1242 = vld [vmem:[%s5 + $0x610] sm:$0xff]
    %v1243 = vld [vmem:[%s5 + $0x618] sm:$0xff]
    %v1244 = vld [vmem:[%s5 + $0x620] sm:$0xff]
    %v1245 = vld [vmem:[%s5 + $0x628] sm:$0xff]
    %v1246 = vld [vmem:[%s5 + $0x630] sm:$0xff]
    %v1247 = vld [vmem:[%s5 + $0x638] sm:$0xff]
    %v1248 = vld [vmem:[%s5 + $0x640] sm:$0xff]
    %v1249 = vld [vmem:[%s5 + $0x648] sm:$0xff]
    %v1250 = vld [vmem:[%s5 + $0x650] sm:$0xff]
    %v1251 = vld [vmem:[%s5 + $0x658] sm:$0xff]
    %v1252 = vld [vmem:[%s5 + $0x660] sm:$0xff]
    %v1253 = vld [vmem:[%s5 + $0x668] sm:$0xff]
    %v1254 = vld [vmem:[%s5 + $0x670] sm:$0xff]
    %v1255 = vld [vmem:[%s5 + $0x678] sm:$0xff]
    %v1256 = vld [vmem:[%s5 + $0x680] sm:$0xff]
    %v1257 = vld [vmem:[%s5 + $0x688] sm:$0xff]
    %v1258 = vld [vmem:[%s5 + $0x690] sm:$0xff]
    %v1259 = vld [vmem:[%s5 + $0x698] sm:$0xff]
    %v1260 = vld [vmem:[%s5 + $0x6a0] sm:$0xff]
    %v1261 = vld [vmem:[%s5 + $0x6a8] sm:$0xff]
    %v1262 = vld [vmem:[%s5 + $0x6b0] sm:$0xff]
    %v1263 = vld [vmem:[%s5 + $0x6b8] sm:$0xff]
    %v1264 = vld [vmem:[%s5 + $0x6c0] sm:$0xff]
    %v1265 = vld [vmem:[%s5 + $0x6c8] sm:$0xff]
    %v1266 = vld [vmem:[%s5 + $0x6d0] sm:$0xff]
    %v1267 = vld [vmem:[%s5 + $0x6d8] sm:$0xff]
    %v1268 = vld [vmem:[%s5 + $0x6e0] sm:$0xff]
    %v1269 = vld [vmem:[%s5 + $0x6e8] sm:$0xff]
    %v1270 = vld [vmem:[%s5 + $0x6f0] sm:$0xff]
    %v1271 = vld [vmem:[%s5 + $0x6f8] sm:$0xff]
    %v1272 = vld [vmem:[%s5 + $0x700] sm:$0xff]
    %v1273 = vld [vmem:[%s5 + $0x708] sm:$0xff]
    %v1274 = vld [vmem:[%s5 + $0x710] sm:$0xff]
    %v1275 = vld [vmem:[%s5 + $0x718] sm:$0xff]
    %v1276 = vld [vmem:[%s5 + $0x720] sm:$0xff]
    %v1277 = vld [vmem:[%s5 + $0x728] sm:$0xff]
    %v1278 = vld [vmem:[%s5 + $0x730] sm:$0xff]
    %v1279 = vld [vmem:[%s5 + $0x738] sm:$0xff]
    %v1280 = vld [vmem:[%s5 + $0x740] sm:$0xff]
    %v1281 = vld [vmem:[%s5 + $0x748] sm:$0xff]
    %v1282 = vld [vmem:[%s5 + $0x750] sm:$0xff]
    %v1283 = vld [vmem:[%s5 + $0x758] sm:$0xff]
    %v1284 = vld [vmem:[%s5 + $0x760] sm:$0xff]
    %v1285 = vld [vmem:[%s5 + $0x768] sm:$0xff]
    %v1286 = vld [vmem:[%s5 + $0x770] sm:$0xff]
    %v1287 = vld [vmem:[%s5 + $0x778] sm:$0xff]
    %v1288 = vld [vmem:[%s5 + $0x780] sm:$0xff]
    %v1289 = vld [vmem:[%s5 + $0x788] sm:$0xff]
    %v1290 = vld [vmem:[%s5 + $0x790] sm:$0xff]
    %v1291 = vld [vmem:[%s5 + $0x798] sm:$0xff]
    %v1292 = vld [vmem:[%s5 + $0x7a0] sm:$0xff]
    %v1293 = vld [vmem:[%s5 + $0x7a8] sm:$0xff]
    %v1294 = vld [vmem:[%s5 + $0x7b0] sm:$0xff]
    %v1295 = vld [vmem:[%s5 + $0x7b8] sm:$0xff]
    %v1296 = vld [vmem:[%s5 + $0x7c0] sm:$0xff]
    %v1297 = vld [vmem:[%s5 + $0x7c8] sm:$0xff]
    %v1298 = vld [vmem:[%s5 + $0x7d0] sm:$0xff]
    %v1299 = vld [vmem:[%s5 + $0x7d8] sm:$0xff]
    %v1300 = vld [vmem:[%s5 + $0x7e0] sm:$0xff]
    %v1301 = vld [vmem:[%s5 + $0x7e8] sm:$0xff]
    %v1302 = vld [vmem:[%s5 + $0x7f0] sm:$0xff]
    %v1303 = vld [vmem:[%s5 + $0x7f8] sm:$0xff]
    %v1304 = vld [vmem:[%s5 + $0x800] sm:$0xff]
    %v1305 = vld [vmem:[%s5 + $0x808] sm:$0xff]
    %v1306 = vld [vmem:[%s5 + $0x810] sm:$0xff]
    %v1307 = vld [vmem:[%s5 + $0x818] sm:$0xff]
    %v1308 = vld [vmem:[%s5 + $0x820] sm:$0xff]
    %v1309 = vld [vmem:[%s5 + $0x828] sm:$0xff]
    %v1310 = vld [vmem:[%s5 + $0x830] sm:$0xff]
    %v1311 = vld [vmem:[%s5 + $0x838] sm:$0xff]
    %v1312 = vld [vmem:[%s5 + $0x840] sm:$0xff]
    %v1313 = vld [vmem:[%s5 + $0x848] sm:$0xff]
    %v1314 = vld [vmem:[%s5 + $0x850] sm:$0xff]
    %v1315 = vld [vmem:[%s5 + $0x858] sm:$0xff]
    %v1316 = vld [vmem:[%s5 + $0x860] sm:$0xff]
    %v1317 = vld [vmem:[%s5 + $0x868] sm:$0xff]
    %v1318 = vld [vmem:[%s5 + $0x870] sm:$0xff]
    %v1319 = vld [vmem:[%s5 + $0x878] sm:$0xff]
    %v1320 = vld [vmem:[%s5 + $0x880] sm:$0xff]
    %v1321 = vld [vmem:[%s5 + $0x888] sm:$0xff]
    %v1322 = vld [vmem:[%s5 + $0x890] sm:$0xff]
    %v1323 = vld [vmem:[%s5 + $0x898] sm:$0xff]
    %v1324 = vld [vmem:[%s5 + $0x8a0] sm:$0xff]
    %v1325 = vld [vmem:[%s5 + $0x8a8] sm:$0xff]
    %v1326 = vld [vmem:[%s5 + $0x8b0] sm:$0xff]
    %v1327 = vld [vmem:[%s5 + $0x8b8] sm:$0xff]
    %v1328 = vld [vmem:[%s5 + $0x8c0] sm:$0xff]
    %v1329 = vld [vmem:[%s5 + $0x8c8] sm:$0xff]
    %v1330 = vld [vmem:[%s5 + $0x8d0] sm:$0xff]
    %v1331 = vld [vmem:[%s5 + $0x8d8] sm:$0xff]
    %v1332 = vld [vmem:[%s5 + $0x8e0] sm:$0xff]
    %v1333 = vld [vmem:[%s5 + $0x8e8] sm:$0xff]
    %v1334 = vld [vmem:[%s5 + $0x8f0] sm:$0xff]
    %v1335 = vld [vmem:[%s5 + $0x8f8] sm:$0xff]
    %v1336 = vld [vmem:[%s5 + $0x900] sm:$0xff]
    %v1337 = vld [vmem:[%s5 + $0x908] sm:$0xff]
    %v1338 = vld [vmem:[%s5 + $0x910] sm:$0xff]
    %v1339 = vld [vmem:[%s5 + $0x918] sm:$0xff]
    %v1340 = vld [vmem:[%s5 + $0x920] sm:$0xff]
    %v1341 = vld [vmem:[%s5 + $0x928] sm:$0xff]
    %v1342 = vld [vmem:[%s5 + $0x930] sm:$0xff]
    %v1343 = vld [vmem:[%s5 + $0x938] sm:$0xff]
    %v1344 = vld [vmem:[%s5 + $0x940] sm:$0xff]
    %v1345 = vld [vmem:[%s5 + $0x948] sm:$0xff]
    %v1346 = vld [vmem:[%s5 + $0x950] sm:$0xff]
    %v1347 = vld [vmem:[%s5 + $0x958] sm:$0xff]
    %v1348 = vld [vmem:[%s5 + $0x960] sm:$0xff]
    %v1349 = vld [vmem:[%s5 + $0x968] sm:$0xff]
    %v1350 = vld [vmem:[%s5 + $0x970] sm:$0xff]
    %v1351 = vld [vmem:[%s5 + $0x978] sm:$0xff]
    %v1352 = vld [vmem:[%s5 + $0x980] sm:$0xff]
    %v1353 = vld [vmem:[%s5 + $0x988] sm:$0xff]
    %v1354 = vld [vmem:[%s5 + $0x990] sm:$0xff]
    %v1355 = vld [vmem:[%s5 + $0x998] sm:$0xff]
    %v1356 = vld [vmem:[%s5 + $0x9a0] sm:$0xff]
    %v1357 = vld [vmem:[%s5 + $0x9a8] sm:$0xff]
    %v1358 = vld [vmem:[%s5 + $0x9b0] sm:$0xff]
    %v1359 = vld [vmem:[%s5 + $0x9b8] sm:$0xff]
    %v1360 = vld [vmem:[%s5 + $0x9c0] sm:$0xff]
    %v1361 = vld [vmem:[%s5 + $0x9c8] sm:$0xff]
    %v1362 = vld [vmem:[%s5 + $0x9d0] sm:$0xff]
    %v1363 = vld [vmem:[%s5 + $0x9d8] sm:$0xff]
    %v1364 = vld [vmem:[%s5 + $0x9e0] sm:$0xff]
    %v1365 = vld [vmem:[%s5 + $0x9e8] sm:$0xff]
    %v1366 = vld [vmem:[%s5 + $0x9f0] sm:$0xff]
    %v1367 = vld [vmem:[%s5 + $0x9f8] sm:$0xff]
    %v1368 = vld [vmem:[%s5 + $0xa00] sm:$0xff]
    %v1369 = vld [vmem:[%s5 + $0xa08] sm:$0xff]
    %v1370 = vld [vmem:[%s5 + $0xa10] sm:$0xff]
    %v1371 = vld [vmem:[%s5 + $0xa18] sm:$0xff]
    %v1372 = vld [vmem:[%s5 + $0xa20] sm:$0xff]
    %v1373 = vld [vmem:[%s5 + $0xa28] sm:$0xff]
    %v1374 = vld [vmem:[%s5 + $0xa30] sm:$0xff]
    %v1375 = vld [vmem:[%s5 + $0xa38] sm:$0xff]
    %v1376 = vld [vmem:[%s5 + $0xa40] sm:$0xff]
    %v1377 = vld [vmem:[%s5 + $0xa48] sm:$0xff]
    %v1378 = vld [vmem:[%s5 + $0xa50] sm:$0xff]
    %v1379 = vld [vmem:[%s5 + $0xa58] sm:$0xff]
    %v1380 = vld [vmem:[%s5 + $0xa60] sm:$0xff]
    %v1381 = vld [vmem:[%s5 + $0xa68] sm:$0xff]
    %v1382 = vld [vmem:[%s5 + $0xa70] sm:$0xff]
    %v1383 = vld [vmem:[%s5 + $0xa78] sm:$0xff]
    %v1384 = vld [vmem:[%s5 + $0xa80] sm:$0xff]
    %v1385 = vld [vmem:[%s5 + $0xa88] sm:$0xff]
    %v1386 = vld [vmem:[%s5 + $0xa90] sm:$0xff]
    %v1387 = vld [vmem:[%s5 + $0xa98] sm:$0xff]
    %v1388 = vld [vmem:[%s5 + $0xaa0] sm:$0xff]
    %v1389 = vld [vmem:[%s5 + $0xaa8] sm:$0xff]
    %v1390 = vld [vmem:[%s5 + $0xab0] sm:$0xff]
    %v1391 = vld [vmem:[%s5 + $0xab8] sm:$0xff]
    %v1392 = vld [vmem:[%s5 + $0xac0] sm:$0xff]
    %v1393 = vld [vmem:[%s5 + $0xac8] sm:$0xff]
    %v1394 = vld [vmem:[%s5 + $0xad0] sm:$0xff]
    %v1395 = vld [vmem:[%s5 + $0xad8] sm:$0xff]
    %v1396 = vld [vmem:[%s5 + $0xae0] sm:$0xff]
    %v1397 = vld [vmem:[%s5 + $0xae8] sm:$0xff]
    %v1398 = vld [vmem:[%s5 + $0xaf0] sm:$0xff]
    %v1399 = vld [vmem:[%s5 + $0xaf8] sm:$0xff]
    %v1400 = vld [vmem:[%s5 + $0xb00] sm:$0xff]
    %v1401 = vld [vmem:[%s5 + $0xb08] sm:$0xff]
    %v1402 = vld [vmem:[%s5 + $0xb10] sm:$0xff]
    %v1403 = vld [vmem:[%s5 + $0xb18] sm:$0xff]
    %v1404 = vld [vmem:[%s5 + $0xb20] sm:$0xff]
    %v1405 = vld [vmem:[%s5 + $0xb28] sm:$0xff]
    %v1406 = vld [vmem:[%s5 + $0xb30] sm:$0xff]
    %v1407 = vld [vmem:[%s5 + $0xb38] sm:$0xff]
    %v1408 = vld [vmem:[%s5 + $0xb40] sm:$0xff]
    %v1409 = vld [vmem:[%s5 + $0xb48] sm:$0xff]
    %v1410 = vld [vmem:[%s5 + $0xb50] sm:$0xff]
    %v1411 = vld [vmem:[%s5 + $0xb58] sm:$0xff]
    %v1412 = vld [vmem:[%s5 + $0xb60] sm:$0xff]
    %v1413 = vld [vmem:[%s5 + $0xb68] sm:$0xff]
    %v1414 = vld [vmem:[%s5 + $0xb70] sm:$0xff]
    %v1415 = vld [vmem:[%s5 + $0xb78] sm:$0xff]
    %v1416 = vld [vmem:[%s5 + $0xb80] sm:$0xff]
    %v1417 = vld [vmem:[%s5 + $0xb88] sm:$0xff]
    %v1418 = vld [vmem:[%s5 + $0xb90] sm:$0xff]
    %v1419 = vld [vmem:[%s5 + $0xb98] sm:$0xff]
    %v1420 = vld [vmem:[%s5 + $0xba0] sm:$0xff]
    %v1421 = vld [vmem:[%s5 + $0xba8] sm:$0xff]
    %v1422 = vld [vmem:[%s5 + $0xbb0] sm:$0xff]
    %v1423 = vld [vmem:[%s5 + $0xbb8] sm:$0xff]
    %v1424 = vld [vmem:[%s5 + $0xbc0] sm:$0xff]
    %v1425 = vld [vmem:[%s5 + $0xbc8] sm:$0xff]
    %v1426 = vld [vmem:[%s5 + $0xbd0] sm:$0xff]
    %v1427 = vld [vmem:[%s5 + $0xbd8] sm:$0xff]
    %v1428 = vld [vmem:[%s5 + $0xbe0] sm:$0xff]
    %v1429 = vld [vmem:[%s5 + $0xbe8] sm:$0xff]
    %v1430 = vld [vmem:[%s5 + $0xbf0] sm:$0xff]
    %v1431 = vld [vmem:[%s5 + $0xbf8] sm:$0xff]
    %v1432 = vld [vmem:[%s5 + $0xc00] sm:$0xff]
    %v1433 = vld [vmem:[%s5 + $0xc08] sm:$0xff]
    %v1434 = vld [vmem:[%s5 + $0xc10] sm:$0xff]
    %v1435 = vld [vmem:[%s5 + $0xc18] sm:$0xff]
    %v1436 = vld [vmem:[%s5 + $0xc20] sm:$0xff]
    %v1437 = vld [vmem:[%s5 + $0xc28] sm:$0xff]
    %v1438 = vld [vmem:[%s5 + $0xc30] sm:$0xff]
    %v1439 = vld [vmem:[%s5 + $0xc38] sm:$0xff]
    %v1440 = vld [vmem:[%s5 + $0xc40] sm:$0xff]
    %v1441 = vld [vmem:[%s5 + $0xc48] sm:$0xff]
    %v1442 = vld [vmem:[%s5 + $0xc50] sm:$0xff]
    %v1443 = vld [vmem:[%s5 + $0xc58] sm:$0xff]
    %v1444 = vld [vmem:[%s5 + $0xc60] sm:$0xff]
    %v1445 = vld [vmem:[%s5 + $0xc68] sm:$0xff]
    %v1446 = vld [vmem:[%s5 + $0xc70] sm:$0xff]
    %v1447 = vld [vmem:[%s5 + $0xc78] sm:$0xff]
    %v1448 = vld [vmem:[%s5 + $0xc80] sm:$0xff]
    %v1449 = vld [vmem:[%s5 + $0xc88] sm:$0xff]
    %v1450 = vld [vmem:[%s5 + $0xc90] sm:$0xff]
    %v1451 = vld [vmem:[%s5 + $0xc98] sm:$0xff]
    %v1452 = vld [vmem:[%s5 + $0xca0] sm:$0xff]
    %v1453 = vld [vmem:[%s5 + $0xca8] sm:$0xff]
    %v1454 = vld [vmem:[%s5 + $0xcb0] sm:$0xff]
    %v1455 = vld [vmem:[%s5 + $0xcb8] sm:$0xff]
    %v1456 = vld [vmem:[%s5 + $0xcc0] sm:$0xff]
    %v1457 = vld [vmem:[%s5 + $0xcc8] sm:$0xff]
    %v1458 = vld [vmem:[%s5 + $0xcd0] sm:$0xff]
    %v1459 = vld [vmem:[%s5 + $0xcd8] sm:$0xff]
    %v1460 = vld [vmem:[%s5 + $0xce0] sm:$0xff]
    %v1461 = vld [vmem:[%s5 + $0xce8] sm:$0xff]
    %v1462 = vld [vmem:[%s5 + $0xcf0] sm:$0xff]
    %v1463 = vld [vmem:[%s5 + $0xcf8] sm:$0xff]
    %v1464 = vld [vmem:[%s5 + $0xd00] sm:$0xff]
    %v1465 = vld [vmem:[%s5 + $0xd08] sm:$0xff]
    %v1466 = vld [vmem:[%s5 + $0xd10] sm:$0xff]
    %v1467 = vld [vmem:[%s5 + $0xd18] sm:$0xff]
    %v1468 = vld [vmem:[%s5 + $0xd20] sm:$0xff]
    %v1469 = vld [vmem:[%s5 + $0xd28] sm:$0xff]
    %v1470 = vld [vmem:[%s5 + $0xd30] sm:$0xff]
    %v1471 = vld [vmem:[%s5 + $0xd38] sm:$0xff]
    %v1472 = vld [vmem:[%s5 + $0xd40] sm:$0xff]
    %v1473 = vld [vmem:[%s5 + $0xd48] sm:$0xff]
    %v1474 = vld [vmem:[%s5 + $0xd50] sm:$0xff]
    %v1475 = vld [vmem:[%s5 + $0xd58] sm:$0xff]
    %v1476 = vld [vmem:[%s5 + $0xd60] sm:$0xff]
    %v1477 = vld [vmem:[%s5 + $0xd68] sm:$0xff]
    %v1478 = vld [vmem:[%s5 + $0xd70] sm:$0xff]
    %v1479 = vld [vmem:[%s5 + $0xd78] sm:$0xff]
    %v1480 = vld [vmem:[%s5 + $0xd80] sm:$0xff]
    %v1481 = vld [vmem:[%s5 + $0xd88] sm:$0xff]
    %v1482 = vld [vmem:[%s5 + $0xd90] sm:$0xff]
    %v1483 = vld [vmem:[%s5 + $0xd98] sm:$0xff]
    %v1484 = vld [vmem:[%s5 + $0xda0] sm:$0xff]
    %v1485 = vld [vmem:[%s5 + $0xda8] sm:$0xff]
    %v1486 = vld [vmem:[%s5 + $0xdb0] sm:$0xff]
    %v1487 = vld [vmem:[%s5 + $0xdb8] sm:$0xff]
    %v1488 = vld [vmem:[%s5 + $0xdc0] sm:$0xff]
    %v1489 = vld [vmem:[%s5 + $0xdc8] sm:$0xff]
    %v1490 = vld [vmem:[%s5 + $0xdd0] sm:$0xff]
    %v1491 = vld [vmem:[%s5 + $0xdd8] sm:$0xff]
    %v1492 = vld [vmem:[%s5 + $0xde0] sm:$0xff]
    %v1493 = vld [vmem:[%s5 + $0xde8] sm:$0xff]
    %v1494 = vld [vmem:[%s5 + $0xdf0] sm:$0xff]
    %v1495 = vld [vmem:[%s5 + $0xdf8] sm:$0xff]
    %v1496 = vld [vmem:[%s5 + $0xe00] sm:$0xff]
    %v1497 = vld [vmem:[%s5 + $0xe08] sm:$0xff]
    %v1498 = vld [vmem:[%s5 + $0xe10] sm:$0xff]
    %v1499 = vld [vmem:[%s5 + $0xe18] sm:$0xff]
    %v1500 = vld [vmem:[%s5 + $0xe20] sm:$0xff]
    %v1501 = vld [vmem:[%s5 + $0xe28] sm:$0xff]
    %v1502 = vld [vmem:[%s5 + $0xe30] sm:$0xff]
    %v1503 = vld [vmem:[%s5 + $0xe38] sm:$0xff]
    %v1504 = vld [vmem:[%s5 + $0xe40] sm:$0xff]
    %v1505 = vld [vmem:[%s5 + $0xe48] sm:$0xff]
    %v1506 = vld [vmem:[%s5 + $0xe50] sm:$0xff]
    %v1507 = vld [vmem:[%s5 + $0xe58] sm:$0xff]
    %v1508 = vld [vmem:[%s5 + $0xe60] sm:$0xff]
    %v1509 = vld [vmem:[%s5 + $0xe68] sm:$0xff]
    %v1510 = vld [vmem:[%s5 + $0xe70] sm:$0xff]
    %v1511 = vld [vmem:[%s5 + $0xe78] sm:$0xff]
    %v1512 = vld [vmem:[%s5 + $0xe80] sm:$0xff]
    %v1513 = vld [vmem:[%s5 + $0xe88] sm:$0xff]
    %v1514 = vld [vmem:[%s5 + $0xe90] sm:$0xff]
    %v1515 = vld [vmem:[%s5 + $0xe98] sm:$0xff]
    %v1516 = vld [vmem:[%s5 + $0xea0] sm:$0xff]
    %v1517 = vld [vmem:[%s5 + $0xea8] sm:$0xff]
    %v1518 = vld [vmem:[%s5 + $0xeb0] sm:$0xff]
    %v1519 = vld [vmem:[%s5 + $0xeb8] sm:$0xff]
    %v1520 = vld [vmem:[%s5 + $0xec0] sm:$0xff]
    %v1521 = vld [vmem:[%s5 + $0xec8] sm:$0xff]
    %v1522 = vld [vmem:[%s5 + $0xed0] sm:$0xff]
    %v1523 = vld [vmem:[%s5 + $0xed8] sm:$0xff]
    %v1524 = vld [vmem:[%s5 + $0xee0] sm:$0xff]
    %v1525 = vld [vmem:[%s5 + $0xee8] sm:$0xff]
    %v1526 = vld [vmem:[%s5 + $0xef0] sm:$0xff]
    %v1527 = vld [vmem:[%s5 + $0xef8] sm:$0xff]
    %v1528 = vld [vmem:[%s5 + $0xf00] sm:$0xff]
    %v1529 = vld [vmem:[%s5 + $0xf08] sm:$0xff]
    %v1530 = vld [vmem:[%s5 + $0xf10] sm:$0xff]
    %v1531 = vld [vmem:[%s5 + $0xf18] sm:$0xff]
    %v1532 = vld [vmem:[%s5 + $0xf20] sm:$0xff]
    %v1533 = vld [vmem:[%s5 + $0xf28] sm:$0xff]
    %v1534 = vld [vmem:[%s5 + $0xf30] sm:$0xff]
    %v1535 = vld [vmem:[%s5 + $0xf38] sm:$0xff]
    %v1536 = vld [vmem:[%s5 + $0xf40] sm:$0xff]
    %v1537 = vld [vmem:[%s5 + $0xf48] sm:$0xff]
    %v1538 = vld [vmem:[%s5 + $0xf50] sm:$0xff]
    %v1539 = vld [vmem:[%s5 + $0xf58] sm:$0xff]
    %v1540 = vld [vmem:[%s5 + $0xf60] sm:$0xff]
    %v1541 = vld [vmem:[%s5 + $0xf68] sm:$0xff]
    %v1542 = vld [vmem:[%s5 + $0xf70] sm:$0xff]
    %v1543 = vld [vmem:[%s5 + $0xf78] sm:$0xff]
    %v1544 = vld [vmem:[%s5 + $0xf80] sm:$0xff]
    %v1545 = vld [vmem:[%s5 + $0xf88] sm:$0xff]
    %v1546 = vld [vmem:[%s5 + $0xf90] sm:$0xff]
    %v1547 = vld [vmem:[%s5 + $0xf98] sm:$0xff]
    %v1548 = vld [vmem:[%s5 + $0xfa0] sm:$0xff]
    %v1549 = vld [vmem:[%s5 + $0xfa8] sm:$0xff]
    %v1550 = vld [vmem:[%s5 + $0xfb0] sm:$0xff]
    %v1551 = vld [vmem:[%s5 + $0xfb8] sm:$0xff]
    %v1552 = vld [vmem:[%s5 + $0xfc0] sm:$0xff]
    %v1553 = vld [vmem:[%s5 + $0xfc8] sm:$0xff]
    %v1554 = vld [vmem:[%s5 + $0xfd0] sm:$0xff]
    %v1555 = vld [vmem:[%s5 + $0xfd8] sm:$0xff]
    %v1556 = vld [vmem:[%s5 + $0xfe0] sm:$0xff]
    %v1557 = vld [vmem:[%s5 + $0xfe8] sm:$0xff]
    %v1558 = vld [vmem:[%s5 + $0xff0] sm:$0xff]
    %v1559 = vld [vmem:[%s5 + $0xff8] sm:$0xff]
    %v2072 = vunpack.c.l.b16 %v1048
    %v2073 = vunpack.c.h.b16 %v1048
    %v2074 = vunpack.c.l.b16 %v1049
    %v2075 = vunpack.c.h.b16 %v1049
    %v2076 = vunpack.c.l.b16 %v1050
    %v2077 = vunpack.c.h.b16 %v1050
    %v2078 = vunpack.c.l.b16 %v1051
    %v2079 = vunpack.c.h.b16 %v1051
    %v2080 = vunpack.c.l.b16 %v1052
    %v2081 = vunpack.c.h.b16 %v1052
    %v2082 = vunpack.c.l.b16 %v1053
    %v2083 = vunpack.c.h.b16 %v1053
    %v2084 = vunpack.c.l.b16 %v1054
    %v2085 = vunpack.c.h.b16 %v1054
    %v2086 = vunpack.c.l.b16 %v1055
    %v2087 = vunpack.c.h.b16 %v1055
    %v2088 = vunpack.c.l.b16 %v1056
    %v2089 = vunpack.c.h.b16 %v1056
    %v2090 = vunpack.c.l.b16 %v1057
    %v2091 = vunpack.c.h.b16 %v1057
    %v2092 = vunpack.c.l.b16 %v1058
    %v2093 = vunpack.c.h.b16 %v1058
    %v2094 = vunpack.c.l.b16 %v1059
    %v2095 = vunpack.c.h.b16 %v1059
    %v2096 = vunpack.c.l.b16 %v1060
    %v2097 = vunpack.c.h.b16 %v1060
    %v2098 = vunpack.c.l.b16 %v1061
    %v2099 = vunpack.c.h.b16 %v1061
    %v2100 = vunpack.c.l.b16 %v1062
    %v2101 = vunpack.c.h.b16 %v1062
    %v2102 = vunpack.c.l.b16 %v1063
    %v2103 = vunpack.c.h.b16 %v1063
    %v2104 = vunpack.c.l.b16 %v1064
    %v2105 = vunpack.c.h.b16 %v1064
    %v2106 = vunpack.c.l.b16 %v1065
    %v2107 = vunpack.c.h.b16 %v1065
    %v2108 = vunpack.c.l.b16 %v1066
    %v2109 = vunpack.c.h.b16 %v1066
    %v2110 = vunpack.c.l.b16 %v1067
    %v2111 = vunpack.c.h.b16 %v1067
    %v2112 = vunpack.c.l.b16 %v1068
    %v2113 = vunpack.c.h.b16 %v1068
    %v2114 = vunpack.c.l.b16 %v1069
    %v2115 = vunpack.c.h.b16 %v1069
    %v2116 = vunpack.c.l.b16 %v1070
    %v2117 = vunpack.c.h.b16 %v1070
    %v2118 = vunpack.c.l.b16 %v1071
    %v2119 = vunpack.c.h.b16 %v1071
    %v2120 = vunpack.c.l.b16 %v1072
    %v2121 = vunpack.c.h.b16 %v1072
    %v2122 = vunpack.c.l.b16 %v1073
    %v2123 = vunpack.c.h.b16 %v1073
    %v2124 = vunpack.c.l.b16 %v1074
    %v2125 = vunpack.c.h.b16 %v1074
    %v2126 = vunpack.c.l.b16 %v1075
    %v2127 = vunpack.c.h.b16 %v1075
    %v2128 = vunpack.c.l.b16 %v1076
    %v2129 = vunpack.c.h.b16 %v1076
    %v2130 = vunpack.c.l.b16 %v1077
    %v2131 = vunpack.c.h.b16 %v1077
    %v2132 = vunpack.c.l.b16 %v1078
    %v2133 = vunpack.c.h.b16 %v1078
    %v2134 = vunpack.c.l.b16 %v1079
    %v2135 = vunpack.c.h.b16 %v1079
    %v2136 = vunpack.c.l.b16 %v1080
    %v2137 = vunpack.c.h.b16 %v1080
    %v2138 = vunpack.c.l.b16 %v1081
    %v2139 = vunpack.c.h.b16 %v1081
    %v2140 = vunpack.c.l.b16 %v1082
    %v2141 = vunpack.c.h.b16 %v1082
    %v2142 = vunpack.c.l.b16 %v1083
    %v2143 = vunpack.c.h.b16 %v1083
    %v2144 = vunpack.c.l.b16 %v1084
    %v2145 = vunpack.c.h.b16 %v1084
    %v2146 = vunpack.c.l.b16 %v1085
    %v2147 = vunpack.c.h.b16 %v1085
    %v2148 = vunpack.c.l.b16 %v1086
    %v2149 = vunpack.c.h.b16 %v1086
    %v2150 = vunpack.c.l.b16 %v1087
    %v2151 = vunpack.c.h.b16 %v1087
    %v2152 = vunpack.c.l.b16 %v1088
    %v2153 = vunpack.c.h.b16 %v1088
    %v2154 = vunpack.c.l.b16 %v1089
    %v2155 = vunpack.c.h.b16 %v1089
    %v2156 = vunpack.c.l.b16 %v1090
    %v2157 = vunpack.c.h.b16 %v1090
    %v2158 = vunpack.c.l.b16 %v1091
    %v2159 = vunpack.c.h.b16 %v1091
    %v2160 = vunpack.c.l.b16 %v1092
    %v2161 = vunpack.c.h.b16 %v1092
    %v2162 = vunpack.c.l.b16 %v1093
    %v2163 = vunpack.c.h.b16 %v1093
    %v2164 = vunpack.c.l.b16 %v1094
    %v2165 = vunpack.c.h.b16 %v1094
    %v2166 = vunpack.c.l.b16 %v1095
    %v2167 = vunpack.c.h.b16 %v1095
    %v2168 = vunpack.c.l.b16 %v1096
    %v2169 = vunpack.c.h.b16 %v1096
    %v2170 = vunpack.c.l.b16 %v1097
    %v2171 = vunpack.c.h.b16 %v1097
    %v2172 = vunpack.c.l.b16 %v1098
    %v2173 = vunpack.c.h.b16 %v1098
    %v2174 = vunpack.c.l.b16 %v1099
    %v2175 = vunpack.c.h.b16 %v1099
    %v2176 = vunpack.c.l.b16 %v1100
    %v2177 = vunpack.c.h.b16 %v1100
    %v2178 = vunpack.c.l.b16 %v1101
    %v2179 = vunpack.c.h.b16 %v1101
    %v2180 = vunpack.c.l.b16 %v1102
    %v2181 = vunpack.c.h.b16 %v1102
    %v2182 = vunpack.c.l.b16 %v1103
    %v2183 = vunpack.c.h.b16 %v1103
    %v2184 = vunpack.c.l.b16 %v1104
    %v2185 = vunpack.c.h.b16 %v1104
    %v2186 = vunpack.c.l.b16 %v1105
    %v2187 = vunpack.c.h.b16 %v1105
    %v2188 = vunpack.c.l.b16 %v1106
    %v2189 = vunpack.c.h.b16 %v1106
    %v2190 = vunpack.c.l.b16 %v1107
    %v2191 = vunpack.c.h.b16 %v1107
    %v2192 = vunpack.c.l.b16 %v1108
    %v2193 = vunpack.c.h.b16 %v1108
    %v2194 = vunpack.c.l.b16 %v1109
    %v2195 = vunpack.c.h.b16 %v1109
    %v2196 = vunpack.c.l.b16 %v1110
    %v2197 = vunpack.c.h.b16 %v1110
    %v2198 = vunpack.c.l.b16 %v1111
    %v2199 = vunpack.c.h.b16 %v1111
    %v2200 = vunpack.c.l.b16 %v1112
    %v2201 = vunpack.c.h.b16 %v1112
    %v2202 = vunpack.c.l.b16 %v1113
    %v2203 = vunpack.c.h.b16 %v1113
    %v2204 = vunpack.c.l.b16 %v1114
    %v2205 = vunpack.c.h.b16 %v1114
    %v2206 = vunpack.c.l.b16 %v1115
    %v2207 = vunpack.c.h.b16 %v1115
    %v2208 = vunpack.c.l.b16 %v1116
    %v2209 = vunpack.c.h.b16 %v1116
    %v2210 = vunpack.c.l.b16 %v1117
    %v2211 = vunpack.c.h.b16 %v1117
    %v2212 = vunpack.c.l.b16 %v1118
    %v2213 = vunpack.c.h.b16 %v1118
    %v2214 = vunpack.c.l.b16 %v1119
    %v2215 = vunpack.c.h.b16 %v1119
    %v2216 = vunpack.c.l.b16 %v1120
    %v2217 = vunpack.c.h.b16 %v1120
    %v2218 = vunpack.c.l.b16 %v1121
    %v2219 = vunpack.c.h.b16 %v1121
    %v2220 = vunpack.c.l.b16 %v1122
    %v2221 = vunpack.c.h.b16 %v1122
    %v2222 = vunpack.c.l.b16 %v1123
    %v2223 = vunpack.c.h.b16 %v1123
    %v2224 = vunpack.c.l.b16 %v1124
    %v2225 = vunpack.c.h.b16 %v1124
    %v2226 = vunpack.c.l.b16 %v1125
    %v2227 = vunpack.c.h.b16 %v1125
    %v2228 = vunpack.c.l.b16 %v1126
    %v2229 = vunpack.c.h.b16 %v1126
    %v2230 = vunpack.c.l.b16 %v1127
    %v2231 = vunpack.c.h.b16 %v1127
    %v2232 = vunpack.c.l.b16 %v1128
    %v2233 = vunpack.c.h.b16 %v1128
    %v2234 = vunpack.c.l.b16 %v1129
    %v2235 = vunpack.c.h.b16 %v1129
    %v2236 = vunpack.c.l.b16 %v1130
    %v2237 = vunpack.c.h.b16 %v1130
    %v2238 = vunpack.c.l.b16 %v1131
    %v2239 = vunpack.c.h.b16 %v1131
    %v2240 = vunpack.c.l.b16 %v1132
    %v2241 = vunpack.c.h.b16 %v1132
    %v2242 = vunpack.c.l.b16 %v1133
    %v2243 = vunpack.c.h.b16 %v1133
    %v2244 = vunpack.c.l.b16 %v1134
    %v2245 = vunpack.c.h.b16 %v1134
    %v2246 = vunpack.c.l.b16 %v1135
    %v2247 = vunpack.c.h.b16 %v1135
    %v2248 = vunpack.c.l.b16 %v1136
    %v2249 = vunpack.c.h.b16 %v1136
    %v2250 = vunpack.c.l.b16 %v1137
    %v2251 = vunpack.c.h.b16 %v1137
    %v2252 = vunpack.c.l.b16 %v1138
    %v2253 = vunpack.c.h.b16 %v1138
    %v2254 = vunpack.c.l.b16 %v1139
    %v2255 = vunpack.c.h.b16 %v1139
    %v2256 = vunpack.c.l.b16 %v1140
    %v2257 = vunpack.c.h.b16 %v1140
    %v2258 = vunpack.c.l.b16 %v1141
    %v2259 = vunpack.c.h.b16 %v1141
    %v2260 = vunpack.c.l.b16 %v1142
    %v2261 = vunpack.c.h.b16 %v1142
    %v2262 = vunpack.c.l.b16 %v1143
    %v2263 = vunpack.c.h.b16 %v1143
    %v2264 = vunpack.c.l.b16 %v1144
    %v2265 = vunpack.c.h.b16 %v1144
    %v2266 = vunpack.c.l.b16 %v1145
    %v2267 = vunpack.c.h.b16 %v1145
    %v2268 = vunpack.c.l.b16 %v1146
    %v2269 = vunpack.c.h.b16 %v1146
    %v2270 = vunpack.c.l.b16 %v1147
    %v2271 = vunpack.c.h.b16 %v1147
    %v2272 = vunpack.c.l.b16 %v1148
    %v2273 = vunpack.c.h.b16 %v1148
    %v2274 = vunpack.c.l.b16 %v1149
    %v2275 = vunpack.c.h.b16 %v1149
    %v2276 = vunpack.c.l.b16 %v1150
    %v2277 = vunpack.c.h.b16 %v1150
    %v2278 = vunpack.c.l.b16 %v1151
    %v2279 = vunpack.c.h.b16 %v1151
    %v2280 = vunpack.c.l.b16 %v1152
    %v2281 = vunpack.c.h.b16 %v1152
    %v2282 = vunpack.c.l.b16 %v1153
    %v2283 = vunpack.c.h.b16 %v1153
    %v2284 = vunpack.c.l.b16 %v1154
    %v2285 = vunpack.c.h.b16 %v1154
    %v2286 = vunpack.c.l.b16 %v1155
    %v2287 = vunpack.c.h.b16 %v1155
    %v2288 = vunpack.c.l.b16 %v1156
    %v2289 = vunpack.c.h.b16 %v1156
    %v2290 = vunpack.c.l.b16 %v1157
    %v2291 = vunpack.c.h.b16 %v1157
    %v2292 = vunpack.c.l.b16 %v1158
    %v2293 = vunpack.c.h.b16 %v1158
    %v2294 = vunpack.c.l.b16 %v1159
    %v2295 = vunpack.c.h.b16 %v1159
    %v2296 = vunpack.c.l.b16 %v1160
    %v2297 = vunpack.c.h.b16 %v1160
    %v2298 = vunpack.c.l.b16 %v1161
    %v2299 = vunpack.c.h.b16 %v1161
    %v2300 = vunpack.c.l.b16 %v1162
    %v2301 = vunpack.c.h.b16 %v1162
    %v2302 = vunpack.c.l.b16 %v1163
    %v2303 = vunpack.c.h.b16 %v1163
    %v2304 = vunpack.c.l.b16 %v1164
    %v2305 = vunpack.c.h.b16 %v1164
    %v2306 = vunpack.c.l.b16 %v1165
    %v2307 = vunpack.c.h.b16 %v1165
    %v2308 = vunpack.c.l.b16 %v1166
    %v2309 = vunpack.c.h.b16 %v1166
    %v2310 = vunpack.c.l.b16 %v1167
    %v2311 = vunpack.c.h.b16 %v1167
    %v2312 = vunpack.c.l.b16 %v1168
    %v2313 = vunpack.c.h.b16 %v1168
    %v2314 = vunpack.c.l.b16 %v1169
    %v2315 = vunpack.c.h.b16 %v1169
    %v2316 = vunpack.c.l.b16 %v1170
    %v2317 = vunpack.c.h.b16 %v1170
    %v2318 = vunpack.c.l.b16 %v1171
    %v2319 = vunpack.c.h.b16 %v1171
    %v2320 = vunpack.c.l.b16 %v1172
    %v2321 = vunpack.c.h.b16 %v1172
    %v2322 = vunpack.c.l.b16 %v1173
    %v2323 = vunpack.c.h.b16 %v1173
    %v2324 = vunpack.c.l.b16 %v1174
    %v2325 = vunpack.c.h.b16 %v1174
    %v2326 = vunpack.c.l.b16 %v1175
    %v2327 = vunpack.c.h.b16 %v1175
    %v2328 = vunpack.c.l.b16 %v1176
    %v2329 = vunpack.c.h.b16 %v1176
    %v2330 = vunpack.c.l.b16 %v1177
    %v2331 = vunpack.c.h.b16 %v1177
    %v2332 = vunpack.c.l.b16 %v1178
    %v2333 = vunpack.c.h.b16 %v1178
    %v2334 = vunpack.c.l.b16 %v1179
    %v2335 = vunpack.c.h.b16 %v1179
    %v2336 = vunpack.c.l.b16 %v1180
    %v2337 = vunpack.c.h.b16 %v1180
    %v2338 = vunpack.c.l.b16 %v1181
    %v2339 = vunpack.c.h.b16 %v1181
    %v2340 = vunpack.c.l.b16 %v1182
    %v2341 = vunpack.c.h.b16 %v1182
    %v2342 = vunpack.c.l.b16 %v1183
    %v2343 = vunpack.c.h.b16 %v1183
    %v2344 = vunpack.c.l.b16 %v1184
    %v2345 = vunpack.c.h.b16 %v1184
    %v2346 = vunpack.c.l.b16 %v1185
    %v2347 = vunpack.c.h.b16 %v1185
    %v2348 = vunpack.c.l.b16 %v1186
    %v2349 = vunpack.c.h.b16 %v1186
    %v2350 = vunpack.c.l.b16 %v1187
    %v2351 = vunpack.c.h.b16 %v1187
    %v2352 = vunpack.c.l.b16 %v1188
    %v2353 = vunpack.c.h.b16 %v1188
    %v2354 = vunpack.c.l.b16 %v1189
    %v2355 = vunpack.c.h.b16 %v1189
    %v2356 = vunpack.c.l.b16 %v1190
    %v2357 = vunpack.c.h.b16 %v1190
    %v2358 = vunpack.c.l.b16 %v1191
    %v2359 = vunpack.c.h.b16 %v1191
    %v2360 = vunpack.c.l.b16 %v1192
    %v2361 = vunpack.c.h.b16 %v1192
    %v2362 = vunpack.c.l.b16 %v1193
    %v2363 = vunpack.c.h.b16 %v1193
    %v2364 = vunpack.c.l.b16 %v1194
    %v2365 = vunpack.c.h.b16 %v1194
    %v2366 = vunpack.c.l.b16 %v1195
    %v2367 = vunpack.c.h.b16 %v1195
    %v2368 = vunpack.c.l.b16 %v1196
    %v2369 = vunpack.c.h.b16 %v1196
    %v2370 = vunpack.c.l.b16 %v1197
    %v2371 = vunpack.c.h.b16 %v1197
    %v2372 = vunpack.c.l.b16 %v1198
    %v2373 = vunpack.c.h.b16 %v1198
    %v2374 = vunpack.c.l.b16 %v1199
    %v2375 = vunpack.c.h.b16 %v1199
    %v2376 = vunpack.c.l.b16 %v1200
    %v2377 = vunpack.c.h.b16 %v1200
    %v2378 = vunpack.c.l.b16 %v1201
    %v2379 = vunpack.c.h.b16 %v1201
    %v2380 = vunpack.c.l.b16 %v1202
    %v2381 = vunpack.c.h.b16 %v1202
    %v2382 = vunpack.c.l.b16 %v1203
    %v2383 = vunpack.c.h.b16 %v1203
    %v2384 = vunpack.c.l.b16 %v1204
    %v2385 = vunpack.c.h.b16 %v1204
    %v2386 = vunpack.c.l.b16 %v1205
    %v2387 = vunpack.c.h.b16 %v1205
    %v2388 = vunpack.c.l.b16 %v1206
    %v2389 = vunpack.c.h.b16 %v1206
    %v2390 = vunpack.c.l.b16 %v1207
    %v2391 = vunpack.c.h.b16 %v1207
    %v2392 = vunpack.c.l.b16 %v1208
    %v2393 = vunpack.c.h.b16 %v1208
    %v2394 = vunpack.c.l.b16 %v1209
    %v2395 = vunpack.c.h.b16 %v1209
    %v2396 = vunpack.c.l.b16 %v1210
    %v2397 = vunpack.c.h.b16 %v1210
    %v2398 = vunpack.c.l.b16 %v1211
    %v2399 = vunpack.c.h.b16 %v1211
    %v2400 = vunpack.c.l.b16 %v1212
    %v2401 = vunpack.c.h.b16 %v1212
    %v2402 = vunpack.c.l.b16 %v1213
    %v2403 = vunpack.c.h.b16 %v1213
    %v2404 = vunpack.c.l.b16 %v1214
    %v2405 = vunpack.c.h.b16 %v1214
    %v2406 = vunpack.c.l.b16 %v1215
    %v2407 = vunpack.c.h.b16 %v1215
    %v2408 = vunpack.c.l.b16 %v1216
    %v2409 = vunpack.c.h.b16 %v1216
    %v2410 = vunpack.c.l.b16 %v1217
    %v2411 = vunpack.c.h.b16 %v1217
    %v2412 = vunpack.c.l.b16 %v1218
    %v2413 = vunpack.c.h.b16 %v1218
    %v2414 = vunpack.c.l.b16 %v1219
    %v2415 = vunpack.c.h.b16 %v1219
    %v2416 = vunpack.c.l.b16 %v1220
    %v2417 = vunpack.c.h.b16 %v1220
    %v2418 = vunpack.c.l.b16 %v1221
    %v2419 = vunpack.c.h.b16 %v1221
    %v2420 = vunpack.c.l.b16 %v1222
    %v2421 = vunpack.c.h.b16 %v1222
    %v2422 = vunpack.c.l.b16 %v1223
    %v2423 = vunpack.c.h.b16 %v1223
    %v2424 = vunpack.c.l.b16 %v1224
    %v2425 = vunpack.c.h.b16 %v1224
    %v2426 = vunpack.c.l.b16 %v1225
    %v2427 = vunpack.c.h.b16 %v1225
    %v2428 = vunpack.c.l.b16 %v1226
    %v2429 = vunpack.c.h.b16 %v1226
    %v2430 = vunpack.c.l.b16 %v1227
    %v2431 = vunpack.c.h.b16 %v1227
    %v2432 = vunpack.c.l.b16 %v1228
    %v2433 = vunpack.c.h.b16 %v1228
    %v2434 = vunpack.c.l.b16 %v1229
    %v2435 = vunpack.c.h.b16 %v1229
    %v2436 = vunpack.c.l.b16 %v1230
    %v2437 = vunpack.c.h.b16 %v1230
    %v2438 = vunpack.c.l.b16 %v1231
    %v2439 = vunpack.c.h.b16 %v1231
    %v2440 = vunpack.c.l.b16 %v1232
    %v2441 = vunpack.c.h.b16 %v1232
    %v2442 = vunpack.c.l.b16 %v1233
    %v2443 = vunpack.c.h.b16 %v1233
    %v2444 = vunpack.c.l.b16 %v1234
    %v2445 = vunpack.c.h.b16 %v1234
    %v2446 = vunpack.c.l.b16 %v1235
    %v2447 = vunpack.c.h.b16 %v1235
    %v2448 = vunpack.c.l.b16 %v1236
    %v2449 = vunpack.c.h.b16 %v1236
    %v2450 = vunpack.c.l.b16 %v1237
    %v2451 = vunpack.c.h.b16 %v1237
    %v2452 = vunpack.c.l.b16 %v1238
    %v2453 = vunpack.c.h.b16 %v1238
    %v2454 = vunpack.c.l.b16 %v1239
    %v2455 = vunpack.c.h.b16 %v1239
    %v2456 = vunpack.c.l.b16 %v1240
    %v2457 = vunpack.c.h.b16 %v1240
    %v2458 = vunpack.c.l.b16 %v1241
    %v2459 = vunpack.c.h.b16 %v1241
    %v2460 = vunpack.c.l.b16 %v1242
    %v2461 = vunpack.c.h.b16 %v1242
    %v2462 = vunpack.c.l.b16 %v1243
    %v2463 = vunpack.c.h.b16 %v1243
    %v2464 = vunpack.c.l.b16 %v1244
    %v2465 = vunpack.c.h.b16 %v1244
    %v2466 = vunpack.c.l.b16 %v1245
    %v2467 = vunpack.c.h.b16 %v1245
    %v2468 = vunpack.c.l.b16 %v1246
    %v2469 = vunpack.c.h.b16 %v1246
    %v2470 = vunpack.c.l.b16 %v1247
    %v2471 = vunpack.c.h.b16 %v1247
    %v2472 = vunpack.c.l.b16 %v1248
    %v2473 = vunpack.c.h.b16 %v1248
    %v2474 = vunpack.c.l.b16 %v1249
    %v2475 = vunpack.c.h.b16 %v1249
    %v2476 = vunpack.c.l.b16 %v1250
    %v2477 = vunpack.c.h.b16 %v1250
    %v2478 = vunpack.c.l.b16 %v1251
    %v2479 = vunpack.c.h.b16 %v1251
    %v2480 = vunpack.c.l.b16 %v1252
    %v2481 = vunpack.c.h.b16 %v1252
    %v2482 = vunpack.c.l.b16 %v1253
    %v2483 = vunpack.c.h.b16 %v1253
    %v2484 = vunpack.c.l.b16 %v1254
    %v2485 = vunpack.c.h.b16 %v1254
    %v2486 = vunpack.c.l.b16 %v1255
    %v2487 = vunpack.c.h.b16 %v1255
    %v2488 = vunpack.c.l.b16 %v1256
    %v2489 = vunpack.c.h.b16 %v1256
    %v2490 = vunpack.c.l.b16 %v1257
    %v2491 = vunpack.c.h.b16 %v1257
    %v2492 = vunpack.c.l.b16 %v1258
    %v2493 = vunpack.c.h.b16 %v1258
    %v2494 = vunpack.c.l.b16 %v1259
    %v2495 = vunpack.c.h.b16 %v1259
    %v2496 = vunpack.c.l.b16 %v1260
    %v2497 = vunpack.c.h.b16 %v1260
    %v2498 = vunpack.c.l.b16 %v1261
    %v2499 = vunpack.c.h.b16 %v1261
    %v2500 = vunpack.c.l.b16 %v1262
    %v2501 = vunpack.c.h.b16 %v1262
    %v2502 = vunpack.c.l.b16 %v1263
    %v2503 = vunpack.c.h.b16 %v1263
    %v2504 = vunpack.c.l.b16 %v1264
    %v2505 = vunpack.c.h.b16 %v1264
    %v2506 = vunpack.c.l.b16 %v1265
    %v2507 = vunpack.c.h.b16 %v1265
    %v2508 = vunpack.c.l.b16 %v1266
    %v2509 = vunpack.c.h.b16 %v1266
    %v2510 = vunpack.c.l.b16 %v1267
    %v2511 = vunpack.c.h.b16 %v1267
    %v2512 = vunpack.c.l.b16 %v1268
    %v2513 = vunpack.c.h.b16 %v1268
    %v2514 = vunpack.c.l.b16 %v1269
    %v2515 = vunpack.c.h.b16 %v1269
    %v2516 = vunpack.c.l.b16 %v1270
    %v2517 = vunpack.c.h.b16 %v1270
    %v2518 = vunpack.c.l.b16 %v1271
    %v2519 = vunpack.c.h.b16 %v1271
    %v2520 = vunpack.c.l.b16 %v1272
    %v2521 = vunpack.c.h.b16 %v1272
    %v2522 = vunpack.c.l.b16 %v1273
    %v2523 = vunpack.c.h.b16 %v1273
    %v2524 = vunpack.c.l.b16 %v1274
    %v2525 = vunpack.c.h.b16 %v1274
    %v2526 = vunpack.c.l.b16 %v1275
    %v2527 = vunpack.c.h.b16 %v1275
    %v2528 = vunpack.c.l.b16 %v1276
    %v2529 = vunpack.c.h.b16 %v1276
    %v2530 = vunpack.c.l.b16 %v1277
    %v2531 = vunpack.c.h.b16 %v1277
    %v2532 = vunpack.c.l.b16 %v1278
    %v2533 = vunpack.c.h.b16 %v1278
    %v2534 = vunpack.c.l.b16 %v1279
    %v2535 = vunpack.c.h.b16 %v1279
    %v2536 = vunpack.c.l.b16 %v1280
    %v2537 = vunpack.c.h.b16 %v1280
    %v2538 = vunpack.c.l.b16 %v1281
    %v2539 = vunpack.c.h.b16 %v1281
    %v2540 = vunpack.c.l.b16 %v1282
    %v2541 = vunpack.c.h.b16 %v1282
    %v2542 = vunpack.c.l.b16 %v1283
    %v2543 = vunpack.c.h.b16 %v1283
    %v2544 = vunpack.c.l.b16 %v1284
    %v2545 = vunpack.c.h.b16 %v1284
    %v2546 = vunpack.c.l.b16 %v1285
    %v2547 = vunpack.c.h.b16 %v1285
    %v2548 = vunpack.c.l.b16 %v1286
    %v2549 = vunpack.c.h.b16 %v1286
    %v2550 = vunpack.c.l.b16 %v1287
    %v2551 = vunpack.c.h.b16 %v1287
    %v2552 = vunpack.c.l.b16 %v1288
    %v2553 = vunpack.c.h.b16 %v1288
    %v2554 = vunpack.c.l.b16 %v1289
    %v2555 = vunpack.c.h.b16 %v1289
    %v2556 = vunpack.c.l.b16 %v1290
    %v2557 = vunpack.c.h.b16 %v1290
    %v2558 = vunpack.c.l.b16 %v1291
    %v2559 = vunpack.c.h.b16 %v1291
    %v2560 = vunpack.c.l.b16 %v1292
    %v2561 = vunpack.c.h.b16 %v1292
    %v2562 = vunpack.c.l.b16 %v1293
    %v2563 = vunpack.c.h.b16 %v1293
    %v2564 = vunpack.c.l.b16 %v1294
    %v2565 = vunpack.c.h.b16 %v1294
    %v2566 = vunpack.c.l.b16 %v1295
    %v2567 = vunpack.c.h.b16 %v1295
    %v2568 = vunpack.c.l.b16 %v1296
    %v2569 = vunpack.c.h.b16 %v1296
    %v2570 = vunpack.c.l.b16 %v1297
    %v2571 = vunpack.c.h.b16 %v1297
    %v2572 = vunpack.c.l.b16 %v1298
    %v2573 = vunpack.c.h.b16 %v1298
    %v2574 = vunpack.c.l.b16 %v1299
    %v2575 = vunpack.c.h.b16 %v1299
    %v2576 = vunpack.c.l.b16 %v1300
    %v2577 = vunpack.c.h.b16 %v1300
    %v2578 = vunpack.c.l.b16 %v1301
    %v2579 = vunpack.c.h.b16 %v1301
    %v2580 = vunpack.c.l.b16 %v1302
    %v2581 = vunpack.c.h.b16 %v1302
    %v2582 = vunpack.c.l.b16 %v1303
    %v2583 = vunpack.c.h.b16 %v1303
    %v2584 = vunpack.c.l.b16 %v1304
    %v2585 = vunpack.c.h.b16 %v1304
    %v2586 = vunpack.c.l.b16 %v1305
    %v2587 = vunpack.c.h.b16 %v1305
    %v2588 = vunpack.c.l.b16 %v1306
    %v2589 = vunpack.c.h.b16 %v1306
    %v2590 = vunpack.c.l.b16 %v1307
    %v2591 = vunpack.c.h.b16 %v1307
    %v2592 = vunpack.c.l.b16 %v1308
    %v2593 = vunpack.c.h.b16 %v1308
    %v2594 = vunpack.c.l.b16 %v1309
    %v2595 = vunpack.c.h.b16 %v1309
    %v2596 = vunpack.c.l.b16 %v1310
    %v2597 = vunpack.c.h.b16 %v1310
    %v2598 = vunpack.c.l.b16 %v1311
    %v2599 = vunpack.c.h.b16 %v1311
    %v2600 = vunpack.c.l.b16 %v1312
    %v2601 = vunpack.c.h.b16 %v1312
    %v2602 = vunpack.c.l.b16 %v1313
    %v2603 = vunpack.c.h.b16 %v1313
    %v2604 = vunpack.c.l.b16 %v1314
    %v2605 = vunpack.c.h.b16 %v1314
    %v2606 = vunpack.c.l.b16 %v1315
    %v2607 = vunpack.c.h.b16 %v1315
    %v2608 = vunpack.c.l.b16 %v1316
    %v2609 = vunpack.c.h.b16 %v1316
    %v2610 = vunpack.c.l.b16 %v1317
    %v2611 = vunpack.c.h.b16 %v1317
    %v2612 = vunpack.c.l.b16 %v1318
    %v2613 = vunpack.c.h.b16 %v1318
    %v2614 = vunpack.c.l.b16 %v1319
    %v2615 = vunpack.c.h.b16 %v1319
    %v2616 = vunpack.c.l.b16 %v1320
    %v2617 = vunpack.c.h.b16 %v1320
    %v2618 = vunpack.c.l.b16 %v1321
    %v2619 = vunpack.c.h.b16 %v1321
    %v2620 = vunpack.c.l.b16 %v1322
    %v2621 = vunpack.c.h.b16 %v1322
    %v2622 = vunpack.c.l.b16 %v1323
    %v2623 = vunpack.c.h.b16 %v1323
    %v2624 = vunpack.c.l.b16 %v1324
    %v2625 = vunpack.c.h.b16 %v1324
    %v2626 = vunpack.c.l.b16 %v1325
    %v2627 = vunpack.c.h.b16 %v1325
    %v2628 = vunpack.c.l.b16 %v1326
    %v2629 = vunpack.c.h.b16 %v1326
    %v2630 = vunpack.c.l.b16 %v1327
    %v2631 = vunpack.c.h.b16 %v1327
    %v2632 = vunpack.c.l.b16 %v1328
    %v2633 = vunpack.c.h.b16 %v1328
    %v2634 = vunpack.c.l.b16 %v1329
    %v2635 = vunpack.c.h.b16 %v1329
    %v2636 = vunpack.c.l.b16 %v1330
    %v2637 = vunpack.c.h.b16 %v1330
    %v2638 = vunpack.c.l.b16 %v1331
    %v2639 = vunpack.c.h.b16 %v1331
    %v2640 = vunpack.c.l.b16 %v1332
    %v2641 = vunpack.c.h.b16 %v1332
    %v2642 = vunpack.c.l.b16 %v1333
    %v2643 = vunpack.c.h.b16 %v1333
    %v2644 = vunpack.c.l.b16 %v1334
    %v2645 = vunpack.c.h.b16 %v1334
    %v2646 = vunpack.c.l.b16 %v1335
    %v2647 = vunpack.c.h.b16 %v1335
    %v2648 = vunpack.c.l.b16 %v1336
    %v2649 = vunpack.c.h.b16 %v1336
    %v2650 = vunpack.c.l.b16 %v1337
    %v2651 = vunpack.c.h.b16 %v1337
    %v2652 = vunpack.c.l.b16 %v1338
    %v2653 = vunpack.c.h.b16 %v1338
    %v2654 = vunpack.c.l.b16 %v1339
    %v2655 = vunpack.c.h.b16 %v1339
    %v2656 = vunpack.c.l.b16 %v1340
    %v2657 = vunpack.c.h.b16 %v1340
    %v2658 = vunpack.c.l.b16 %v1341
    %v2659 = vunpack.c.h.b16 %v1341
    %v2660 = vunpack.c.l.b16 %v1342
    %v2661 = vunpack.c.h.b16 %v1342
    %v2662 = vunpack.c.l.b16 %v1343
    %v2663 = vunpack.c.h.b16 %v1343
    %v2664 = vunpack.c.l.b16 %v1344
    %v2665 = vunpack.c.h.b16 %v1344
    %v2666 = vunpack.c.l.b16 %v1345
    %v2667 = vunpack.c.h.b16 %v1345
    %v2668 = vunpack.c.l.b16 %v1346
    %v2669 = vunpack.c.h.b16 %v1346
    %v2670 = vunpack.c.l.b16 %v1347
    %v2671 = vunpack.c.h.b16 %v1347
    %v2672 = vunpack.c.l.b16 %v1348
    %v2673 = vunpack.c.h.b16 %v1348
    %v2674 = vunpack.c.l.b16 %v1349
    %v2675 = vunpack.c.h.b16 %v1349
    %v2676 = vunpack.c.l.b16 %v1350
    %v2677 = vunpack.c.h.b16 %v1350
    %v2678 = vunpack.c.l.b16 %v1351
    %v2679 = vunpack.c.h.b16 %v1351
    %v2680 = vunpack.c.l.b16 %v1352
    %v2681 = vunpack.c.h.b16 %v1352
    %v2682 = vunpack.c.l.b16 %v1353
    %v2683 = vunpack.c.h.b16 %v1353
    %v2684 = vunpack.c.l.b16 %v1354
    %v2685 = vunpack.c.h.b16 %v1354
    %v2686 = vunpack.c.l.b16 %v1355
    %v2687 = vunpack.c.h.b16 %v1355
    %v2688 = vunpack.c.l.b16 %v1356
    %v2689 = vunpack.c.h.b16 %v1356
    %v2690 = vunpack.c.l.b16 %v1357
    %v2691 = vunpack.c.h.b16 %v1357
    %v2692 = vunpack.c.l.b16 %v1358
    %v2693 = vunpack.c.h.b16 %v1358
    %v2694 = vunpack.c.l.b16 %v1359
    %v2695 = vunpack.c.h.b16 %v1359
    %v2696 = vunpack.c.l.b16 %v1360
    %v2697 = vunpack.c.h.b16 %v1360
    %v2698 = vunpack.c.l.b16 %v1361
    %v2699 = vunpack.c.h.b16 %v1361
    %v2700 = vunpack.c.l.b16 %v1362
    %v2701 = vunpack.c.h.b16 %v1362
    %v2702 = vunpack.c.l.b16 %v1363
    %v2703 = vunpack.c.h.b16 %v1363
    %v2704 = vunpack.c.l.b16 %v1364
    %v2705 = vunpack.c.h.b16 %v1364
    %v2706 = vunpack.c.l.b16 %v1365
    %v2707 = vunpack.c.h.b16 %v1365
    %v2708 = vunpack.c.l.b16 %v1366
    %v2709 = vunpack.c.h.b16 %v1366
    %v2710 = vunpack.c.l.b16 %v1367
    %v2711 = vunpack.c.h.b16 %v1367
    %v2712 = vunpack.c.l.b16 %v1368
    %v2713 = vunpack.c.h.b16 %v1368
    %v2714 = vunpack.c.l.b16 %v1369
    %v2715 = vunpack.c.h.b16 %v1369
    %v2716 = vunpack.c.l.b16 %v1370
    %v2717 = vunpack.c.h.b16 %v1370
    %v2718 = vunpack.c.l.b16 %v1371
    %v2719 = vunpack.c.h.b16 %v1371
    %v2720 = vunpack.c.l.b16 %v1372
    %v2721 = vunpack.c.h.b16 %v1372
    %v2722 = vunpack.c.l.b16 %v1373
    %v2723 = vunpack.c.h.b16 %v1373
    %v2724 = vunpack.c.l.b16 %v1374
    %v2725 = vunpack.c.h.b16 %v1374
    %v2726 = vunpack.c.l.b16 %v1375
    %v2727 = vunpack.c.h.b16 %v1375
    %v2728 = vunpack.c.l.b16 %v1376
    %v2729 = vunpack.c.h.b16 %v1376
    %v2730 = vunpack.c.l.b16 %v1377
    %v2731 = vunpack.c.h.b16 %v1377
    %v2732 = vunpack.c.l.b16 %v1378
    %v2733 = vunpack.c.h.b16 %v1378
    %v2734 = vunpack.c.l.b16 %v1379
    %v2735 = vunpack.c.h.b16 %v1379
    %v2736 = vunpack.c.l.b16 %v1380
    %v2737 = vunpack.c.h.b16 %v1380
    %v2738 = vunpack.c.l.b16 %v1381
    %v2739 = vunpack.c.h.b16 %v1381
    %v2740 = vunpack.c.l.b16 %v1382
    %v2741 = vunpack.c.h.b16 %v1382
    %v2742 = vunpack.c.l.b16 %v1383
    %v2743 = vunpack.c.h.b16 %v1383
    %v2744 = vunpack.c.l.b16 %v1384
    %v2745 = vunpack.c.h.b16 %v1384
    %v2746 = vunpack.c.l.b16 %v1385
    %v2747 = vunpack.c.h.b16 %v1385
    %v2748 = vunpack.c.l.b16 %v1386
    %v2749 = vunpack.c.h.b16 %v1386
    %v2750 = vunpack.c.l.b16 %v1387
    %v2751 = vunpack.c.h.b16 %v1387
    %v2752 = vunpack.c.l.b16 %v1388
    %v2753 = vunpack.c.h.b16 %v1388
    %v2754 = vunpack.c.l.b16 %v1389
    %v2755 = vunpack.c.h.b16 %v1389
    %v2756 = vunpack.c.l.b16 %v1390
    %v2757 = vunpack.c.h.b16 %v1390
    %v2758 = vunpack.c.l.b16 %v1391
    %v2759 = vunpack.c.h.b16 %v1391
    %v2760 = vunpack.c.l.b16 %v1392
    %v2761 = vunpack.c.h.b16 %v1392
    %v2762 = vunpack.c.l.b16 %v1393
    %v2763 = vunpack.c.h.b16 %v1393
    %v2764 = vunpack.c.l.b16 %v1394
    %v2765 = vunpack.c.h.b16 %v1394
    %v2766 = vunpack.c.l.b16 %v1395
    %v2767 = vunpack.c.h.b16 %v1395
    %v2768 = vunpack.c.l.b16 %v1396
    %v2769 = vunpack.c.h.b16 %v1396
    %v2770 = vunpack.c.l.b16 %v1397
    %v2771 = vunpack.c.h.b16 %v1397
    %v2772 = vunpack.c.l.b16 %v1398
    %v2773 = vunpack.c.h.b16 %v1398
    %v2774 = vunpack.c.l.b16 %v1399
    %v2775 = vunpack.c.h.b16 %v1399
    %v2776 = vunpack.c.l.b16 %v1400
    %v2777 = vunpack.c.h.b16 %v1400
    %v2778 = vunpack.c.l.b16 %v1401
    %v2779 = vunpack.c.h.b16 %v1401
    %v2780 = vunpack.c.l.b16 %v1402
    %v2781 = vunpack.c.h.b16 %v1402
    %v2782 = vunpack.c.l.b16 %v1403
    %v2783 = vunpack.c.h.b16 %v1403
    %v2784 = vunpack.c.l.b16 %v1404
    %v2785 = vunpack.c.h.b16 %v1404
    %v2786 = vunpack.c.l.b16 %v1405
    %v2787 = vunpack.c.h.b16 %v1405
    %v2788 = vunpack.c.l.b16 %v1406
    %v2789 = vunpack.c.h.b16 %v1406
    %v2790 = vunpack.c.l.b16 %v1407
    %v2791 = vunpack.c.h.b16 %v1407
    %v2792 = vunpack.c.l.b16 %v1408
    %v2793 = vunpack.c.h.b16 %v1408
    %v2794 = vunpack.c.l.b16 %v1409
    %v2795 = vunpack.c.h.b16 %v1409
    %v2796 = vunpack.c.l.b16 %v1410
    %v2797 = vunpack.c.h.b16 %v1410
    %v2798 = vunpack.c.l.b16 %v1411
    %v2799 = vunpack.c.h.b16 %v1411
    %v2800 = vunpack.c.l.b16 %v1412
    %v2801 = vunpack.c.h.b16 %v1412
    %v2802 = vunpack.c.l.b16 %v1413
    %v2803 = vunpack.c.h.b16 %v1413
    %v2804 = vunpack.c.l.b16 %v1414
    %v2805 = vunpack.c.h.b16 %v1414
    %v2806 = vunpack.c.l.b16 %v1415
    %v2807 = vunpack.c.h.b16 %v1415
    %v2808 = vunpack.c.l.b16 %v1416
    %v2809 = vunpack.c.h.b16 %v1416
    %v2810 = vunpack.c.l.b16 %v1417
    %v2811 = vunpack.c.h.b16 %v1417
    %v2812 = vunpack.c.l.b16 %v1418
    %v2813 = vunpack.c.h.b16 %v1418
    %v2814 = vunpack.c.l.b16 %v1419
    %v2815 = vunpack.c.h.b16 %v1419
    %v2816 = vunpack.c.l.b16 %v1420
    %v2817 = vunpack.c.h.b16 %v1420
    %v2818 = vunpack.c.l.b16 %v1421
    %v2819 = vunpack.c.h.b16 %v1421
    %v2820 = vunpack.c.l.b16 %v1422
    %v2821 = vunpack.c.h.b16 %v1422
    %v2822 = vunpack.c.l.b16 %v1423
    %v2823 = vunpack.c.h.b16 %v1423
    %v2824 = vunpack.c.l.b16 %v1424
    %v2825 = vunpack.c.h.b16 %v1424
    %v2826 = vunpack.c.l.b16 %v1425
    %v2827 = vunpack.c.h.b16 %v1425
    %v2828 = vunpack.c.l.b16 %v1426
    %v2829 = vunpack.c.h.b16 %v1426
    %v2830 = vunpack.c.l.b16 %v1427
    %v2831 = vunpack.c.h.b16 %v1427
    %v2832 = vunpack.c.l.b16 %v1428
    %v2833 = vunpack.c.h.b16 %v1428
    %v2834 = vunpack.c.l.b16 %v1429
    %v2835 = vunpack.c.h.b16 %v1429
    %v2836 = vunpack.c.l.b16 %v1430
    %v2837 = vunpack.c.h.b16 %v1430
    %v2838 = vunpack.c.l.b16 %v1431
    %v2839 = vunpack.c.h.b16 %v1431
    %v2840 = vunpack.c.l.b16 %v1432
    %v2841 = vunpack.c.h.b16 %v1432
    %v2842 = vunpack.c.l.b16 %v1433
    %v2843 = vunpack.c.h.b16 %v1433
    %v2844 = vunpack.c.l.b16 %v1434
    %v2845 = vunpack.c.h.b16 %v1434
    %v2846 = vunpack.c.l.b16 %v1435
    %v2847 = vunpack.c.h.b16 %v1435
    %v2848 = vunpack.c.l.b16 %v1436
    %v2849 = vunpack.c.h.b16 %v1436
    %v2850 = vunpack.c.l.b16 %v1437
    %v2851 = vunpack.c.h.b16 %v1437
    %v2852 = vunpack.c.l.b16 %v1438
    %v2853 = vunpack.c.h.b16 %v1438
    %v2854 = vunpack.c.l.b16 %v1439
    %v2855 = vunpack.c.h.b16 %v1439
    %v2856 = vunpack.c.l.b16 %v1440
    %v2857 = vunpack.c.h.b16 %v1440
    %v2858 = vunpack.c.l.b16 %v1441
    %v2859 = vunpack.c.h.b16 %v1441
    %v2860 = vunpack.c.l.b16 %v1442
    %v2861 = vunpack.c.h.b16 %v1442
    %v2862 = vunpack.c.l.b16 %v1443
    %v2863 = vunpack.c.h.b16 %v1443
    %v2864 = vunpack.c.l.b16 %v1444
    %v2865 = vunpack.c.h.b16 %v1444
    %v2866 = vunpack.c.l.b16 %v1445
    %v2867 = vunpack.c.h.b16 %v1445
    %v2868 = vunpack.c.l.b16 %v1446
    %v2869 = vunpack.c.h.b16 %v1446
    %v2870 = vunpack.c.l.b16 %v1447
    %v2871 = vunpack.c.h.b16 %v1447
    %v2872 = vunpack.c.l.b16 %v1448
    %v2873 = vunpack.c.h.b16 %v1448
    %v2874 = vunpack.c.l.b16 %v1449
    %v2875 = vunpack.c.h.b16 %v1449
    %v2876 = vunpack.c.l.b16 %v1450
    %v2877 = vunpack.c.h.b16 %v1450
    %v2878 = vunpack.c.l.b16 %v1451
    %v2879 = vunpack.c.h.b16 %v1451
    %v2880 = vunpack.c.l.b16 %v1452
    %v2881 = vunpack.c.h.b16 %v1452
    %v2882 = vunpack.c.l.b16 %v1453
    %v2883 = vunpack.c.h.b16 %v1453
    %v2884 = vunpack.c.l.b16 %v1454
    %v2885 = vunpack.c.h.b16 %v1454
    %v2886 = vunpack.c.l.b16 %v1455
    %v2887 = vunpack.c.h.b16 %v1455
    %v2888 = vunpack.c.l.b16 %v1456
    %v2889 = vunpack.c.h.b16 %v1456
    %v2890 = vunpack.c.l.b16 %v1457
    %v2891 = vunpack.c.h.b16 %v1457
    %v2892 = vunpack.c.l.b16 %v1458
    %v2893 = vunpack.c.h.b16 %v1458
    %v2894 = vunpack.c.l.b16 %v1459
    %v2895 = vunpack.c.h.b16 %v1459
    %v2896 = vunpack.c.l.b16 %v1460
    %v2897 = vunpack.c.h.b16 %v1460
    %v2898 = vunpack.c.l.b16 %v1461
    %v2899 = vunpack.c.h.b16 %v1461
    %v2900 = vunpack.c.l.b16 %v1462
    %v2901 = vunpack.c.h.b16 %v1462
    %v2902 = vunpack.c.l.b16 %v1463
    %v2903 = vunpack.c.h.b16 %v1463
    %v2904 = vunpack.c.l.b16 %v1464
    %v2905 = vunpack.c.h.b16 %v1464
    %v2906 = vunpack.c.l.b16 %v1465
    %v2907 = vunpack.c.h.b16 %v1465
    %v2908 = vunpack.c.l.b16 %v1466
    %v2909 = vunpack.c.h.b16 %v1466
    %v2910 = vunpack.c.l.b16 %v1467
    %v2911 = vunpack.c.h.b16 %v1467
    %v2912 = vunpack.c.l.b16 %v1468
    %v2913 = vunpack.c.h.b16 %v1468
    %v2914 = vunpack.c.l.b16 %v1469
    %v2915 = vunpack.c.h.b16 %v1469
    %v2916 = vunpack.c.l.b16 %v1470
    %v2917 = vunpack.c.h.b16 %v1470
    %v2918 = vunpack.c.l.b16 %v1471
    %v2919 = vunpack.c.h.b16 %v1471
    %v2920 = vunpack.c.l.b16 %v1472
    %v2921 = vunpack.c.h.b16 %v1472
    %v2922 = vunpack.c.l.b16 %v1473
    %v2923 = vunpack.c.h.b16 %v1473
    %v2924 = vunpack.c.l.b16 %v1474
    %v2925 = vunpack.c.h.b16 %v1474
    %v2926 = vunpack.c.l.b16 %v1475
    %v2927 = vunpack.c.h.b16 %v1475
    %v2928 = vunpack.c.l.b16 %v1476
    %v2929 = vunpack.c.h.b16 %v1476
    %v2930 = vunpack.c.l.b16 %v1477
    %v2931 = vunpack.c.h.b16 %v1477
    %v2932 = vunpack.c.l.b16 %v1478
    %v2933 = vunpack.c.h.b16 %v1478
    %v2934 = vunpack.c.l.b16 %v1479
    %v2935 = vunpack.c.h.b16 %v1479
    %v2936 = vunpack.c.l.b16 %v1480
    %v2937 = vunpack.c.h.b16 %v1480
    %v2938 = vunpack.c.l.b16 %v1481
    %v2939 = vunpack.c.h.b16 %v1481
    %v2940 = vunpack.c.l.b16 %v1482
    %v2941 = vunpack.c.h.b16 %v1482
    %v2942 = vunpack.c.l.b16 %v1483
    %v2943 = vunpack.c.h.b16 %v1483
    %v2944 = vunpack.c.l.b16 %v1484
    %v2945 = vunpack.c.h.b16 %v1484
    %v2946 = vunpack.c.l.b16 %v1485
    %v2947 = vunpack.c.h.b16 %v1485
    %v2948 = vunpack.c.l.b16 %v1486
    %v2949 = vunpack.c.h.b16 %v1486
    %v2950 = vunpack.c.l.b16 %v1487
    %v2951 = vunpack.c.h.b16 %v1487
    %v2952 = vunpack.c.l.b16 %v1488
    %v2953 = vunpack.c.h.b16 %v1488
    %v2954 = vunpack.c.l.b16 %v1489
    %v2955 = vunpack.c.h.b16 %v1489
    %v2956 = vunpack.c.l.b16 %v1490
    %v2957 = vunpack.c.h.b16 %v1490
    %v2958 = vunpack.c.l.b16 %v1491
    %v2959 = vunpack.c.h.b16 %v1491
    %v2960 = vunpack.c.l.b16 %v1492
    %v2961 = vunpack.c.h.b16 %v1492
    %v2962 = vunpack.c.l.b16 %v1493
    %v2963 = vunpack.c.h.b16 %v1493
    %v2964 = vunpack.c.l.b16 %v1494
    %v2965 = vunpack.c.h.b16 %v1494
    %v2966 = vunpack.c.l.b16 %v1495
    %v2967 = vunpack.c.h.b16 %v1495
    %v2968 = vunpack.c.l.b16 %v1496
    %v2969 = vunpack.c.h.b16 %v1496
    %v2970 = vunpack.c.l.b16 %v1497
    %v2971 = vunpack.c.h.b16 %v1497
    %v2972 = vunpack.c.l.b16 %v1498
    %v2973 = vunpack.c.h.b16 %v1498
    %v2974 = vunpack.c.l.b16 %v1499
    %v2975 = vunpack.c.h.b16 %v1499
    %v2976 = vunpack.c.l.b16 %v1500
    %v2977 = vunpack.c.h.b16 %v1500
    %v2978 = vunpack.c.l.b16 %v1501
    %v2979 = vunpack.c.h.b16 %v1501
    %v2980 = vunpack.c.l.b16 %v1502
    %v2981 = vunpack.c.h.b16 %v1502
    %v2982 = vunpack.c.l.b16 %v1503
    %v2983 = vunpack.c.h.b16 %v1503
    %v2984 = vunpack.c.l.b16 %v1504
    %v2985 = vunpack.c.h.b16 %v1504
    %v2986 = vunpack.c.l.b16 %v1505
    %v2987 = vunpack.c.h.b16 %v1505
    %v2988 = vunpack.c.l.b16 %v1506
    %v2989 = vunpack.c.h.b16 %v1506
    %v2990 = vunpack.c.l.b16 %v1507
    %v2991 = vunpack.c.h.b16 %v1507
    %v2992 = vunpack.c.l.b16 %v1508
    %v2993 = vunpack.c.h.b16 %v1508
    %v2994 = vunpack.c.l.b16 %v1509
    %v2995 = vunpack.c.h.b16 %v1509
    %v2996 = vunpack.c.l.b16 %v1510
    %v2997 = vunpack.c.h.b16 %v1510
    %v2998 = vunpack.c.l.b16 %v1511
    %v2999 = vunpack.c.h.b16 %v1511
    %v3000 = vunpack.c.l.b16 %v1512
    %v3001 = vunpack.c.h.b16 %v1512
    %v3002 = vunpack.c.l.b16 %v1513
    %v3003 = vunpack.c.h.b16 %v1513
    %v3004 = vunpack.c.l.b16 %v1514
    %v3005 = vunpack.c.h.b16 %v1514
    %v3006 = vunpack.c.l.b16 %v1515
    %v3007 = vunpack.c.h.b16 %v1515
    %v3008 = vunpack.c.l.b16 %v1516
    %v3009 = vunpack.c.h.b16 %v1516
    %v3010 = vunpack.c.l.b16 %v1517
    %v3011 = vunpack.c.h.b16 %v1517
    %v3012 = vunpack.c.l.b16 %v1518
    %v3013 = vunpack.c.h.b16 %v1518
    %v3014 = vunpack.c.l.b16 %v1519
    %v3015 = vunpack.c.h.b16 %v1519
    %v3016 = vunpack.c.l.b16 %v1520
    %v3017 = vunpack.c.h.b16 %v1520
    %v3018 = vunpack.c.l.b16 %v1521
    %v3019 = vunpack.c.h.b16 %v1521
    %v3020 = vunpack.c.l.b16 %v1522
    %v3021 = vunpack.c.h.b16 %v1522
    %v3022 = vunpack.c.l.b16 %v1523
    %v3023 = vunpack.c.h.b16 %v1523
    %v3024 = vunpack.c.l.b16 %v1524
    %v3025 = vunpack.c.h.b16 %v1524
    %v3026 = vunpack.c.l.b16 %v1525
    %v3027 = vunpack.c.h.b16 %v1525
    %v3028 = vunpack.c.l.b16 %v1526
    %v3029 = vunpack.c.h.b16 %v1526
    %v3030 = vunpack.c.l.b16 %v1527
    %v3031 = vunpack.c.h.b16 %v1527
    %v3032 = vunpack.c.l.b16 %v1528
    %v3033 = vunpack.c.h.b16 %v1528
    %v3034 = vunpack.c.l.b16 %v1529
    %v3035 = vunpack.c.h.b16 %v1529
    %v3036 = vunpack.c.l.b16 %v1530
    %v3037 = vunpack.c.h.b16 %v1530
    %v3038 = vunpack.c.l.b16 %v1531
    %v3039 = vunpack.c.h.b16 %v1531
    %v3040 = vunpack.c.l.b16 %v1532
    %v3041 = vunpack.c.h.b16 %v1532
    %v3042 = vunpack.c.l.b16 %v1533
    %v3043 = vunpack.c.h.b16 %v1533
    %v3044 = vunpack.c.l.b16 %v1534
    %v3045 = vunpack.c.h.b16 %v1534
    %v3046 = vunpack.c.l.b16 %v1535
    %v3047 = vunpack.c.h.b16 %v1535
    %v3048 = vunpack.c.l.b16 %v1536
    %v3049 = vunpack.c.h.b16 %v1536
    %v3050 = vunpack.c.l.b16 %v1537
    %v3051 = vunpack.c.h.b16 %v1537
    %v3052 = vunpack.c.l.b16 %v1538
    %v3053 = vunpack.c.h.b16 %v1538
    %v3054 = vunpack.c.l.b16 %v1539
    %v3055 = vunpack.c.h.b16 %v1539
    %v3056 = vunpack.c.l.b16 %v1540
    %v3057 = vunpack.c.h.b16 %v1540
    %v3058 = vunpack.c.l.b16 %v1541
    %v3059 = vunpack.c.h.b16 %v1541
    %v3060 = vunpack.c.l.b16 %v1542
    %v3061 = vunpack.c.h.b16 %v1542
    %v3062 = vunpack.c.l.b16 %v1543
    %v3063 = vunpack.c.h.b16 %v1543
    %v3064 = vunpack.c.l.b16 %v1544
    %v3065 = vunpack.c.h.b16 %v1544
    %v3066 = vunpack.c.l.b16 %v1545
    %v3067 = vunpack.c.h.b16 %v1545
    %v3068 = vunpack.c.l.b16 %v1546
    %v3069 = vunpack.c.h.b16 %v1546
    %v3070 = vunpack.c.l.b16 %v1547
    %v3071 = vunpack.c.h.b16 %v1547
    %v3072 = vunpack.c.l.b16 %v1548
    %v3073 = vunpack.c.h.b16 %v1548
    %v3074 = vunpack.c.l.b16 %v1549
    %v3075 = vunpack.c.h.b16 %v1549
    %v3076 = vunpack.c.l.b16 %v1550
    %v3077 = vunpack.c.h.b16 %v1550
    %v3078 = vunpack.c.l.b16 %v1551
    %v3079 = vunpack.c.h.b16 %v1551
    %v3080 = vunpack.c.l.b16 %v1552
    %v3081 = vunpack.c.h.b16 %v1552
    %v3082 = vunpack.c.l.b16 %v1553
    %v3083 = vunpack.c.h.b16 %v1553
    %v3084 = vunpack.c.l.b16 %v1554
    %v3085 = vunpack.c.h.b16 %v1554
    %v3086 = vunpack.c.l.b16 %v1555
    %v3087 = vunpack.c.h.b16 %v1555
    %v3088 = vunpack.c.l.b16 %v1556
    %v3089 = vunpack.c.h.b16 %v1556
    %v3090 = vunpack.c.l.b16 %v1557
    %v3091 = vunpack.c.h.b16 %v1557
    %v3092 = vunpack.c.l.b16 %v1558
    %v3093 = vunpack.c.h.b16 %v1558
    %v3094 = vunpack.c.l.b16 %v1559
    %v3095 = vunpack.c.h.b16 %v1559
    %v3096 = vpack.c.b16 %v2080, %v2072
    %v3097 = vpack.c.b16 %v2081, %v2073
    %v3098 = vpack.c.b16 %v2082, %v2074
    %v3099 = vpack.c.b16 %v2083, %v2075
    %v3100 = vpack.c.b16 %v2084, %v2076
    %v3101 = vpack.c.b16 %v2085, %v2077
    %v3102 = vpack.c.b16 %v2086, %v2078
    %v3103 = vpack.c.b16 %v2087, %v2079
    %v3104 = vpack.c.b16 %v2096, %v2088
    %v3105 = vpack.c.b16 %v2097, %v2089
    %v3106 = vpack.c.b16 %v2098, %v2090
    %v3107 = vpack.c.b16 %v2099, %v2091
    %v3108 = vpack.c.b16 %v2100, %v2092
    %v3109 = vpack.c.b16 %v2101, %v2093
    %v3110 = vpack.c.b16 %v2102, %v2094
    %v3111 = vpack.c.b16 %v2103, %v2095
    %v3112 = vpack.c.b16 %v2112, %v2104
    %v3113 = vpack.c.b16 %v2113, %v2105
    %v3114 = vpack.c.b16 %v2114, %v2106
    %v3115 = vpack.c.b16 %v2115, %v2107
    %v3116 = vpack.c.b16 %v2116, %v2108
    %v3117 = vpack.c.b16 %v2117, %v2109
    %v3118 = vpack.c.b16 %v2118, %v2110
    %v3119 = vpack.c.b16 %v2119, %v2111
    %v3120 = vpack.c.b16 %v2128, %v2120
    %v3121 = vpack.c.b16 %v2129, %v2121
    %v3122 = vpack.c.b16 %v2130, %v2122
    %v3123 = vpack.c.b16 %v2131, %v2123
    %v3124 = vpack.c.b16 %v2132, %v2124
    %v3125 = vpack.c.b16 %v2133, %v2125
    %v3126 = vpack.c.b16 %v2134, %v2126
    %v3127 = vpack.c.b16 %v2135, %v2127
    %v3128 = vpack.c.b16 %v2144, %v2136
    %v3129 = vpack.c.b16 %v2145, %v2137
    %v3130 = vpack.c.b16 %v2146, %v2138
    %v3131 = vpack.c.b16 %v2147, %v2139
    %v3132 = vpack.c.b16 %v2148, %v2140
    %v3133 = vpack.c.b16 %v2149, %v2141
    %v3134 = vpack.c.b16 %v2150, %v2142
    %v3135 = vpack.c.b16 %v2151, %v2143
    %v3136 = vpack.c.b16 %v2160, %v2152
    %v3137 = vpack.c.b16 %v2161, %v2153
    %v3138 = vpack.c.b16 %v2162, %v2154
    %v3139 = vpack.c.b16 %v2163, %v2155
    %v3140 = vpack.c.b16 %v2164, %v2156
    %v3141 = vpack.c.b16 %v2165, %v2157
    %v3142 = vpack.c.b16 %v2166, %v2158
    %v3143 = vpack.c.b16 %v2167, %v2159
    %v3144 = vpack.c.b16 %v2176, %v2168
    %v3145 = vpack.c.b16 %v2177, %v2169
    %v3146 = vpack.c.b16 %v2178, %v2170
    %v3147 = vpack.c.b16 %v2179, %v2171
    %v3148 = vpack.c.b16 %v2180, %v2172
    %v3149 = vpack.c.b16 %v2181, %v2173
    %v3150 = vpack.c.b16 %v2182, %v2174
    %v3151 = vpack.c.b16 %v2183, %v2175
    %v3152 = vpack.c.b16 %v2192, %v2184
    %v3153 = vpack.c.b16 %v2193, %v2185
    %v3154 = vpack.c.b16 %v2194, %v2186
    %v3155 = vpack.c.b16 %v2195, %v2187
    %v3156 = vpack.c.b16 %v2196, %v2188
    %v3157 = vpack.c.b16 %v2197, %v2189
    %v3158 = vpack.c.b16 %v2198, %v2190
    %v3159 = vpack.c.b16 %v2199, %v2191
    %v3160 = vpack.c.b16 %v2208, %v2200
    %v3161 = vpack.c.b16 %v2209, %v2201
    %v3162 = vpack.c.b16 %v2210, %v2202
    %v3163 = vpack.c.b16 %v2211, %v2203
    %v3164 = vpack.c.b16 %v2212, %v2204
    %v3165 = vpack.c.b16 %v2213, %v2205
    %v3166 = vpack.c.b16 %v2214, %v2206
    %v3167 = vpack.c.b16 %v2215, %v2207
    %v3168 = vpack.c.b16 %v2224, %v2216
    %v3169 = vpack.c.b16 %v2225, %v2217
    %v3170 = vpack.c.b16 %v2226, %v2218
    %v3171 = vpack.c.b16 %v2227, %v2219
    %v3172 = vpack.c.b16 %v2228, %v2220
    %v3173 = vpack.c.b16 %v2229, %v2221
    %v3174 = vpack.c.b16 %v2230, %v2222
    %v3175 = vpack.c.b16 %v2231, %v2223
    %v3176 = vpack.c.b16 %v2240, %v2232
    %v3177 = vpack.c.b16 %v2241, %v2233
    %v3178 = vpack.c.b16 %v2242, %v2234
    %v3179 = vpack.c.b16 %v2243, %v2235
    %v3180 = vpack.c.b16 %v2244, %v2236
    %v3181 = vpack.c.b16 %v2245, %v2237
    %v3182 = vpack.c.b16 %v2246, %v2238
    %v3183 = vpack.c.b16 %v2247, %v2239
    %v3184 = vpack.c.b16 %v2256, %v2248
    %v3185 = vpack.c.b16 %v2257, %v2249
    %v3186 = vpack.c.b16 %v2258, %v2250
    %v3187 = vpack.c.b16 %v2259, %v2251
    %v3188 = vpack.c.b16 %v2260, %v2252
    %v3189 = vpack.c.b16 %v2261, %v2253
    %v3190 = vpack.c.b16 %v2262, %v2254
    %v3191 = vpack.c.b16 %v2263, %v2255
    %v3192 = vpack.c.b16 %v2272, %v2264
    %v3193 = vpack.c.b16 %v2273, %v2265
    %v3194 = vpack.c.b16 %v2274, %v2266
    %v3195 = vpack.c.b16 %v2275, %v2267
    %v3196 = vpack.c.b16 %v2276, %v2268
    %v3197 = vpack.c.b16 %v2277, %v2269
    %v3198 = vpack.c.b16 %v2278, %v2270
    %v3199 = vpack.c.b16 %v2279, %v2271
    %v3200 = vpack.c.b16 %v2288, %v2280
    %v3201 = vpack.c.b16 %v2289, %v2281
    %v3202 = vpack.c.b16 %v2290, %v2282
    %v3203 = vpack.c.b16 %v2291, %v2283
    %v3204 = vpack.c.b16 %v2292, %v2284
    %v3205 = vpack.c.b16 %v2293, %v2285
    %v3206 = vpack.c.b16 %v2294, %v2286
    %v3207 = vpack.c.b16 %v2295, %v2287
    %v3208 = vpack.c.b16 %v2304, %v2296
    %v3209 = vpack.c.b16 %v2305, %v2297
    %v3210 = vpack.c.b16 %v2306, %v2298
    %v3211 = vpack.c.b16 %v2307, %v2299
    %v3212 = vpack.c.b16 %v2308, %v2300
    %v3213 = vpack.c.b16 %v2309, %v2301
    %v3214 = vpack.c.b16 %v2310, %v2302
    %v3215 = vpack.c.b16 %v2311, %v2303
    %v3216 = vpack.c.b16 %v2320, %v2312
    %v3217 = vpack.c.b16 %v2321, %v2313
    %v3218 = vpack.c.b16 %v2322, %v2314
    %v3219 = vpack.c.b16 %v2323, %v2315
    %v3220 = vpack.c.b16 %v2324, %v2316
    %v3221 = vpack.c.b16 %v2325, %v2317
    %v3222 = vpack.c.b16 %v2326, %v2318
    %v3223 = vpack.c.b16 %v2327, %v2319
    %v3224 = vpack.c.b16 %v2336, %v2328
    %v3225 = vpack.c.b16 %v2337, %v2329
    %v3226 = vpack.c.b16 %v2338, %v2330
    %v3227 = vpack.c.b16 %v2339, %v2331
    %v3228 = vpack.c.b16 %v2340, %v2332
    %v3229 = vpack.c.b16 %v2341, %v2333
    %v3230 = vpack.c.b16 %v2342, %v2334
    %v3231 = vpack.c.b16 %v2343, %v2335
    %v3232 = vpack.c.b16 %v2352, %v2344
    %v3233 = vpack.c.b16 %v2353, %v2345
    %v3234 = vpack.c.b16 %v2354, %v2346
    %v3235 = vpack.c.b16 %v2355, %v2347
    %v3236 = vpack.c.b16 %v2356, %v2348
    %v3237 = vpack.c.b16 %v2357, %v2349
    %v3238 = vpack.c.b16 %v2358, %v2350
    %v3239 = vpack.c.b16 %v2359, %v2351
    %v3240 = vpack.c.b16 %v2368, %v2360
    %v3241 = vpack.c.b16 %v2369, %v2361
    %v3242 = vpack.c.b16 %v2370, %v2362
    %v3243 = vpack.c.b16 %v2371, %v2363
    %v3244 = vpack.c.b16 %v2372, %v2364
    %v3245 = vpack.c.b16 %v2373, %v2365
    %v3246 = vpack.c.b16 %v2374, %v2366
    %v3247 = vpack.c.b16 %v2375, %v2367
    %v3248 = vpack.c.b16 %v2384, %v2376
    %v3249 = vpack.c.b16 %v2385, %v2377
    %v3250 = vpack.c.b16 %v2386, %v2378
    %v3251 = vpack.c.b16 %v2387, %v2379
    %v3252 = vpack.c.b16 %v2388, %v2380
    %v3253 = vpack.c.b16 %v2389, %v2381
    %v3254 = vpack.c.b16 %v2390, %v2382
    %v3255 = vpack.c.b16 %v2391, %v2383
    %v3256 = vpack.c.b16 %v2400, %v2392
    %v3257 = vpack.c.b16 %v2401, %v2393
    %v3258 = vpack.c.b16 %v2402, %v2394
    %v3259 = vpack.c.b16 %v2403, %v2395
    %v3260 = vpack.c.b16 %v2404, %v2396
    %v3261 = vpack.c.b16 %v2405, %v2397
    %v3262 = vpack.c.b16 %v2406, %v2398
    %v3263 = vpack.c.b16 %v2407, %v2399
    %v3264 = vpack.c.b16 %v2416, %v2408
    %v3265 = vpack.c.b16 %v2417, %v2409
    %v3266 = vpack.c.b16 %v2418, %v2410
    %v3267 = vpack.c.b16 %v2419, %v2411
    %v3268 = vpack.c.b16 %v2420, %v2412
    %v3269 = vpack.c.b16 %v2421, %v2413
    %v3270 = vpack.c.b16 %v2422, %v2414
    %v3271 = vpack.c.b16 %v2423, %v2415
    %v3272 = vpack.c.b16 %v2432, %v2424
    %v3273 = vpack.c.b16 %v2433, %v2425
    %v3274 = vpack.c.b16 %v2434, %v2426
    %v3275 = vpack.c.b16 %v2435, %v2427
    %v3276 = vpack.c.b16 %v2436, %v2428
    %v3277 = vpack.c.b16 %v2437, %v2429
    %v3278 = vpack.c.b16 %v2438, %v2430
    %v3279 = vpack.c.b16 %v2439, %v2431
    %v3280 = vpack.c.b16 %v2448, %v2440
    %v3281 = vpack.c.b16 %v2449, %v2441
    %v3282 = vpack.c.b16 %v2450, %v2442
    %v3283 = vpack.c.b16 %v2451, %v2443
    %v3284 = vpack.c.b16 %v2452, %v2444
    %v3285 = vpack.c.b16 %v2453, %v2445
    %v3286 = vpack.c.b16 %v2454, %v2446
    %v3287 = vpack.c.b16 %v2455, %v2447
    %v3288 = vpack.c.b16 %v2464, %v2456
    %v3289 = vpack.c.b16 %v2465, %v2457
    %v3290 = vpack.c.b16 %v2466, %v2458
    %v3291 = vpack.c.b16 %v2467, %v2459
    %v3292 = vpack.c.b16 %v2468, %v2460
    %v3293 = vpack.c.b16 %v2469, %v2461
    %v3294 = vpack.c.b16 %v2470, %v2462
    %v3295 = vpack.c.b16 %v2471, %v2463
    %v3296 = vpack.c.b16 %v2480, %v2472
    %v3297 = vpack.c.b16 %v2481, %v2473
    %v3298 = vpack.c.b16 %v2482, %v2474
    %v3299 = vpack.c.b16 %v2483, %v2475
    %v3300 = vpack.c.b16 %v2484, %v2476
    %v3301 = vpack.c.b16 %v2485, %v2477
    %v3302 = vpack.c.b16 %v2486, %v2478
    %v3303 = vpack.c.b16 %v2487, %v2479
    %v3304 = vpack.c.b16 %v2496, %v2488
    %v3305 = vpack.c.b16 %v2497, %v2489
    %v3306 = vpack.c.b16 %v2498, %v2490
    %v3307 = vpack.c.b16 %v2499, %v2491
    %v3308 = vpack.c.b16 %v2500, %v2492
    %v3309 = vpack.c.b16 %v2501, %v2493
    %v3310 = vpack.c.b16 %v2502, %v2494
    %v3311 = vpack.c.b16 %v2503, %v2495
    %v3312 = vpack.c.b16 %v2512, %v2504
    %v3313 = vpack.c.b16 %v2513, %v2505
    %v3314 = vpack.c.b16 %v2514, %v2506
    %v3315 = vpack.c.b16 %v2515, %v2507
    %v3316 = vpack.c.b16 %v2516, %v2508
    %v3317 = vpack.c.b16 %v2517, %v2509
    %v3318 = vpack.c.b16 %v2518, %v2510
    %v3319 = vpack.c.b16 %v2519, %v2511
    %v3320 = vpack.c.b16 %v2528, %v2520
    %v3321 = vpack.c.b16 %v2529, %v2521
    %v3322 = vpack.c.b16 %v2530, %v2522
    %v3323 = vpack.c.b16 %v2531, %v2523
    %v3324 = vpack.c.b16 %v2532, %v2524
    %v3325 = vpack.c.b16 %v2533, %v2525
    %v3326 = vpack.c.b16 %v2534, %v2526
    %v3327 = vpack.c.b16 %v2535, %v2527
    %v3328 = vpack.c.b16 %v2544, %v2536
    %v3329 = vpack.c.b16 %v2545, %v2537
    %v3330 = vpack.c.b16 %v2546, %v2538
    %v3331 = vpack.c.b16 %v2547, %v2539
    %v3332 = vpack.c.b16 %v2548, %v2540
    %v3333 = vpack.c.b16 %v2549, %v2541
    %v3334 = vpack.c.b16 %v2550, %v2542
    %v3335 = vpack.c.b16 %v2551, %v2543
    %v3336 = vpack.c.b16 %v2560, %v2552
    %v3337 = vpack.c.b16 %v2561, %v2553
    %v3338 = vpack.c.b16 %v2562, %v2554
    %v3339 = vpack.c.b16 %v2563, %v2555
    %v3340 = vpack.c.b16 %v2564, %v2556
    %v3341 = vpack.c.b16 %v2565, %v2557
    %v3342 = vpack.c.b16 %v2566, %v2558
    %v3343 = vpack.c.b16 %v2567, %v2559
    %v3344 = vpack.c.b16 %v2576, %v2568
    %v3345 = vpack.c.b16 %v2577, %v2569
    %v3346 = vpack.c.b16 %v2578, %v2570
    %v3347 = vpack.c.b16 %v2579, %v2571
    %v3348 = vpack.c.b16 %v2580, %v2572
    %v3349 = vpack.c.b16 %v2581, %v2573
    %v3350 = vpack.c.b16 %v2582, %v2574
    %v3351 = vpack.c.b16 %v2583, %v2575
    %v3352 = vpack.c.b16 %v2592, %v2584
    %v3353 = vpack.c.b16 %v2593, %v2585
    %v3354 = vpack.c.b16 %v2594, %v2586
    %v3355 = vpack.c.b16 %v2595, %v2587
    %v3356 = vpack.c.b16 %v2596, %v2588
    %v3357 = vpack.c.b16 %v2597, %v2589
    %v3358 = vpack.c.b16 %v2598, %v2590
    %v3359 = vpack.c.b16 %v2599, %v2591
    %v3360 = vpack.c.b16 %v2608, %v2600
    %v3361 = vpack.c.b16 %v2609, %v2601
    %v3362 = vpack.c.b16 %v2610, %v2602
    %v3363 = vpack.c.b16 %v2611, %v2603
    %v3364 = vpack.c.b16 %v2612, %v2604
    %v3365 = vpack.c.b16 %v2613, %v2605
    %v3366 = vpack.c.b16 %v2614, %v2606
    %v3367 = vpack.c.b16 %v2615, %v2607
    %v3368 = vpack.c.b16 %v2624, %v2616
    %v3369 = vpack.c.b16 %v2625, %v2617
    %v3370 = vpack.c.b16 %v2626, %v2618
    %v3371 = vpack.c.b16 %v2627, %v2619
    %v3372 = vpack.c.b16 %v2628, %v2620
    %v3373 = vpack.c.b16 %v2629, %v2621
    %v3374 = vpack.c.b16 %v2630, %v2622
    %v3375 = vpack.c.b16 %v2631, %v2623
    %v3376 = vpack.c.b16 %v2640, %v2632
    %v3377 = vpack.c.b16 %v2641, %v2633
    %v3378 = vpack.c.b16 %v2642, %v2634
    %v3379 = vpack.c.b16 %v2643, %v2635
    %v3380 = vpack.c.b16 %v2644, %v2636
    %v3381 = vpack.c.b16 %v2645, %v2637
    %v3382 = vpack.c.b16 %v2646, %v2638
    %v3383 = vpack.c.b16 %v2647, %v2639
    %v3384 = vpack.c.b16 %v2656, %v2648
    %v3385 = vpack.c.b16 %v2657, %v2649
    %v3386 = vpack.c.b16 %v2658, %v2650
    %v3387 = vpack.c.b16 %v2659, %v2651
    %v3388 = vpack.c.b16 %v2660, %v2652
    %v3389 = vpack.c.b16 %v2661, %v2653
    %v3390 = vpack.c.b16 %v2662, %v2654
    %v3391 = vpack.c.b16 %v2663, %v2655
    %v3392 = vpack.c.b16 %v2672, %v2664
    %v3393 = vpack.c.b16 %v2673, %v2665
    %v3394 = vpack.c.b16 %v2674, %v2666
    %v3395 = vpack.c.b16 %v2675, %v2667
    %v3396 = vpack.c.b16 %v2676, %v2668
    %v3397 = vpack.c.b16 %v2677, %v2669
    %v3398 = vpack.c.b16 %v2678, %v2670
    %v3399 = vpack.c.b16 %v2679, %v2671
    %v3400 = vpack.c.b16 %v2688, %v2680
    %v3401 = vpack.c.b16 %v2689, %v2681
    %v3402 = vpack.c.b16 %v2690, %v2682
    %v3403 = vpack.c.b16 %v2691, %v2683
    %v3404 = vpack.c.b16 %v2692, %v2684
    %v3405 = vpack.c.b16 %v2693, %v2685
    %v3406 = vpack.c.b16 %v2694, %v2686
    %v3407 = vpack.c.b16 %v2695, %v2687
    %v3408 = vpack.c.b16 %v2704, %v2696
    %v3409 = vpack.c.b16 %v2705, %v2697
    %v3410 = vpack.c.b16 %v2706, %v2698
    %v3411 = vpack.c.b16 %v2707, %v2699
    %v3412 = vpack.c.b16 %v2708, %v2700
    %v3413 = vpack.c.b16 %v2709, %v2701
    %v3414 = vpack.c.b16 %v2710, %v2702
    %v3415 = vpack.c.b16 %v2711, %v2703
    %v3416 = vpack.c.b16 %v2720, %v2712
    %v3417 = vpack.c.b16 %v2721, %v2713
    %v3418 = vpack.c.b16 %v2722, %v2714
    %v3419 = vpack.c.b16 %v2723, %v2715
    %v3420 = vpack.c.b16 %v2724, %v2716
    %v3421 = vpack.c.b16 %v2725, %v2717
    %v3422 = vpack.c.b16 %v2726, %v2718
    %v3423 = vpack.c.b16 %v2727, %v2719
    %v3424 = vpack.c.b16 %v2736, %v2728
    %v3425 = vpack.c.b16 %v2737, %v2729
    %v3426 = vpack.c.b16 %v2738, %v2730
    %v3427 = vpack.c.b16 %v2739, %v2731
    %v3428 = vpack.c.b16 %v2740, %v2732
    %v3429 = vpack.c.b16 %v2741, %v2733
    %v3430 = vpack.c.b16 %v2742, %v2734
    %v3431 = vpack.c.b16 %v2743, %v2735
    %v3432 = vpack.c.b16 %v2752, %v2744
    %v3433 = vpack.c.b16 %v2753, %v2745
    %v3434 = vpack.c.b16 %v2754, %v2746
    %v3435 = vpack.c.b16 %v2755, %v2747
    %v3436 = vpack.c.b16 %v2756, %v2748
    %v3437 = vpack.c.b16 %v2757, %v2749
    %v3438 = vpack.c.b16 %v2758, %v2750
    %v3439 = vpack.c.b16 %v2759, %v2751
    %v3440 = vpack.c.b16 %v2768, %v2760
    %v3441 = vpack.c.b16 %v2769, %v2761
    %v3442 = vpack.c.b16 %v2770, %v2762
    %v3443 = vpack.c.b16 %v2771, %v2763
    %v3444 = vpack.c.b16 %v2772, %v2764
    %v3445 = vpack.c.b16 %v2773, %v2765
    %v3446 = vpack.c.b16 %v2774, %v2766
    %v3447 = vpack.c.b16 %v2775, %v2767
    %v3448 = vpack.c.b16 %v2784, %v2776
    %v3449 = vpack.c.b16 %v2785, %v2777
    %v3450 = vpack.c.b16 %v2786, %v2778
    %v3451 = vpack.c.b16 %v2787, %v2779
    %v3452 = vpack.c.b16 %v2788, %v2780
    %v3453 = vpack.c.b16 %v2789, %v2781
    %v3454 = vpack.c.b16 %v2790, %v2782
    %v3455 = vpack.c.b16 %v2791, %v2783
    %v3456 = vpack.c.b16 %v2800, %v2792
    %v3457 = vpack.c.b16 %v2801, %v2793
    %v3458 = vpack.c.b16 %v2802, %v2794
    %v3459 = vpack.c.b16 %v2803, %v2795
    %v3460 = vpack.c.b16 %v2804, %v2796
    %v3461 = vpack.c.b16 %v2805, %v2797
    %v3462 = vpack.c.b16 %v2806, %v2798
    %v3463 = vpack.c.b16 %v2807, %v2799
    %v3464 = vpack.c.b16 %v2816, %v2808
    %v3465 = vpack.c.b16 %v2817, %v2809
    %v3466 = vpack.c.b16 %v2818, %v2810
    %v3467 = vpack.c.b16 %v2819, %v2811
    %v3468 = vpack.c.b16 %v2820, %v2812
    %v3469 = vpack.c.b16 %v2821, %v2813
    %v3470 = vpack.c.b16 %v2822, %v2814
    %v3471 = vpack.c.b16 %v2823, %v2815
    %v3472 = vpack.c.b16 %v2832, %v2824
    %v3473 = vpack.c.b16 %v2833, %v2825
    %v3474 = vpack.c.b16 %v2834, %v2826
    %v3475 = vpack.c.b16 %v2835, %v2827
    %v3476 = vpack.c.b16 %v2836, %v2828
    %v3477 = vpack.c.b16 %v2837, %v2829
    %v3478 = vpack.c.b16 %v2838, %v2830
    %v3479 = vpack.c.b16 %v2839, %v2831
    %v3480 = vpack.c.b16 %v2848, %v2840
    %v3481 = vpack.c.b16 %v2849, %v2841
    %v3482 = vpack.c.b16 %v2850, %v2842
    %v3483 = vpack.c.b16 %v2851, %v2843
    %v3484 = vpack.c.b16 %v2852, %v2844
    %v3485 = vpack.c.b16 %v2853, %v2845
    %v3486 = vpack.c.b16 %v2854, %v2846
    %v3487 = vpack.c.b16 %v2855, %v2847
    %v3488 = vpack.c.b16 %v2864, %v2856
    %v3489 = vpack.c.b16 %v2865, %v2857
    %v3490 = vpack.c.b16 %v2866, %v2858
    %v3491 = vpack.c.b16 %v2867, %v2859
    %v3492 = vpack.c.b16 %v2868, %v2860
    %v3493 = vpack.c.b16 %v2869, %v2861
    %v3494 = vpack.c.b16 %v2870, %v2862
    %v3495 = vpack.c.b16 %v2871, %v2863
    %v3496 = vpack.c.b16 %v2880, %v2872
    %v3497 = vpack.c.b16 %v2881, %v2873
    %v3498 = vpack.c.b16 %v2882, %v2874
    %v3499 = vpack.c.b16 %v2883, %v2875
    %v3500 = vpack.c.b16 %v2884, %v2876
    %v3501 = vpack.c.b16 %v2885, %v2877
    %v3502 = vpack.c.b16 %v2886, %v2878
    %v3503 = vpack.c.b16 %v2887, %v2879
    %v3504 = vpack.c.b16 %v2896, %v2888
    %v3505 = vpack.c.b16 %v2897, %v2889
    %v3506 = vpack.c.b16 %v2898, %v2890
    %v3507 = vpack.c.b16 %v2899, %v2891
    %v3508 = vpack.c.b16 %v2900, %v2892
    %v3509 = vpack.c.b16 %v2901, %v2893
    %v3510 = vpack.c.b16 %v2902, %v2894
    %v3511 = vpack.c.b16 %v2903, %v2895
    %v3512 = vpack.c.b16 %v2912, %v2904
    %v3513 = vpack.c.b16 %v2913, %v2905
    %v3514 = vpack.c.b16 %v2914, %v2906
    %v3515 = vpack.c.b16 %v2915, %v2907
    %v3516 = vpack.c.b16 %v2916, %v2908
    %v3517 = vpack.c.b16 %v2917, %v2909
    %v3518 = vpack.c.b16 %v2918, %v2910
    %v3519 = vpack.c.b16 %v2919, %v2911
    %v3520 = vpack.c.b16 %v2928, %v2920
    %v3521 = vpack.c.b16 %v2929, %v2921
    %v3522 = vpack.c.b16 %v2930, %v2922
    %v3523 = vpack.c.b16 %v2931, %v2923
    %v3524 = vpack.c.b16 %v2932, %v2924
    %v3525 = vpack.c.b16 %v2933, %v2925
    %v3526 = vpack.c.b16 %v2934, %v2926
    %v3527 = vpack.c.b16 %v2935, %v2927
    %v3528 = vpack.c.b16 %v2944, %v2936
    %v3529 = vpack.c.b16 %v2945, %v2937
    %v3530 = vpack.c.b16 %v2946, %v2938
    %v3531 = vpack.c.b16 %v2947, %v2939
    %v3532 = vpack.c.b16 %v2948, %v2940
    %v3533 = vpack.c.b16 %v2949, %v2941
    %v3534 = vpack.c.b16 %v2950, %v2942
    %v3535 = vpack.c.b16 %v2951, %v2943
    %v3536 = vpack.c.b16 %v2960, %v2952
    %v3537 = vpack.c.b16 %v2961, %v2953
    %v3538 = vpack.c.b16 %v2962, %v2954
    %v3539 = vpack.c.b16 %v2963, %v2955
    %v3540 = vpack.c.b16 %v2964, %v2956
    %v3541 = vpack.c.b16 %v2965, %v2957
    %v3542 = vpack.c.b16 %v2966, %v2958
    %v3543 = vpack.c.b16 %v2967, %v2959
    %v3544 = vpack.c.b16 %v2976, %v2968
    %v3545 = vpack.c.b16 %v2977, %v2969
    %v3546 = vpack.c.b16 %v2978, %v2970
    %v3547 = vpack.c.b16 %v2979, %v2971
    %v3548 = vpack.c.b16 %v2980, %v2972
    %v3549 = vpack.c.b16 %v2981, %v2973
    %v3550 = vpack.c.b16 %v2982, %v2974
    %v3551 = vpack.c.b16 %v2983, %v2975
    %v3552 = vpack.c.b16 %v2992, %v2984
    %v3553 = vpack.c.b16 %v2993, %v2985
    %v3554 = vpack.c.b16 %v2994, %v2986
    %v3555 = vpack.c.b16 %v2995, %v2987
    %v3556 = vpack.c.b16 %v2996, %v2988
    %v3557 = vpack.c.b16 %v2997, %v2989
    %v3558 = vpack.c.b16 %v2998, %v2990
    %v3559 = vpack.c.b16 %v2999, %v2991
    %v3560 = vpack.c.b16 %v3008, %v3000
    %v3561 = vpack.c.b16 %v3009, %v3001
    %v3562 = vpack.c.b16 %v3010, %v3002
    %v3563 = vpack.c.b16 %v3011, %v3003
    %v3564 = vpack.c.b16 %v3012, %v3004
    %v3565 = vpack.c.b16 %v3013, %v3005
    %v3566 = vpack.c.b16 %v3014, %v3006
    %v3567 = vpack.c.b16 %v3015, %v3007
    %v3568 = vpack.c.b16 %v3024, %v3016
    %v3569 = vpack.c.b16 %v3025, %v3017
    %v3570 = vpack.c.b16 %v3026, %v3018
    %v3571 = vpack.c.b16 %v3027, %v3019
    %v3572 = vpack.c.b16 %v3028, %v3020
    %v3573 = vpack.c.b16 %v3029, %v3021
    %v3574 = vpack.c.b16 %v3030, %v3022
    %v3575 = vpack.c.b16 %v3031, %v3023
    %v3576 = vpack.c.b16 %v3040, %v3032
    %v3577 = vpack.c.b16 %v3041, %v3033
    %v3578 = vpack.c.b16 %v3042, %v3034
    %v3579 = vpack.c.b16 %v3043, %v3035
    %v3580 = vpack.c.b16 %v3044, %v3036
    %v3581 = vpack.c.b16 %v3045, %v3037
    %v3582 = vpack.c.b16 %v3046, %v3038
    %v3583 = vpack.c.b16 %v3047, %v3039
    %v3584 = vpack.c.b16 %v3056, %v3048
    %v3585 = vpack.c.b16 %v3057, %v3049
    %v3586 = vpack.c.b16 %v3058, %v3050
    %v3587 = vpack.c.b16 %v3059, %v3051
    %v3588 = vpack.c.b16 %v3060, %v3052
    %v3589 = vpack.c.b16 %v3061, %v3053
    %v3590 = vpack.c.b16 %v3062, %v3054
    %v3591 = vpack.c.b16 %v3063, %v3055
    %v3592 = vpack.c.b16 %v3072, %v3064
    %v3593 = vpack.c.b16 %v3073, %v3065
    %v3594 = vpack.c.b16 %v3074, %v3066
    %v3595 = vpack.c.b16 %v3075, %v3067
    %v3596 = vpack.c.b16 %v3076, %v3068
    %v3597 = vpack.c.b16 %v3077, %v3069
    %v3598 = vpack.c.b16 %v3078, %v3070
    %v3599 = vpack.c.b16 %v3079, %v3071
    %v3600 = vpack.c.b16 %v3088, %v3080
    %v3601 = vpack.c.b16 %v3089, %v3081
    %v3602 = vpack.c.b16 %v3090, %v3082
    %v3603 = vpack.c.b16 %v3091, %v3083
    %v3604 = vpack.c.b16 %v3092, %v3084
    %v3605 = vpack.c.b16 %v3093, %v3085
    %v3606 = vpack.c.b16 %v3094, %v3086
    %v3607 = vpack.c.b16 %v3095, %v3087
    %4120 = vmatprep.subr.bf16.mxu0 %v3153
    %4121 = vmatpush1.bf16.msra.mxu0 %v3152
    %4122 = vmatprep.subr.bf16.mxu0 %v3145
    %4123 = vmatpush1.bf16.msra.mxu0 %v3144
    %4124 = vmatprep.subr.bf16.mxu0 %v3137
    %4125 = vmatpush1.bf16.msra.mxu0 %v3136
    %4126 = vmatprep.subr.bf16.mxu0 %v3129
    %4127 = vmatpush1.bf16.msra.mxu0 %v3128
    %4128 = vmatprep.subr.bf16.mxu0 %v3121
    %4129 = vmatpush1.bf16.msra.mxu0 %v3120
    %4130 = vmatprep.subr.bf16.mxu0 %v3113
    %4131 = vmatpush1.bf16.msra.mxu0 %v3112
    %4132 = vmatprep.subr.bf16.mxu0 %v3105
    %4133 = vmatpush1.bf16.msra.mxu0 %v3104
    %4134 = vmatprep.subr.bf16.mxu0 %v3097
    %4135 = vmatpush1.bf16.msra.mxu0 %v3096
    %4136 = vmatprep.subr.bf16.mxu0 %v3217
    %4137 = vmatpush2.bf16.msra.mxu0 %v3216
    %4138 = vmatprep.subr.bf16.mxu0 %v3209
    %4139 = vmatpush2.bf16.msra.mxu0 %v3208
    %4140 = vmatprep.subr.bf16.mxu0 %v3201
    %4141 = vmatpush2.bf16.msra.mxu0 %v3200
    %4142 = vmatprep.subr.bf16.mxu0 %v3193
    %4143 = vmatpush2.bf16.msra.mxu0 %v3192
    %4144 = vmatprep.subr.bf16.mxu0 %v3185
    %4145 = vmatpush2.bf16.msra.mxu0 %v3184
    %4146 = vmatprep.subr.bf16.mxu0 %v3177
    %4147 = vmatpush2.bf16.msra.mxu0 %v3176
    %4148 = vmatprep.subr.bf16.mxu0 %v3169
    %4149 = vmatpush2.bf16.msra.mxu0 %v3168
    %4150 = vmatprep.subr.bf16.mxu0 %v3161
    %4151 = vmatpush2.bf16.msra.mxu0 %v3160
    %4152 = vmatprep.mubr.bf16.mxu0 %v1041
    %4153 = vmatmul.mubr.bf16.gmra.mxu0 %v1040
    %v4154 = vpop.f32.mrf.mxu0
    %v4155 = vadd.f32 0.0, %v4154
    %v4156 = vpop.f32.mrf.mxu0
    %v4157 = vadd.f32 0.0, %v4156
    %v4158 = vpop.f32.mrf.mxu0
    %v4159 = vpop.f32.mrf.mxu0
    %4160 = vdwg.mxu0
    %4161 = vmatprep.subr.bf16.mxu0 %v3281
    %4162 = vmatpush1.bf16.msra.mxu0 %v3280
    %4163 = vmatprep.subr.bf16.mxu0 %v3273
    %4164 = vmatpush1.bf16.msra.mxu0 %v3272
    %4165 = vmatprep.subr.bf16.mxu0 %v3265
    %4166 = vmatpush1.bf16.msra.mxu0 %v3264
    %4167 = vmatprep.subr.bf16.mxu0 %v3257
    %4168 = vmatpush1.bf16.msra.mxu0 %v3256
    %4169 = vmatprep.subr.bf16.mxu0 %v3249
    %4170 = vmatpush1.bf16.msra.mxu0 %v3248
    %4171 = vmatprep.subr.bf16.mxu0 %v3241
    %4172 = vmatpush1.bf16.msra.mxu0 %v3240
    %4173 = vmatprep.subr.bf16.mxu0 %v3233
    %4174 = vmatpush1.bf16.msra.mxu0 %v3232
    %4175 = vmatprep.subr.bf16.mxu0 %v3225
    %4176 = vmatpush1.bf16.msra.mxu0 %v3224
    %4177 = vmatprep.subr.bf16.mxu0 %v3345
    %4178 = vmatpush2.bf16.msra.mxu0 %v3344
    %4179 = vmatprep.subr.bf16.mxu0 %v3337
    %4180 = vmatpush2.bf16.msra.mxu0 %v3336
    %4181 = vmatprep.subr.bf16.mxu0 %v3329
    %4182 = vmatpush2.bf16.msra.mxu0 %v3328
    %4183 = vmatprep.subr.bf16.mxu0 %v3321
    %4184 = vmatpush2.bf16.msra.mxu0 %v3320
    %4185 = vmatprep.subr.bf16.mxu0 %v3313
    %4186 = vmatpush2.bf16.msra.mxu0 %v3312
    %4187 = vmatprep.subr.bf16.mxu0 %v3305
    %4188 = vmatpush2.bf16.msra.mxu0 %v3304
    %4189 = vmatprep.subr.bf16.mxu0 %v3297
    %4190 = vmatpush2.bf16.msra.mxu0 %v3296
    %4191 = vmatprep.subr.bf16.mxu0 %v3289
    %4192 = vmatpush2.bf16.msra.mxu0 %v3288
    %4193 = vmatprep.mubr.bf16.mxu0 %v1043
    %4194 = vmatmul.mubr.bf16.gmra.mxu0 %v1042
    %v4195 = vpop.f32.mrf.mxu0
    %v4196 = vadd.f32 %v4155, %v4195
    %v4197 = vpop.f32.mrf.mxu0
    %v4198 = vadd.f32 %v4157, %v4197
    %v4199 = vpop.f32.mrf.mxu0
    %v4200 = vpop.f32.mrf.mxu0
    %4201 = vdwg.mxu0
    %4202 = vmatprep.subr.bf16.mxu0 %v3409
    %4203 = vmatpush1.bf16.msra.mxu0 %v3408
    %4204 = vmatprep.subr.bf16.mxu0 %v3401
    %4205 = vmatpush1.bf16.msra.mxu0 %v3400
    %4206 = vmatprep.subr.bf16.mxu0 %v3393
    %4207 = vmatpush1.bf16.msra.mxu0 %v3392
    %4208 = vmatprep.subr.bf16.mxu0 %v3385
    %4209 = vmatpush1.bf16.msra.mxu0 %v3384
    %4210 = vmatprep.subr.bf16.mxu0 %v3377
    %4211 = vmatpush1.bf16.msra.mxu0 %v3376
    %4212 = vmatprep.subr.bf16.mxu0 %v3369
    %4213 = vmatpush1.bf16.msra.mxu0 %v3368
    %4214 = vmatprep.subr.bf16.mxu0 %v3361
    %4215 = vmatpush1.bf16.msra.mxu0 %v3360
    %4216 = vmatprep.subr.bf16.mxu0 %v3353
    %4217 = vmatpush1.bf16.msra.mxu0 %v3352
    %4218 = vmatprep.subr.bf16.mxu0 %v3473
    %4219 = vmatpush2.bf16.msra.mxu0 %v3472
    %4220 = vmatprep.subr.bf16.mxu0 %v3465
    %4221 = vmatpush2.bf16.msra.mxu0 %v3464
    %4222 = vmatprep.subr.bf16.mxu0 %v3457
    %4223 = vmatpush2.bf16.msra.mxu0 %v3456
    %4224 = vmatprep.subr.bf16.mxu0 %v3449
    %4225 = vmatpush2.bf16.msra.mxu0 %v3448
    %4226 = vmatprep.subr.bf16.mxu0 %v3441
    %4227 = vmatpush2.bf16.msra.mxu0 %v3440
    %4228 = vmatprep.subr.bf16.mxu0 %v3433
    %4229 = vmatpush2.bf16.msra.mxu0 %v3432
    %4230 = vmatprep.subr.bf16.mxu0 %v3425
    %4231 = vmatpush2.bf16.msra.mxu0 %v3424
    %4232 = vmatprep.subr.bf16.mxu0 %v3417
    %4233 = vmatpush2.bf16.msra.mxu0 %v3416
    %4234 = vmatprep.mubr.bf16.mxu0 %v1045
    %4235 = vmatmul.mubr.bf16.gmra.mxu0 %v1044
    %v4236 = vpop.f32.mrf.mxu0
    %v4237 = vadd.f32 %v4196, %v4236
    %v4238 = vpop.f32.mrf.mxu0
    %v4239 = vadd.f32 %v4198, %v4238
    %v4240 = vpop.f32.mrf.mxu0
    %v4241 = vpop.f32.mrf.mxu0
    %4242 = vdwg.mxu0
    %4243 = vmatprep.subr.bf16.mxu0 %v3537
    %4244 = vmatpush1.bf16.msra.mxu0 %v3536
    %4245 = vmatprep.subr.bf16.mxu0 %v3529
    %4246 = vmatpush1.bf16.msra.mxu0 %v3528
    %4247 = vmatprep.subr.bf16.mxu0 %v3521
    %4248 = vmatpush1.bf16.msra.mxu0 %v3520
    %4249 = vmatprep.subr.bf16.mxu0 %v3513
    %4250 = vmatpush1.bf16.msra.mxu0 %v3512
    %4251 = vmatprep.subr.bf16.mxu0 %v3505
    %4252 = vmatpush1.bf16.msra.mxu0 %v3504
    %4253 = vmatprep.subr.bf16.mxu0 %v3497
    %4254 = vmatpush1.bf16.msra.mxu0 %v3496
    %4255 = vmatprep.subr.bf16.mxu0 %v3489
    %4256 = vmatpush1.bf16.msra.mxu0 %v3488
    %4257 = vmatprep.subr.bf16.mxu0 %v3481
    %4258 = vmatpush1.bf16.msra.mxu0 %v3480
    %4259 = vmatprep.subr.bf16.mxu0 %v3601
    %4260 = vmatpush2.bf16.msra.mxu0 %v3600
    %4261 = vmatprep.subr.bf16.mxu0 %v3593
    %4262 = vmatpush2.bf16.msra.mxu0 %v3592
    %4263 = vmatprep.subr.bf16.mxu0 %v3585
    %4264 = vmatpush2.bf16.msra.mxu0 %v3584
    %4265 = vmatprep.subr.bf16.mxu0 %v3577
    %4266 = vmatpush2.bf16.msra.mxu0 %v3576
    %4267 = vmatprep.subr.bf16.mxu0 %v3569
    %4268 = vmatpush2.bf16.msra.mxu0 %v3568
    %4269 = vmatprep.subr.bf16.mxu0 %v3561
    %4270 = vmatpush2.bf16.msra.mxu0 %v3560
    %4271 = vmatprep.subr.bf16.mxu0 %v3553
    %4272 = vmatpush2.bf16.msra.mxu0 %v3552
    %4273 = vmatprep.subr.bf16.mxu0 %v3545
    %4274 = vmatpush2.bf16.msra.mxu0 %v3544
    %4275 = vmatprep.mubr.bf16.mxu0 %v1047
    %4276 = vmatmul.mubr.bf16.gmra.mxu0 %v1046
    %v4277 = vpop.f32.mrf.mxu0
    %v4278 = vadd.f32 %v4237, %v4277
    %v4279 = vpop.f32.mrf.mxu0
    %v4280 = vadd.f32 %v4239, %v4279
    %v4281 = vpop.f32.mrf.mxu0
    %v4282 = vpop.f32.mrf.mxu0
    %4283 = vdwg.mxu0
    %4284 = vmatprep.subr.bf16.mxu0 %v3155
    %4285 = vmatpush1.bf16.msra.mxu0 %v3154
    %4286 = vmatprep.subr.bf16.mxu0 %v3147
    %4287 = vmatpush1.bf16.msra.mxu0 %v3146
    %4288 = vmatprep.subr.bf16.mxu0 %v3139
    %4289 = vmatpush1.bf16.msra.mxu0 %v3138
    %4290 = vmatprep.subr.bf16.mxu0 %v3131
    %4291 = vmatpush1.bf16.msra.mxu0 %v3130
    %4292 = vmatprep.subr.bf16.mxu0 %v3123
    %4293 = vmatpush1.bf16.msra.mxu0 %v3122
    %4294 = vmatprep.subr.bf16.mxu0 %v3115
    %4295 = vmatpush1.bf16.msra.mxu0 %v3114
    %4296 = vmatprep.subr.bf16.mxu0 %v3107
    %4297 = vmatpush1.bf16.msra.mxu0 %v3106
    %4298 = vmatprep.subr.bf16.mxu0 %v3099
    %4299 = vmatpush1.bf16.msra.mxu0 %v3098
    %4300 = vmatprep.subr.bf16.mxu0 %v3219
    %4301 = vmatpush2.bf16.msra.mxu0 %v3218
    %4302 = vmatprep.subr.bf16.mxu0 %v3211
    %4303 = vmatpush2.bf16.msra.mxu0 %v3210
    %4304 = vmatprep.subr.bf16.mxu0 %v3203
    %4305 = vmatpush2.bf16.msra.mxu0 %v3202
    %4306 = vmatprep.subr.bf16.mxu0 %v3195
    %4307 = vmatpush2.bf16.msra.mxu0 %v3194
    %4308 = vmatprep.subr.bf16.mxu0 %v3187
    %4309 = vmatpush2.bf16.msra.mxu0 %v3186
    %4310 = vmatprep.subr.bf16.mxu0 %v3179
    %4311 = vmatpush2.bf16.msra.mxu0 %v3178
    %4312 = vmatprep.subr.bf16.mxu0 %v3171
    %4313 = vmatpush2.bf16.msra.mxu0 %v3170
    %4314 = vmatprep.subr.bf16.mxu0 %v3163
    %4315 = vmatpush2.bf16.msra.mxu0 %v3162
    %4316 = vmatprep.mubr.bf16.mxu0 %v1041
    %4317 = vmatmul.mubr.bf16.gmra.mxu0 %v1040
    %v4318 = vpop.f32.mrf.mxu0
    %v4319 = vadd.f32 0.0, %v4318
    %v4320 = vpop.f32.mrf.mxu0
    %v4321 = vadd.f32 0.0, %v4320
    %v4322 = vpop.f32.mrf.mxu0
    %v4323 = vpop.f32.mrf.mxu0
    %4324 = vdwg.mxu0
    %4325 = vmatprep.subr.bf16.mxu0 %v3283
    %4326 = vmatpush1.bf16.msra.mxu0 %v3282
    %4327 = vmatprep.subr.bf16.mxu0 %v3275
    %4328 = vmatpush1.bf16.msra.mxu0 %v3274
    %4329 = vmatprep.subr.bf16.mxu0 %v3267
    %4330 = vmatpush1.bf16.msra.mxu0 %v3266
    %4331 = vmatprep.subr.bf16.mxu0 %v3259
    %4332 = vmatpush1.bf16.msra.mxu0 %v3258
    %4333 = vmatprep.subr.bf16.mxu0 %v3251
    %4334 = vmatpush1.bf16.msra.mxu0 %v3250
    %4335 = vmatprep.subr.bf16.mxu0 %v3243
    %4336 = vmatpush1.bf16.msra.mxu0 %v3242
    %4337 = vmatprep.subr.bf16.mxu0 %v3235
    %4338 = vmatpush1.bf16.msra.mxu0 %v3234
    %4339 = vmatprep.subr.bf16.mxu0 %v3227
    %4340 = vmatpush1.bf16.msra.mxu0 %v3226
    %4341 = vmatprep.subr.bf16.mxu0 %v3347
    %4342 = vmatpush2.bf16.msra.mxu0 %v3346
    %4343 = vmatprep.subr.bf16.mxu0 %v3339
    %4344 = vmatpush2.bf16.msra.mxu0 %v3338
    %4345 = vmatprep.subr.bf16.mxu0 %v3331
    %4346 = vmatpush2.bf16.msra.mxu0 %v3330
    %4347 = vmatprep.subr.bf16.mxu0 %v3323
    %4348 = vmatpush2.bf16.msra.mxu0 %v3322
    %4349 = vmatprep.subr.bf16.mxu0 %v3315
    %4350 = vmatpush2.bf16.msra.mxu0 %v3314
    %4351 = vmatprep.subr.bf16.mxu0 %v3307
    %4352 = vmatpush2.bf16.msra.mxu0 %v3306
    %4353 = vmatprep.subr.bf16.mxu0 %v3299
    %4354 = vmatpush2.bf16.msra.mxu0 %v3298
    %4355 = vmatprep.subr.bf16.mxu0 %v3291
    %4356 = vmatpush2.bf16.msra.mxu0 %v3290
    %4357 = vmatprep.mubr.bf16.mxu0 %v1043
    %4358 = vmatmul.mubr.bf16.gmra.mxu0 %v1042
    %v4359 = vpop.f32.mrf.mxu0
    %v4360 = vadd.f32 %v4319, %v4359
    %v4361 = vpop.f32.mrf.mxu0
    %v4362 = vadd.f32 %v4321, %v4361
    %v4363 = vpop.f32.mrf.mxu0
    %v4364 = vpop.f32.mrf.mxu0
    %4365 = vdwg.mxu0
    %4366 = vmatprep.subr.bf16.mxu0 %v3411
    %4367 = vmatpush1.bf16.msra.mxu0 %v3410
    %4368 = vmatprep.subr.bf16.mxu0 %v3403
    %4369 = vmatpush1.bf16.msra.mxu0 %v3402
    %4370 = vmatprep.subr.bf16.mxu0 %v3395
    %4371 = vmatpush1.bf16.msra.mxu0 %v3394
    %4372 = vmatprep.subr.bf16.mxu0 %v3387
    %4373 = vmatpush1.bf16.msra.mxu0 %v3386
    %4374 = vmatprep.subr.bf16.mxu0 %v3379
    %4375 = vmatpush1.bf16.msra.mxu0 %v3378
    %4376 = vmatprep.subr.bf16.mxu0 %v3371
    %4377 = vmatpush1.bf16.msra.mxu0 %v3370
    %4378 = vmatprep.subr.bf16.mxu0 %v3363
    %4379 = vmatpush1.bf16.msra.mxu0 %v3362
    %4380 = vmatprep.subr.bf16.mxu0 %v3355
    %4381 = vmatpush1.bf16.msra.mxu0 %v3354
    %4382 = vmatprep.subr.bf16.mxu0 %v3475
    %4383 = vmatpush2.bf16.msra.mxu0 %v3474
    %4384 = vmatprep.subr.bf16.mxu0 %v3467
    %4385 = vmatpush2.bf16.msra.mxu0 %v3466
    %4386 = vmatprep.subr.bf16.mxu0 %v3459
    %4387 = vmatpush2.bf16.msra.mxu0 %v3458
    %4388 = vmatprep.subr.bf16.mxu0 %v3451
    %4389 = vmatpush2.bf16.msra.mxu0 %v3450
    %4390 = vmatprep.subr.bf16.mxu0 %v3443
    %4391 = vmatpush2.bf16.msra.mxu0 %v3442
    %4392 = vmatprep.subr.bf16.mxu0 %v3435
    %4393 = vmatpush2.bf16.msra.mxu0 %v3434
    %4394 = vmatprep.subr.bf16.mxu0 %v3427
    %4395 = vmatpush2.bf16.msra.mxu0 %v3426
    %4396 = vmatprep.subr.bf16.mxu0 %v3419
    %4397 = vmatpush2.bf16.msra.mxu0 %v3418
    %4398 = vmatprep.mubr.bf16.mxu0 %v1045
    %4399 = vmatmul.mubr.bf16.gmra.mxu0 %v1044
    %v4400 = vpop.f32.mrf.mxu0
    %v4401 = vadd.f32 %v4360, %v4400
    %v4402 = vpop.f32.mrf.mxu0
    %v4403 = vadd.f32 %v4362, %v4402
    %v4404 = vpop.f32.mrf.mxu0
    %v4405 = vpop.f32.mrf.mxu0
    %4406 = vdwg.mxu0
    %4407 = vmatprep.subr.bf16.mxu0 %v3539
    %4408 = vmatpush1.bf16.msra.mxu0 %v3538
    %4409 = vmatprep.subr.bf16.mxu0 %v3531
    %4410 = vmatpush1.bf16.msra.mxu0 %v3530
    %4411 = vmatprep.subr.bf16.mxu0 %v3523
    %4412 = vmatpush1.bf16.msra.mxu0 %v3522
    %4413 = vmatprep.subr.bf16.mxu0 %v3515
    %4414 = vmatpush1.bf16.msra.mxu0 %v3514
    %4415 = vmatprep.subr.bf16.mxu0 %v3507
    %4416 = vmatpush1.bf16.msra.mxu0 %v3506
    %4417 = vmatprep.subr.bf16.mxu0 %v3499
    %4418 = vmatpush1.bf16.msra.mxu0 %v3498
    %4419 = vmatprep.subr.bf16.mxu0 %v3491
    %4420 = vmatpush1.bf16.msra.mxu0 %v3490
    %4421 = vmatprep.subr.bf16.mxu0 %v3483
    %4422 = vmatpush1.bf16.msra.mxu0 %v3482
    %4423 = vmatprep.subr.bf16.mxu0 %v3603
    %4424 = vmatpush2.bf16.msra.mxu0 %v3602
    %4425 = vmatprep.subr.bf16.mxu0 %v3595
    %4426 = vmatpush2.bf16.msra.mxu0 %v3594
    %4427 = vmatprep.subr.bf16.mxu0 %v3587
    %4428 = vmatpush2.bf16.msra.mxu0 %v3586
    %4429 = vmatprep.subr.bf16.mxu0 %v3579
    %4430 = vmatpush2.bf16.msra.mxu0 %v3578
    %4431 = vmatprep.subr.bf16.mxu0 %v3571
    %4432 = vmatpush2.bf16.msra.mxu0 %v3570
    %4433 = vmatprep.subr.bf16.mxu0 %v3563
    %4434 = vmatpush2.bf16.msra.mxu0 %v3562
    %4435 = vmatprep.subr.bf16.mxu0 %v3555
    %4436 = vmatpush2.bf16.msra.mxu0 %v3554
    %4437 = vmatprep.subr.bf16.mxu0 %v3547
    %4438 = vmatpush2.bf16.msra.mxu0 %v3546
    %4439 = vmatprep.mubr.bf16.mxu0 %v1047
    %4440 = vmatmul.mubr.bf16.gmra.mxu0 %v1046
    %v4441 = vpop.f32.mrf.mxu0
    %v4442 = vadd.f32 %v4401, %v4441
    %v4443 = vpop.f32.mrf.mxu0
    %v4444 = vadd.f32 %v4403, %v4443
    %v4445 = vpop.f32.mrf.mxu0
    %v4446 = vpop.f32.mrf.mxu0
    %4447 = vdwg.mxu0
    %4448 = vmatprep.subr.bf16.mxu0 %v3157
    %4449 = vmatpush1.bf16.msra.mxu0 %v3156
    %4450 = vmatprep.subr.bf16.mxu0 %v3149
    %4451 = vmatpush1.bf16.msra.mxu0 %v3148
    %4452 = vmatprep.subr.bf16.mxu0 %v3141
    %4453 = vmatpush1.bf16.msra.mxu0 %v3140
    %4454 = vmatprep.subr.bf16.mxu0 %v3133
    %4455 = vmatpush1.bf16.msra.mxu0 %v3132
    %4456 = vmatprep.subr.bf16.mxu0 %v3125
    %4457 = vmatpush1.bf16.msra.mxu0 %v3124
    %4458 = vmatprep.subr.bf16.mxu0 %v3117
    %4459 = vmatpush1.bf16.msra.mxu0 %v3116
    %4460 = vmatprep.subr.bf16.mxu0 %v3109
    %4461 = vmatpush1.bf16.msra.mxu0 %v3108
    %4462 = vmatprep.subr.bf16.mxu0 %v3101
    %4463 = vmatpush1.bf16.msra.mxu0 %v3100
    %4464 = vmatprep.subr.bf16.mxu0 %v3221
    %4465 = vmatpush2.bf16.msra.mxu0 %v3220
    %4466 = vmatprep.subr.bf16.mxu0 %v3213
    %4467 = vmatpush2.bf16.msra.mxu0 %v3212
    %4468 = vmatprep.subr.bf16.mxu0 %v3205
    %4469 = vmatpush2.bf16.msra.mxu0 %v3204
    %4470 = vmatprep.subr.bf16.mxu0 %v3197
    %4471 = vmatpush2.bf16.msra.mxu0 %v3196
    %4472 = vmatprep.subr.bf16.mxu0 %v3189
    %4473 = vmatpush2.bf16.msra.mxu0 %v3188
    %4474 = vmatprep.subr.bf16.mxu0 %v3181
    %4475 = vmatpush2.bf16.msra.mxu0 %v3180
    %4476 = vmatprep.subr.bf16.mxu0 %v3173
    %4477 = vmatpush2.bf16.msra.mxu0 %v3172
    %4478 = vmatprep.subr.bf16.mxu0 %v3165
    %4479 = vmatpush2.bf16.msra.mxu0 %v3164
    %4480 = vmatprep.mubr.bf16.mxu0 %v1041
    %4481 = vmatmul.mubr.bf16.gmra.mxu0 %v1040
    %v4482 = vpop.f32.mrf.mxu0
    %v4483 = vadd.f32 0.0, %v4482
    %v4484 = vpop.f32.mrf.mxu0
    %v4485 = vadd.f32 0.0, %v4484
    %v4486 = vpop.f32.mrf.mxu0
    %v4487 = vpop.f32.mrf.mxu0
    %4488 = vdwg.mxu0
    %4489 = vmatprep.subr.bf16.mxu0 %v3285
    %4490 = vmatpush1.bf16.msra.mxu0 %v3284
    %4491 = vmatprep.subr.bf16.mxu0 %v3277
    %4492 = vmatpush1.bf16.msra.mxu0 %v3276
    %4493 = vmatprep.subr.bf16.mxu0 %v3269
    %4494 = vmatpush1.bf16.msra.mxu0 %v3268
    %4495 = vmatprep.subr.bf16.mxu0 %v3261
    %4496 = vmatpush1.bf16.msra.mxu0 %v3260
    %4497 = vmatprep.subr.bf16.mxu0 %v3253
    %4498 = vmatpush1.bf16.msra.mxu0 %v3252
    %4499 = vmatprep.subr.bf16.mxu0 %v3245
    %4500 = vmatpush1.bf16.msra.mxu0 %v3244
    %4501 = vmatprep.subr.bf16.mxu0 %v3237
    %4502 = vmatpush1.bf16.msra.mxu0 %v3236
    %4503 = vmatprep.subr.bf16.mxu0 %v3229
    %4504 = vmatpush1.bf16.msra.mxu0 %v3228
    %4505 = vmatprep.subr.bf16.mxu0 %v3349
    %4506 = vmatpush2.bf16.msra.mxu0 %v3348
    %4507 = vmatprep.subr.bf16.mxu0 %v3341
    %4508 = vmatpush2.bf16.msra.mxu0 %v3340
    %4509 = vmatprep.subr.bf16.mxu0 %v3333
    %4510 = vmatpush2.bf16.msra.mxu0 %v3332
    %4511 = vmatprep.subr.bf16.mxu0 %v3325
    %4512 = vmatpush2.bf16.msra.mxu0 %v3324
    %4513 = vmatprep.subr.bf16.mxu0 %v3317
    %4514 = vmatpush2.bf16.msra.mxu0 %v3316
    %4515 = vmatprep.subr.bf16.mxu0 %v3309
    %4516 = vmatpush2.bf16.msra.mxu0 %v3308
    %4517 = vmatprep.subr.bf16.mxu0 %v3301
    %4518 = vmatpush2.bf16.msra.mxu0 %v3300
    %4519 = vmatprep.subr.bf16.mxu0 %v3293
    %4520 = vmatpush2.bf16.msra.mxu0 %v3292
    %4521 = vmatprep.mubr.bf16.mxu0 %v1043
    %4522 = vmatmul.mubr.bf16.gmra.mxu0 %v1042
    %v4523 = vpop.f32.mrf.mxu0
    %v4524 = vadd.f32 %v4483, %v4523
    %v4525 = vpop.f32.mrf.mxu0
    %v4526 = vadd.f32 %v4485, %v4525
    %v4527 = vpop.f32.mrf.mxu0
    %v4528 = vpop.f32.mrf.mxu0
    %4529 = vdwg.mxu0
    %4530 = vmatprep.subr.bf16.mxu0 %v3413
    %4531 = vmatpush1.bf16.msra.mxu0 %v3412
    %4532 = vmatprep.subr.bf16.mxu0 %v3405
    %4533 = vmatpush1.bf16.msra.mxu0 %v3404
    %4534 = vmatprep.subr.bf16.mxu0 %v3397
    %4535 = vmatpush1.bf16.msra.mxu0 %v3396
    %4536 = vmatprep.subr.bf16.mxu0 %v3389
    %4537 = vmatpush1.bf16.msra.mxu0 %v3388
    %4538 = vmatprep.subr.bf16.mxu0 %v3381
    %4539 = vmatpush1.bf16.msra.mxu0 %v3380
    %4540 = vmatprep.subr.bf16.mxu0 %v3373
    %4541 = vmatpush1.bf16.msra.mxu0 %v3372
    %4542 = vmatprep.subr.bf16.mxu0 %v3365
    %4543 = vmatpush1.bf16.msra.mxu0 %v3364
    %4544 = vmatprep.subr.bf16.mxu0 %v3357
    %4545 = vmatpush1.bf16.msra.mxu0 %v3356
    %4546 = vmatprep.subr.bf16.mxu0 %v3477
    %4547 = vmatpush2.bf16.msra.mxu0 %v3476
    %4548 = vmatprep.subr.bf16.mxu0 %v3469
    %4549 = vmatpush2.bf16.msra.mxu0 %v3468
    %4550 = vmatprep.subr.bf16.mxu0 %v3461
    %4551 = vmatpush2.bf16.msra.mxu0 %v3460
    %4552 = vmatprep.subr.bf16.mxu0 %v3453
    %4553 = vmatpush2.bf16.msra.mxu0 %v3452
    %4554 = vmatprep.subr.bf16.mxu0 %v3445
    %4555 = vmatpush2.bf16.msra.mxu0 %v3444
    %4556 = vmatprep.subr.bf16.mxu0 %v3437
    %4557 = vmatpush2.bf16.msra.mxu0 %v3436
    %4558 = vmatprep.subr.bf16.mxu0 %v3429
    %4559 = vmatpush2.bf16.msra.mxu0 %v3428
    %4560 = vmatprep.subr.bf16.mxu0 %v3421
    %4561 = vmatpush2.bf16.msra.mxu0 %v3420
    %4562 = vmatprep.mubr.bf16.mxu0 %v1045
    %4563 = vmatmul.mubr.bf16.gmra.mxu0 %v1044
    %v4564 = vpop.f32.mrf.mxu0
    %v4565 = vadd.f32 %v4524, %v4564
    %v4566 = vpop.f32.mrf.mxu0
    %v4567 = vadd.f32 %v4526, %v4566
    %v4568 = vpop.f32.mrf.mxu0
    %v4569 = vpop.f32.mrf.mxu0
    %4570 = vdwg.mxu0
    %4571 = vmatprep.subr.bf16.mxu0 %v3541
    %4572 = vmatpush1.bf16.msra.mxu0 %v3540
    %4573 = vmatprep.subr.bf16.mxu0 %v3533
    %4574 = vmatpush1.bf16.msra.mxu0 %v3532
    %4575 = vmatprep.subr.bf16.mxu0 %v3525
    %4576 = vmatpush1.bf16.msra.mxu0 %v3524
    %4577 = vmatprep.subr.bf16.mxu0 %v3517
    %4578 = vmatpush1.bf16.msra.mxu0 %v3516
    %4579 = vmatprep.subr.bf16.mxu0 %v3509
    %4580 = vmatpush1.bf16.msra.mxu0 %v3508
    %4581 = vmatprep.subr.bf16.mxu0 %v3501
    %4582 = vmatpush1.bf16.msra.mxu0 %v3500
    %4583 = vmatprep.subr.bf16.mxu0 %v3493
    %4584 = vmatpush1.bf16.msra.mxu0 %v3492
    %4585 = vmatprep.subr.bf16.mxu0 %v3485
    %4586 = vmatpush1.bf16.msra.mxu0 %v3484
    %4587 = vmatprep.subr.bf16.mxu0 %v3605
    %4588 = vmatpush2.bf16.msra.mxu0 %v3604
    %4589 = vmatprep.subr.bf16.mxu0 %v3597
    %4590 = vmatpush2.bf16.msra.mxu0 %v3596
    %4591 = vmatprep.subr.bf16.mxu0 %v3589
    %4592 = vmatpush2.bf16.msra.mxu0 %v3588
    %4593 = vmatprep.subr.bf16.mxu0 %v3581
    %4594 = vmatpush2.bf16.msra.mxu0 %v3580
    %4595 = vmatprep.subr.bf16.mxu0 %v3573
    %4596 = vmatpush2.bf16.msra.mxu0 %v3572
    %4597 = vmatprep.subr.bf16.mxu0 %v3565
    %4598 = vmatpush2.bf16.msra.mxu0 %v3564
    %4599 = vmatprep.subr.bf16.mxu0 %v3557
    %4600 = vmatpush2.bf16.msra.mxu0 %v3556
    %4601 = vmatprep.subr.bf16.mxu0 %v3549
    %4602 = vmatpush2.bf16.msra.mxu0 %v3548
    %4603 = vmatprep.mubr.bf16.mxu0 %v1047
    %4604 = vmatmul.mubr.bf16.gmra.mxu0 %v1046
    %v4605 = vpop.f32.mrf.mxu0
    %v4606 = vadd.f32 %v4565, %v4605
    %v4607 = vpop.f32.mrf.mxu0
    %v4608 = vadd.f32 %v4567, %v4607
    %v4609 = vpop.f32.mrf.mxu0
    %v4610 = vpop.f32.mrf.mxu0
    %4611 = vdwg.mxu0
    %4612 = vmatprep.subr.bf16.mxu0 %v3159
    %4613 = vmatpush1.bf16.msra.mxu0 %v3158
    %4614 = vmatprep.subr.bf16.mxu0 %v3151
    %4615 = vmatpush1.bf16.msra.mxu0 %v3150
    %4616 = vmatprep.subr.bf16.mxu0 %v3143
    %4617 = vmatpush1.bf16.msra.mxu0 %v3142
    %4618 = vmatprep.subr.bf16.mxu0 %v3135
    %4619 = vmatpush1.bf16.msra.mxu0 %v3134
    %4620 = vmatprep.subr.bf16.mxu0 %v3127
    %4621 = vmatpush1.bf16.msra.mxu0 %v3126
    %4622 = vmatprep.subr.bf16.mxu0 %v3119
    %4623 = vmatpush1.bf16.msra.mxu0 %v3118
    %4624 = vmatprep.subr.bf16.mxu0 %v3111
    %4625 = vmatpush1.bf16.msra.mxu0 %v3110
    %4626 = vmatprep.subr.bf16.mxu0 %v3103
    %4627 = vmatpush1.bf16.msra.mxu0 %v3102
    %4628 = vmatprep.subr.bf16.mxu0 %v3223
    %4629 = vmatpush2.bf16.msra.mxu0 %v3222
    %4630 = vmatprep.subr.bf16.mxu0 %v3215
    %4631 = vmatpush2.bf16.msra.mxu0 %v3214
    %4632 = vmatprep.subr.bf16.mxu0 %v3207
    %4633 = vmatpush2.bf16.msra.mxu0 %v3206
    %4634 = vmatprep.subr.bf16.mxu0 %v3199
    %4635 = vmatpush2.bf16.msra.mxu0 %v3198
    %4636 = vmatprep.subr.bf16.mxu0 %v3191
    %4637 = vmatpush2.bf16.msra.mxu0 %v3190
    %4638 = vmatprep.subr.bf16.mxu0 %v3183
    %4639 = vmatpush2.bf16.msra.mxu0 %v3182
    %4640 = vmatprep.subr.bf16.mxu0 %v3175
    %4641 = vmatpush2.bf16.msra.mxu0 %v3174
    %4642 = vmatprep.subr.bf16.mxu0 %v3167
    %4643 = vmatpush2.bf16.msra.mxu0 %v3166
    %4644 = vmatprep.mubr.bf16.mxu0 %v1041
    %4645 = vmatmul.mubr.bf16.gmra.mxu0 %v1040
    %v4646 = vpop.f32.mrf.mxu0
    %v4647 = vadd.f32 0.0, %v4646
    %v4648 = vpop.f32.mrf.mxu0
    %v4649 = vadd.f32 0.0, %v4648
    %v4650 = vpop.f32.mrf.mxu0
    %v4651 = vpop.f32.mrf.mxu0
    %4652 = vdwg.mxu0
    %4653 = vmatprep.subr.bf16.mxu0 %v3287
    %4654 = vmatpush1.bf16.msra.mxu0 %v3286
    %4655 = vmatprep.subr.bf16.mxu0 %v3279
    %4656 = vmatpush1.bf16.msra.mxu0 %v3278
    %4657 = vmatprep.subr.bf16.mxu0 %v3271
    %4658 = vmatpush1.bf16.msra.mxu0 %v3270
    %4659 = vmatprep.subr.bf16.mxu0 %v3263
    %4660 = vmatpush1.bf16.msra.mxu0 %v3262
    %4661 = vmatprep.subr.bf16.mxu0 %v3255
    %4662 = vmatpush1.bf16.msra.mxu0 %v3254
    %4663 = vmatprep.subr.bf16.mxu0 %v3247
    %4664 = vmatpush1.bf16.msra.mxu0 %v3246
    %4665 = vmatprep.subr.bf16.mxu0 %v3239
    %4666 = vmatpush1.bf16.msra.mxu0 %v3238
    %4667 = vmatprep.subr.bf16.mxu0 %v3231
    %4668 = vmatpush1.bf16.msra.mxu0 %v3230
    %4669 = vmatprep.subr.bf16.mxu0 %v3351
    %4670 = vmatpush2.bf16.msra.mxu0 %v3350
    %4671 = vmatprep.subr.bf16.mxu0 %v3343
    %4672 = vmatpush2.bf16.msra.mxu0 %v3342
    %4673 = vmatprep.subr.bf16.mxu0 %v3335
    %4674 = vmatpush2.bf16.msra.mxu0 %v3334
    %4675 = vmatprep.subr.bf16.mxu0 %v3327
    %4676 = vmatpush2.bf16.msra.mxu0 %v3326
    %4677 = vmatprep.subr.bf16.mxu0 %v3319
    %4678 = vmatpush2.bf16.msra.mxu0 %v3318
    %4679 = vmatprep.subr.bf16.mxu0 %v3311
    %4680 = vmatpush2.bf16.msra.mxu0 %v3310
    %4681 = vmatprep.subr.bf16.mxu0 %v3303
    %4682 = vmatpush2.bf16.msra.mxu0 %v3302
    %4683 = vmatprep.subr.bf16.mxu0 %v3295
    %4684 = vmatpush2.bf16.msra.mxu0 %v3294
    %4685 = vmatprep.mubr.bf16.mxu0 %v1043
    %4686 = vmatmul.mubr.bf16.gmra.mxu0 %v1042
    %v4687 = vpop.f32.mrf.mxu0
    %v4688 = vadd.f32 %v4647, %v4687
    %v4689 = vpop.f32.mrf.mxu0
    %v4690 = vadd.f32 %v4649, %v4689
    %v4691 = vpop.f32.mrf.mxu0
    %v4692 = vpop.f32.mrf.mxu0
    %4693 = vdwg.mxu0
    %4694 = vmatprep.subr.bf16.mxu0 %v3415
    %4695 = vmatpush1.bf16.msra.mxu0 %v3414
    %4696 = vmatprep.subr.bf16.mxu0 %v3407
    %4697 = vmatpush1.bf16.msra.mxu0 %v3406
    %4698 = vmatprep.subr.bf16.mxu0 %v3399
    %4699 = vmatpush1.bf16.msra.mxu0 %v3398
    %4700 = vmatprep.subr.bf16.mxu0 %v3391
    %4701 = vmatpush1.bf16.msra.mxu0 %v3390
    %4702 = vmatprep.subr.bf16.mxu0 %v3383
    %4703 = vmatpush1.bf16.msra.mxu0 %v3382
    %4704 = vmatprep.subr.bf16.mxu0 %v3375
    %4705 = vmatpush1.bf16.msra.mxu0 %v3374
    %4706 = vmatprep.subr.bf16.mxu0 %v3367
    %4707 = vmatpush1.bf16.msra.mxu0 %v3366
    %4708 = vmatprep.subr.bf16.mxu0 %v3359
    %4709 = vmatpush1.bf16.msra.mxu0 %v3358
    %4710 = vmatprep.subr.bf16.mxu0 %v3479
    %4711 = vmatpush2.bf16.msra.mxu0 %v3478
    %4712 = vmatprep.subr.bf16.mxu0 %v3471
    %4713 = vmatpush2.bf16.msra.mxu0 %v3470
    %4714 = vmatprep.subr.bf16.mxu0 %v3463
    %4715 = vmatpush2.bf16.msra.mxu0 %v3462
    %4716 = vmatprep.subr.bf16.mxu0 %v3455
    %4717 = vmatpush2.bf16.msra.mxu0 %v3454
    %4718 = vmatprep.subr.bf16.mxu0 %v3447
    %4719 = vmatpush2.bf16.msra.mxu0 %v3446
    %4720 = vmatprep.subr.bf16.mxu0 %v3439
    %4721 = vmatpush2.bf16.msra.mxu0 %v3438
    %4722 = vmatprep.subr.bf16.mxu0 %v3431
    %4723 = vmatpush2.bf16.msra.mxu0 %v3430
    %4724 = vmatprep.subr.bf16.mxu0 %v3423
    %4725 = vmatpush2.bf16.msra.mxu0 %v3422
    %4726 = vmatprep.mubr.bf16.mxu0 %v1045
    %4727 = vmatmul.mubr.bf16.gmra.mxu0 %v1044
    %v4728 = vpop.f32.mrf.mxu0
    %v4729 = vadd.f32 %v4688, %v4728
    %v4730 = vpop.f32.mrf.mxu0
    %v4731 = vadd.f32 %v4690, %v4730
    %v4732 = vpop.f32.mrf.mxu0
    %v4733 = vpop.f32.mrf.mxu0
    %4734 = vdwg.mxu0
    %4735 = vmatprep.subr.bf16.mxu0 %v3543
    %4736 = vmatpush1.bf16.msra.mxu0 %v3542
    %4737 = vmatprep.subr.bf16.mxu0 %v3535
    %4738 = vmatpush1.bf16.msra.mxu0 %v3534
    %4739 = vmatprep.subr.bf16.mxu0 %v3527
    %4740 = vmatpush1.bf16.msra.mxu0 %v3526
    %4741 = vmatprep.subr.bf16.mxu0 %v3519
    %4742 = vmatpush1.bf16.msra.mxu0 %v3518
    %4743 = vmatprep.subr.bf16.mxu0 %v3511
    %4744 = vmatpush1.bf16.msra.mxu0 %v3510
    %4745 = vmatprep.subr.bf16.mxu0 %v3503
    %4746 = vmatpush1.bf16.msra.mxu0 %v3502
    %4747 = vmatprep.subr.bf16.mxu0 %v3495
    %4748 = vmatpush1.bf16.msra.mxu0 %v3494
    %4749 = vmatprep.subr.bf16.mxu0 %v3487
    %4750 = vmatpush1.bf16.msra.mxu0 %v3486
    %4751 = vmatprep.subr.bf16.mxu0 %v3607
    %4752 = vmatpush2.bf16.msra.mxu0 %v3606
    %4753 = vmatprep.subr.bf16.mxu0 %v3599
    %4754 = vmatpush2.bf16.msra.mxu0 %v3598
    %4755 = vmatprep.subr.bf16.mxu0 %v3591
    %4756 = vmatpush2.bf16.msra.mxu0 %v3590
    %4757 = vmatprep.subr.bf16.mxu0 %v3583
    %4758 = vmatpush2.bf16.msra.mxu0 %v3582
    %4759 = vmatprep.subr.bf16.mxu0 %v3575
    %4760 = vmatpush2.bf16.msra.mxu0 %v3574
    %4761 = vmatprep.subr.bf16.mxu0 %v3567
    %4762 = vmatpush2.bf16.msra.mxu0 %v3566
    %4763 = vmatprep.subr.bf16.mxu0 %v3559
    %4764 = vmatpush2.bf16.msra.mxu0 %v3558
    %4765 = vmatprep.subr.bf16.mxu0 %v3551
    %4766 = vmatpush2.bf16.msra.mxu0 %v3550
    %4767 = vmatprep.mubr.bf16.mxu0 %v1047
    %4768 = vmatmul.mubr.bf16.gmra.mxu0 %v1046
    %v4769 = vpop.f32.mrf.mxu0
    %v4770 = vadd.f32 %v4729, %v4769
    %v4771 = vpop.f32.mrf.mxu0
    %v4772 = vadd.f32 %v4731, %v4771
    %v4773 = vpop.f32.mrf.mxu0
    %v4774 = vpop.f32.mrf.mxu0
    %4775 = vdwg.mxu0
    %v4776 = vmul.f32 %v1032, %v4278
    %v4777 = vmul.f32 %v1033, %v4280
    %v4778 = vmul.f32 %v1034, %v4442
    %v4779 = vmul.f32 %v1035, %v4444
    %v4780 = vmul.f32 %v1036, %v4606
    %v4781 = vmul.f32 %v1037, %v4608
    %v4782 = vmul.f32 %v1038, %v4770
    %v4783 = vmul.f32 %v1039, %v4772
    %v4784 = vadd.f32 %v4776, %v4777
    %v4785 = vadd.f32 %v4784, %v4778
    %v4786 = vadd.f32 %v4785, %v4779
    %v4787 = vadd.f32 %v4786, %v4780
    %v4788 = vadd.f32 %v4787, %v4781
    %v4789 = vadd.f32 %v4788, %v4782
    %v4790 = vadd.f32 %v4789, %v4783
    %4791 = vadd.xlane.f32.xlu0 %v4790
    %v4792 = vpop.xlane.xlu0 %4791
    %v4793 = vld [vmem:[#allocation2] sm:$0x1]
    %v4795 = vlaneseq
    %v4796 = vshrl.u32 %v4795, 7
    %v4797 = vsub.s32 0, %v4796
    %v4798 = vrot.slane %v4793, %v4797
    %v4800 = vadd.f32 %v4792, %v4798
    %vm4801 = vcmask 7168
    %4802 = vst.msk [vmem:[%s7] sm:$0xff] %vm4801, %v4800
    // Predicated region
    $region34: #{dtinet_forward.5} parent=1 // pred_check
      _
    $region35: #{dtinet_forward.5} parent=1 // pred_check_branch
      %4804 = sbr.rel (0) target = $region37
    $region36: #{dtinet_forward.5} parent=1 // pred_region
      _
    $region37: #{dtinet_forward.5} parent=1 // pred_fallthru
      _
    // Predicated region
    $region38: #{dtinet_forward.5} parent=1 // pred_check
      _
    $region39: #{dtinet_forward.5} parent=1 // pred_check_branch
      %4806 = sbr.rel (0) target = $region41
    $region40: #{dtinet_forward.5} parent=1 // pred_region
      _
    $region41: #{dtinet_forward.5} parent=1 // pred_fallthru
      _
    %4807 = vsyncpa [#allocation4], 1

</llo_original>
